<compile_context>
chip_gen: v5e
topology: v5e:2x2
jax: 0.10.0
libtpu: 0.0.40
codegen_flags: <defaults>
</compile_context>

<pallas_src>
import functools

import jax
import jax.numpy as jnp
from jax import lax
from jax.experimental import pallas as pl
from jax.experimental.pallas import tpu as pltpu

_LANE = 128  # lane width: channel padding target


def _round_up(x, m):
    return (x + m - 1) // m * m


def _pad_last(a, target):
    if a.shape[-1] == target:
        return a
    pad = [(0, 0)] * a.ndim
    pad[-1] = (0, target - a.shape[-1])
    return jnp.pad(a, pad)


def _pad_axis(a, axis, target):
    if a.shape[axis] == target:
        return a
    pad = [(0, 0)] * a.ndim
    pad[axis] = (0, target - a.shape[axis])
    return jnp.pad(a, pad)


def fold_bn(gamma, beta, mean, var, eps=1e-5):
    scale = gamma / jnp.sqrt(var + eps)
    bias = beta - mean * scale
    return scale, bias


def _vmem_limit_bytes():
    """Generation-aware VMEM budget: ~96 MiB on v5e/v6e (128 MiB physical VMEM),
    ~48 MiB on v7x (64 MiB per-TensorCore VMEM)."""
    cap = 64 * 1024 * 1024
    try:
        info = pltpu.get_tpu_info()
        cap = int(getattr(info, "vmem_capacity_bytes", cap) or cap)
    except Exception:
        pass
    return min(int(cap * 0.75), 100 * 1024 * 1024)


# -----------------------------------------------------------------------------
# Fully fused Bottleneck kernel (one grid step per batch element)
# -----------------------------------------------------------------------------
def _bottleneck_kernel(x_ref, w1_ref, b1_ref, w2_ref, b2_ref, w3_ref, b3_ref,
                       o_ref, pad_ref, *, D, H, W):
    Cin = x_ref.shape[-1]
    Cmid = w1_ref.shape[-1]
    Cout = w3_ref.shape[-1]
    M = D * H * W

    x2d = x_ref[...].reshape(M, Cin)              # bf16; also the identity residual

    # ---- conv1 (1x1x1, BN scale folded into weights) + bias + ReLU -----------
    y1 = jnp.dot(x2d, w1_ref[...], preferred_element_type=jnp.float32)
    y1 = jnp.maximum(y1 + b1_ref[...], 0.0)

    # ---- build the zero-halo conv2 input in a VMEM scratch --------------------
    # (no XLA pad op, no padded HBM buffer; re-zeroed every step so megacore
    #  sharding of the grid stays correct)
    pad_ref[...] = jnp.zeros(pad_ref.shape, pad_ref.dtype)
    pad_ref[1:1 + D, 1:1 + H, 1:1 + W, :] = (
        y1.reshape(D, H, W, Cmid).astype(pad_ref.dtype))

    # ---- conv2 (3x3x3, scale folded) + bias + ReLU ----------------------------
    # 9 MXU dots; per (kd, kh) the 3 kw taps are concatenated along channels so
    # each dot has K = 3*Cmid and M = D*H*W.
    ypad = pad_ref[...]                           # (D+2, H+2, W+2, Cmid) bf16
    acc = jnp.zeros((M, Cmid), jnp.float32)
    for kd in range(3):                           # static unroll: 9 dots total
        for kh in range(3):
            taps = [ypad[kd:kd + D, kh:kh + H, kw:kw + W, :].reshape(M, Cmid)
                    for kw in range(3)]
            acc = acc + jnp.dot(jnp.concatenate(taps, axis=-1),
                                w2_ref[kd * 3 + kh],
                                preferred_element_type=jnp.float32)
    y2 = jnp.maximum(acc + b2_ref[...], 0.0)

    # ---- conv3 (1x1x1, scale folded) + bias + residual + ReLU (epilogue) ------
    y3 = jnp.dot(y2.astype(w3_ref.dtype), w3_ref[...],
                 preferred_element_type=jnp.float32)
    y3 = jnp.maximum(y3 + b3_ref[...] + x2d.astype(jnp.float32), 0.0)
    o_ref[...] = y3.reshape(D, H, W, Cout).astype(o_ref.dtype)


# -----------------------------------------------------------------------------
# Full Bottleneck forward
# -----------------------------------------------------------------------------
def bottleneck_forward(x_ncdhw, params, stride=1, dilation=1):
    # TODO(synk): stride != 1, dilation != 1 and the downsample branch are not
    # implemented (module defaults: stride=1, dilation=1, downsample=None).
    assert stride == 1 and dilation == 1

    N, Cin, D, H, W = x_ncdhw.shape
    w1, w2, w3 = params["w1"], params["w2"], params["w3"]
    Cmid, Cout = w1.shape[1], w3.shape[1]
    assert Cout == Cin, "identity residual requires inplanes == planes*4"

    Cin_p = _round_up(Cin, _LANE)
    Cmid_p = _round_up(Cmid, _LANE)
    Cout_p = _round_up(Cout, _LANE)

    # Fold inference-mode BN: scale goes into the conv weights (exact algebra),
    # bias stays as an f32 add in the kernel.
    s1, b1 = fold_bn(*params["bn1"])
    s2, b2 = fold_bn(*params["bn2"])
    s3, b3 = fold_bn(*params["bn3"])
    b1p = _pad_last(b1, Cmid_p)[None, :].astype(jnp.float32)
    b2p = _pad_last(b2, Cmid_p)[None, :].astype(jnp.float32)
    b3p = _pad_last(b3, Cout_p)[None, :].astype(jnp.float32)

    # TODO(synk): on v7x the resident weights could be cast to fp8 for ~2x MXU
    # throughput and half the resident-VMEM; kept bf16 for numerical parity.
    w1p = _pad_axis(_pad_axis(w1 * s1[None, :], 0, Cin_p), 1, Cmid_p).astype(jnp.bfloat16)
    w2f = w2 * s2[None, None, :]                                    # (27, Cmid, Cmid)
    w2p = _pad_axis(_pad_axis(w2f, 1, Cmid_p), 2, Cmid_p)           # (27, Cmid_p, Cmid_p)
    w2p = w2p.reshape(3, 3, 3, Cmid_p, Cmid_p)                      # [kd, kh, kw, cin, cout]
    w2p = w2p.reshape(9, 3 * Cmid_p, Cmid_p).astype(jnp.bfloat16)   # kw taps concat along cin
    w3p = _pad_axis(_pad_axis(w3 * s3[None, :], 0, Cmid_p), 1, Cout_p).astype(jnp.bfloat16)

    # Boundary layout op: NCDHW -> NDHWC + channel zero-pad + bf16 cast in one
    # fused XLA expression (cost_estimate below lets XLA overlap it with the kernel).
    x = jnp.transpose(x_ncdhw, (0, 2, 3, 4, 1))
    xp = _pad_last(x, Cin_p).astype(jnp.bfloat16)                   # (N, D, H, W, Cin_p)

    Mrows = D * H * W
    out_dtype = x_ncdhw.dtype
    flops = 2 * N * Mrows * (Cin_p * Cmid_p + 27 * Cmid_p * Cmid_p + Cmid_p * Cout_p)
    bytes_accessed = (
        N * Mrows * Cin_p * 2                                        # x (bf16), read once
        + N * Mrows * Cout_p * jnp.dtype(out_dtype).itemsize         # output write
        + (w1p.size + w2p.size + w3p.size) * 2                       # bf16 weights
        + (b1p.size + b2p.size + b3p.size) * 4)                      # f32 biases

    # Whole-sample residency: one grid step per batch element keeps every
    # intermediate in VMEM (weights stay resident via constant index_maps).
    # TODO(synk): very large D*H*W volumes need a depth-blocked variant (TD output
    # slices per step) to stay inside v7x's 64 MiB per-TC VMEM.
    kernel = functools.partial(_bottleneck_kernel, D=D, H=H, W=W)
    out = pl.pallas_call(
        kernel,
        out_shape=jax.ShapeDtypeStruct((N, D, H, W, Cout_p), out_dtype),
        grid_spec=pltpu.PrefetchScalarGridSpec(
            num_scalar_prefetch=0,
            grid=(N,),
            in_specs=[
                pl.BlockSpec((None, D, H, W, Cin_p), lambda n: (n, 0, 0, 0, 0)),
                pl.BlockSpec((Cin_p, Cmid_p), lambda n: (0, 0)),             # w1 resident
                pl.BlockSpec((1, Cmid_p), lambda n: (0, 0)),
                pl.BlockSpec((9, 3 * Cmid_p, Cmid_p), lambda n: (0, 0, 0)),  # w2 resident
                pl.BlockSpec((1, Cmid_p), lambda n: (0, 0)),
                pl.BlockSpec((Cmid_p, Cout_p), lambda n: (0, 0)),            # w3 resident
                pl.BlockSpec((1, Cout_p), lambda n: (0, 0)),
            ],
            out_specs=pl.BlockSpec((None, D, H, W, Cout_p),
                                   lambda n: (n, 0, 0, 0, 0)),
            scratch_shapes=[
                pltpu.VMEM((D + 2, H + 2, W + 2, Cmid_p), jnp.bfloat16)],
        ),
        compiler_params=pltpu.CompilerParams(
            dimension_semantics=("parallel",),
            vmem_limit_bytes=_vmem_limit_bytes(),
        ),
        cost_estimate=pl.CostEstimate(
            flops=flops, transcendentals=0, bytes_accessed=bytes_accessed),
    )(xp, w1p, b1p, w2p, b2p, w3p, b3p)

    out = out[..., :Cout]
    return jnp.transpose(out, (0, 4, 1, 2, 3))                       # back to NCDHW


# -----------------------------------------------------------------------------
# Pure-JAX reference (same bf16-operand / f32-accumulate / scale-folded numerics;
# BN folding is mathematically exact for inference-mode BatchNorm)
# -----------------------------------------------------------------------------
def reference_forward(x_ncdhw, params, stride=1, dilation=1):
    x = jnp.transpose(x_ncdhw, (0, 2, 3, 4, 1)).astype(jnp.bfloat16)  # NDHWC

    s1, b1 = fold_bn(*params["bn1"])
    s2, b2 = fold_bn(*params["bn2"])
    s3, b3 = fold_bn(*params["bn3"])

    w1 = (params["w1"] * s1[None, :]).astype(jnp.bfloat16)
    w2 = (params["w2"] * s2[None, None, :]).reshape(
        3, 3, 3, *params["w2"].shape[1:]).astype(jnp.bfloat16)
    w3 = (params["w3"] * s3[None, :]).astype(jnp.bfloat16)

    out = jnp.einsum("ndhwc,co->ndhwo", x, w1, preferred_element_type=jnp.float32)
    out = jax.nn.relu(out + b1).astype(jnp.bfloat16)
    out = lax.conv_general_dilated(
        out, w2, window_strides=(stride,) * 3,
        padding=[(dilation, dilation)] * 3, rhs_dilation=(dilation,) * 3,
        dimension_numbers=("NDHWC", "DHWIO", "NDHWC"),
        preferred_element_type=jnp.float32)
    out = jax.nn.relu(out + b2).astype(jnp.bfloat16)
    out = jnp.einsum("ndhwc,co->ndhwo", out, w3, preferred_element_type=jnp.float32)
    out = jax.nn.relu(out + b3 + x.astype(jnp.float32))
    return jnp.transpose(out, (0, 4, 1, 2, 3))


# -----------------------------------------------------------------------------
if __name__ == "__main__":
    key = jax.random.PRNGKey(0)
    N, inplanes, planes = 2, 16, 4          # expansion=4 -> out channels = 16
    D = H = W = 8

    ks = jax.random.split(key, 16)
    params = {
        # weights stored as (Cin, Cout) for 1x1x1 and (27, Cin, Cout) for 3x3x3
        # (tap ordering kd-major, then kh, then kw)
        "w1": jax.random.normal(ks[0], (inplanes, planes), jnp.float32) * 0.1,
        "w2": jax.random.normal(ks[1], (27, planes, planes), jnp.float32) * 0.1,
        "w3": jax.random.normal(ks[2], (planes, planes * 4), jnp.float32) * 0.1,
        "bn1": (
            jax.random.uniform(ks[3], (planes,), jnp.float32, 0.5, 1.5),
            jax.random.normal(ks[4], (planes,), jnp.float32) * 0.1,
            jax.random.normal(ks[5], (planes,), jnp.float32) * 0.1,
            jax.random.uniform(ks[6], (planes,), jnp.float32, 0.5, 1.5),
        ),
        "bn2": (
            jax.random.uniform(ks[7], (planes,), jnp.float32, 0.5, 1.5),
            jax.random.normal(ks[8], (planes,), jnp.float32) * 0.1,
            jax.random.normal(ks[9], (planes,), jnp.float32) * 0.1,
            jax.random.uniform(ks[10], (planes,), jnp.float32, 0.5, 1.5),
        ),
        "bn3": (
            jax.random.uniform(ks[11], (planes * 4,), jnp.float32, 0.5, 1.5),
            jax.random.normal(ks[12], (planes * 4,), jnp.float32) * 0.1,
            jax.random.normal(ks[13], (planes * 4,), jnp.float32) * 0.1,
            jax.random.uniform(ks[14], (planes * 4,), jnp.float32, 0.5, 1.5),
        ),
    }

    x = jax.random.normal(ks[15], (N, inplanes, D, H, W), jnp.float32)

    out = jax.block_until_ready(bottleneck_forward(x, params, stride=1, dilation=1))
    ref = jax.block_until_ready(reference_forward(x, params, stride=1, dilation=1))

    assert out.shape == (N, planes * 4, D, H, W), out.shape
    max_err = float(jnp.max(jnp.abs(out - ref)))
    assert jnp.allclose(out, ref, atol=5e-2, rtol=5e-2), max_err

    print("KERNEL_OK")
</pallas_src>

<mosaic_0001>
module attributes {stable_mosaic.version = 11 : i64} {
  func.func @_bottleneck_kernel(%arg0: i32, %arg1: memref<1x8x8x8x128xbf16, #tpu.memory_space<vmem>>, %arg2: memref<128x128xbf16, #tpu.memory_space<vmem>>, %arg3: memref<1x128xf32, #tpu.memory_space<vmem>>, %arg4: memref<9x384x128xbf16, #tpu.memory_space<vmem>>, %arg5: memref<1x128xf32, #tpu.memory_space<vmem>>, %arg6: memref<128x128xbf16, #tpu.memory_space<vmem>>, %arg7: memref<1x128xf32, #tpu.memory_space<vmem>>, %arg8: memref<1x8x8x8x128xf32, #tpu.memory_space<vmem>>, %arg9: memref<10x10x10x128xbf16, #tpu.memory_space<vmem>>) attributes {dimension_semantics = [#tpu.dimension_semantics<parallel>], iteration_bounds = array<i64: 2>, scalar_prefetch = 0 : i64, scratch_operands = 1 : i64, tpu.core_type = #tpu.core_type<tc>, window_params = [{transform_indices = @transform_0, window_bounds = array<i64: 1, 8, 8, 8, 128>}, {pipeline_mode = #tpu.pipeline_mode<synchronous>, transform_indices = @transform_1, window_bounds = array<i64: 128, 128>}, {pipeline_mode = #tpu.pipeline_mode<synchronous>, transform_indices = @transform_2, window_bounds = array<i64: 1, 128>}, {pipeline_mode = #tpu.pipeline_mode<synchronous>, transform_indices = @transform_3, window_bounds = array<i64: 9, 384, 128>}, {pipeline_mode = #tpu.pipeline_mode<synchronous>, transform_indices = @transform_4, window_bounds = array<i64: 1, 128>}, {pipeline_mode = #tpu.pipeline_mode<synchronous>, transform_indices = @transform_5, window_bounds = array<i64: 128, 128>}, {pipeline_mode = #tpu.pipeline_mode<synchronous>, transform_indices = @transform_6, window_bounds = array<i64: 1, 128>}, {transform_indices = @transform_7, window_bounds = array<i64: 1, 8, 8, 8, 128>}]} {
    %c0 = arith.constant 0 : index
    %c0_0 = arith.constant 0 : index
    %c0_1 = arith.constant 0 : index
    %c0_2 = arith.constant 0 : index
    %c0_3 = arith.constant 0 : index
    %0 = vector.load %arg1[%c0, %c0_0, %c0_1, %c0_2, %c0_3] : memref<1x8x8x8x128xbf16, #tpu.memory_space<vmem>>, vector<1x8x8x8x128xbf16>
    %1 = vector.shape_cast %0 : vector<1x8x8x8x128xbf16> to vector<8x8x8x128xbf16>
    %2 = vector.shape_cast %1 : vector<8x8x8x128xbf16> to vector<512x128xbf16>
    %c0_4 = arith.constant 0 : index
    %c0_5 = arith.constant 0 : index
    %3 = vector.load %arg2[%c0_4, %c0_5] : memref<128x128xbf16, #tpu.memory_space<vmem>>, vector<128x128xbf16>
    %cst = arith.constant dense<0.000000e+00> : vector<512x128xf32>
    %4 = tpu.matmul %2, %3, %cst {dimension_numbers = #tpu.dot_dimension_numbers<[1], [0], [0], [1], [0, 0, 1, 1], [], []>} : vector<512x128xbf16>, vector<128x128xbf16>, vector<512x128xf32> -> vector<512x128xf32>
    %c0_6 = arith.constant 0 : index
    %c0_7 = arith.constant 0 : index
    %5 = vector.load %arg3[%c0_6, %c0_7] : memref<1x128xf32, #tpu.memory_space<vmem>>, vector<1x128xf32>
    %6 = vector.broadcast %5 : vector<1x128xf32> to vector<512x128xf32>
    %7 = arith.addf %4, %6 : vector<512x128xf32>
    %cst_8 = arith.constant 0.000000e+00 : f32
    %8 = vector.broadcast %cst_8 : f32 to vector<512x128xf32>
    %9 = arith.maximumf %7, %8 : vector<512x128xf32>
    %cst_9 = arith.constant 0.000000e+00 : bf16
    %10 = vector.broadcast %cst_9 : bf16 to vector<10x10x10x128xbf16>
    %c0_10 = arith.constant 0 : index
    %c0_11 = arith.constant 0 : index
    %c0_12 = arith.constant 0 : index
    %c0_13 = arith.constant 0 : index
    %11 = vector.load %arg9[%c0_10, %c0_11, %c0_12, %c0_13] : memref<10x10x10x128xbf16, #tpu.memory_space<vmem>>, vector<10x10x10x128xbf16>
    tpu.vector_store %arg9[%c0_10, %c0_11, %c0_12, %c0_13], %10 {strides = array<i32>} : memref<10x10x10x128xbf16, #tpu.memory_space<vmem>>, vector<10x10x10x128xbf16>,
    %12 = vector.shape_cast %9 : vector<512x128xf32> to vector<8x8x8x128xf32>
    %13 = arith.truncf %12 : vector<8x8x8x128xf32> to vector<8x8x8x128xbf16>
    %c1 = arith.constant 1 : index
    %c1_14 = arith.constant 1 : index
    %c1_15 = arith.constant 1 : index
    %c0_16 = arith.constant 0 : index
    %14 = vector.load %arg9[%c1, %c1_14, %c1_15, %c0_16] : memref<10x10x10x128xbf16, #tpu.memory_space<vmem>>, vector<8x8x8x128xbf16>
    tpu.vector_store %arg9[%c1, %c1_14, %c1_15, %c0_16], %13 {strides = array<i32>} : memref<10x10x10x128xbf16, #tpu.memory_space<vmem>>, vector<8x8x8x128xbf16>,
    %c0_17 = arith.constant 0 : index
    %c0_18 = arith.constant 0 : index
    %c0_19 = arith.constant 0 : index
    %c0_20 = arith.constant 0 : index
    %15 = vector.load %arg9[%c0_17, %c0_18, %c0_19, %c0_20] : memref<10x10x10x128xbf16, #tpu.memory_space<vmem>>, vector<10x10x10x128xbf16>
    %cst_21 = arith.constant 0.000000e+00 : f32
    %16 = vector.broadcast %cst_21 : f32 to vector<512x128xf32>
    %17 = vector.extract_strided_slice %15 {offsets = [0, 0, 0, 0], sizes = [8, 8, 8, 128], strides = [1, 1, 1, 1]} : vector<10x10x10x128xbf16> to vector<8x8x8x128xbf16>
    %18 = vector.shape_cast %17 : vector<8x8x8x128xbf16> to vector<512x128xbf16>
    %19 = vector.extract_strided_slice %15 {offsets = [0, 0, 1, 0], sizes = [8, 8, 8, 128], strides = [1, 1, 1, 1]} : vector<10x10x10x128xbf16> to vector<8x8x8x128xbf16>
    %20 = vector.shape_cast %19 : vector<8x8x8x128xbf16> to vector<512x128xbf16>
    %21 = vector.extract_strided_slice %15 {offsets = [0, 0, 2, 0], sizes = [8, 8, 8, 128], strides = [1, 1, 1, 1]} : vector<10x10x10x128xbf16> to vector<8x8x8x128xbf16>
    %22 = vector.shape_cast %21 : vector<8x8x8x128xbf16> to vector<512x128xbf16>
    %23 = tpu.concatenate %18, %20, %22 in 1 : vector<512x128xbf16>, vector<512x128xbf16>, vector<512x128xbf16> -> vector<512x384xbf16>
    %c0_22 = arith.constant 0 : index
    %c0_23 = arith.constant 0 : index
    %c0_24 = arith.constant 0 : index
    %24 = vector.load %arg4[%c0_22, %c0_23, %c0_24] : memref<9x384x128xbf16, #tpu.memory_space<vmem>>, vector<1x384x128xbf16>
    %25 = vector.shape_cast %24 : vector<1x384x128xbf16> to vector<384x128xbf16>
    %cst_25 = arith.constant dense<0.000000e+00> : vector<512x128xf32>
    %26 = tpu.matmul %23, %25, %cst_25 {dimension_numbers = #tpu.dot_dimension_numbers<[1], [0], [0], [1], [0, 0, 1, 1], [], []>} : vector<512x384xbf16>, vector<384x128xbf16>, vector<512x128xf32> -> vector<512x128xf32>
    %27 = arith.addf %16, %26 : vector<512x128xf32>
    %28 = vector.extract_strided_slice %15 {offsets = [0, 1, 0, 0], sizes = [8, 8, 8, 128], strides = [1, 1, 1, 1]} : vector<10x10x10x128xbf16> to vector<8x8x8x128xbf16>
    %29 = vector.shape_cast %28 : vector<8x8x8x128xbf16> to vector<512x128xbf16>
    %30 = vector.extract_strided_slice %15 {offsets = [0, 1, 1, 0], sizes = [8, 8, 8, 128], strides = [1, 1, 1, 1]} : vector<10x10x10x128xbf16> to vector<8x8x8x128xbf16>
    %31 = vector.shape_cast %30 : vector<8x8x8x128xbf16> to vector<512x128xbf16>
    %32 = vector.extract_strided_slice %15 {offsets = [0, 1, 2, 0], sizes = [8, 8, 8, 128], strides = [1, 1, 1, 1]} : vector<10x10x10x128xbf16> to vector<8x8x8x128xbf16>
    %33 = vector.shape_cast %32 : vector<8x8x8x128xbf16> to vector<512x128xbf16>
    %34 = tpu.concatenate %29, %31, %33 in 1 : vector<512x128xbf16>, vector<512x128xbf16>, vector<512x128xbf16> -> vector<512x384xbf16>
    %c1_26 = arith.constant 1 : index
    %c0_27 = arith.constant 0 : index
    %c0_28 = arith.constant 0 : index
    %35 = vector.load %arg4[%c1_26, %c0_27, %c0_28] : memref<9x384x128xbf16, #tpu.memory_space<vmem>>, vector<1x384x128xbf16>
    %36 = vector.shape_cast %35 : vector<1x384x128xbf16> to vector<384x128xbf16>
    %cst_29 = arith.constant dense<0.000000e+00> : vector<512x128xf32>
    %37 = tpu.matmul %34, %36, %cst_29 {dimension_numbers = #tpu.dot_dimension_numbers<[1], [0], [0], [1], [0, 0, 1, 1], [], []>} : vector<512x384xbf16>, vector<384x128xbf16>, vector<512x128xf32> -> vector<512x128xf32>
    %38 = arith.addf %27, %37 : vector<512x128xf32>
    %39 = vector.extract_strided_slice %15 {offsets = [0, 2, 0, 0], sizes = [8, 8, 8, 128], strides = [1, 1, 1, 1]} : vector<10x10x10x128xbf16> to vector<8x8x8x128xbf16>
    %40 = vector.shape_cast %39 : vector<8x8x8x128xbf16> to vector<512x128xbf16>
    %41 = vector.extract_strided_slice %15 {offsets = [0, 2, 1, 0], sizes = [8, 8, 8, 128], strides = [1, 1, 1, 1]} : vector<10x10x10x128xbf16> to vector<8x8x8x128xbf16>
    %42 = vector.shape_cast %41 : vector<8x8x8x128xbf16> to vector<512x128xbf16>
    %43 = vector.extract_strided_slice %15 {offsets = [0, 2, 2, 0], sizes = [8, 8, 8, 128], strides = [1, 1, 1, 1]} : vector<10x10x10x128xbf16> to vector<8x8x8x128xbf16>
    %44 = vector.shape_cast %43 : vector<8x8x8x128xbf16> to vector<512x128xbf16>
    %45 = tpu.concatenate %40, %42, %44 in 1 : vector<512x128xbf16>, vector<512x128xbf16>, vector<512x128xbf16> -> vector<512x384xbf16>
    %c2 = arith.constant 2 : index
    %c0_30 = arith.constant 0 : index
    %c0_31 = arith.constant 0 : index
    %46 = vector.load %arg4[%c2, %c0_30, %c0_31] : memref<9x384x128xbf16, #tpu.memory_space<vmem>>, vector<1x384x128xbf16>
    %47 = vector.shape_cast %46 : vector<1x384x128xbf16> to vector<384x128xbf16>
    %cst_32 = arith.constant dense<0.000000e+00> : vector<512x128xf32>
    %48 = tpu.matmul %45, %47, %cst_32 {dimension_numbers = #tpu.dot_dimension_numbers<[1], [0], [0], [1], [0, 0, 1, 1], [], []>} : vector<512x384xbf16>, vector<384x128xbf16>, vector<512x128xf32> -> vector<512x128xf32>
    %49 = arith.addf %38, %48 : vector<512x128xf32>
    %50 = vector.extract_strided_slice %15 {offsets = [1, 0, 0, 0], sizes = [8, 8, 8, 128], strides = [1, 1, 1, 1]} : vector<10x10x10x128xbf16> to vector<8x8x8x128xbf16>
    %51 = vector.shape_cast %50 : vector<8x8x8x128xbf16> to vector<512x128xbf16>
    %52 = vector.extract_strided_slice %15 {offsets = [1, 0, 1, 0], sizes = [8, 8, 8, 128], strides = [1, 1, 1, 1]} : vector<10x10x10x128xbf16> to vector<8x8x8x128xbf16>
    %53 = vector.shape_cast %52 : vector<8x8x8x128xbf16> to vector<512x128xbf16>
    %54 = vector.extract_strided_slice %15 {offsets = [1, 0, 2, 0], sizes = [8, 8, 8, 128], strides = [1, 1, 1, 1]} : vector<10x10x10x128xbf16> to vector<8x8x8x128xbf16>
    %55 = vector.shape_cast %54 : vector<8x8x8x128xbf16> to vector<512x128xbf16>
    %56 = tpu.concatenate %51, %53, %55 in 1 : vector<512x128xbf16>, vector<512x128xbf16>, vector<512x128xbf16> -> vector<512x384xbf16>
    %c3 = arith.constant 3 : index
    %c0_33 = arith.constant 0 : index
    %c0_34 = arith.constant 0 : index
    %57 = vector.load %arg4[%c3, %c0_33, %c0_34] : memref<9x384x128xbf16, #tpu.memory_space<vmem>>, vector<1x384x128xbf16>
    %58 = vector.shape_cast %57 : vector<1x384x128xbf16> to vector<384x128xbf16>
    %cst_35 = arith.constant dense<0.000000e+00> : vector<512x128xf32>
    %59 = tpu.matmul %56, %58, %cst_35 {dimension_numbers = #tpu.dot_dimension_numbers<[1], [0], [0], [1], [0, 0, 1, 1], [], []>} : vector<512x384xbf16>, vector<384x128xbf16>, vector<512x128xf32> -> vector<512x128xf32>
    %60 = arith.addf %49, %59 : vector<512x128xf32>
    %61 = vector.extract_strided_slice %15 {offsets = [1, 1, 0, 0], sizes = [8, 8, 8, 128], strides = [1, 1, 1, 1]} : vector<10x10x10x128xbf16> to vector<8x8x8x128xbf16>
    %62 = vector.shape_cast %61 : vector<8x8x8x128xbf16> to vector<512x128xbf16>
    %63 = vector.extract_strided_slice %15 {offsets = [1, 1, 1, 0], sizes = [8, 8, 8, 128], strides = [1, 1, 1, 1]} : vector<10x10x10x128xbf16> to vector<8x8x8x128xbf16>
    %64 = vector.shape_cast %63 : vector<8x8x8x128xbf16> to vector<512x128xbf16>
    %65 = vector.extract_strided_slice %15 {offsets = [1, 1, 2, 0], sizes = [8, 8, 8, 128], strides = [1, 1, 1, 1]} : vector<10x10x10x128xbf16> to vector<8x8x8x128xbf16>
    %66 = vector.shape_cast %65 : vector<8x8x8x128xbf16> to vector<512x128xbf16>
    %67 = tpu.concatenate %62, %64, %66 in 1 : vector<512x128xbf16>, vector<512x128xbf16>, vector<512x128xbf16> -> vector<512x384xbf16>
    %c4 = arith.constant 4 : index
    %c0_36 = arith.constant 0 : index
    %c0_37 = arith.constant 0 : index
    %68 = vector.load %arg4[%c4, %c0_36, %c0_37] : memref<9x384x128xbf16, #tpu.memory_space<vmem>>, vector<1x384x128xbf16>
    %69 = vector.shape_cast %68 : vector<1x384x128xbf16> to vector<384x128xbf16>
    %cst_38 = arith.constant dense<0.000000e+00> : vector<512x128xf32>
    %70 = tpu.matmul %67, %69, %cst_38 {dimension_numbers = #tpu.dot_dimension_numbers<[1], [0], [0], [1], [0, 0, 1, 1], [], []>} : vector<512x384xbf16>, vector<384x128xbf16>, vector<512x128xf32> -> vector<512x128xf32>
    %71 = arith.addf %60, %70 : vector<512x128xf32>
    %72 = vector.extract_strided_slice %15 {offsets = [1, 2, 0, 0], sizes = [8, 8, 8, 128], strides = [1, 1, 1, 1]} : vector<10x10x10x128xbf16> to vector<8x8x8x128xbf16>
    %73 = vector.shape_cast %72 : vector<8x8x8x128xbf16> to vector<512x128xbf16>
    %74 = vector.extract_strided_slice %15 {offsets = [1, 2, 1, 0], sizes = [8, 8, 8, 128], strides = [1, 1, 1, 1]} : vector<10x10x10x128xbf16> to vector<8x8x8x128xbf16>
    %75 = vector.shape_cast %74 : vector<8x8x8x128xbf16> to vector<512x128xbf16>
    %76 = vector.extract_strided_slice %15 {offsets = [1, 2, 2, 0], sizes = [8, 8, 8, 128], strides = [1, 1, 1, 1]} : vector<10x10x10x128xbf16> to vector<8x8x8x128xbf16>
    %77 = vector.shape_cast %76 : vector<8x8x8x128xbf16> to vector<512x128xbf16>
    %78 = tpu.concatenate %73, %75, %77 in 1 : vector<512x128xbf16>, vector<512x128xbf16>, vector<512x128xbf16> -> vector<512x384xbf16>
    %c5 = arith.constant 5 : index
    %c0_39 = arith.constant 0 : index
    %c0_40 = arith.constant 0 : index
    %79 = vector.load %arg4[%c5, %c0_39, %c0_40] : memref<9x384x128xbf16, #tpu.memory_space<vmem>>, vector<1x384x128xbf16>
    %80 = vector.shape_cast %79 : vector<1x384x128xbf16> to vector<384x128xbf16>
    %cst_41 = arith.constant dense<0.000000e+00> : vector<512x128xf32>
    %81 = tpu.matmul %78, %80, %cst_41 {dimension_numbers = #tpu.dot_dimension_numbers<[1], [0], [0], [1], [0, 0, 1, 1], [], []>} : vector<512x384xbf16>, vector<384x128xbf16>, vector<512x128xf32> -> vector<512x128xf32>
    %82 = arith.addf %71, %81 : vector<512x128xf32>
    %83 = vector.extract_strided_slice %15 {offsets = [2, 0, 0, 0], sizes = [8, 8, 8, 128], strides = [1, 1, 1, 1]} : vector<10x10x10x128xbf16> to vector<8x8x8x128xbf16>
    %84 = vector.shape_cast %83 : vector<8x8x8x128xbf16> to vector<512x128xbf16>
    %85 = vector.extract_strided_slice %15 {offsets = [2, 0, 1, 0], sizes = [8, 8, 8, 128], strides = [1, 1, 1, 1]} : vector<10x10x10x128xbf16> to vector<8x8x8x128xbf16>
    %86 = vector.shape_cast %85 : vector<8x8x8x128xbf16> to vector<512x128xbf16>
    %87 = vector.extract_strided_slice %15 {offsets = [2, 0, 2, 0], sizes = [8, 8, 8, 128], strides = [1, 1, 1, 1]} : vector<10x10x10x128xbf16> to vector<8x8x8x128xbf16>
    %88 = vector.shape_cast %87 : vector<8x8x8x128xbf16> to vector<512x128xbf16>
    %89 = tpu.concatenate %84, %86, %88 in 1 : vector<512x128xbf16>, vector<512x128xbf16>, vector<512x128xbf16> -> vector<512x384xbf16>
    %c6 = arith.constant 6 : index
    %c0_42 = arith.constant 0 : index
    %c0_43 = arith.constant 0 : index
    %90 = vector.load %arg4[%c6, %c0_42, %c0_43] : memref<9x384x128xbf16, #tpu.memory_space<vmem>>, vector<1x384x128xbf16>
    %91 = vector.shape_cast %90 : vector<1x384x128xbf16> to vector<384x128xbf16>
    %cst_44 = arith.constant dense<0.000000e+00> : vector<512x128xf32>
    %92 = tpu.matmul %89, %91, %cst_44 {dimension_numbers = #tpu.dot_dimension_numbers<[1], [0], [0], [1], [0, 0, 1, 1], [], []>} : vector<512x384xbf16>, vector<384x128xbf16>, vector<512x128xf32> -> vector<512x128xf32>
    %93 = arith.addf %82, %92 : vector<512x128xf32>
    %94 = vector.extract_strided_slice %15 {offsets = [2, 1, 0, 0], sizes = [8, 8, 8, 128], strides = [1, 1, 1, 1]} : vector<10x10x10x128xbf16> to vector<8x8x8x128xbf16>
    %95 = vector.shape_cast %94 : vector<8x8x8x128xbf16> to vector<512x128xbf16>
    %96 = vector.extract_strided_slice %15 {offsets = [2, 1, 1, 0], sizes = [8, 8, 8, 128], strides = [1, 1, 1, 1]} : vector<10x10x10x128xbf16> to vector<8x8x8x128xbf16>
    %97 = vector.shape_cast %96 : vector<8x8x8x128xbf16> to vector<512x128xbf16>
    %98 = vector.extract_strided_slice %15 {offsets = [2, 1, 2, 0], sizes = [8, 8, 8, 128], strides = [1, 1, 1, 1]} : vector<10x10x10x128xbf16> to vector<8x8x8x128xbf16>
    %99 = vector.shape_cast %98 : vector<8x8x8x128xbf16> to vector<512x128xbf16>
    %100 = tpu.concatenate %95, %97, %99 in 1 : vector<512x128xbf16>, vector<512x128xbf16>, vector<512x128xbf16> -> vector<512x384xbf16>
    %c7 = arith.constant 7 : index
    %c0_45 = arith.constant 0 : index
    %c0_46 = arith.constant 0 : index
    %101 = vector.load %arg4[%c7, %c0_45, %c0_46] : memref<9x384x128xbf16, #tpu.memory_space<vmem>>, vector<1x384x128xbf16>
    %102 = vector.shape_cast %101 : vector<1x384x128xbf16> to vector<384x128xbf16>
    %cst_47 = arith.constant dense<0.000000e+00> : vector<512x128xf32>
    %103 = tpu.matmul %100, %102, %cst_47 {dimension_numbers = #tpu.dot_dimension_numbers<[1], [0], [0], [1], [0, 0, 1, 1], [], []>} : vector<512x384xbf16>, vector<384x128xbf16>, vector<512x128xf32> -> vector<512x128xf32>
    %104 = arith.addf %93, %103 : vector<512x128xf32>
    %105 = vector.extract_strided_slice %15 {offsets = [2, 2, 0, 0], sizes = [8, 8, 8, 128], strides = [1, 1, 1, 1]} : vector<10x10x10x128xbf16> to vector<8x8x8x128xbf16>
    %106 = vector.shape_cast %105 : vector<8x8x8x128xbf16> to vector<512x128xbf16>
    %107 = vector.extract_strided_slice %15 {offsets = [2, 2, 1, 0], sizes = [8, 8, 8, 128], strides = [1, 1, 1, 1]} : vector<10x10x10x128xbf16> to vector<8x8x8x128xbf16>
    %108 = vector.shape_cast %107 : vector<8x8x8x128xbf16> to vector<512x128xbf16>
    %109 = vector.extract_strided_slice %15 {offsets = [2, 2, 2, 0], sizes = [8, 8, 8, 128], strides = [1, 1, 1, 1]} : vector<10x10x10x128xbf16> to vector<8x8x8x128xbf16>
    %110 = vector.shape_cast %109 : vector<8x8x8x128xbf16> to vector<512x128xbf16>
    %111 = tpu.concatenate %106, %108, %110 in 1 : vector<512x128xbf16>, vector<512x128xbf16>, vector<512x128xbf16> -> vector<512x384xbf16>
    %c8 = arith.constant 8 : index
    %c0_48 = arith.constant 0 : index
    %c0_49 = arith.constant 0 : index
    %112 = vector.load %arg4[%c8, %c0_48, %c0_49] : memref<9x384x128xbf16, #tpu.memory_space<vmem>>, vector<1x384x128xbf16>
    %113 = vector.shape_cast %112 : vector<1x384x128xbf16> to vector<384x128xbf16>
    %cst_50 = arith.constant dense<0.000000e+00> : vector<512x128xf32>
    %114 = tpu.matmul %111, %113, %cst_50 {dimension_numbers = #tpu.dot_dimension_numbers<[1], [0], [0], [1], [0, 0, 1, 1], [], []>} : vector<512x384xbf16>, vector<384x128xbf16>, vector<512x128xf32> -> vector<512x128xf32>
    %115 = arith.addf %104, %114 : vector<512x128xf32>
    %c0_51 = arith.constant 0 : index
    %c0_52 = arith.constant 0 : index
    %116 = vector.load %arg5[%c0_51, %c0_52] : memref<1x128xf32, #tpu.memory_space<vmem>>, vector<1x128xf32>
    %117 = vector.broadcast %116 : vector<1x128xf32> to vector<512x128xf32>
    %118 = arith.addf %115, %117 : vector<512x128xf32>
    %cst_53 = arith.constant 0.000000e+00 : f32
    %119 = vector.broadcast %cst_53 : f32 to vector<512x128xf32>
    %120 = arith.maximumf %118, %119 : vector<512x128xf32>
    %121 = arith.truncf %120 : vector<512x128xf32> to vector<512x128xbf16>
    %c0_54 = arith.constant 0 : index
    %c0_55 = arith.constant 0 : index
    %122 = vector.load %arg6[%c0_54, %c0_55] : memref<128x128xbf16, #tpu.memory_space<vmem>>, vector<128x128xbf16>
    %cst_56 = arith.constant dense<0.000000e+00> : vector<512x128xf32>
    %123 = tpu.matmul %121, %122, %cst_56 {dimension_numbers = #tpu.dot_dimension_numbers<[1], [0], [0], [1], [0, 0, 1, 1], [], []>} : vector<512x128xbf16>, vector<128x128xbf16>, vector<512x128xf32> -> vector<512x128xf32>
    %c0_57 = arith.constant 0 : index
    %c0_58 = arith.constant 0 : index
    %124 = vector.load %arg7[%c0_57, %c0_58] : memref<1x128xf32, #tpu.memory_space<vmem>>, vector<1x128xf32>
    %125 = vector.broadcast %124 : vector<1x128xf32> to vector<512x128xf32>
    %126 = arith.addf %123, %125 : vector<512x128xf32>
    %127 = arith.extf %2 : vector<512x128xbf16> to vector<512x128xf32>
    %128 = arith.addf %126, %127 : vector<512x128xf32>
    %cst_59 = arith.constant 0.000000e+00 : f32
    %129 = vector.broadcast %cst_59 : f32 to vector<512x128xf32>
    %130 = arith.maximumf %128, %129 : vector<512x128xf32>
    %131 = vector.shape_cast %130 : vector<512x128xf32> to vector<8x8x8x128xf32>
    %c0_60 = arith.constant 0 : index
    %c0_61 = arith.constant 0 : index
    %c0_62 = arith.constant 0 : index
    %c0_63 = arith.constant 0 : index
    %c0_64 = arith.constant 0 : index
    %132 = vector.load %arg8[%c0_60, %c0_61, %c0_62, %c0_63, %c0_64] : memref<1x8x8x8x128xf32, #tpu.memory_space<vmem>>, vector<1x8x8x8x128xf32>
    %133 = vector.shape_cast %132 : vector<1x8x8x8x128xf32> to vector<8x8x8x128xf32>
    %134 = vector.shape_cast %131 : vector<8x8x8x128xf32> to vector<1x8x8x8x128xf32>
    tpu.vector_store %arg8[%c0_60, %c0_61, %c0_62, %c0_63, %c0_64], %134 {strides = array<i32>} : memref<1x8x8x8x128xf32, #tpu.memory_space<vmem>>, vector<1x8x8x8x128xf32>,
    return
  }
  func.func @transform_0(%arg0: i32) -> (i32, i32, i32, i32, i32) {
    %c0_i32 = arith.constant 0 : i32
    %c0_i32_0 = arith.constant 0 : i32
    %c0_i32_1 = arith.constant 0 : i32
    %c0_i32_2 = arith.constant 0 : i32
    %c0_i32_3 = arith.constant 0 : i32
    return %arg0, %c0_i32, %c0_i32_0, %c0_i32_1, %c0_i32_2 : i32, i32, i32, i32, i32
  }
  func.func @transform_1(%arg0: i32) -> (i32, i32) {
    %c0_i32 = arith.constant 0 : i32
    %c0_i32_0 = arith.constant 0 : i32
    %c0_i32_1 = arith.constant 0 : i32
    return %c0_i32, %c0_i32_0 : i32, i32
  }
  func.func @transform_2(%arg0: i32) -> (i32, i32) {
    %c0_i32 = arith.constant 0 : i32
    %c0_i32_0 = arith.constant 0 : i32
    %c0_i32_1 = arith.constant 0 : i32
    return %c0_i32, %c0_i32_0 : i32, i32
  }
  func.func @transform_3(%arg0: i32) -> (i32, i32, i32) {
    %c0_i32 = arith.constant 0 : i32
    %c0_i32_0 = arith.constant 0 : i32
    %c0_i32_1 = arith.constant 0 : i32
    %c0_i32_2 = arith.constant 0 : i32
    return %c0_i32, %c0_i32_0, %c0_i32_1 : i32, i32, i32
  }
  func.func @transform_4(%arg0: i32) -> (i32, i32) {
    %c0_i32 = arith.constant 0 : i32
    %c0_i32_0 = arith.constant 0 : i32
    %c0_i32_1 = arith.constant 0 : i32
    return %c0_i32, %c0_i32_0 : i32, i32
  }
  func.func @transform_5(%arg0: i32) -> (i32, i32) {
    %c0_i32 = arith.constant 0 : i32
    %c0_i32_0 = arith.constant 0 : i32
    %c0_i32_1 = arith.constant 0 : i32
    return %c0_i32, %c0_i32_0 : i32, i32
  }
  func.func @transform_6(%arg0: i32) -> (i32, i32) {
    %c0_i32 = arith.constant 0 : i32
    %c0_i32_0 = arith.constant 0 : i32
    %c0_i32_1 = arith.constant 0 : i32
    return %c0_i32, %c0_i32_0 : i32, i32
  }
  func.func @transform_7(%arg0: i32) -> (i32, i32, i32, i32, i32) {
    %c0_i32 = arith.constant 0 : i32
    %c0_i32_0 = arith.constant 0 : i32
    %c0_i32_1 = arith.constant 0 : i32
    %c0_i32_2 = arith.constant 0 : i32
    %c0_i32_3 = arith.constant 0 : i32
    return %arg0, %c0_i32, %c0_i32_0, %c0_i32_1, %c0_i32_2 : i32, i32, i32, i32, i32
  }
}

</mosaic_0001>

<llo_original>
// kernel: tpu_custom_call.1
$region0: #{tpu_custom_call.1}
  #allocation0 [shape = 'u32[]', space=smem, size = 0x4, offset = 0x4, fixed_abs, tag = 'smem constant byte address 0x4 - core index']
  #allocation1 [shape = 'u32[72,128]{1,0:T(1,128)}', space=vmem, size = 0x9000, scoped, tag = 'internal scratch']
  #allocation2 [shape = 'bf16[10,10,10,128]{3,2,1,0:T(8,128)(2,1)}', space=vmem, size = 0x64000, scoped, tag = 'scratch operand']
  %s0 = inlined_call_operand.hbm [shape: bf16[2,8,8,8,128], index: 0, kind: input, shape index: {}]
  %s1 = inlined_call_operand.hbm [shape: bf16[128,128], index: 1, kind: input, shape index: {}]
  %s2 = inlined_call_operand.vmem [shape: f32[1,128], index: 2, kind: input, shape index: {}]
  %s3 = inlined_call_operand.hbm [shape: bf16[9,384,128], index: 3, kind: input, shape index: {}]
  %s4 = inlined_call_operand.vmem [shape: f32[1,128], index: 4, kind: input, shape index: {}]
  %s5 = inlined_call_operand.hbm [shape: bf16[128,128], index: 5, kind: input, shape index: {}]
  %s6 = inlined_call_operand.vmem [shape: f32[1,128], index: 6, kind: input, shape index: {}]
  %s7 = inlined_call_operand.hbm [shape: f32[2,8,8,8,128], index: 7, kind: output, shape index: {}]
  %s8 = sld [smem:[#allocation0]]
  $region77: #{tpu_custom_call.1} parent=0
    _
  %s10 = ssub.s32 1, %s8
  %s11 = scalar_select 0, %s10, %s8
  $region1: #{tpu_custom_call.1} parent=0
    #allocation3 [shape = 'u8[262144]{0}', space=vmem, size = 0x40000, scoped, tag = 'input window, operand 0']
    #allocation4 [shape = 's32[2]{0}', space=sflag, size = 0x8, scoped, tag = 'scoped memory for tpu_custom_call.1']
    #allocation5 [shape = 's32[2]{0}', space=sflag, size = 0x8, scoped, tag = 'scoped memory for tpu_custom_call.1']
    #allocation6 [shape = 'u8[32768]{0}', space=vmem, size = 0x8000, scoped, tag = 'input window, operand 1, single buffered']
    #allocation7 [shape = 's32[1]{0}', space=sflag, size = 0x4, scoped, tag = 'scoped memory for tpu_custom_call.1']
    #allocation8 [shape = 'u8[884736]{0}', space=vmem, size = 0xd8000, scoped, tag = 'input window, operand 3, single buffered']
    #allocation9 [shape = 'u8[32768]{0}', space=vmem, size = 0x8000, scoped, tag = 'input window, operand 5, single buffered']
    #allocation10 [shape = 's32[1]{0}', space=sflag, size = 0x4, scoped, tag = 'scoped memory for tpu_custom_call.1']
    #allocation11 [shape = 'u8[524288]{0}', space=vmem, size = 0x80000, scoped, tag = 'output window, operand 0']
    %12 = vsyncpa [#allocation4], 0
    %s13 = scalar_lea.sflag [#allocation4], 1
    %14 = vsyncpa %s13, 0
    %15 = vsyncpa [#allocation7], 0
    %16 = vsyncpa [#allocation10], 0
    %17 = vsyncpa [#allocation5], 0
    %s18 = scalar_lea.sflag [#allocation5], 1
    %19 = vsyncpa %s18, 0
    loop: start=0, step=1, limit=4
    $region2: #{tpu_custom_call.1} parent=1 // loop_pre_header
      _
    $region3: #{tpu_custom_call.1} parent=1 // loop_header
      %s21 = sphi 0, %s25
      %p22 = scmp.ge.s32.totalorder %s21, 4
      %s31 = sphi 0, %s33
      %s34 = sphi 0, %s31
      %s35 = sphi 0, %s34
      %s51 = sphi 0, %s35
      %s55 = sphi 0, %s55
      %s57 = sphi 0, %s55
      %s58 = sphi 0, %s57
      %s72 = sphi 0, %s58
      %s76 = sphi 0, %s76
      %s78 = sphi 0, %s76
      %s79 = sphi 0, %s78
      %s93 = sphi 0, %s79
      %s97 = sphi 0, %s97
      %s99 = sphi 0, %s97
      %s100 = sphi 0, %s99
      %s114 = sphi 0, %s100
      %s118 = sphi 0, %s118
      %s120 = sphi 0, %s118
      %s121 = sphi 0, %s120
      %s135 = sphi 0, %s121
      %s139 = sphi 0, %s139
      %s141 = sphi 0, %s139
      %s142 = sphi 0, %s141
      %s156 = sphi 0, %s142
      %s160 = sphi 0, %s160
      %s162 = sphi 0, %s160
      %s163 = sphi 0, %s162
      %s177 = sphi 0, %s163
      %s183 = sphi 0, %s185
      %s186 = sphi 0, %s183
      %s187 = sphi 0, %s186
      %s203 = sphi 0, %s187
    $region4: #{tpu_custom_call.1} parent=1 // loop_header_branch
      %24 = sbr.rel (%p22) target = $region8
    $region5: #{tpu_custom_call.1} parent=1 // loop_body
      %s26 = ssub.s32 %s21, 1
      %s27 = ssub.s32 %s21, 2
      %s28 = sadd.s32 %s21, 1
      %s29 = ssub.s32 %s21, %s28
      %p30 = scmp.eq.s32.totalorder %s29, 0
      %s32 = sadd.s32 %s31, 1
      %s33 = scalar_select %p30, %s31, %s32
      %p36 = pneg %p30
      %p37 = scmp.eq.s32.totalorder %s21, 1
      %p38 = por %p36, %p37
      %p39 = scmp.ne.s32.totalorder %s31, %s34
      %p40 = scmp.eq.s32.totalorder %s21, 0
      %p41 = por %p39, %p40
      %p42 = scmp.ne.s32.totalorder %s31, %s34
      %p43 = scmp.eq.s32.totalorder %s26, 1
      %p44 = por %p42, %p43
      %p45 = scmp.ne.s32.totalorder %s34, %s35
      %p46 = scmp.eq.s32.totalorder %s26, 0
      %p47 = por %p45, %p46
      %p48 = scmp.ne.s32.totalorder %s34, %s35
      %p49 = scmp.eq.s32.totalorder %s27, 1
      %p50 = por %p48, %p49
      %p52 = scmp.ne.s32.totalorder %s35, %s51
      %p53 = scmp.eq.s32.totalorder %s27, 0
      %p54 = por %p52, %p53
      %s56 = sadd.s32 %s55, 1
      %p59 = scmp.eq.s32.totalorder %s21, 1
      %p60 = scmp.ne.s32.totalorder %s55, %s57
      %p61 = scmp.eq.s32.totalorder %s21, 0
      %p62 = por %p60, %p61
      %p63 = scmp.ne.s32.totalorder %s55, %s57
      %p64 = scmp.eq.s32.totalorder %s26, 1
      %p65 = por %p63, %p64
      %p66 = scmp.ne.s32.totalorder %s57, %s58
      %p67 = scmp.eq.s32.totalorder %s26, 0
      %p68 = por %p66, %p67
      %p69 = scmp.ne.s32.totalorder %s57, %s58
      %p70 = scmp.eq.s32.totalorder %s27, 1
      %p71 = por %p69, %p70
      %p73 = scmp.ne.s32.totalorder %s58, %s72
      %p74 = scmp.eq.s32.totalorder %s27, 0
      %p75 = por %p73, %p74
      %s77 = sadd.s32 %s76, 1
      %p80 = scmp.eq.s32.totalorder %s21, 1
      %p81 = scmp.ne.s32.totalorder %s76, %s78
      %p82 = scmp.eq.s32.totalorder %s21, 0
      %p83 = por %p81, %p82
      %p84 = scmp.ne.s32.totalorder %s76, %s78
      %p85 = scmp.eq.s32.totalorder %s26, 1
      %p86 = por %p84, %p85
      %p87 = scmp.ne.s32.totalorder %s78, %s79
      %p88 = scmp.eq.s32.totalorder %s26, 0
      %p89 = por %p87, %p88
      %p90 = scmp.ne.s32.totalorder %s78, %s79
      %p91 = scmp.eq.s32.totalorder %s27, 1
      %p92 = por %p90, %p91
      %p94 = scmp.ne.s32.totalorder %s79, %s93
      %p95 = scmp.eq.s32.totalorder %s27, 0
      %p96 = por %p94, %p95
      %s98 = sadd.s32 %s97, 1
      %p101 = scmp.eq.s32.totalorder %s21, 1
      %p102 = scmp.ne.s32.totalorder %s97, %s99
      %p103 = scmp.eq.s32.totalorder %s21, 0
      %p104 = por %p102, %p103
      %p105 = scmp.ne.s32.totalorder %s97, %s99
      %p106 = scmp.eq.s32.totalorder %s26, 1
      %p107 = por %p105, %p106
      %p108 = scmp.ne.s32.totalorder %s99, %s100
      %p109 = scmp.eq.s32.totalorder %s26, 0
      %p110 = por %p108, %p109
      %p111 = scmp.ne.s32.totalorder %s99, %s100
      %p112 = scmp.eq.s32.totalorder %s27, 1
      %p113 = por %p111, %p112
      %p115 = scmp.ne.s32.totalorder %s100, %s114
      %p116 = scmp.eq.s32.totalorder %s27, 0
      %p117 = por %p115, %p116
      %s119 = sadd.s32 %s118, 1
      %p122 = scmp.eq.s32.totalorder %s21, 1
      %p123 = scmp.ne.s32.totalorder %s118, %s120
      %p124 = scmp.eq.s32.totalorder %s21, 0
      %p125 = por %p123, %p124
      %p126 = scmp.ne.s32.totalorder %s118, %s120
      %p127 = scmp.eq.s32.totalorder %s26, 1
      %p128 = por %p126, %p127
      %p129 = scmp.ne.s32.totalorder %s120, %s121
      %p130 = scmp.eq.s32.totalorder %s26, 0
      %p131 = por %p129, %p130
      %p132 = scmp.ne.s32.totalorder %s120, %s121
      %p133 = scmp.eq.s32.totalorder %s27, 1
      %p134 = por %p132, %p133
      %p136 = scmp.ne.s32.totalorder %s121, %s135
      %p137 = scmp.eq.s32.totalorder %s27, 0
      %p138 = por %p136, %p137
      %s140 = sadd.s32 %s139, 1
      %p143 = scmp.eq.s32.totalorder %s21, 1
      %p144 = scmp.ne.s32.totalorder %s139, %s141
      %p145 = scmp.eq.s32.totalorder %s21, 0
      %p146 = por %p144, %p145
      %p147 = scmp.ne.s32.totalorder %s139, %s141
      %p148 = scmp.eq.s32.totalorder %s26, 1
      %p149 = por %p147, %p148
      %p150 = scmp.ne.s32.totalorder %s141, %s142
      %p151 = scmp.eq.s32.totalorder %s26, 0
      %p152 = por %p150, %p151
      %p153 = scmp.ne.s32.totalorder %s141, %s142
      %p154 = scmp.eq.s32.totalorder %s27, 1
      %p155 = por %p153, %p154
      %p157 = scmp.ne.s32.totalorder %s142, %s156
      %p158 = scmp.eq.s32.totalorder %s27, 0
      %p159 = por %p157, %p158
      %s161 = sadd.s32 %s160, 1
      %p164 = scmp.eq.s32.totalorder %s21, 1
      %p165 = scmp.ne.s32.totalorder %s160, %s162
      %p166 = scmp.eq.s32.totalorder %s21, 0
      %p167 = por %p165, %p166
      %p168 = scmp.ne.s32.totalorder %s160, %s162
      %p169 = scmp.eq.s32.totalorder %s26, 1
      %p170 = por %p168, %p169
      %p171 = scmp.ne.s32.totalorder %s162, %s163
      %p172 = scmp.eq.s32.totalorder %s26, 0
      %p173 = por %p171, %p172
      %p174 = scmp.ne.s32.totalorder %s162, %s163
      %p175 = scmp.eq.s32.totalorder %s27, 1
      %p176 = por %p174, %p175
      %p178 = scmp.ne.s32.totalorder %s163, %s177
      %p179 = scmp.eq.s32.totalorder %s27, 0
      %p180 = por %p178, %p179
      %s181 = ssub.s32 %s21, %s28
      %p182 = scmp.eq.s32.totalorder %s181, 0
      %s184 = sadd.s32 %s183, 1
      %s185 = scalar_select %p182, %s183, %s184
      %p188 = pneg %p182
      %p189 = scmp.eq.s32.totalorder %s21, 1
      %p190 = por %p188, %p189
      %p191 = scmp.ne.s32.totalorder %s183, %s186
      %p192 = scmp.eq.s32.totalorder %s21, 0
      %p193 = por %p191, %p192
      %p194 = scmp.ne.s32.totalorder %s183, %s186
      %p195 = scmp.eq.s32.totalorder %s26, 1
      %p196 = por %p194, %p195
      %p197 = scmp.ne.s32.totalorder %s186, %s187
      %p198 = scmp.eq.s32.totalorder %s26, 0
      %p199 = por %p197, %p198
      %p200 = scmp.ne.s32.totalorder %s186, %s187
      %p201 = scmp.eq.s32.totalorder %s27, 1
      %p202 = por %p200, %p201
      %p204 = scmp.ne.s32.totalorder %s187, %s203
      %p205 = scmp.eq.s32.totalorder %s27, 0
      %p206 = por %p204, %p205
      %p207 = scmp.le.s32.totalorder 1, %s21
      %p208 = scmp.lt.s32.totalorder %s21, 3
      %p209 = pnand %p207, %p208
      %p210 = pneg %p209
      // Predicated region
      $region9: #{tpu_custom_call.1} parent=5 // pred_check
        _
      $region10: #{tpu_custom_call.1} parent=5 // pred_check_branch
        %212 = sbr.rel (%p209) target = $region12
      $region11: #{tpu_custom_call.1} parent=5 // pred_region
        %s213 = ssub.s32 %s21, 1
        // Predicated region
        $region13: #{tpu_custom_call.1} parent=11 // pred_check
          %p214 = pneg %p68
        $region14: #{tpu_custom_call.1} parent=11 // pred_check_branch
          %216 = sbr.rel (%p214) target = $region16
        $region15: #{tpu_custom_call.1} parent=11 // pred_region
          %218 = vsyncadd [#allocation7], 0
          %s219 = sshll.u32 %s1, 4
          %s220 = int_to_ptr.hbm [resolvable:$true] %s219
          %s221 = sshll.u32 [#allocation6], 4
          %s222 = int_to_ptr.vmem [resolvable:$true] %s221
          %227 = dma.hbm_to_vmem [thread:$0]  %s220, 1024, %s222, [#allocation7], 64, 64, 4
        $region16: #{tpu_custom_call.1} parent=11 // pred_fallthru
          _
        // Predicated region
        $region17: #{tpu_custom_call.1} parent=11 // pred_check
          %p228 = pneg %p89
        $region18: #{tpu_custom_call.1} parent=11 // pred_check_branch
          %230 = sbr.rel (%p228) target = $region20
        $region19: #{tpu_custom_call.1} parent=11 // pred_region
          _
        $region20: #{tpu_custom_call.1} parent=11 // pred_fallthru
          _
        // Predicated region
        $region21: #{tpu_custom_call.1} parent=11 // pred_check
          %p231 = pneg %p110
        $region22: #{tpu_custom_call.1} parent=11 // pred_check_branch
          %233 = sbr.rel (%p231) target = $region24
        $region23: #{tpu_custom_call.1} parent=11 // pred_region
          %235 = vsyncadd [#allocation7], 0
          %s236 = sshll.u32 %s3, 4
          %s237 = int_to_ptr.hbm [resolvable:$true] %s236
          %s238 = sshll.u32 [#allocation8], 4
          %s239 = int_to_ptr.vmem [resolvable:$true] %s238
          %244 = dma.hbm_to_vmem [thread:$0]  %s237, 27648, %s239, [#allocation7], 64, 64, 4
        $region24: #{tpu_custom_call.1} parent=11 // pred_fallthru
          _
        // Predicated region
        $region25: #{tpu_custom_call.1} parent=11 // pred_check
          %p245 = pneg %p131
        $region26: #{tpu_custom_call.1} parent=11 // pred_check_branch
          %247 = sbr.rel (%p245) target = $region28
        $region27: #{tpu_custom_call.1} parent=11 // pred_region
          _
        $region28: #{tpu_custom_call.1} parent=11 // pred_fallthru
          _
        // Predicated region
        $region29: #{tpu_custom_call.1} parent=11 // pred_check
          %p248 = pneg %p152
        $region30: #{tpu_custom_call.1} parent=11 // pred_check_branch
          %250 = sbr.rel (%p248) target = $region32
        $region31: #{tpu_custom_call.1} parent=11 // pred_region
          %252 = vsyncadd [#allocation10], 0
          %s253 = sshll.u32 %s5, 4
          %s254 = int_to_ptr.hbm [resolvable:$true] %s253
          %s255 = sshll.u32 [#allocation9], 4
          %s256 = int_to_ptr.vmem [resolvable:$true] %s255
          %261 = dma.hbm_to_vmem [thread:$0]  %s254, 1024, %s256, [#allocation10], 64, 64, 4
        $region32: #{tpu_custom_call.1} parent=11 // pred_fallthru
          _
        // Predicated region
        $region33: #{tpu_custom_call.1} parent=11 // pred_check
          %p262 = pneg %p173
        $region34: #{tpu_custom_call.1} parent=11 // pred_check_branch
          %264 = sbr.rel (%p262) target = $region36
        $region35: #{tpu_custom_call.1} parent=11 // pred_region
          _
        $region36: #{tpu_custom_call.1} parent=11 // pred_fallthru
          _
      $region12: #{tpu_custom_call.1} parent=5 // pred_fallthru
        _
      %p265 = scmp.lt.s32.totalorder %s21, 2
      // Predicated region
      $region37: #{tpu_custom_call.1} parent=5 // pred_check
        %p266 = pneg %p265
      $region38: #{tpu_custom_call.1} parent=5 // pred_check_branch
        %268 = sbr.rel (%p266) target = $region40
      $region39: #{tpu_custom_call.1} parent=5 // pred_region
        // Predicated region
        $region41: #{tpu_custom_call.1} parent=39 // pred_check
          %p269 = pneg %p41
        $region42: #{tpu_custom_call.1} parent=39 // pred_check_branch
          %271 = sbr.rel (%p269) target = $region44
        $region43: #{tpu_custom_call.1} parent=39 // pred_region
          %s272 = sand.u32 %s31, 1
          %s273 = scalar_lea.sflag [#allocation4], %s272
          %s274 = sand.u32 %s31, 1
          %s275 = smul.addr %s274, 256
          %s276 = scalar_lea.vmem [#allocation3], %s275
          %278 = vsyncadd %s273, 0
          %s279 = smul.addr %s21, 64
          %s280 = smul.addr %s279, 4
          %s281 = scalar_lea.hbm %s0, %s280
          %s282 = sshll.u32 %s281, 4
          %s283 = int_to_ptr.hbm [resolvable:$true] %s282
          %s284 = sshll.u32 %s276, 4
          %s285 = int_to_ptr.vmem [resolvable:$true] %s284
          %290 = dma.hbm_to_vmem [thread:$0]  %s283, 4096, %s285, %s273, 64, 64, 4
        $region44: #{tpu_custom_call.1} parent=39 // pred_fallthru
          _
      $region40: #{tpu_custom_call.1} parent=5 // pred_fallthru
        _
      %p291 = scmp.le.s32.totalorder 1, %s21
      %p292 = scmp.lt.s32.totalorder %s21, 3
      %p293 = pnand %p291, %p292
      %p294 = pneg %p293
      // Predicated region
      $region45: #{tpu_custom_call.1} parent=5 // pred_check
        _
      $region46: #{tpu_custom_call.1} parent=5 // pred_check_branch
        %296 = sbr.rel (%p293) target = $region48
      $region47: #{tpu_custom_call.1} parent=5 // pred_region
        %s297 = ssub.s32 %s21, 1
        %s298 = sand.u32 %s34, 1
        %s299 = scalar_lea.sflag [#allocation4], %s298
        %s300 = sand.u32 %s34, 1
        %s301 = smul.addr %s300, 256
        %s302 = scalar_lea.vmem [#allocation3], %s301
        // Predicated region
        $region49: #{tpu_custom_call.1} parent=47 // pred_check
          %p303 = pneg %p47
        $region50: #{tpu_custom_call.1} parent=47 // pred_check_branch
          %305 = sbr.rel (%p303) target = $region52
        $region51: #{tpu_custom_call.1} parent=47 // pred_region
          %307 = dma.done %s299, 4096
        $region52: #{tpu_custom_call.1} parent=47 // pred_fallthru
          _
        // Predicated region
        $region53: #{tpu_custom_call.1} parent=47 // pred_check
          %p308 = pneg %p68
        $region54: #{tpu_custom_call.1} parent=47 // pred_check_branch
          %310 = sbr.rel (%p308) target = $region56
        $region55: #{tpu_custom_call.1} parent=47 // pred_region
          %312 = dma.done [#allocation7], 1024
        $region56: #{tpu_custom_call.1} parent=47 // pred_fallthru
          _
        // Predicated region
        $region57: #{tpu_custom_call.1} parent=47 // pred_check
          %p313 = pneg %p110
        $region58: #{tpu_custom_call.1} parent=47 // pred_check_branch
          %315 = sbr.rel (%p313) target = $region60
        $region59: #{tpu_custom_call.1} parent=47 // pred_region
          %317 = dma.done [#allocation7], 27648
        $region60: #{tpu_custom_call.1} parent=47 // pred_fallthru
          _
        // Predicated region
        $region61: #{tpu_custom_call.1} parent=47 // pred_check
          %p318 = pneg %p152
        $region62: #{tpu_custom_call.1} parent=47 // pred_check_branch
          %320 = sbr.rel (%p318) target = $region64
        $region63: #{tpu_custom_call.1} parent=47 // pred_region
          %322 = dma.done [#allocation10], 1024
        $region64: #{tpu_custom_call.1} parent=47 // pred_fallthru
          _
        %s323 = sand.u32 %s34, 1
        %s324 = scalar_lea.sflag [#allocation4], %s323
        %s325 = sand.u32 %s34, 1
        %s326 = smul.addr %s325, 256
        %s327 = scalar_lea.vmem [#allocation3], %s326
        %p328 = pneg %p47
        %p329 = pneg %p44
        %p330 = pneg %p68
        %p331 = pneg %p65
        %p332 = pneg %p89
        %p333 = pneg %p86
        %p334 = pneg %p110
        %p335 = pneg %p107
        %p336 = pneg %p131
        %p337 = pneg %p128
        %p338 = pneg %p152
        %p339 = pneg %p149
        %p340 = pneg %p173
        %p341 = pneg %p170
        %p342 = pneg %p199
        %p343 = pneg %p196
        %s344 = sand.u32 %s186, 1
        %s345 = scalar_lea.sflag [#allocation5], %s344
        %s346 = sand.u32 %s186, 1
        %s347 = smul.addr %s346, 512
        %s348 = scalar_lea.vmem [#allocation11], %s347
        %v350 = vld [vmem:[%s302] sm:$0xf]
        %v351 = vld [vmem:[%s302 + $0x4] sm:$0xf]
        %v352 = vld [vmem:[%s302 + $0x8] sm:$0xf]
        %v353 = vld [vmem:[%s302 + $0xc] sm:$0xf]
        %v354 = vld [vmem:[%s302 + $0x10] sm:$0xf]
        %v355 = vld [vmem:[%s302 + $0x14] sm:$0xf]
        %v356 = vld [vmem:[%s302 + $0x18] sm:$0xf]
        %v357 = vld [vmem:[%s302 + $0x1c] sm:$0xf]
        %v358 = vld [vmem:[%s302 + $0x20] sm:$0xf]
        %v359 = vld [vmem:[%s302 + $0x24] sm:$0xf]
        %v360 = vld [vmem:[%s302 + $0x28] sm:$0xf]
        %v361 = vld [vmem:[%s302 + $0x2c] sm:$0xf]
        %v362 = vld [vmem:[%s302 + $0x30] sm:$0xf]
        %v363 = vld [vmem:[%s302 + $0x34] sm:$0xf]
        %v364 = vld [vmem:[%s302 + $0x38] sm:$0xf]
        %v365 = vld [vmem:[%s302 + $0x3c] sm:$0xf]
        %v366 = vld [vmem:[%s302 + $0x40] sm:$0xf]
        %v367 = vld [vmem:[%s302 + $0x44] sm:$0xf]
        %v368 = vld [vmem:[%s302 + $0x48] sm:$0xf]
        %v369 = vld [vmem:[%s302 + $0x4c] sm:$0xf]
        %v370 = vld [vmem:[%s302 + $0x50] sm:$0xf]
        %v371 = vld [vmem:[%s302 + $0x54] sm:$0xf]
        %v372 = vld [vmem:[%s302 + $0x58] sm:$0xf]
        %v373 = vld [vmem:[%s302 + $0x5c] sm:$0xf]
        %v374 = vld [vmem:[%s302 + $0x60] sm:$0xf]
        %v375 = vld [vmem:[%s302 + $0x64] sm:$0xf]
        %v376 = vld [vmem:[%s302 + $0x68] sm:$0xf]
        %v377 = vld [vmem:[%s302 + $0x6c] sm:$0xf]
        %v378 = vld [vmem:[%s302 + $0x70] sm:$0xf]
        %v379 = vld [vmem:[%s302 + $0x74] sm:$0xf]
        %v380 = vld [vmem:[%s302 + $0x78] sm:$0xf]
        %v381 = vld [vmem:[%s302 + $0x7c] sm:$0xf]
        %v382 = vld [vmem:[%s302 + $0x80] sm:$0xf]
        %v383 = vld [vmem:[%s302 + $0x84] sm:$0xf]
        %v384 = vld [vmem:[%s302 + $0x88] sm:$0xf]
        %v385 = vld [vmem:[%s302 + $0x8c] sm:$0xf]
        %v386 = vld [vmem:[%s302 + $0x90] sm:$0xf]
        %v387 = vld [vmem:[%s302 + $0x94] sm:$0xf]
        %v388 = vld [vmem:[%s302 + $0x98] sm:$0xf]
        %v389 = vld [vmem:[%s302 + $0x9c] sm:$0xf]
        %v390 = vld [vmem:[%s302 + $0xa0] sm:$0xf]
        %v391 = vld [vmem:[%s302 + $0xa4] sm:$0xf]
        %v392 = vld [vmem:[%s302 + $0xa8] sm:$0xf]
        %v393 = vld [vmem:[%s302 + $0xac] sm:$0xf]
        %v394 = vld [vmem:[%s302 + $0xb0] sm:$0xf]
        %v395 = vld [vmem:[%s302 + $0xb4] sm:$0xf]
        %v396 = vld [vmem:[%s302 + $0xb8] sm:$0xf]
        %v397 = vld [vmem:[%s302 + $0xbc] sm:$0xf]
        %v398 = vld [vmem:[%s302 + $0xc0] sm:$0xf]
        %v399 = vld [vmem:[%s302 + $0xc4] sm:$0xf]
        %v400 = vld [vmem:[%s302 + $0xc8] sm:$0xf]
        %v401 = vld [vmem:[%s302 + $0xcc] sm:$0xf]
        %v402 = vld [vmem:[%s302 + $0xd0] sm:$0xf]
        %v403 = vld [vmem:[%s302 + $0xd4] sm:$0xf]
        %v404 = vld [vmem:[%s302 + $0xd8] sm:$0xf]
        %v405 = vld [vmem:[%s302 + $0xdc] sm:$0xf]
        %v406 = vld [vmem:[%s302 + $0xe0] sm:$0xf]
        %v407 = vld [vmem:[%s302 + $0xe4] sm:$0xf]
        %v408 = vld [vmem:[%s302 + $0xe8] sm:$0xf]
        %v409 = vld [vmem:[%s302 + $0xec] sm:$0xf]
        %v410 = vld [vmem:[%s302 + $0xf0] sm:$0xf]
        %v411 = vld [vmem:[%s302 + $0xf4] sm:$0xf]
        %v412 = vld [vmem:[%s302 + $0xf8] sm:$0xf]
        %v413 = vld [vmem:[%s302 + $0xfc] sm:$0xf]
        %v414 = vld [vmem:[#allocation6] sm:$0xf]
        %v415 = vld [vmem:[#allocation6 + $0x4] sm:$0xf]
        %v416 = vld [vmem:[#allocation6 + $0x8] sm:$0xf]
        %v417 = vld [vmem:[#allocation6 + $0xc] sm:$0xf]
        %v418 = vld [vmem:[#allocation6 + $0x10] sm:$0xf]
        %v419 = vld [vmem:[#allocation6 + $0x14] sm:$0xf]
        %v420 = vld [vmem:[#allocation6 + $0x18] sm:$0xf]
        %v421 = vld [vmem:[#allocation6 + $0x1c] sm:$0xf]
        %v422 = vld [vmem:[#allocation6 + $0x20] sm:$0xf]
        %v423 = vld [vmem:[#allocation6 + $0x24] sm:$0xf]
        %v424 = vld [vmem:[#allocation6 + $0x28] sm:$0xf]
        %v425 = vld [vmem:[#allocation6 + $0x2c] sm:$0xf]
        %v426 = vld [vmem:[#allocation6 + $0x30] sm:$0xf]
        %v427 = vld [vmem:[#allocation6 + $0x34] sm:$0xf]
        %v428 = vld [vmem:[#allocation6 + $0x38] sm:$0xf]
        %v429 = vld [vmem:[#allocation6 + $0x3c] sm:$0xf]
        %v430 = vld [vmem:[%s2] sm:$0x1]
        %v432 = vperm.slane %v430, 0
        %v498 = vunpack.c.l.b16 %v350
        %v499 = vunpack.c.l.b16 %v351
        %v500 = vunpack.c.l.b16 %v352
        %v501 = vunpack.c.l.b16 %v353
        %v502 = vunpack.c.l.b16 %v354
        %v503 = vunpack.c.l.b16 %v355
        %v504 = vunpack.c.l.b16 %v356
        %v505 = vunpack.c.l.b16 %v357
        %v506 = vunpack.c.l.b16 %v358
        %v507 = vunpack.c.l.b16 %v359
        %v508 = vunpack.c.l.b16 %v360
        %v509 = vunpack.c.l.b16 %v361
        %v510 = vunpack.c.l.b16 %v362
        %v511 = vunpack.c.l.b16 %v363
        %v512 = vunpack.c.l.b16 %v364
        %v513 = vunpack.c.l.b16 %v365
        %v514 = vunpack.c.l.b16 %v366
        %v515 = vunpack.c.l.b16 %v367
        %v516 = vunpack.c.l.b16 %v368
        %v517 = vunpack.c.l.b16 %v369
        %v518 = vunpack.c.l.b16 %v370
        %v519 = vunpack.c.l.b16 %v371
        %v520 = vunpack.c.l.b16 %v372
        %v521 = vunpack.c.l.b16 %v373
        %v522 = vunpack.c.l.b16 %v374
        %v523 = vunpack.c.l.b16 %v375
        %v524 = vunpack.c.l.b16 %v376
        %v525 = vunpack.c.l.b16 %v377
        %v526 = vunpack.c.l.b16 %v378
        %v527 = vunpack.c.l.b16 %v379
        %v528 = vunpack.c.l.b16 %v380
        %v529 = vunpack.c.l.b16 %v381
        %v530 = vunpack.c.l.b16 %v382
        %v531 = vunpack.c.l.b16 %v383
        %v532 = vunpack.c.l.b16 %v384
        %v533 = vunpack.c.l.b16 %v385
        %v534 = vunpack.c.l.b16 %v386
        %v535 = vunpack.c.l.b16 %v387
        %v536 = vunpack.c.l.b16 %v388
        %v537 = vunpack.c.l.b16 %v389
        %v538 = vunpack.c.l.b16 %v390
        %v539 = vunpack.c.l.b16 %v391
        %v540 = vunpack.c.l.b16 %v392
        %v541 = vunpack.c.l.b16 %v393
        %v542 = vunpack.c.l.b16 %v394
        %v543 = vunpack.c.l.b16 %v395
        %v544 = vunpack.c.l.b16 %v396
        %v545 = vunpack.c.l.b16 %v397
        %v546 = vunpack.c.l.b16 %v398
        %v547 = vunpack.c.l.b16 %v399
        %v548 = vunpack.c.l.b16 %v400
        %v549 = vunpack.c.l.b16 %v401
        %v550 = vunpack.c.l.b16 %v402
        %v551 = vunpack.c.l.b16 %v403
        %v552 = vunpack.c.l.b16 %v404
        %v553 = vunpack.c.l.b16 %v405
        %v554 = vunpack.c.l.b16 %v406
        %v555 = vunpack.c.l.b16 %v407
        %v556 = vunpack.c.l.b16 %v408
        %v557 = vunpack.c.l.b16 %v409
        %v558 = vunpack.c.l.b16 %v410
        %v559 = vunpack.c.l.b16 %v411
        %v560 = vunpack.c.l.b16 %v412
        %v561 = vunpack.c.l.b16 %v413
        %v562 = vpack.c.b16 %v499, %v498
        %v563 = vpack.c.b16 %v501, %v500
        %v564 = vpack.c.b16 %v503, %v502
        %v565 = vpack.c.b16 %v505, %v504
        %v566 = vpack.c.b16 %v507, %v506
        %v567 = vpack.c.b16 %v509, %v508
        %v568 = vpack.c.b16 %v511, %v510
        %v569 = vpack.c.b16 %v513, %v512
        %v570 = vpack.c.b16 %v515, %v514
        %v571 = vpack.c.b16 %v517, %v516
        %v572 = vpack.c.b16 %v519, %v518
        %v573 = vpack.c.b16 %v521, %v520
        %v574 = vpack.c.b16 %v523, %v522
        %v575 = vpack.c.b16 %v525, %v524
        %v576 = vpack.c.b16 %v527, %v526
        %v577 = vpack.c.b16 %v529, %v528
        %v578 = vpack.c.b16 %v531, %v530
        %v579 = vpack.c.b16 %v533, %v532
        %v580 = vpack.c.b16 %v535, %v534
        %v581 = vpack.c.b16 %v537, %v536
        %v582 = vpack.c.b16 %v539, %v538
        %v583 = vpack.c.b16 %v541, %v540
        %v584 = vpack.c.b16 %v543, %v542
        %v585 = vpack.c.b16 %v545, %v544
        %v586 = vpack.c.b16 %v547, %v546
        %v587 = vpack.c.b16 %v549, %v548
        %v588 = vpack.c.b16 %v551, %v550
        %v589 = vpack.c.b16 %v553, %v552
        %v590 = vpack.c.b16 %v555, %v554
        %v591 = vpack.c.b16 %v557, %v556
        %v592 = vpack.c.b16 %v559, %v558
        %v593 = vpack.c.b16 %v561, %v560
        %v642 = vunpack.c.l.b16 %v414
        %v643 = vunpack.c.l.b16 %v415
        %v644 = vunpack.c.l.b16 %v416
        %v645 = vunpack.c.l.b16 %v417
        %v646 = vunpack.c.l.b16 %v418
        %v647 = vunpack.c.l.b16 %v419
        %v648 = vunpack.c.l.b16 %v420
        %v649 = vunpack.c.l.b16 %v421
        %v650 = vunpack.c.l.b16 %v422
        %v651 = vunpack.c.l.b16 %v423
        %v652 = vunpack.c.l.b16 %v424
        %v653 = vunpack.c.l.b16 %v425
        %v654 = vunpack.c.l.b16 %v426
        %v655 = vunpack.c.l.b16 %v427
        %v656 = vunpack.c.l.b16 %v428
        %v657 = vunpack.c.l.b16 %v429
        %v658 = vpack.c.b16 %v643, %v642
        %v659 = vpack.c.b16 %v645, %v644
        %v660 = vpack.c.b16 %v647, %v646
        %v661 = vpack.c.b16 %v649, %v648
        %v662 = vpack.c.b16 %v651, %v650
        %v663 = vpack.c.b16 %v653, %v652
        %v664 = vpack.c.b16 %v655, %v654
        %v665 = vpack.c.b16 %v657, %v656
        %674 = vmatpush.bf16.msra.mxu0 %v665
        %675 = vmatpush.bf16.msra.mxu0 %v664
        %676 = vmatpush.bf16.msra.mxu0 %v663
        %677 = vmatpush.bf16.msra.mxu0 %v662
        %678 = vmatpush.bf16.msra.mxu0 %v661
        %679 = vmatpush.bf16.msra.mxu0 %v660
        %680 = vmatpush.bf16.msra.mxu0 %v659
        %681 = vmatpush.bf16.msra.mxu0 %v658
        %682 = vmatmul.bf16.gmra.mxu0 %v562
        %v683 = vpop.f32.mrf.mxu0
        %v684 = vadd.f32 %v432, %v683
        %v685 = vpop.f32.mrf.mxu0
        %v686 = vadd.f32 %v432, %v685
        %687 = vmatmul.bf16.gmra.mxu0 %v563
        %v688 = vpop.f32.mrf.mxu0
        %v689 = vadd.f32 %v432, %v688
        %v690 = vpop.f32.mrf.mxu0
        %v691 = vadd.f32 %v432, %v690
        %692 = vmatmul.bf16.gmra.mxu0 %v564
        %v693 = vpop.f32.mrf.mxu0
        %v694 = vadd.f32 %v432, %v693
        %v695 = vpop.f32.mrf.mxu0
        %v696 = vadd.f32 %v432, %v695
        %697 = vmatmul.bf16.gmra.mxu0 %v565
        %v698 = vpop.f32.mrf.mxu0
        %v699 = vadd.f32 %v432, %v698
        %v700 = vpop.f32.mrf.mxu0
        %v701 = vadd.f32 %v432, %v700
        %702 = vmatmul.bf16.gmra.mxu0 %v566
        %v703 = vpop.f32.mrf.mxu0
        %v704 = vadd.f32 %v432, %v703
        %v705 = vpop.f32.mrf.mxu0
        %v706 = vadd.f32 %v432, %v705
        %707 = vmatmul.bf16.gmra.mxu0 %v567
        %v708 = vpop.f32.mrf.mxu0
        %v709 = vadd.f32 %v432, %v708
        %v710 = vpop.f32.mrf.mxu0
        %v711 = vadd.f32 %v432, %v710
        %712 = vmatmul.bf16.gmra.mxu0 %v568
        %v713 = vpop.f32.mrf.mxu0
        %v714 = vadd.f32 %v432, %v713
        %v715 = vpop.f32.mrf.mxu0
        %v716 = vadd.f32 %v432, %v715
        %717 = vmatmul.bf16.gmra.mxu0 %v569
        %v718 = vpop.f32.mrf.mxu0
        %v719 = vadd.f32 %v432, %v718
        %v720 = vpop.f32.mrf.mxu0
        %v721 = vadd.f32 %v432, %v720
        %722 = vmatmul.bf16.gmra.mxu0 %v570
        %v723 = vpop.f32.mrf.mxu0
        %v724 = vadd.f32 %v432, %v723
        %v725 = vpop.f32.mrf.mxu0
        %v726 = vadd.f32 %v432, %v725
        %727 = vmatmul.bf16.gmra.mxu0 %v571
        %v728 = vpop.f32.mrf.mxu0
        %v729 = vadd.f32 %v432, %v728
        %v730 = vpop.f32.mrf.mxu0
        %v731 = vadd.f32 %v432, %v730
        %732 = vmatmul.bf16.gmra.mxu0 %v572
        %v733 = vpop.f32.mrf.mxu0
        %v734 = vadd.f32 %v432, %v733
        %v735 = vpop.f32.mrf.mxu0
        %v736 = vadd.f32 %v432, %v735
        %737 = vmatmul.bf16.gmra.mxu0 %v573
        %v738 = vpop.f32.mrf.mxu0
        %v739 = vadd.f32 %v432, %v738
        %v740 = vpop.f32.mrf.mxu0
        %v741 = vadd.f32 %v432, %v740
        %742 = vmatmul.bf16.gmra.mxu0 %v574
        %v743 = vpop.f32.mrf.mxu0
        %v744 = vadd.f32 %v432, %v743
        %v745 = vpop.f32.mrf.mxu0
        %v746 = vadd.f32 %v432, %v745
        %747 = vmatmul.bf16.gmra.mxu0 %v575
        %v748 = vpop.f32.mrf.mxu0
        %v749 = vadd.f32 %v432, %v748
        %v750 = vpop.f32.mrf.mxu0
        %v751 = vadd.f32 %v432, %v750
        %752 = vmatmul.bf16.gmra.mxu0 %v576
        %v753 = vpop.f32.mrf.mxu0
        %v754 = vadd.f32 %v432, %v753
        %v755 = vpop.f32.mrf.mxu0
        %v756 = vadd.f32 %v432, %v755
        %757 = vmatmul.bf16.gmra.mxu0 %v577
        %v758 = vpop.f32.mrf.mxu0
        %v759 = vadd.f32 %v432, %v758
        %v760 = vpop.f32.mrf.mxu0
        %v761 = vadd.f32 %v432, %v760
        %762 = vmatmul.bf16.gmra.mxu0 %v578
        %v763 = vpop.f32.mrf.mxu0
        %v764 = vadd.f32 %v432, %v763
        %v765 = vpop.f32.mrf.mxu0
        %v766 = vadd.f32 %v432, %v765
        %767 = vmatmul.bf16.gmra.mxu0 %v579
        %v768 = vpop.f32.mrf.mxu0
        %v769 = vadd.f32 %v432, %v768
        %v770 = vpop.f32.mrf.mxu0
        %v771 = vadd.f32 %v432, %v770
        %772 = vmatmul.bf16.gmra.mxu0 %v580
        %v773 = vpop.f32.mrf.mxu0
        %v774 = vadd.f32 %v432, %v773
        %v775 = vpop.f32.mrf.mxu0
        %v776 = vadd.f32 %v432, %v775
        %777 = vmatmul.bf16.gmra.mxu0 %v581
        %v778 = vpop.f32.mrf.mxu0
        %v779 = vadd.f32 %v432, %v778
        %v780 = vpop.f32.mrf.mxu0
        %v781 = vadd.f32 %v432, %v780
        %782 = vmatmul.bf16.gmra.mxu0 %v582
        %v783 = vpop.f32.mrf.mxu0
        %v784 = vadd.f32 %v432, %v783
        %v785 = vpop.f32.mrf.mxu0
        %v786 = vadd.f32 %v432, %v785
        %787 = vmatmul.bf16.gmra.mxu0 %v583
        %v788 = vpop.f32.mrf.mxu0
        %v789 = vadd.f32 %v432, %v788
        %v790 = vpop.f32.mrf.mxu0
        %v791 = vadd.f32 %v432, %v790
        %792 = vmatmul.bf16.gmra.mxu0 %v584
        %v793 = vpop.f32.mrf.mxu0
        %v794 = vadd.f32 %v432, %v793
        %v795 = vpop.f32.mrf.mxu0
        %v796 = vadd.f32 %v432, %v795
        %797 = vmatmul.bf16.gmra.mxu0 %v585
        %v798 = vpop.f32.mrf.mxu0
        %v799 = vadd.f32 %v432, %v798
        %v800 = vpop.f32.mrf.mxu0
        %v801 = vadd.f32 %v432, %v800
        %802 = vmatmul.bf16.gmra.mxu0 %v586
        %v803 = vpop.f32.mrf.mxu0
        %v804 = vadd.f32 %v432, %v803
        %v805 = vpop.f32.mrf.mxu0
        %v806 = vadd.f32 %v432, %v805
        %807 = vmatmul.bf16.gmra.mxu0 %v587
        %v808 = vpop.f32.mrf.mxu0
        %v809 = vadd.f32 %v432, %v808
        %v810 = vpop.f32.mrf.mxu0
        %v811 = vadd.f32 %v432, %v810
        %812 = vmatmul.bf16.gmra.mxu0 %v588
        %v813 = vpop.f32.mrf.mxu0
        %v814 = vadd.f32 %v432, %v813
        %v815 = vpop.f32.mrf.mxu0
        %v816 = vadd.f32 %v432, %v815
        %817 = vmatmul.bf16.gmra.mxu0 %v589
        %v818 = vpop.f32.mrf.mxu0
        %v819 = vadd.f32 %v432, %v818
        %v820 = vpop.f32.mrf.mxu0
        %v821 = vadd.f32 %v432, %v820
        %822 = vmatmul.bf16.gmra.mxu0 %v590
        %v823 = vpop.f32.mrf.mxu0
        %v824 = vadd.f32 %v432, %v823
        %v825 = vpop.f32.mrf.mxu0
        %v826 = vadd.f32 %v432, %v825
        %827 = vmatmul.bf16.gmra.mxu0 %v591
        %v828 = vpop.f32.mrf.mxu0
        %v829 = vadd.f32 %v432, %v828
        %v830 = vpop.f32.mrf.mxu0
        %v831 = vadd.f32 %v432, %v830
        %832 = vmatmul.bf16.gmra.mxu0 %v592
        %v833 = vpop.f32.mrf.mxu0
        %v834 = vadd.f32 %v432, %v833
        %v835 = vpop.f32.mrf.mxu0
        %v836 = vadd.f32 %v432, %v835
        %837 = vmatmul.bf16.gmra.mxu0 %v593
        %v838 = vpop.f32.mrf.mxu0
        %v839 = vadd.f32 %v432, %v838
        %v840 = vpop.f32.mrf.mxu0
        %v841 = vadd.f32 %v432, %v840
        %842 = vdwg.mxu0
        %v843 = vmax.f32 %v684, 0.0
        %v844 = vmax.f32 %v686, 0.0
        %v845 = vmax.f32 %v689, 0.0
        %v846 = vmax.f32 %v691, 0.0
        %v847 = vmax.f32 %v694, 0.0
        %v848 = vmax.f32 %v696, 0.0
        %v849 = vmax.f32 %v699, 0.0
        %v850 = vmax.f32 %v701, 0.0
        %v851 = vmax.f32 %v704, 0.0
        %v852 = vmax.f32 %v706, 0.0
        %v853 = vmax.f32 %v709, 0.0
        %v854 = vmax.f32 %v711, 0.0
        %v855 = vmax.f32 %v714, 0.0
        %v856 = vmax.f32 %v716, 0.0
        %v857 = vmax.f32 %v719, 0.0
        %v858 = vmax.f32 %v721, 0.0
        %v859 = vmax.f32 %v724, 0.0
        %v860 = vmax.f32 %v726, 0.0
        %v861 = vmax.f32 %v729, 0.0
        %v862 = vmax.f32 %v731, 0.0
        %v863 = vmax.f32 %v734, 0.0
        %v864 = vmax.f32 %v736, 0.0
        %v865 = vmax.f32 %v739, 0.0
        %v866 = vmax.f32 %v741, 0.0
        %v867 = vmax.f32 %v744, 0.0
        %v868 = vmax.f32 %v746, 0.0
        %v869 = vmax.f32 %v749, 0.0
        %v870 = vmax.f32 %v751, 0.0
        %v871 = vmax.f32 %v754, 0.0
        %v872 = vmax.f32 %v756, 0.0
        %v873 = vmax.f32 %v759, 0.0
        %v874 = vmax.f32 %v761, 0.0
        %v875 = vmax.f32 %v764, 0.0
        %v876 = vmax.f32 %v766, 0.0
        %v877 = vmax.f32 %v769, 0.0
        %v878 = vmax.f32 %v771, 0.0
        %v879 = vmax.f32 %v774, 0.0
        %v880 = vmax.f32 %v776, 0.0
        %v881 = vmax.f32 %v779, 0.0
        %v882 = vmax.f32 %v781, 0.0
        %v883 = vmax.f32 %v784, 0.0
        %v884 = vmax.f32 %v786, 0.0
        %v885 = vmax.f32 %v789, 0.0
        %v886 = vmax.f32 %v791, 0.0
        %v887 = vmax.f32 %v794, 0.0
        %v888 = vmax.f32 %v796, 0.0
        %v889 = vmax.f32 %v799, 0.0
        %v890 = vmax.f32 %v801, 0.0
        %v891 = vmax.f32 %v804, 0.0
        %v892 = vmax.f32 %v806, 0.0
        %v893 = vmax.f32 %v809, 0.0
        %v894 = vmax.f32 %v811, 0.0
        %v895 = vmax.f32 %v814, 0.0
        %v896 = vmax.f32 %v816, 0.0
        %v897 = vmax.f32 %v819, 0.0
        %v898 = vmax.f32 %v821, 0.0
        %v899 = vmax.f32 %v824, 0.0
        %v900 = vmax.f32 %v826, 0.0
        %v901 = vmax.f32 %v829, 0.0
        %v902 = vmax.f32 %v831, 0.0
        %v903 = vmax.f32 %v834, 0.0
        %v904 = vmax.f32 %v836, 0.0
        %v905 = vmax.f32 %v839, 0.0
        %v906 = vmax.f32 %v841, 0.0
        %907 = vst [vmem:[#allocation2] sm:$0xf] 0
        %908 = vst [vmem:[#allocation2 + $0x4] sm:$0x1] 0
        %909 = vst [vmem:[#allocation2 + $0x8] sm:$0xf] 0
        %910 = vst [vmem:[#allocation2 + $0xc] sm:$0x1] 0
        %911 = vst [vmem:[#allocation2 + $0x10] sm:$0xf] 0
        %912 = vst [vmem:[#allocation2 + $0x14] sm:$0x1] 0
        %913 = vst [vmem:[#allocation2 + $0x18] sm:$0xf] 0
        %914 = vst [vmem:[#allocation2 + $0x1c] sm:$0x1] 0
        %915 = vst [vmem:[#allocation2 + $0x20] sm:$0xf] 0
        %916 = vst [vmem:[#allocation2 + $0x24] sm:$0x1] 0
        %917 = vst [vmem:[#allocation2 + $0x28] sm:$0xf] 0
        %918 = vst [vmem:[#allocation2 + $0x2c] sm:$0x1] 0
        %919 = vst [vmem:[#allocation2 + $0x30] sm:$0xf] 0
        %920 = vst [vmem:[#allocation2 + $0x34] sm:$0x1] 0
        %921 = vst [vmem:[#allocation2 + $0x38] sm:$0xf] 0
        %922 = vst [vmem:[#allocation2 + $0x3c] sm:$0x1] 0
        %923 = vst [vmem:[#allocation2 + $0x40] sm:$0xf] 0
        %924 = vst [vmem:[#allocation2 + $0x44] sm:$0x1] 0
        %925 = vst [vmem:[#allocation2 + $0x48] sm:$0xf] 0
        %926 = vst [vmem:[#allocation2 + $0x4c] sm:$0x1] 0
        %927 = vst [vmem:[#allocation2 + $0x50] sm:$0xf] 0
        %928 = vst [vmem:[#allocation2 + $0x54] sm:$0x1] 0
        %929 = vst [vmem:[#allocation2 + $0x58] sm:$0xf] 0
        %930 = vst [vmem:[#allocation2 + $0x5c] sm:$0x1] 0
        %931 = vst [vmem:[#allocation2 + $0x60] sm:$0xf] 0
        %932 = vst [vmem:[#allocation2 + $0x64] sm:$0x1] 0
        %933 = vst [vmem:[#allocation2 + $0x68] sm:$0xf] 0
        %934 = vst [vmem:[#allocation2 + $0x6c] sm:$0x1] 0
        %935 = vst [vmem:[#allocation2 + $0x70] sm:$0xf] 0
        %936 = vst [vmem:[#allocation2 + $0x74] sm:$0x1] 0
        %937 = vst [vmem:[#allocation2 + $0x78] sm:$0xf] 0
        %938 = vst [vmem:[#allocation2 + $0x7c] sm:$0x1] 0
        %939 = vst [vmem:[#allocation2 + $0x80] sm:$0xf] 0
        %940 = vst [vmem:[#allocation2 + $0x84] sm:$0x1] 0
        %941 = vst [vmem:[#allocation2 + $0x88] sm:$0xf] 0
        %942 = vst [vmem:[#allocation2 + $0x8c] sm:$0x1] 0
        %943 = vst [vmem:[#allocation2 + $0x90] sm:$0xf] 0
        %944 = vst [vmem:[#allocation2 + $0x94] sm:$0x1] 0
        %945 = vst [vmem:[#allocation2 + $0x98] sm:$0xf] 0
        %946 = vst [vmem:[#allocation2 + $0x9c] sm:$0x1] 0
        %947 = vst [vmem:[#allocation2 + $0xa0] sm:$0xf] 0
        %948 = vst [vmem:[#allocation2 + $0xa4] sm:$0x1] 0
        %949 = vst [vmem:[#allocation2 + $0xa8] sm:$0xf] 0
        %950 = vst [vmem:[#allocation2 + $0xac] sm:$0x1] 0
        %951 = vst [vmem:[#allocation2 + $0xb0] sm:$0xf] 0
        %952 = vst [vmem:[#allocation2 + $0xb4] sm:$0x1] 0
        %953 = vst [vmem:[#allocation2 + $0xb8] sm:$0xf] 0
        %954 = vst [vmem:[#allocation2 + $0xbc] sm:$0x1] 0
        %955 = vst [vmem:[#allocation2 + $0xc0] sm:$0xf] 0
        %956 = vst [vmem:[#allocation2 + $0xc4] sm:$0x1] 0
        %957 = vst [vmem:[#allocation2 + $0xc8] sm:$0xf] 0
        %958 = vst [vmem:[#allocation2 + $0xcc] sm:$0x1] 0
        %959 = vst [vmem:[#allocation2 + $0xd0] sm:$0xf] 0
        %960 = vst [vmem:[#allocation2 + $0xd4] sm:$0x1] 0
        %961 = vst [vmem:[#allocation2 + $0xd8] sm:$0xf] 0
        %962 = vst [vmem:[#allocation2 + $0xdc] sm:$0x1] 0
        %963 = vst [vmem:[#allocation2 + $0xe0] sm:$0xf] 0
        %964 = vst [vmem:[#allocation2 + $0xe4] sm:$0x1] 0
        %965 = vst [vmem:[#allocation2 + $0xe8] sm:$0xf] 0
        %966 = vst [vmem:[#allocation2 + $0xec] sm:$0x1] 0
        %967 = vst [vmem:[#allocation2 + $0xf0] sm:$0xf] 0
        %968 = vst [vmem:[#allocation2 + $0xf4] sm:$0x1] 0
        %969 = vst [vmem:[#allocation2 + $0xf8] sm:$0xf] 0
        %970 = vst [vmem:[#allocation2 + $0xfc] sm:$0x1] 0
        %971 = vst [vmem:[#allocation2 + $0x100] sm:$0xf] 0
        %972 = vst [vmem:[#allocation2 + $0x104] sm:$0x1] 0
        %973 = vst [vmem:[#allocation2 + $0x108] sm:$0xf] 0
        %974 = vst [vmem:[#allocation2 + $0x10c] sm:$0x1] 0
        %975 = vst [vmem:[#allocation2 + $0x110] sm:$0xf] 0
        %976 = vst [vmem:[#allocation2 + $0x114] sm:$0x1] 0
        %977 = vst [vmem:[#allocation2 + $0x118] sm:$0xf] 0
        %978 = vst [vmem:[#allocation2 + $0x11c] sm:$0x1] 0
        %979 = vst [vmem:[#allocation2 + $0x120] sm:$0xf] 0
        %980 = vst [vmem:[#allocation2 + $0x124] sm:$0x1] 0
        %981 = vst [vmem:[#allocation2 + $0x128] sm:$0xf] 0
        %982 = vst [vmem:[#allocation2 + $0x12c] sm:$0x1] 0
        %983 = vst [vmem:[#allocation2 + $0x130] sm:$0xf] 0
        %984 = vst [vmem:[#allocation2 + $0x134] sm:$0x1] 0
        %985 = vst [vmem:[#allocation2 + $0x138] sm:$0xf] 0
        %986 = vst [vmem:[#allocation2 + $0x13c] sm:$0x1] 0
        %987 = vst [vmem:[#allocation2 + $0x140] sm:$0xf] 0
        %988 = vst [vmem:[#allocation2 + $0x144] sm:$0x1] 0
        %989 = vst [vmem:[#allocation2 + $0x148] sm:$0xf] 0
        %990 = vst [vmem:[#allocation2 + $0x14c] sm:$0x1] 0
        %991 = vst [vmem:[#allocation2 + $0x150] sm:$0xf] 0
        %992 = vst [vmem:[#allocation2 + $0x154] sm:$0x1] 0
        %993 = vst [vmem:[#allocation2 + $0x158] sm:$0xf] 0
        %994 = vst [vmem:[#allocation2 + $0x15c] sm:$0x1] 0
        %995 = vst [vmem:[#allocation2 + $0x160] sm:$0xf] 0
        %996 = vst [vmem:[#allocation2 + $0x164] sm:$0x1] 0
        %997 = vst [vmem:[#allocation2 + $0x168] sm:$0xf] 0
        %998 = vst [vmem:[#allocation2 + $0x16c] sm:$0x1] 0
        %999 = vst [vmem:[#allocation2 + $0x170] sm:$0xf] 0
        %1000 = vst [vmem:[#allocation2 + $0x174] sm:$0x1] 0
        %1001 = vst [vmem:[#allocation2 + $0x178] sm:$0xf] 0
        %1002 = vst [vmem:[#allocation2 + $0x17c] sm:$0x1] 0
        %1003 = vst [vmem:[#allocation2 + $0x180] sm:$0xf] 0
        %1004 = vst [vmem:[#allocation2 + $0x184] sm:$0x1] 0
        %1005 = vst [vmem:[#allocation2 + $0x188] sm:$0xf] 0
        %1006 = vst [vmem:[#allocation2 + $0x18c] sm:$0x1] 0
        %1007 = vst [vmem:[#allocation2 + $0x190] sm:$0xf] 0
        %1008 = vst [vmem:[#allocation2 + $0x194] sm:$0x1] 0
        %1009 = vst [vmem:[#allocation2 + $0x198] sm:$0xf] 0
        %1010 = vst [vmem:[#allocation2 + $0x19c] sm:$0x1] 0
        %1011 = vst [vmem:[#allocation2 + $0x1a0] sm:$0xf] 0
        %1012 = vst [vmem:[#allocation2 + $0x1a4] sm:$0x1] 0
        %1013 = vst [vmem:[#allocation2 + $0x1a8] sm:$0xf] 0
        %1014 = vst [vmem:[#allocation2 + $0x1ac] sm:$0x1] 0
        %1015 = vst [vmem:[#allocation2 + $0x1b0] sm:$0xf] 0
        %1016 = vst [vmem:[#allocation2 + $0x1b4] sm:$0x1] 0
        %1017 = vst [vmem:[#allocation2 + $0x1b8] sm:$0xf] 0
        %1018 = vst [vmem:[#allocation2 + $0x1bc] sm:$0x1] 0
        %1019 = vst [vmem:[#allocation2 + $0x1c0] sm:$0xf] 0
        %1020 = vst [vmem:[#allocation2 + $0x1c4] sm:$0x1] 0
        %1021 = vst [vmem:[#allocation2 + $0x1c8] sm:$0xf] 0
        %1022 = vst [vmem:[#allocation2 + $0x1cc] sm:$0x1] 0
        %1023 = vst [vmem:[#allocation2 + $0x1d0] sm:$0xf] 0
        %1024 = vst [vmem:[#allocation2 + $0x1d4] sm:$0x1] 0
        %1025 = vst [vmem:[#allocation2 + $0x1d8] sm:$0xf] 0
        %1026 = vst [vmem:[#allocation2 + $0x1dc] sm:$0x1] 0
        %1027 = vst [vmem:[#allocation2 + $0x1e0] sm:$0xf] 0
        %1028 = vst [vmem:[#allocation2 + $0x1e4] sm:$0x1] 0
        %1029 = vst [vmem:[#allocation2 + $0x1e8] sm:$0xf] 0
        %1030 = vst [vmem:[#allocation2 + $0x1ec] sm:$0x1] 0
        %1031 = vst [vmem:[#allocation2 + $0x1f0] sm:$0xf] 0
        %1032 = vst [vmem:[#allocation2 + $0x1f4] sm:$0x1] 0
        %1033 = vst [vmem:[#allocation2 + $0x1f8] sm:$0xf] 0
        %1034 = vst [vmem:[#allocation2 + $0x1fc] sm:$0x1] 0
        %1035 = vst [vmem:[#allocation2 + $0x200] sm:$0xf] 0
        %1036 = vst [vmem:[#allocation2 + $0x204] sm:$0x1] 0
        %1037 = vst [vmem:[#allocation2 + $0x208] sm:$0xf] 0
        %1038 = vst [vmem:[#allocation2 + $0x20c] sm:$0x1] 0
        %1039 = vst [vmem:[#allocation2 + $0x210] sm:$0xf] 0
        %1040 = vst [vmem:[#allocation2 + $0x214] sm:$0x1] 0
        %1041 = vst [vmem:[#allocation2 + $0x218] sm:$0xf] 0
        %1042 = vst [vmem:[#allocation2 + $0x21c] sm:$0x1] 0
        %1043 = vst [vmem:[#allocation2 + $0x220] sm:$0xf] 0
        %1044 = vst [vmem:[#allocation2 + $0x224] sm:$0x1] 0
        %1045 = vst [vmem:[#allocation2 + $0x228] sm:$0xf] 0
        %1046 = vst [vmem:[#allocation2 + $0x22c] sm:$0x1] 0
        %1047 = vst [vmem:[#allocation2 + $0x230] sm:$0xf] 0
        %1048 = vst [vmem:[#allocation2 + $0x234] sm:$0x1] 0
        %1049 = vst [vmem:[#allocation2 + $0x238] sm:$0xf] 0
        %1050 = vst [vmem:[#allocation2 + $0x23c] sm:$0x1] 0
        %1051 = vst [vmem:[#allocation2 + $0x240] sm:$0xf] 0
        %1052 = vst [vmem:[#allocation2 + $0x244] sm:$0x1] 0
        %1053 = vst [vmem:[#allocation2 + $0x248] sm:$0xf] 0
        %1054 = vst [vmem:[#allocation2 + $0x24c] sm:$0x1] 0
        %1055 = vst [vmem:[#allocation2 + $0x250] sm:$0xf] 0
        %1056 = vst [vmem:[#allocation2 + $0x254] sm:$0x1] 0
        %1057 = vst [vmem:[#allocation2 + $0x258] sm:$0xf] 0
        %1058 = vst [vmem:[#allocation2 + $0x25c] sm:$0x1] 0
        %1059 = vst [vmem:[#allocation2 + $0x260] sm:$0xf] 0
        %1060 = vst [vmem:[#allocation2 + $0x264] sm:$0x1] 0
        %1061 = vst [vmem:[#allocation2 + $0x268] sm:$0xf] 0
        %1062 = vst [vmem:[#allocation2 + $0x26c] sm:$0x1] 0
        %1063 = vst [vmem:[#allocation2 + $0x270] sm:$0xf] 0
        %1064 = vst [vmem:[#allocation2 + $0x274] sm:$0x1] 0
        %1065 = vst [vmem:[#allocation2 + $0x278] sm:$0xf] 0
        %1066 = vst [vmem:[#allocation2 + $0x27c] sm:$0x1] 0
        %1067 = vst [vmem:[#allocation2 + $0x280] sm:$0xf] 0
        %1068 = vst [vmem:[#allocation2 + $0x284] sm:$0x1] 0
        %1069 = vst [vmem:[#allocation2 + $0x288] sm:$0xf] 0
        %1070 = vst [vmem:[#allocation2 + $0x28c] sm:$0x1] 0
        %1071 = vst [vmem:[#allocation2 + $0x290] sm:$0xf] 0
        %1072 = vst [vmem:[#allocation2 + $0x294] sm:$0x1] 0
        %1073 = vst [vmem:[#allocation2 + $0x298] sm:$0xf] 0
        %1074 = vst [vmem:[#allocation2 + $0x29c] sm:$0x1] 0
        %1075 = vst [vmem:[#allocation2 + $0x2a0] sm:$0xf] 0
        %1076 = vst [vmem:[#allocation2 + $0x2a4] sm:$0x1] 0
        %1077 = vst [vmem:[#allocation2 + $0x2a8] sm:$0xf] 0
        %1078 = vst [vmem:[#allocation2 + $0x2ac] sm:$0x1] 0
        %1079 = vst [vmem:[#allocation2 + $0x2b0] sm:$0xf] 0
        %1080 = vst [vmem:[#allocation2 + $0x2b4] sm:$0x1] 0
        %1081 = vst [vmem:[#allocation2 + $0x2b8] sm:$0xf] 0
        %1082 = vst [vmem:[#allocation2 + $0x2bc] sm:$0x1] 0
        %1083 = vst [vmem:[#allocation2 + $0x2c0] sm:$0xf] 0
        %1084 = vst [vmem:[#allocation2 + $0x2c4] sm:$0x1] 0
        %1085 = vst [vmem:[#allocation2 + $0x2c8] sm:$0xf] 0
        %1086 = vst [vmem:[#allocation2 + $0x2cc] sm:$0x1] 0
        %1087 = vst [vmem:[#allocation2 + $0x2d0] sm:$0xf] 0
        %1088 = vst [vmem:[#allocation2 + $0x2d4] sm:$0x1] 0
        %1089 = vst [vmem:[#allocation2 + $0x2d8] sm:$0xf] 0
        %1090 = vst [vmem:[#allocation2 + $0x2dc] sm:$0x1] 0
        %1091 = vst [vmem:[#allocation2 + $0x2e0] sm:$0xf] 0
        %1092 = vst [vmem:[#allocation2 + $0x2e4] sm:$0x1] 0
        %1093 = vst [vmem:[#allocation2 + $0x2e8] sm:$0xf] 0
        %1094 = vst [vmem:[#allocation2 + $0x2ec] sm:$0x1] 0
        %1095 = vst [vmem:[#allocation2 + $0x2f0] sm:$0xf] 0
        %1096 = vst [vmem:[#allocation2 + $0x2f4] sm:$0x1] 0
        %1097 = vst [vmem:[#allocation2 + $0x2f8] sm:$0xf] 0
        %1098 = vst [vmem:[#allocation2 + $0x2fc] sm:$0x1] 0
        %1099 = vst [vmem:[#allocation2 + $0x300] sm:$0xf] 0
        %1100 = vst [vmem:[#allocation2 + $0x304] sm:$0x1] 0
        %1101 = vst [vmem:[#allocation2 + $0x308] sm:$0xf] 0
        %1102 = vst [vmem:[#allocation2 + $0x30c] sm:$0x1] 0
        %1103 = vst [vmem:[#allocation2 + $0x310] sm:$0xf] 0
        %1104 = vst [vmem:[#allocation2 + $0x314] sm:$0x1] 0
        %1105 = vst [vmem:[#allocation2 + $0x318] sm:$0xf] 0
        %1106 = vst [vmem:[#allocation2 + $0x31c] sm:$0x1] 0
        %v1107 = vpack.c.bf16 %v843, %v843
        %v1108 = vpack.c.bf16 %v844, %v844
        %v1109 = vpack.c.bf16 %v845, %v845
        %v1110 = vpack.c.bf16 %v846, %v846
        %v1111 = vpack.c.bf16 %v847, %v847
        %v1112 = vpack.c.bf16 %v848, %v848
        %v1113 = vpack.c.bf16 %v849, %v849
        %v1114 = vpack.c.bf16 %v850, %v850
        %v1115 = vpack.c.bf16 %v851, %v851
        %v1116 = vpack.c.bf16 %v852, %v852
        %v1117 = vpack.c.bf16 %v853, %v853
        %v1118 = vpack.c.bf16 %v854, %v854
        %v1119 = vpack.c.bf16 %v855, %v855
        %v1120 = vpack.c.bf16 %v856, %v856
        %v1121 = vpack.c.bf16 %v857, %v857
        %v1122 = vpack.c.bf16 %v858, %v858
        %v1123 = vpack.c.bf16 %v859, %v859
        %v1124 = vpack.c.bf16 %v860, %v860
        %v1125 = vpack.c.bf16 %v861, %v861
        %v1126 = vpack.c.bf16 %v862, %v862
        %v1127 = vpack.c.bf16 %v863, %v863
        %v1128 = vpack.c.bf16 %v864, %v864
        %v1129 = vpack.c.bf16 %v865, %v865
        %v1130 = vpack.c.bf16 %v866, %v866
        %v1131 = vpack.c.bf16 %v867, %v867
        %v1132 = vpack.c.bf16 %v868, %v868
        %v1133 = vpack.c.bf16 %v869, %v869
        %v1134 = vpack.c.bf16 %v870, %v870
        %v1135 = vpack.c.bf16 %v871, %v871
        %v1136 = vpack.c.bf16 %v872, %v872
        %v1137 = vpack.c.bf16 %v873, %v873
        %v1138 = vpack.c.bf16 %v874, %v874
        %v1139 = vpack.c.bf16 %v875, %v875
        %v1140 = vpack.c.bf16 %v876, %v876
        %v1141 = vpack.c.bf16 %v877, %v877
        %v1142 = vpack.c.bf16 %v878, %v878
        %v1143 = vpack.c.bf16 %v879, %v879
        %v1144 = vpack.c.bf16 %v880, %v880
        %v1145 = vpack.c.bf16 %v881, %v881
        %v1146 = vpack.c.bf16 %v882, %v882
        %v1147 = vpack.c.bf16 %v883, %v883
        %v1148 = vpack.c.bf16 %v884, %v884
        %v1149 = vpack.c.bf16 %v885, %v885
        %v1150 = vpack.c.bf16 %v886, %v886
        %v1151 = vpack.c.bf16 %v887, %v887
        %v1152 = vpack.c.bf16 %v888, %v888
        %v1153 = vpack.c.bf16 %v889, %v889
        %v1154 = vpack.c.bf16 %v890, %v890
        %v1155 = vpack.c.bf16 %v891, %v891
        %v1156 = vpack.c.bf16 %v892, %v892
        %v1157 = vpack.c.bf16 %v893, %v893
        %v1158 = vpack.c.bf16 %v894, %v894
        %v1159 = vpack.c.bf16 %v895, %v895
        %v1160 = vpack.c.bf16 %v896, %v896
        %v1161 = vpack.c.bf16 %v897, %v897
        %v1162 = vpack.c.bf16 %v898, %v898
        %v1163 = vpack.c.bf16 %v899, %v899
        %v1164 = vpack.c.bf16 %v900, %v900
        %v1165 = vpack.c.bf16 %v901, %v901
        %v1166 = vpack.c.bf16 %v902, %v902
        %v1167 = vpack.c.bf16 %v903, %v903
        %v1168 = vpack.c.bf16 %v904, %v904
        %v1169 = vpack.c.bf16 %v905, %v905
        %v1170 = vpack.c.bf16 %v906, %v906
        %v1172 = vshrl.u32 %v1107, 16
        %v1174 = vrot.slane %v1172, 7
        %v1175 = vshll.u32 %v1107, 16
        %v1177 = vor.u32 %v1174, %v1175
        %v1178 = vrot.slane %v1174, 4
        %v1180 = vshrl.u32 %v1108, 16
        %v1182 = vrot.slane %v1180, 7
        %v1183 = vshll.u32 %v1108, 16
        %v1185 = vor.u32 %v1182, %v1183
        %v1186 = vrot.slane %v1182, 4
        %v1188 = vshrl.u32 %v1109, 16
        %v1190 = vrot.slane %v1188, 7
        %v1191 = vshll.u32 %v1109, 16
        %v1193 = vor.u32 %v1190, %v1191
        %v1194 = vrot.slane %v1190, 4
        %v1196 = vshrl.u32 %v1110, 16
        %v1198 = vrot.slane %v1196, 7
        %v1199 = vshll.u32 %v1110, 16
        %v1201 = vor.u32 %v1198, %v1199
        %v1202 = vrot.slane %v1198, 4
        %v1204 = vshrl.u32 %v1111, 16
        %v1206 = vrot.slane %v1204, 7
        %v1207 = vshll.u32 %v1111, 16
        %v1209 = vor.u32 %v1206, %v1207
        %v1210 = vrot.slane %v1206, 4
        %v1212 = vshrl.u32 %v1112, 16
        %v1214 = vrot.slane %v1212, 7
        %v1215 = vshll.u32 %v1112, 16
        %v1217 = vor.u32 %v1214, %v1215
        %v1218 = vrot.slane %v1214, 4
        %v1220 = vshrl.u32 %v1113, 16
        %v1222 = vrot.slane %v1220, 7
        %v1223 = vshll.u32 %v1113, 16
        %v1225 = vor.u32 %v1222, %v1223
        %v1226 = vrot.slane %v1222, 4
        %v1228 = vshrl.u32 %v1114, 16
        %v1230 = vrot.slane %v1228, 7
        %v1231 = vshll.u32 %v1114, 16
        %v1233 = vor.u32 %v1230, %v1231
        %v1234 = vrot.slane %v1230, 4
        %v1236 = vshrl.u32 %v1115, 16
        %v1238 = vrot.slane %v1236, 7
        %v1239 = vshll.u32 %v1115, 16
        %v1241 = vor.u32 %v1238, %v1239
        %v1242 = vrot.slane %v1238, 4
        %v1244 = vshrl.u32 %v1116, 16
        %v1246 = vrot.slane %v1244, 7
        %v1247 = vshll.u32 %v1116, 16
        %v1249 = vor.u32 %v1246, %v1247
        %v1250 = vrot.slane %v1246, 4
        %v1252 = vshrl.u32 %v1117, 16
        %v1254 = vrot.slane %v1252, 7
        %v1255 = vshll.u32 %v1117, 16
        %v1257 = vor.u32 %v1254, %v1255
        %v1258 = vrot.slane %v1254, 4
        %v1260 = vshrl.u32 %v1118, 16
        %v1262 = vrot.slane %v1260, 7
        %v1263 = vshll.u32 %v1118, 16
        %v1265 = vor.u32 %v1262, %v1263
        %v1266 = vrot.slane %v1262, 4
        %v1268 = vshrl.u32 %v1119, 16
        %v1270 = vrot.slane %v1268, 7
        %v1271 = vshll.u32 %v1119, 16
        %v1273 = vor.u32 %v1270, %v1271
        %v1274 = vrot.slane %v1270, 4
        %v1276 = vshrl.u32 %v1120, 16
        %v1278 = vrot.slane %v1276, 7
        %v1279 = vshll.u32 %v1120, 16
        %v1281 = vor.u32 %v1278, %v1279
        %v1282 = vrot.slane %v1278, 4
        %v1284 = vshrl.u32 %v1121, 16
        %v1286 = vrot.slane %v1284, 7
        %v1287 = vshll.u32 %v1121, 16
        %v1289 = vor.u32 %v1286, %v1287
        %v1290 = vrot.slane %v1286, 4
        %v1292 = vshrl.u32 %v1122, 16
        %v1294 = vrot.slane %v1292, 7
        %v1295 = vshll.u32 %v1122, 16
        %v1297 = vor.u32 %v1294, %v1295
        %v1298 = vrot.slane %v1294, 4
        %v1300 = vshrl.u32 %v1123, 16
        %v1302 = vrot.slane %v1300, 7
        %v1303 = vshll.u32 %v1123, 16
        %v1305 = vor.u32 %v1302, %v1303
        %v1306 = vrot.slane %v1302, 4
        %v1308 = vshrl.u32 %v1124, 16
        %v1310 = vrot.slane %v1308, 7
        %v1311 = vshll.u32 %v1124, 16
        %v1313 = vor.u32 %v1310, %v1311
        %v1314 = vrot.slane %v1310, 4
        %v1316 = vshrl.u32 %v1125, 16
        %v1318 = vrot.slane %v1316, 7
        %v1319 = vshll.u32 %v1125, 16
        %v1321 = vor.u32 %v1318, %v1319
        %v1322 = vrot.slane %v1318, 4
        %v1324 = vshrl.u32 %v1126, 16
        %v1326 = vrot.slane %v1324, 7
        %v1327 = vshll.u32 %v1126, 16
        %v1329 = vor.u32 %v1326, %v1327
        %v1330 = vrot.slane %v1326, 4
        %v1332 = vshrl.u32 %v1127, 16
        %v1334 = vrot.slane %v1332, 7
        %v1335 = vshll.u32 %v1127, 16
        %v1337 = vor.u32 %v1334, %v1335
        %v1338 = vrot.slane %v1334, 4
        %v1340 = vshrl.u32 %v1128, 16
        %v1342 = vrot.slane %v1340, 7
        %v1343 = vshll.u32 %v1128, 16
        %v1345 = vor.u32 %v1342, %v1343
        %v1346 = vrot.slane %v1342, 4
        %v1348 = vshrl.u32 %v1129, 16
        %v1350 = vrot.slane %v1348, 7
        %v1351 = vshll.u32 %v1129, 16
        %v1353 = vor.u32 %v1350, %v1351
        %v1354 = vrot.slane %v1350, 4
        %v1356 = vshrl.u32 %v1130, 16
        %v1358 = vrot.slane %v1356, 7
        %v1359 = vshll.u32 %v1130, 16
        %v1361 = vor.u32 %v1358, %v1359
        %v1362 = vrot.slane %v1358, 4
        %v1364 = vshrl.u32 %v1131, 16
        %v1366 = vrot.slane %v1364, 7
        %v1367 = vshll.u32 %v1131, 16
        %v1369 = vor.u32 %v1366, %v1367
        %v1370 = vrot.slane %v1366, 4
        %v1372 = vshrl.u32 %v1132, 16
        %v1374 = vrot.slane %v1372, 7
        %v1375 = vshll.u32 %v1132, 16
        %v1377 = vor.u32 %v1374, %v1375
        %v1378 = vrot.slane %v1374, 4
        %v1380 = vshrl.u32 %v1133, 16
        %v1382 = vrot.slane %v1380, 7
        %v1383 = vshll.u32 %v1133, 16
        %v1385 = vor.u32 %v1382, %v1383
        %v1386 = vrot.slane %v1382, 4
        %v1388 = vshrl.u32 %v1134, 16
        %v1390 = vrot.slane %v1388, 7
        %v1391 = vshll.u32 %v1134, 16
        %v1393 = vor.u32 %v1390, %v1391
        %v1394 = vrot.slane %v1390, 4
        %v1396 = vshrl.u32 %v1135, 16
        %v1398 = vrot.slane %v1396, 7
        %v1399 = vshll.u32 %v1135, 16
        %v1401 = vor.u32 %v1398, %v1399
        %v1402 = vrot.slane %v1398, 4
        %v1404 = vshrl.u32 %v1136, 16
        %v1406 = vrot.slane %v1404, 7
        %v1407 = vshll.u32 %v1136, 16
        %v1409 = vor.u32 %v1406, %v1407
        %v1410 = vrot.slane %v1406, 4
        %v1412 = vshrl.u32 %v1137, 16
        %v1414 = vrot.slane %v1412, 7
        %v1415 = vshll.u32 %v1137, 16
        %v1417 = vor.u32 %v1414, %v1415
        %v1418 = vrot.slane %v1414, 4
        %v1420 = vshrl.u32 %v1138, 16
        %v1422 = vrot.slane %v1420, 7
        %v1423 = vshll.u32 %v1138, 16
        %v1425 = vor.u32 %v1422, %v1423
        %v1426 = vrot.slane %v1422, 4
        %v1428 = vshrl.u32 %v1139, 16
        %v1430 = vrot.slane %v1428, 7
        %v1431 = vshll.u32 %v1139, 16
        %v1433 = vor.u32 %v1430, %v1431
        %v1434 = vrot.slane %v1430, 4
        %v1436 = vshrl.u32 %v1140, 16
        %v1438 = vrot.slane %v1436, 7
        %v1439 = vshll.u32 %v1140, 16
        %v1441 = vor.u32 %v1438, %v1439
        %v1442 = vrot.slane %v1438, 4
        %v1444 = vshrl.u32 %v1141, 16
        %v1446 = vrot.slane %v1444, 7
        %v1447 = vshll.u32 %v1141, 16
        %v1449 = vor.u32 %v1446, %v1447
        %v1450 = vrot.slane %v1446, 4
        %v1452 = vshrl.u32 %v1142, 16
        %v1454 = vrot.slane %v1452, 7
        %v1455 = vshll.u32 %v1142, 16
        %v1457 = vor.u32 %v1454, %v1455
        %v1458 = vrot.slane %v1454, 4
        %v1460 = vshrl.u32 %v1143, 16
        %v1462 = vrot.slane %v1460, 7
        %v1463 = vshll.u32 %v1143, 16
        %v1465 = vor.u32 %v1462, %v1463
        %v1466 = vrot.slane %v1462, 4
        %v1468 = vshrl.u32 %v1144, 16
        %v1470 = vrot.slane %v1468, 7
        %v1471 = vshll.u32 %v1144, 16
        %v1473 = vor.u32 %v1470, %v1471
        %v1474 = vrot.slane %v1470, 4
        %v1476 = vshrl.u32 %v1145, 16
        %v1478 = vrot.slane %v1476, 7
        %v1479 = vshll.u32 %v1145, 16
        %v1481 = vor.u32 %v1478, %v1479
        %v1482 = vrot.slane %v1478, 4
        %v1484 = vshrl.u32 %v1146, 16
        %v1486 = vrot.slane %v1484, 7
        %v1487 = vshll.u32 %v1146, 16
        %v1489 = vor.u32 %v1486, %v1487
        %v1490 = vrot.slane %v1486, 4
        %v1492 = vshrl.u32 %v1147, 16
        %v1494 = vrot.slane %v1492, 7
        %v1495 = vshll.u32 %v1147, 16
        %v1497 = vor.u32 %v1494, %v1495
        %v1498 = vrot.slane %v1494, 4
        %v1500 = vshrl.u32 %v1148, 16
        %v1502 = vrot.slane %v1500, 7
        %v1503 = vshll.u32 %v1148, 16
        %v1505 = vor.u32 %v1502, %v1503
        %v1506 = vrot.slane %v1502, 4
        %v1508 = vshrl.u32 %v1149, 16
        %v1510 = vrot.slane %v1508, 7
        %v1511 = vshll.u32 %v1149, 16
        %v1513 = vor.u32 %v1510, %v1511
        %v1514 = vrot.slane %v1510, 4
        %v1516 = vshrl.u32 %v1150, 16
        %v1518 = vrot.slane %v1516, 7
        %v1519 = vshll.u32 %v1150, 16
        %v1521 = vor.u32 %v1518, %v1519
        %v1522 = vrot.slane %v1518, 4
        %v1524 = vshrl.u32 %v1151, 16
        %v1526 = vrot.slane %v1524, 7
        %v1527 = vshll.u32 %v1151, 16
        %v1529 = vor.u32 %v1526, %v1527
        %v1530 = vrot.slane %v1526, 4
        %v1532 = vshrl.u32 %v1152, 16
        %v1534 = vrot.slane %v1532, 7
        %v1535 = vshll.u32 %v1152, 16
        %v1537 = vor.u32 %v1534, %v1535
        %v1538 = vrot.slane %v1534, 4
        %v1540 = vshrl.u32 %v1153, 16
        %v1542 = vrot.slane %v1540, 7
        %v1543 = vshll.u32 %v1153, 16
        %v1545 = vor.u32 %v1542, %v1543
        %v1546 = vrot.slane %v1542, 4
        %v1548 = vshrl.u32 %v1154, 16
        %v1550 = vrot.slane %v1548, 7
        %v1551 = vshll.u32 %v1154, 16
        %v1553 = vor.u32 %v1550, %v1551
        %v1554 = vrot.slane %v1550, 4
        %v1556 = vshrl.u32 %v1155, 16
        %v1558 = vrot.slane %v1556, 7
        %v1559 = vshll.u32 %v1155, 16
        %v1561 = vor.u32 %v1558, %v1559
        %v1562 = vrot.slane %v1558, 4
        %v1564 = vshrl.u32 %v1156, 16
        %v1566 = vrot.slane %v1564, 7
        %v1567 = vshll.u32 %v1156, 16
        %v1569 = vor.u32 %v1566, %v1567
        %v1570 = vrot.slane %v1566, 4
        %v1572 = vshrl.u32 %v1157, 16
        %v1574 = vrot.slane %v1572, 7
        %v1575 = vshll.u32 %v1157, 16
        %v1577 = vor.u32 %v1574, %v1575
        %v1578 = vrot.slane %v1574, 4
        %v1580 = vshrl.u32 %v1158, 16
        %v1582 = vrot.slane %v1580, 7
        %v1583 = vshll.u32 %v1158, 16
        %v1585 = vor.u32 %v1582, %v1583
        %v1586 = vrot.slane %v1582, 4
        %v1588 = vshrl.u32 %v1159, 16
        %v1590 = vrot.slane %v1588, 7
        %v1591 = vshll.u32 %v1159, 16
        %v1593 = vor.u32 %v1590, %v1591
        %v1594 = vrot.slane %v1590, 4
        %v1596 = vshrl.u32 %v1160, 16
        %v1598 = vrot.slane %v1596, 7
        %v1599 = vshll.u32 %v1160, 16
        %v1601 = vor.u32 %v1598, %v1599
        %v1602 = vrot.slane %v1598, 4
        %v1604 = vshrl.u32 %v1161, 16
        %v1606 = vrot.slane %v1604, 7
        %v1607 = vshll.u32 %v1161, 16
        %v1609 = vor.u32 %v1606, %v1607
        %v1610 = vrot.slane %v1606, 4
        %v1612 = vshrl.u32 %v1162, 16
        %v1614 = vrot.slane %v1612, 7
        %v1615 = vshll.u32 %v1162, 16
        %v1617 = vor.u32 %v1614, %v1615
        %v1618 = vrot.slane %v1614, 4
        %v1620 = vshrl.u32 %v1163, 16
        %v1622 = vrot.slane %v1620, 7
        %v1623 = vshll.u32 %v1163, 16
        %v1625 = vor.u32 %v1622, %v1623
        %v1626 = vrot.slane %v1622, 4
        %v1628 = vshrl.u32 %v1164, 16
        %v1630 = vrot.slane %v1628, 7
        %v1631 = vshll.u32 %v1164, 16
        %v1633 = vor.u32 %v1630, %v1631
        %v1634 = vrot.slane %v1630, 4
        %v1636 = vshrl.u32 %v1165, 16
        %v1638 = vrot.slane %v1636, 7
        %v1639 = vshll.u32 %v1165, 16
        %v1641 = vor.u32 %v1638, %v1639
        %v1642 = vrot.slane %v1638, 4
        %v1644 = vshrl.u32 %v1166, 16
        %v1646 = vrot.slane %v1644, 7
        %v1647 = vshll.u32 %v1166, 16
        %v1649 = vor.u32 %v1646, %v1647
        %v1650 = vrot.slane %v1646, 4
        %v1652 = vshrl.u32 %v1167, 16
        %v1654 = vrot.slane %v1652, 7
        %v1655 = vshll.u32 %v1167, 16
        %v1657 = vor.u32 %v1654, %v1655
        %v1658 = vrot.slane %v1654, 4
        %v1660 = vshrl.u32 %v1168, 16
        %v1662 = vrot.slane %v1660, 7
        %v1663 = vshll.u32 %v1168, 16
        %v1665 = vor.u32 %v1662, %v1663
        %v1666 = vrot.slane %v1662, 4
        %v1668 = vshrl.u32 %v1169, 16
        %v1670 = vrot.slane %v1668, 7
        %v1671 = vshll.u32 %v1169, 16
        %v1673 = vor.u32 %v1670, %v1671
        %v1674 = vrot.slane %v1670, 4
        %v1676 = vshrl.u32 %v1170, 16
        %v1678 = vrot.slane %v1676, 7
        %v1679 = vshll.u32 %v1170, 16
        %v1681 = vor.u32 %v1678, %v1679
        %v1682 = vrot.slane %v1678, 4
        %s1811 = scalar_lea.vmem [#allocation2], 88
        %vm1812 = vcmask 1043456
        %vm1813 = vsmask.f32 7938
        %vm1814 = vmand %vm1812, %vm1813
        %v1815 = vld [vmem:[%s1811] sm:$0xf]
        %v1816 = vsel %vm1814, %v1177, %v1815
        %1817 = vst [vmem:[%s1811] sm:$0xf] %v1816
        %vm1818 = vcmask 1040384
        %vm1819 = vsmask.f32 256
        %vm1820 = vmand %vm1818, %vm1819
        %v1821 = vld [vmem:[%s1811 + $0x4] sm:$0x1]
        %v1822 = vsel %vm1820, %v1178, %v1821
        %1823 = vst [vmem:[%s1811 + $0x4] sm:$0x1] %v1822
        %v1824 = vld [vmem:[%s1811 + $0x8] sm:$0xf]
        %v1825 = vsel %vm1814, %v1185, %v1824
        %1826 = vst [vmem:[%s1811 + $0x8] sm:$0xf] %v1825
        %v1827 = vld [vmem:[%s1811 + $0xc] sm:$0x1]
        %v1828 = vsel %vm1820, %v1186, %v1827
        %1829 = vst [vmem:[%s1811 + $0xc] sm:$0x1] %v1828
        %v1830 = vld [vmem:[%s1811 + $0x10] sm:$0xf]
        %v1831 = vsel %vm1814, %v1193, %v1830
        %1832 = vst [vmem:[%s1811 + $0x10] sm:$0xf] %v1831
        %v1833 = vld [vmem:[%s1811 + $0x14] sm:$0x1]
        %v1834 = vsel %vm1820, %v1194, %v1833
        %1835 = vst [vmem:[%s1811 + $0x14] sm:$0x1] %v1834
        %v1836 = vld [vmem:[%s1811 + $0x18] sm:$0xf]
        %v1837 = vsel %vm1814, %v1201, %v1836
        %1838 = vst [vmem:[%s1811 + $0x18] sm:$0xf] %v1837
        %v1839 = vld [vmem:[%s1811 + $0x1c] sm:$0x1]
        %v1840 = vsel %vm1820, %v1202, %v1839
        %1841 = vst [vmem:[%s1811 + $0x1c] sm:$0x1] %v1840
        %v1842 = vld [vmem:[%s1811 + $0x20] sm:$0xf]
        %v1843 = vsel %vm1814, %v1209, %v1842
        %1844 = vst [vmem:[%s1811 + $0x20] sm:$0xf] %v1843
        %v1845 = vld [vmem:[%s1811 + $0x24] sm:$0x1]
        %v1846 = vsel %vm1820, %v1210, %v1845
        %1847 = vst [vmem:[%s1811 + $0x24] sm:$0x1] %v1846
        %v1848 = vld [vmem:[%s1811 + $0x28] sm:$0xf]
        %v1849 = vsel %vm1814, %v1217, %v1848
        %1850 = vst [vmem:[%s1811 + $0x28] sm:$0xf] %v1849
        %v1851 = vld [vmem:[%s1811 + $0x2c] sm:$0x1]
        %v1852 = vsel %vm1820, %v1218, %v1851
        %1853 = vst [vmem:[%s1811 + $0x2c] sm:$0x1] %v1852
        %v1854 = vld [vmem:[%s1811 + $0x30] sm:$0xf]
        %v1855 = vsel %vm1814, %v1225, %v1854
        %1856 = vst [vmem:[%s1811 + $0x30] sm:$0xf] %v1855
        %v1857 = vld [vmem:[%s1811 + $0x34] sm:$0x1]
        %v1858 = vsel %vm1820, %v1226, %v1857
        %1859 = vst [vmem:[%s1811 + $0x34] sm:$0x1] %v1858
        %v1860 = vld [vmem:[%s1811 + $0x38] sm:$0xf]
        %v1861 = vsel %vm1814, %v1233, %v1860
        %1862 = vst [vmem:[%s1811 + $0x38] sm:$0xf] %v1861
        %v1863 = vld [vmem:[%s1811 + $0x3c] sm:$0x1]
        %v1864 = vsel %vm1820, %v1234, %v1863
        %1865 = vst [vmem:[%s1811 + $0x3c] sm:$0x1] %v1864
        %v1866 = vld [vmem:[%s1811 + $0x50] sm:$0xf]
        %v1867 = vsel %vm1814, %v1241, %v1866
        %1868 = vst [vmem:[%s1811 + $0x50] sm:$0xf] %v1867
        %v1869 = vld [vmem:[%s1811 + $0x54] sm:$0x1]
        %v1870 = vsel %vm1820, %v1242, %v1869
        %1871 = vst [vmem:[%s1811 + $0x54] sm:$0x1] %v1870
        %v1872 = vld [vmem:[%s1811 + $0x58] sm:$0xf]
        %v1873 = vsel %vm1814, %v1249, %v1872
        %1874 = vst [vmem:[%s1811 + $0x58] sm:$0xf] %v1873
        %v1875 = vld [vmem:[%s1811 + $0x5c] sm:$0x1]
        %v1876 = vsel %vm1820, %v1250, %v1875
        %1877 = vst [vmem:[%s1811 + $0x5c] sm:$0x1] %v1876
        %v1878 = vld [vmem:[%s1811 + $0x60] sm:$0xf]
        %v1879 = vsel %vm1814, %v1257, %v1878
        %1880 = vst [vmem:[%s1811 + $0x60] sm:$0xf] %v1879
        %v1881 = vld [vmem:[%s1811 + $0x64] sm:$0x1]
        %v1882 = vsel %vm1820, %v1258, %v1881
        %1883 = vst [vmem:[%s1811 + $0x64] sm:$0x1] %v1882
        %v1884 = vld [vmem:[%s1811 + $0x68] sm:$0xf]
        %v1885 = vsel %vm1814, %v1265, %v1884
        %1886 = vst [vmem:[%s1811 + $0x68] sm:$0xf] %v1885
        %v1887 = vld [vmem:[%s1811 + $0x6c] sm:$0x1]
        %v1888 = vsel %vm1820, %v1266, %v1887
        %1889 = vst [vmem:[%s1811 + $0x6c] sm:$0x1] %v1888
        %v1890 = vld [vmem:[%s1811 + $0x70] sm:$0xf]
        %v1891 = vsel %vm1814, %v1273, %v1890
        %1892 = vst [vmem:[%s1811 + $0x70] sm:$0xf] %v1891
        %v1893 = vld [vmem:[%s1811 + $0x74] sm:$0x1]
        %v1894 = vsel %vm1820, %v1274, %v1893
        %1895 = vst [vmem:[%s1811 + $0x74] sm:$0x1] %v1894
        %v1896 = vld [vmem:[%s1811 + $0x78] sm:$0xf]
        %v1897 = vsel %vm1814, %v1281, %v1896
        %1898 = vst [vmem:[%s1811 + $0x78] sm:$0xf] %v1897
        %v1899 = vld [vmem:[%s1811 + $0x7c] sm:$0x1]
        %v1900 = vsel %vm1820, %v1282, %v1899
        %1901 = vst [vmem:[%s1811 + $0x7c] sm:$0x1] %v1900
        %v1902 = vld [vmem:[%s1811 + $0x80] sm:$0xf]
        %v1903 = vsel %vm1814, %v1289, %v1902
        %1904 = vst [vmem:[%s1811 + $0x80] sm:$0xf] %v1903
        %v1905 = vld [vmem:[%s1811 + $0x84] sm:$0x1]
        %v1906 = vsel %vm1820, %v1290, %v1905
        %1907 = vst [vmem:[%s1811 + $0x84] sm:$0x1] %v1906
        %v1908 = vld [vmem:[%s1811 + $0x88] sm:$0xf]
        %v1909 = vsel %vm1814, %v1297, %v1908
        %1910 = vst [vmem:[%s1811 + $0x88] sm:$0xf] %v1909
        %v1911 = vld [vmem:[%s1811 + $0x8c] sm:$0x1]
        %v1912 = vsel %vm1820, %v1298, %v1911
        %1913 = vst [vmem:[%s1811 + $0x8c] sm:$0x1] %v1912
        %v1914 = vld [vmem:[%s1811 + $0xa0] sm:$0xf]
        %v1915 = vsel %vm1814, %v1305, %v1914
        %1916 = vst [vmem:[%s1811 + $0xa0] sm:$0xf] %v1915
        %v1917 = vld [vmem:[%s1811 + $0xa4] sm:$0x1]
        %v1918 = vsel %vm1820, %v1306, %v1917
        %1919 = vst [vmem:[%s1811 + $0xa4] sm:$0x1] %v1918
        %v1920 = vld [vmem:[%s1811 + $0xa8] sm:$0xf]
        %v1921 = vsel %vm1814, %v1313, %v1920
        %1922 = vst [vmem:[%s1811 + $0xa8] sm:$0xf] %v1921
        %v1923 = vld [vmem:[%s1811 + $0xac] sm:$0x1]
        %v1924 = vsel %vm1820, %v1314, %v1923
        %1925 = vst [vmem:[%s1811 + $0xac] sm:$0x1] %v1924
        %v1926 = vld [vmem:[%s1811 + $0xb0] sm:$0xf]
        %v1927 = vsel %vm1814, %v1321, %v1926
        %1928 = vst [vmem:[%s1811 + $0xb0] sm:$0xf] %v1927
        %v1929 = vld [vmem:[%s1811 + $0xb4] sm:$0x1]
        %v1930 = vsel %vm1820, %v1322, %v1929
        %1931 = vst [vmem:[%s1811 + $0xb4] sm:$0x1] %v1930
        %v1932 = vld [vmem:[%s1811 + $0xb8] sm:$0xf]
        %v1933 = vsel %vm1814, %v1329, %v1932
        %1934 = vst [vmem:[%s1811 + $0xb8] sm:$0xf] %v1933
        %v1935 = vld [vmem:[%s1811 + $0xbc] sm:$0x1]
        %v1936 = vsel %vm1820, %v1330, %v1935
        %1937 = vst [vmem:[%s1811 + $0xbc] sm:$0x1] %v1936
        %v1938 = vld [vmem:[%s1811 + $0xc0] sm:$0xf]
        %v1939 = vsel %vm1814, %v1337, %v1938
        %1940 = vst [vmem:[%s1811 + $0xc0] sm:$0xf] %v1939
        %v1941 = vld [vmem:[%s1811 + $0xc4] sm:$0x1]
        %v1942 = vsel %vm1820, %v1338, %v1941
        %1943 = vst [vmem:[%s1811 + $0xc4] sm:$0x1] %v1942
        %v1944 = vld [vmem:[%s1811 + $0xc8] sm:$0xf]
        %v1945 = vsel %vm1814, %v1345, %v1944
        %1946 = vst [vmem:[%s1811 + $0xc8] sm:$0xf] %v1945
        %v1947 = vld [vmem:[%s1811 + $0xcc] sm:$0x1]
        %v1948 = vsel %vm1820, %v1346, %v1947
        %1949 = vst [vmem:[%s1811 + $0xcc] sm:$0x1] %v1948
        %v1950 = vld [vmem:[%s1811 + $0xd0] sm:$0xf]
        %v1951 = vsel %vm1814, %v1353, %v1950
        %1952 = vst [vmem:[%s1811 + $0xd0] sm:$0xf] %v1951
        %v1953 = vld [vmem:[%s1811 + $0xd4] sm:$0x1]
        %v1954 = vsel %vm1820, %v1354, %v1953
        %1955 = vst [vmem:[%s1811 + $0xd4] sm:$0x1] %v1954
        %v1956 = vld [vmem:[%s1811 + $0xd8] sm:$0xf]
        %v1957 = vsel %vm1814, %v1361, %v1956
        %1958 = vst [vmem:[%s1811 + $0xd8] sm:$0xf] %v1957
        %v1959 = vld [vmem:[%s1811 + $0xdc] sm:$0x1]
        %v1960 = vsel %vm1820, %v1362, %v1959
        %1961 = vst [vmem:[%s1811 + $0xdc] sm:$0x1] %v1960
        %v1962 = vld [vmem:[%s1811 + $0xf0] sm:$0xf]
        %v1963 = vsel %vm1814, %v1369, %v1962
        %1964 = vst [vmem:[%s1811 + $0xf0] sm:$0xf] %v1963
        %v1965 = vld [vmem:[%s1811 + $0xf4] sm:$0x1]
        %v1966 = vsel %vm1820, %v1370, %v1965
        %1967 = vst [vmem:[%s1811 + $0xf4] sm:$0x1] %v1966
        %v1968 = vld [vmem:[%s1811 + $0xf8] sm:$0xf]
        %v1969 = vsel %vm1814, %v1377, %v1968
        %1970 = vst [vmem:[%s1811 + $0xf8] sm:$0xf] %v1969
        %v1971 = vld [vmem:[%s1811 + $0xfc] sm:$0x1]
        %v1972 = vsel %vm1820, %v1378, %v1971
        %1973 = vst [vmem:[%s1811 + $0xfc] sm:$0x1] %v1972
        %v1974 = vld [vmem:[%s1811 + $0x100] sm:$0xf]
        %v1975 = vsel %vm1814, %v1385, %v1974
        %1976 = vst [vmem:[%s1811 + $0x100] sm:$0xf] %v1975
        %v1977 = vld [vmem:[%s1811 + $0x104] sm:$0x1]
        %v1978 = vsel %vm1820, %v1386, %v1977
        %1979 = vst [vmem:[%s1811 + $0x104] sm:$0x1] %v1978
        %v1980 = vld [vmem:[%s1811 + $0x108] sm:$0xf]
        %v1981 = vsel %vm1814, %v1393, %v1980
        %1982 = vst [vmem:[%s1811 + $0x108] sm:$0xf] %v1981
        %v1983 = vld [vmem:[%s1811 + $0x10c] sm:$0x1]
        %v1984 = vsel %vm1820, %v1394, %v1983
        %1985 = vst [vmem:[%s1811 + $0x10c] sm:$0x1] %v1984
        %v1986 = vld [vmem:[%s1811 + $0x110] sm:$0xf]
        %v1987 = vsel %vm1814, %v1401, %v1986
        %1988 = vst [vmem:[%s1811 + $0x110] sm:$0xf] %v1987
        %v1989 = vld [vmem:[%s1811 + $0x114] sm:$0x1]
        %v1990 = vsel %vm1820, %v1402, %v1989
        %1991 = vst [vmem:[%s1811 + $0x114] sm:$0x1] %v1990
        %v1992 = vld [vmem:[%s1811 + $0x118] sm:$0xf]
        %v1993 = vsel %vm1814, %v1409, %v1992
        %1994 = vst [vmem:[%s1811 + $0x118] sm:$0xf] %v1993
        %v1995 = vld [vmem:[%s1811 + $0x11c] sm:$0x1]
        %v1996 = vsel %vm1820, %v1410, %v1995
        %1997 = vst [vmem:[%s1811 + $0x11c] sm:$0x1] %v1996
        %v1998 = vld [vmem:[%s1811 + $0x120] sm:$0xf]
        %v1999 = vsel %vm1814, %v1417, %v1998
        %2000 = vst [vmem:[%s1811 + $0x120] sm:$0xf] %v1999
        %v2001 = vld [vmem:[%s1811 + $0x124] sm:$0x1]
        %v2002 = vsel %vm1820, %v1418, %v2001
        %2003 = vst [vmem:[%s1811 + $0x124] sm:$0x1] %v2002
        %v2004 = vld [vmem:[%s1811 + $0x128] sm:$0xf]
        %v2005 = vsel %vm1814, %v1425, %v2004
        %2006 = vst [vmem:[%s1811 + $0x128] sm:$0xf] %v2005
        %v2007 = vld [vmem:[%s1811 + $0x12c] sm:$0x1]
        %v2008 = vsel %vm1820, %v1426, %v2007
        %2009 = vst [vmem:[%s1811 + $0x12c] sm:$0x1] %v2008
        %v2010 = vld [vmem:[%s1811 + $0x140] sm:$0xf]
        %v2011 = vsel %vm1814, %v1433, %v2010
        %2012 = vst [vmem:[%s1811 + $0x140] sm:$0xf] %v2011
        %v2013 = vld [vmem:[%s1811 + $0x144] sm:$0x1]
        %v2014 = vsel %vm1820, %v1434, %v2013
        %2015 = vst [vmem:[%s1811 + $0x144] sm:$0x1] %v2014
        %v2016 = vld [vmem:[%s1811 + $0x148] sm:$0xf]
        %v2017 = vsel %vm1814, %v1441, %v2016
        %2018 = vst [vmem:[%s1811 + $0x148] sm:$0xf] %v2017
        %v2019 = vld [vmem:[%s1811 + $0x14c] sm:$0x1]
        %v2020 = vsel %vm1820, %v1442, %v2019
        %2021 = vst [vmem:[%s1811 + $0x14c] sm:$0x1] %v2020
        %v2022 = vld [vmem:[%s1811 + $0x150] sm:$0xf]
        %v2023 = vsel %vm1814, %v1449, %v2022
        %2024 = vst [vmem:[%s1811 + $0x150] sm:$0xf] %v2023
        %v2025 = vld [vmem:[%s1811 + $0x154] sm:$0x1]
        %v2026 = vsel %vm1820, %v1450, %v2025
        %2027 = vst [vmem:[%s1811 + $0x154] sm:$0x1] %v2026
        %v2028 = vld [vmem:[%s1811 + $0x158] sm:$0xf]
        %v2029 = vsel %vm1814, %v1457, %v2028
        %2030 = vst [vmem:[%s1811 + $0x158] sm:$0xf] %v2029
        %v2031 = vld [vmem:[%s1811 + $0x15c] sm:$0x1]
        %v2032 = vsel %vm1820, %v1458, %v2031
        %2033 = vst [vmem:[%s1811 + $0x15c] sm:$0x1] %v2032
        %v2034 = vld [vmem:[%s1811 + $0x160] sm:$0xf]
        %v2035 = vsel %vm1814, %v1465, %v2034
        %2036 = vst [vmem:[%s1811 + $0x160] sm:$0xf] %v2035
        %v2037 = vld [vmem:[%s1811 + $0x164] sm:$0x1]
        %v2038 = vsel %vm1820, %v1466, %v2037
        %2039 = vst [vmem:[%s1811 + $0x164] sm:$0x1] %v2038
        %v2040 = vld [vmem:[%s1811 + $0x168] sm:$0xf]
        %v2041 = vsel %vm1814, %v1473, %v2040
        %2042 = vst [vmem:[%s1811 + $0x168] sm:$0xf] %v2041
        %v2043 = vld [vmem:[%s1811 + $0x16c] sm:$0x1]
        %v2044 = vsel %vm1820, %v1474, %v2043
        %2045 = vst [vmem:[%s1811 + $0x16c] sm:$0x1] %v2044
        %v2046 = vld [vmem:[%s1811 + $0x170] sm:$0xf]
        %v2047 = vsel %vm1814, %v1481, %v2046
        %2048 = vst [vmem:[%s1811 + $0x170] sm:$0xf] %v2047
        %v2049 = vld [vmem:[%s1811 + $0x174] sm:$0x1]
        %v2050 = vsel %vm1820, %v1482, %v2049
        %2051 = vst [vmem:[%s1811 + $0x174] sm:$0x1] %v2050
        %v2052 = vld [vmem:[%s1811 + $0x178] sm:$0xf]
        %v2053 = vsel %vm1814, %v1489, %v2052
        %2054 = vst [vmem:[%s1811 + $0x178] sm:$0xf] %v2053
        %v2055 = vld [vmem:[%s1811 + $0x17c] sm:$0x1]
        %v2056 = vsel %vm1820, %v1490, %v2055
        %2057 = vst [vmem:[%s1811 + $0x17c] sm:$0x1] %v2056
        %v2058 = vld [vmem:[%s1811 + $0x190] sm:$0xf]
        %v2059 = vsel %vm1814, %v1497, %v2058
        %2060 = vst [vmem:[%s1811 + $0x190] sm:$0xf] %v2059
        %v2061 = vld [vmem:[%s1811 + $0x194] sm:$0x1]
        %v2062 = vsel %vm1820, %v1498, %v2061
        %2063 = vst [vmem:[%s1811 + $0x194] sm:$0x1] %v2062
        %v2064 = vld [vmem:[%s1811 + $0x198] sm:$0xf]
        %v2065 = vsel %vm1814, %v1505, %v2064
        %2066 = vst [vmem:[%s1811 + $0x198] sm:$0xf] %v2065
        %v2067 = vld [vmem:[%s1811 + $0x19c] sm:$0x1]
        %v2068 = vsel %vm1820, %v1506, %v2067
        %2069 = vst [vmem:[%s1811 + $0x19c] sm:$0x1] %v2068
        %v2070 = vld [vmem:[%s1811 + $0x1a0] sm:$0xf]
        %v2071 = vsel %vm1814, %v1513, %v2070
        %2072 = vst [vmem:[%s1811 + $0x1a0] sm:$0xf] %v2071
        %v2073 = vld [vmem:[%s1811 + $0x1a4] sm:$0x1]
        %v2074 = vsel %vm1820, %v1514, %v2073
        %2075 = vst [vmem:[%s1811 + $0x1a4] sm:$0x1] %v2074
        %v2076 = vld [vmem:[%s1811 + $0x1a8] sm:$0xf]
        %v2077 = vsel %vm1814, %v1521, %v2076
        %2078 = vst [vmem:[%s1811 + $0x1a8] sm:$0xf] %v2077
        %v2079 = vld [vmem:[%s1811 + $0x1ac] sm:$0x1]
        %v2080 = vsel %vm1820, %v1522, %v2079
        %2081 = vst [vmem:[%s1811 + $0x1ac] sm:$0x1] %v2080
        %v2082 = vld [vmem:[%s1811 + $0x1b0] sm:$0xf]
        %v2083 = vsel %vm1814, %v1529, %v2082
        %2084 = vst [vmem:[%s1811 + $0x1b0] sm:$0xf] %v2083
        %v2085 = vld [vmem:[%s1811 + $0x1b4] sm:$0x1]
        %v2086 = vsel %vm1820, %v1530, %v2085
        %2087 = vst [vmem:[%s1811 + $0x1b4] sm:$0x1] %v2086
        %v2088 = vld [vmem:[%s1811 + $0x1b8] sm:$0xf]
        %v2089 = vsel %vm1814, %v1537, %v2088
        %2090 = vst [vmem:[%s1811 + $0x1b8] sm:$0xf] %v2089
        %v2091 = vld [vmem:[%s1811 + $0x1bc] sm:$0x1]
        %v2092 = vsel %vm1820, %v1538, %v2091
        %2093 = vst [vmem:[%s1811 + $0x1bc] sm:$0x1] %v2092
        %v2094 = vld [vmem:[%s1811 + $0x1c0] sm:$0xf]
        %v2095 = vsel %vm1814, %v1545, %v2094
        %2096 = vst [vmem:[%s1811 + $0x1c0] sm:$0xf] %v2095
        %v2097 = vld [vmem:[%s1811 + $0x1c4] sm:$0x1]
        %v2098 = vsel %vm1820, %v1546, %v2097
        %2099 = vst [vmem:[%s1811 + $0x1c4] sm:$0x1] %v2098
        %v2100 = vld [vmem:[%s1811 + $0x1c8] sm:$0xf]
        %v2101 = vsel %vm1814, %v1553, %v2100
        %2102 = vst [vmem:[%s1811 + $0x1c8] sm:$0xf] %v2101
        %v2103 = vld [vmem:[%s1811 + $0x1cc] sm:$0x1]
        %v2104 = vsel %vm1820, %v1554, %v2103
        %2105 = vst [vmem:[%s1811 + $0x1cc] sm:$0x1] %v2104
        %v2106 = vld [vmem:[%s1811 + $0x1e0] sm:$0xf]
        %v2107 = vsel %vm1814, %v1561, %v2106
        %2108 = vst [vmem:[%s1811 + $0x1e0] sm:$0xf] %v2107
        %v2109 = vld [vmem:[%s1811 + $0x1e4] sm:$0x1]
        %v2110 = vsel %vm1820, %v1562, %v2109
        %2111 = vst [vmem:[%s1811 + $0x1e4] sm:$0x1] %v2110
        %v2112 = vld [vmem:[%s1811 + $0x1e8] sm:$0xf]
        %v2113 = vsel %vm1814, %v1569, %v2112
        %2114 = vst [vmem:[%s1811 + $0x1e8] sm:$0xf] %v2113
        %v2115 = vld [vmem:[%s1811 + $0x1ec] sm:$0x1]
        %v2116 = vsel %vm1820, %v1570, %v2115
        %2117 = vst [vmem:[%s1811 + $0x1ec] sm:$0x1] %v2116
        %v2118 = vld [vmem:[%s1811 + $0x1f0] sm:$0xf]
        %v2119 = vsel %vm1814, %v1577, %v2118
        %2120 = vst [vmem:[%s1811 + $0x1f0] sm:$0xf] %v2119
        %v2121 = vld [vmem:[%s1811 + $0x1f4] sm:$0x1]
        %v2122 = vsel %vm1820, %v1578, %v2121
        %2123 = vst [vmem:[%s1811 + $0x1f4] sm:$0x1] %v2122
        %v2124 = vld [vmem:[%s1811 + $0x1f8] sm:$0xf]
        %v2125 = vsel %vm1814, %v1585, %v2124
        %2126 = vst [vmem:[%s1811 + $0x1f8] sm:$0xf] %v2125
        %v2127 = vld [vmem:[%s1811 + $0x1fc] sm:$0x1]
        %v2128 = vsel %vm1820, %v1586, %v2127
        %2129 = vst [vmem:[%s1811 + $0x1fc] sm:$0x1] %v2128
        %v2130 = vld [vmem:[%s1811 + $0x200] sm:$0xf]
        %v2131 = vsel %vm1814, %v1593, %v2130
        %2132 = vst [vmem:[%s1811 + $0x200] sm:$0xf] %v2131
        %v2133 = vld [vmem:[%s1811 + $0x204] sm:$0x1]
        %v2134 = vsel %vm1820, %v1594, %v2133
        %2135 = vst [vmem:[%s1811 + $0x204] sm:$0x1] %v2134
        %v2136 = vld [vmem:[%s1811 + $0x208] sm:$0xf]
        %v2137 = vsel %vm1814, %v1601, %v2136
        %2138 = vst [vmem:[%s1811 + $0x208] sm:$0xf] %v2137
        %v2139 = vld [vmem:[%s1811 + $0x20c] sm:$0x1]
        %v2140 = vsel %vm1820, %v1602, %v2139
        %2141 = vst [vmem:[%s1811 + $0x20c] sm:$0x1] %v2140
        %v2142 = vld [vmem:[%s1811 + $0x210] sm:$0xf]
        %v2143 = vsel %vm1814, %v1609, %v2142
        %2144 = vst [vmem:[%s1811 + $0x210] sm:$0xf] %v2143
        %v2145 = vld [vmem:[%s1811 + $0x214] sm:$0x1]
        %v2146 = vsel %vm1820, %v1610, %v2145
        %2147 = vst [vmem:[%s1811 + $0x214] sm:$0x1] %v2146
        %v2148 = vld [vmem:[%s1811 + $0x218] sm:$0xf]
        %v2149 = vsel %vm1814, %v1617, %v2148
        %2150 = vst [vmem:[%s1811 + $0x218] sm:$0xf] %v2149
        %v2151 = vld [vmem:[%s1811 + $0x21c] sm:$0x1]
        %v2152 = vsel %vm1820, %v1618, %v2151
        %2153 = vst [vmem:[%s1811 + $0x21c] sm:$0x1] %v2152
        %v2154 = vld [vmem:[%s1811 + $0x230] sm:$0xf]
        %v2155 = vsel %vm1814, %v1625, %v2154
        %2156 = vst [vmem:[%s1811 + $0x230] sm:$0xf] %v2155
        %v2157 = vld [vmem:[%s1811 + $0x234] sm:$0x1]
        %v2158 = vsel %vm1820, %v1626, %v2157
        %2159 = vst [vmem:[%s1811 + $0x234] sm:$0x1] %v2158
        %v2160 = vld [vmem:[%s1811 + $0x238] sm:$0xf]
        %v2161 = vsel %vm1814, %v1633, %v2160
        %2162 = vst [vmem:[%s1811 + $0x238] sm:$0xf] %v2161
        %v2163 = vld [vmem:[%s1811 + $0x23c] sm:$0x1]
        %v2164 = vsel %vm1820, %v1634, %v2163
        %2165 = vst [vmem:[%s1811 + $0x23c] sm:$0x1] %v2164
        %v2166 = vld [vmem:[%s1811 + $0x240] sm:$0xf]
        %v2167 = vsel %vm1814, %v1641, %v2166
        %2168 = vst [vmem:[%s1811 + $0x240] sm:$0xf] %v2167
        %v2169 = vld [vmem:[%s1811 + $0x244] sm:$0x1]
        %v2170 = vsel %vm1820, %v1642, %v2169
        %2171 = vst [vmem:[%s1811 + $0x244] sm:$0x1] %v2170
        %v2172 = vld [vmem:[%s1811 + $0x248] sm:$0xf]
        %v2173 = vsel %vm1814, %v1649, %v2172
        %2174 = vst [vmem:[%s1811 + $0x248] sm:$0xf] %v2173
        %v2175 = vld [vmem:[%s1811 + $0x24c] sm:$0x1]
        %v2176 = vsel %vm1820, %v1650, %v2175
        %2177 = vst [vmem:[%s1811 + $0x24c] sm:$0x1] %v2176
        %v2178 = vld [vmem:[%s1811 + $0x250] sm:$0xf]
        %v2179 = vsel %vm1814, %v1657, %v2178
        %2180 = vst [vmem:[%s1811 + $0x250] sm:$0xf] %v2179
        %v2181 = vld [vmem:[%s1811 + $0x254] sm:$0x1]
        %v2182 = vsel %vm1820, %v1658, %v2181
        %2183 = vst [vmem:[%s1811 + $0x254] sm:$0x1] %v2182
        %v2184 = vld [vmem:[%s1811 + $0x258] sm:$0xf]
        %v2185 = vsel %vm1814, %v1665, %v2184
        %2186 = vst [vmem:[%s1811 + $0x258] sm:$0xf] %v2185
        %v2187 = vld [vmem:[%s1811 + $0x25c] sm:$0x1]
        %v2188 = vsel %vm1820, %v1666, %v2187
        %2189 = vst [vmem:[%s1811 + $0x25c] sm:$0x1] %v2188
        %v2190 = vld [vmem:[%s1811 + $0x260] sm:$0xf]
        %v2191 = vsel %vm1814, %v1673, %v2190
        %2192 = vst [vmem:[%s1811 + $0x260] sm:$0xf] %v2191
        %v2193 = vld [vmem:[%s1811 + $0x264] sm:$0x1]
        %v2194 = vsel %vm1820, %v1674, %v2193
        %2195 = vst [vmem:[%s1811 + $0x264] sm:$0x1] %v2194
        %v2196 = vld [vmem:[%s1811 + $0x268] sm:$0xf]
        %v2197 = vsel %vm1814, %v1681, %v2196
        %2198 = vst [vmem:[%s1811 + $0x268] sm:$0xf] %v2197
        %v2199 = vld [vmem:[%s1811 + $0x26c] sm:$0x1]
        %v2200 = vsel %vm1820, %v1682, %v2199
        %2201 = vst [vmem:[%s1811 + $0x26c] sm:$0x1] %v2200
        %v2202 = vld [vmem:[#allocation2] sm:$0xf]
        %v2203 = vld [vmem:[#allocation2 + $0x4] sm:$0x1]
        %v2204 = vld [vmem:[#allocation2 + $0x8] sm:$0xf]
        %v2205 = vld [vmem:[#allocation2 + $0xc] sm:$0x1]
        %v2206 = vld [vmem:[#allocation2 + $0x10] sm:$0xf]
        %v2207 = vld [vmem:[#allocation2 + $0x14] sm:$0x1]
        %v2208 = vld [vmem:[#allocation2 + $0x18] sm:$0xf]
        %v2209 = vld [vmem:[#allocation2 + $0x1c] sm:$0x1]
        %v2210 = vld [vmem:[#allocation2 + $0x20] sm:$0xf]
        %v2211 = vld [vmem:[#allocation2 + $0x24] sm:$0x1]
        %v2212 = vld [vmem:[#allocation2 + $0x28] sm:$0xf]
        %v2213 = vld [vmem:[#allocation2 + $0x2c] sm:$0x1]
        %v2214 = vld [vmem:[#allocation2 + $0x30] sm:$0xf]
        %v2215 = vld [vmem:[#allocation2 + $0x34] sm:$0x1]
        %v2216 = vld [vmem:[#allocation2 + $0x38] sm:$0xf]
        %v2217 = vld [vmem:[#allocation2 + $0x3c] sm:$0x1]
        %v2218 = vld [vmem:[#allocation2 + $0x40] sm:$0xf]
        %v2219 = vld [vmem:[#allocation2 + $0x44] sm:$0x1]
        %v2220 = vld [vmem:[#allocation2 + $0x48] sm:$0xf]
        %v2221 = vld [vmem:[#allocation2 + $0x4c] sm:$0x1]
        %v2222 = vld [vmem:[#allocation2 + $0x50] sm:$0xf]
        %v2223 = vld [vmem:[#allocation2 + $0x54] sm:$0x1]
        %v2224 = vld [vmem:[#allocation2 + $0x58] sm:$0xf]
        %v2225 = vld [vmem:[#allocation2 + $0x5c] sm:$0x1]
        %v2226 = vld [vmem:[#allocation2 + $0x60] sm:$0xf]
        %v2227 = vld [vmem:[#allocation2 + $0x64] sm:$0x1]
        %v2228 = vld [vmem:[#allocation2 + $0x68] sm:$0xf]
        %v2229 = vld [vmem:[#allocation2 + $0x6c] sm:$0x1]
        %v2230 = vld [vmem:[#allocation2 + $0x70] sm:$0xf]
        %v2231 = vld [vmem:[#allocation2 + $0x74] sm:$0x1]
        %v2232 = vld [vmem:[#allocation2 + $0x78] sm:$0xf]
        %v2233 = vld [vmem:[#allocation2 + $0x7c] sm:$0x1]
        %v2234 = vld [vmem:[#allocation2 + $0x80] sm:$0xf]
        %v2235 = vld [vmem:[#allocation2 + $0x84] sm:$0x1]
        %v2236 = vld [vmem:[#allocation2 + $0x88] sm:$0xf]
        %v2237 = vld [vmem:[#allocation2 + $0x8c] sm:$0x1]
        %v2238 = vld [vmem:[#allocation2 + $0x90] sm:$0xf]
        %v2239 = vld [vmem:[#allocation2 + $0x94] sm:$0x1]
        %v2240 = vld [vmem:[#allocation2 + $0x98] sm:$0xf]
        %v2241 = vld [vmem:[#allocation2 + $0x9c] sm:$0x1]
        %v2242 = vld [vmem:[#allocation2 + $0xa0] sm:$0xf]
        %v2243 = vld [vmem:[#allocation2 + $0xa4] sm:$0x1]
        %v2244 = vld [vmem:[#allocation2 + $0xa8] sm:$0xf]
        %v2245 = vld [vmem:[#allocation2 + $0xac] sm:$0x1]
        %v2246 = vld [vmem:[#allocation2 + $0xb0] sm:$0xf]
        %v2247 = vld [vmem:[#allocation2 + $0xb4] sm:$0x1]
        %v2248 = vld [vmem:[#allocation2 + $0xb8] sm:$0xf]
        %v2249 = vld [vmem:[#allocation2 + $0xbc] sm:$0x1]
        %v2250 = vld [vmem:[#allocation2 + $0xc0] sm:$0xf]
        %v2251 = vld [vmem:[#allocation2 + $0xc4] sm:$0x1]
        %v2252 = vld [vmem:[#allocation2 + $0xc8] sm:$0xf]
        %v2253 = vld [vmem:[#allocation2 + $0xcc] sm:$0x1]
        %v2254 = vld [vmem:[#allocation2 + $0xd0] sm:$0xf]
        %v2255 = vld [vmem:[#allocation2 + $0xd4] sm:$0x1]
        %v2256 = vld [vmem:[#allocation2 + $0xd8] sm:$0xf]
        %v2257 = vld [vmem:[#allocation2 + $0xdc] sm:$0x1]
        %v2258 = vld [vmem:[#allocation2 + $0xe0] sm:$0xf]
        %v2259 = vld [vmem:[#allocation2 + $0xe4] sm:$0x1]
        %v2260 = vld [vmem:[#allocation2 + $0xe8] sm:$0xf]
        %v2261 = vld [vmem:[#allocation2 + $0xec] sm:$0x1]
        %v2262 = vld [vmem:[#allocation2 + $0xf0] sm:$0xf]
        %v2263 = vld [vmem:[#allocation2 + $0xf4] sm:$0x1]
        %v2264 = vld [vmem:[#allocation2 + $0xf8] sm:$0xf]
        %v2265 = vld [vmem:[#allocation2 + $0xfc] sm:$0x1]
        %v2266 = vld [vmem:[#allocation2 + $0x100] sm:$0xf]
        %v2267 = vld [vmem:[#allocation2 + $0x104] sm:$0x1]
        %v2268 = vld [vmem:[#allocation2 + $0x108] sm:$0xf]
        %v2269 = vld [vmem:[#allocation2 + $0x10c] sm:$0x1]
        %v2270 = vld [vmem:[#allocation2 + $0x110] sm:$0xf]
        %v2271 = vld [vmem:[#allocation2 + $0x114] sm:$0x1]
        %v2272 = vld [vmem:[#allocation2 + $0x118] sm:$0xf]
        %v2273 = vld [vmem:[#allocation2 + $0x11c] sm:$0x1]
        %v2274 = vld [vmem:[#allocation2 + $0x120] sm:$0xf]
        %v2275 = vld [vmem:[#allocation2 + $0x124] sm:$0x1]
        %v2276 = vld [vmem:[#allocation2 + $0x128] sm:$0xf]
        %v2277 = vld [vmem:[#allocation2 + $0x12c] sm:$0x1]
        %v2278 = vld [vmem:[#allocation2 + $0x130] sm:$0xf]
        %v2279 = vld [vmem:[#allocation2 + $0x134] sm:$0x1]
        %v2280 = vld [vmem:[#allocation2 + $0x138] sm:$0xf]
        %v2281 = vld [vmem:[#allocation2 + $0x13c] sm:$0x1]
        %v2282 = vld [vmem:[#allocation2 + $0x140] sm:$0xf]
        %v2283 = vld [vmem:[#allocation2 + $0x144] sm:$0x1]
        %v2284 = vld [vmem:[#allocation2 + $0x148] sm:$0xf]
        %v2285 = vld [vmem:[#allocation2 + $0x14c] sm:$0x1]
        %v2286 = vld [vmem:[#allocation2 + $0x150] sm:$0xf]
        %v2287 = vld [vmem:[#allocation2 + $0x154] sm:$0x1]
        %v2288 = vld [vmem:[#allocation2 + $0x158] sm:$0xf]
        %v2289 = vld [vmem:[#allocation2 + $0x15c] sm:$0x1]
        %v2290 = vld [vmem:[#allocation2 + $0x160] sm:$0xf]
        %v2291 = vld [vmem:[#allocation2 + $0x164] sm:$0x1]
        %v2292 = vld [vmem:[#allocation2 + $0x168] sm:$0xf]
        %v2293 = vld [vmem:[#allocation2 + $0x16c] sm:$0x1]
        %v2294 = vld [vmem:[#allocation2 + $0x170] sm:$0xf]
        %v2295 = vld [vmem:[#allocation2 + $0x174] sm:$0x1]
        %v2296 = vld [vmem:[#allocation2 + $0x178] sm:$0xf]
        %v2297 = vld [vmem:[#allocation2 + $0x17c] sm:$0x1]
        %v2298 = vld [vmem:[#allocation2 + $0x180] sm:$0xf]
        %v2299 = vld [vmem:[#allocation2 + $0x184] sm:$0x1]
        %v2300 = vld [vmem:[#allocation2 + $0x188] sm:$0xf]
        %v2301 = vld [vmem:[#allocation2 + $0x18c] sm:$0x1]
        %v2302 = vld [vmem:[#allocation2 + $0x190] sm:$0xf]
        %v2303 = vld [vmem:[#allocation2 + $0x194] sm:$0x1]
        %v2304 = vld [vmem:[#allocation2 + $0x198] sm:$0xf]
        %v2305 = vld [vmem:[#allocation2 + $0x19c] sm:$0x1]
        %v2306 = vld [vmem:[#allocation2 + $0x1a0] sm:$0xf]
        %v2307 = vld [vmem:[#allocation2 + $0x1a4] sm:$0x1]
        %v2308 = vld [vmem:[#allocation2 + $0x1a8] sm:$0xf]
        %v2309 = vld [vmem:[#allocation2 + $0x1ac] sm:$0x1]
        %v2310 = vld [vmem:[#allocation2 + $0x1b0] sm:$0xf]
        %v2311 = vld [vmem:[#allocation2 + $0x1b4] sm:$0x1]
        %v2312 = vld [vmem:[#allocation2 + $0x1b8] sm:$0xf]
        %v2313 = vld [vmem:[#allocation2 + $0x1bc] sm:$0x1]
        %v2314 = vld [vmem:[#allocation2 + $0x1c0] sm:$0xf]
        %v2315 = vld [vmem:[#allocation2 + $0x1c4] sm:$0x1]
        %v2316 = vld [vmem:[#allocation2 + $0x1c8] sm:$0xf]
        %v2317 = vld [vmem:[#allocation2 + $0x1cc] sm:$0x1]
        %v2318 = vld [vmem:[#allocation2 + $0x1d0] sm:$0xf]
        %v2319 = vld [vmem:[#allocation2 + $0x1d4] sm:$0x1]
        %v2320 = vld [vmem:[#allocation2 + $0x1d8] sm:$0xf]
        %v2321 = vld [vmem:[#allocation2 + $0x1dc] sm:$0x1]
        %v2322 = vld [vmem:[#allocation2 + $0x1e0] sm:$0xf]
        %v2323 = vld [vmem:[#allocation2 + $0x1e4] sm:$0x1]
        %v2324 = vld [vmem:[#allocation2 + $0x1e8] sm:$0xf]
        %v2325 = vld [vmem:[#allocation2 + $0x1ec] sm:$0x1]
        %v2326 = vld [vmem:[#allocation2 + $0x1f0] sm:$0xf]
        %v2327 = vld [vmem:[#allocation2 + $0x1f4] sm:$0x1]
        %v2328 = vld [vmem:[#allocation2 + $0x1f8] sm:$0xf]
        %v2329 = vld [vmem:[#allocation2 + $0x1fc] sm:$0x1]
        %v2330 = vld [vmem:[#allocation2 + $0x200] sm:$0xf]
        %v2331 = vld [vmem:[#allocation2 + $0x204] sm:$0x1]
        %v2332 = vld [vmem:[#allocation2 + $0x208] sm:$0xf]
        %v2333 = vld [vmem:[#allocation2 + $0x20c] sm:$0x1]
        %v2334 = vld [vmem:[#allocation2 + $0x210] sm:$0xf]
        %v2335 = vld [vmem:[#allocation2 + $0x214] sm:$0x1]
        %v2336 = vld [vmem:[#allocation2 + $0x218] sm:$0xf]
        %v2337 = vld [vmem:[#allocation2 + $0x21c] sm:$0x1]
        %v2338 = vld [vmem:[#allocation2 + $0x220] sm:$0xf]
        %v2339 = vld [vmem:[#allocation2 + $0x224] sm:$0x1]
        %v2340 = vld [vmem:[#allocation2 + $0x228] sm:$0xf]
        %v2341 = vld [vmem:[#allocation2 + $0x22c] sm:$0x1]
        %v2342 = vld [vmem:[#allocation2 + $0x230] sm:$0xf]
        %v2343 = vld [vmem:[#allocation2 + $0x234] sm:$0x1]
        %v2344 = vld [vmem:[#allocation2 + $0x238] sm:$0xf]
        %v2345 = vld [vmem:[#allocation2 + $0x23c] sm:$0x1]
        %v2346 = vld [vmem:[#allocation2 + $0x240] sm:$0xf]
        %v2347 = vld [vmem:[#allocation2 + $0x244] sm:$0x1]
        %v2348 = vld [vmem:[#allocation2 + $0x248] sm:$0xf]
        %v2349 = vld [vmem:[#allocation2 + $0x24c] sm:$0x1]
        %v2350 = vld [vmem:[#allocation2 + $0x250] sm:$0xf]
        %v2351 = vld [vmem:[#allocation2 + $0x254] sm:$0x1]
        %v2352 = vld [vmem:[#allocation2 + $0x258] sm:$0xf]
        %v2353 = vld [vmem:[#allocation2 + $0x25c] sm:$0x1]
        %v2354 = vld [vmem:[#allocation2 + $0x260] sm:$0xf]
        %v2355 = vld [vmem:[#allocation2 + $0x264] sm:$0x1]
        %v2356 = vld [vmem:[#allocation2 + $0x268] sm:$0xf]
        %v2357 = vld [vmem:[#allocation2 + $0x26c] sm:$0x1]
        %v2358 = vld [vmem:[#allocation2 + $0x270] sm:$0xf]
        %v2359 = vld [vmem:[#allocation2 + $0x274] sm:$0x1]
        %v2360 = vld [vmem:[#allocation2 + $0x278] sm:$0xf]
        %v2361 = vld [vmem:[#allocation2 + $0x27c] sm:$0x1]
        %v2362 = vld [vmem:[#allocation2 + $0x280] sm:$0xf]
        %v2363 = vld [vmem:[#allocation2 + $0x284] sm:$0x1]
        %v2364 = vld [vmem:[#allocation2 + $0x288] sm:$0xf]
        %v2365 = vld [vmem:[#allocation2 + $0x28c] sm:$0x1]
        %v2366 = vld [vmem:[#allocation2 + $0x290] sm:$0xf]
        %v2367 = vld [vmem:[#allocation2 + $0x294] sm:$0x1]
        %v2368 = vld [vmem:[#allocation2 + $0x298] sm:$0xf]
        %v2369 = vld [vmem:[#allocation2 + $0x29c] sm:$0x1]
        %v2370 = vld [vmem:[#allocation2 + $0x2a0] sm:$0xf]
        %v2371 = vld [vmem:[#allocation2 + $0x2a4] sm:$0x1]
        %v2372 = vld [vmem:[#allocation2 + $0x2a8] sm:$0xf]
        %v2373 = vld [vmem:[#allocation2 + $0x2ac] sm:$0x1]
        %v2374 = vld [vmem:[#allocation2 + $0x2b0] sm:$0xf]
        %v2375 = vld [vmem:[#allocation2 + $0x2b4] sm:$0x1]
        %v2376 = vld [vmem:[#allocation2 + $0x2b8] sm:$0xf]
        %v2377 = vld [vmem:[#allocation2 + $0x2bc] sm:$0x1]
        %v2378 = vld [vmem:[#allocation2 + $0x2c0] sm:$0xf]
        %v2379 = vld [vmem:[#allocation2 + $0x2c4] sm:$0x1]
        %v2380 = vld [vmem:[#allocation2 + $0x2c8] sm:$0xf]
        %v2381 = vld [vmem:[#allocation2 + $0x2cc] sm:$0x1]
        %v2382 = vld [vmem:[#allocation2 + $0x2d0] sm:$0xf]
        %v2383 = vld [vmem:[#allocation2 + $0x2d4] sm:$0x1]
        %v2384 = vld [vmem:[#allocation2 + $0x2d8] sm:$0xf]
        %v2385 = vld [vmem:[#allocation2 + $0x2dc] sm:$0x1]
        %v2386 = vld [vmem:[#allocation2 + $0x2e0] sm:$0xf]
        %v2387 = vld [vmem:[#allocation2 + $0x2e4] sm:$0x1]
        %v2388 = vld [vmem:[#allocation2 + $0x2e8] sm:$0xf]
        %v2389 = vld [vmem:[#allocation2 + $0x2ec] sm:$0x1]
        %v2390 = vld [vmem:[#allocation2 + $0x2f0] sm:$0xf]
        %v2391 = vld [vmem:[#allocation2 + $0x2f4] sm:$0x1]
        %v2392 = vld [vmem:[#allocation2 + $0x2f8] sm:$0xf]
        %v2393 = vld [vmem:[#allocation2 + $0x2fc] sm:$0x1]
        %v2394 = vld [vmem:[#allocation2 + $0x300] sm:$0xf]
        %v2395 = vld [vmem:[#allocation2 + $0x304] sm:$0x1]
        %v2396 = vld [vmem:[#allocation2 + $0x308] sm:$0xf]
        %v2397 = vld [vmem:[#allocation2 + $0x30c] sm:$0x1]
        %v2398 = vld [vmem:[#allocation2 + $0x310] sm:$0xf]
        %v2399 = vld [vmem:[#allocation2 + $0x314] sm:$0x1]
        %v2400 = vld [vmem:[#allocation2 + $0x318] sm:$0xf]
        %v2401 = vld [vmem:[#allocation2 + $0x31c] sm:$0x1]
        %vm2402 = vsmask.f32 3328
        %vm2403 = vsmask.f32 7440
        %vm2404 = vmor %vm2402, %vm2403
        %v2406 = vshrl.u32 %v2202, 16
        %v2408 = vrot.slane %v2406, 4
        %v2409 = vshll.u32 %v2202, 16
        %v2411 = vrot.slane %v2409, 5
        %v2412 = vor.u32 %v2408, %v2411
        %v2413 = vrot.slane %v2412, 4
        %v2415 = vshll.u32 %v2203, 16
        %v2417 = vrot.slane %v2415, 5
        %v2418 = vsel %vm2404, %v2413, %v2417
        %v2420 = vshrl.u32 %v2204, 16
        %v2422 = vrot.slane %v2420, 4
        %v2423 = vshll.u32 %v2204, 16
        %v2425 = vrot.slane %v2423, 5
        %v2426 = vor.u32 %v2422, %v2425
        %v2427 = vrot.slane %v2426, 4
        %v2429 = vshll.u32 %v2205, 16
        %v2431 = vrot.slane %v2429, 5
        %v2432 = vsel %vm2404, %v2427, %v2431
        %v2434 = vshrl.u32 %v2206, 16
        %v2436 = vrot.slane %v2434, 4
        %v2437 = vshll.u32 %v2206, 16
        %v2439 = vrot.slane %v2437, 5
        %v2440 = vor.u32 %v2436, %v2439
        %v2441 = vrot.slane %v2440, 4
        %v2443 = vshll.u32 %v2207, 16
        %v2445 = vrot.slane %v2443, 5
        %v2446 = vsel %vm2404, %v2441, %v2445
        %v2448 = vshrl.u32 %v2208, 16
        %v2450 = vrot.slane %v2448, 4
        %v2451 = vshll.u32 %v2208, 16
        %v2453 = vrot.slane %v2451, 5
        %v2454 = vor.u32 %v2450, %v2453
        %v2455 = vrot.slane %v2454, 4
        %v2457 = vshll.u32 %v2209, 16
        %v2459 = vrot.slane %v2457, 5
        %v2460 = vsel %vm2404, %v2455, %v2459
        %v2462 = vshrl.u32 %v2210, 16
        %v2464 = vrot.slane %v2462, 4
        %v2465 = vshll.u32 %v2210, 16
        %v2467 = vrot.slane %v2465, 5
        %v2468 = vor.u32 %v2464, %v2467
        %v2469 = vrot.slane %v2468, 4
        %v2471 = vshll.u32 %v2211, 16
        %v2473 = vrot.slane %v2471, 5
        %v2474 = vsel %vm2404, %v2469, %v2473
        %v2476 = vshrl.u32 %v2212, 16
        %v2478 = vrot.slane %v2476, 4
        %v2479 = vshll.u32 %v2212, 16
        %v2481 = vrot.slane %v2479, 5
        %v2482 = vor.u32 %v2478, %v2481
        %v2483 = vrot.slane %v2482, 4
        %v2485 = vshll.u32 %v2213, 16
        %v2487 = vrot.slane %v2485, 5
        %v2488 = vsel %vm2404, %v2483, %v2487
        %v2490 = vshrl.u32 %v2214, 16
        %v2492 = vrot.slane %v2490, 4
        %v2493 = vshll.u32 %v2214, 16
        %v2495 = vrot.slane %v2493, 5
        %v2496 = vor.u32 %v2492, %v2495
        %v2497 = vrot.slane %v2496, 4
        %v2499 = vshll.u32 %v2215, 16
        %v2501 = vrot.slane %v2499, 5
        %v2502 = vsel %vm2404, %v2497, %v2501
        %v2504 = vshrl.u32 %v2216, 16
        %v2506 = vrot.slane %v2504, 4
        %v2507 = vshll.u32 %v2216, 16
        %v2509 = vrot.slane %v2507, 5
        %v2510 = vor.u32 %v2506, %v2509
        %v2511 = vrot.slane %v2510, 4
        %v2513 = vshll.u32 %v2217, 16
        %v2515 = vrot.slane %v2513, 5
        %v2516 = vsel %vm2404, %v2511, %v2515
        %v2518 = vshrl.u32 %v2222, 16
        %v2520 = vrot.slane %v2518, 4
        %v2521 = vshll.u32 %v2222, 16
        %v2523 = vrot.slane %v2521, 5
        %v2524 = vor.u32 %v2520, %v2523
        %v2525 = vrot.slane %v2524, 4
        %v2527 = vshll.u32 %v2223, 16
        %v2529 = vrot.slane %v2527, 5
        %v2530 = vsel %vm2404, %v2525, %v2529
        %v2532 = vshrl.u32 %v2224, 16
        %v2534 = vrot.slane %v2532, 4
        %v2535 = vshll.u32 %v2224, 16
        %v2537 = vrot.slane %v2535, 5
        %v2538 = vor.u32 %v2534, %v2537
        %v2539 = vrot.slane %v2538, 4
        %v2541 = vshll.u32 %v2225, 16
        %v2543 = vrot.slane %v2541, 5
        %v2544 = vsel %vm2404, %v2539, %v2543
        %v2546 = vshrl.u32 %v2226, 16
        %v2548 = vrot.slane %v2546, 4
        %v2549 = vshll.u32 %v2226, 16
        %v2551 = vrot.slane %v2549, 5
        %v2552 = vor.u32 %v2548, %v2551
        %v2553 = vrot.slane %v2552, 4
        %v2555 = vshll.u32 %v2227, 16
        %v2557 = vrot.slane %v2555, 5
        %v2558 = vsel %vm2404, %v2553, %v2557
        %v2560 = vshrl.u32 %v2228, 16
        %v2562 = vrot.slane %v2560, 4
        %v2563 = vshll.u32 %v2228, 16
        %v2565 = vrot.slane %v2563, 5
        %v2566 = vor.u32 %v2562, %v2565
        %v2567 = vrot.slane %v2566, 4
        %v2569 = vshll.u32 %v2229, 16
        %v2571 = vrot.slane %v2569, 5
        %v2572 = vsel %vm2404, %v2567, %v2571
        %v2574 = vshrl.u32 %v2230, 16
        %v2576 = vrot.slane %v2574, 4
        %v2577 = vshll.u32 %v2230, 16
        %v2579 = vrot.slane %v2577, 5
        %v2580 = vor.u32 %v2576, %v2579
        %v2581 = vrot.slane %v2580, 4
        %v2583 = vshll.u32 %v2231, 16
        %v2585 = vrot.slane %v2583, 5
        %v2586 = vsel %vm2404, %v2581, %v2585
        %v2588 = vshrl.u32 %v2232, 16
        %v2590 = vrot.slane %v2588, 4
        %v2591 = vshll.u32 %v2232, 16
        %v2593 = vrot.slane %v2591, 5
        %v2594 = vor.u32 %v2590, %v2593
        %v2595 = vrot.slane %v2594, 4
        %v2597 = vshll.u32 %v2233, 16
        %v2599 = vrot.slane %v2597, 5
        %v2600 = vsel %vm2404, %v2595, %v2599
        %v2602 = vshrl.u32 %v2234, 16
        %v2604 = vrot.slane %v2602, 4
        %v2605 = vshll.u32 %v2234, 16
        %v2607 = vrot.slane %v2605, 5
        %v2608 = vor.u32 %v2604, %v2607
        %v2609 = vrot.slane %v2608, 4
        %v2611 = vshll.u32 %v2235, 16
        %v2613 = vrot.slane %v2611, 5
        %v2614 = vsel %vm2404, %v2609, %v2613
        %v2616 = vshrl.u32 %v2236, 16
        %v2618 = vrot.slane %v2616, 4
        %v2619 = vshll.u32 %v2236, 16
        %v2621 = vrot.slane %v2619, 5
        %v2622 = vor.u32 %v2618, %v2621
        %v2623 = vrot.slane %v2622, 4
        %v2625 = vshll.u32 %v2237, 16
        %v2627 = vrot.slane %v2625, 5
        %v2628 = vsel %vm2404, %v2623, %v2627
        %v2630 = vshrl.u32 %v2242, 16
        %v2632 = vrot.slane %v2630, 4
        %v2633 = vshll.u32 %v2242, 16
        %v2635 = vrot.slane %v2633, 5
        %v2636 = vor.u32 %v2632, %v2635
        %v2637 = vrot.slane %v2636, 4
        %v2639 = vshll.u32 %v2243, 16
        %v2641 = vrot.slane %v2639, 5
        %v2642 = vsel %vm2404, %v2637, %v2641
        %v2644 = vshrl.u32 %v2244, 16
        %v2646 = vrot.slane %v2644, 4
        %v2647 = vshll.u32 %v2244, 16
        %v2649 = vrot.slane %v2647, 5
        %v2650 = vor.u32 %v2646, %v2649
        %v2651 = vrot.slane %v2650, 4
        %v2653 = vshll.u32 %v2245, 16
        %v2655 = vrot.slane %v2653, 5
        %v2656 = vsel %vm2404, %v2651, %v2655
        %v2658 = vshrl.u32 %v2246, 16
        %v2660 = vrot.slane %v2658, 4
        %v2661 = vshll.u32 %v2246, 16
        %v2663 = vrot.slane %v2661, 5
        %v2664 = vor.u32 %v2660, %v2663
        %v2665 = vrot.slane %v2664, 4
        %v2667 = vshll.u32 %v2247, 16
        %v2669 = vrot.slane %v2667, 5
        %v2670 = vsel %vm2404, %v2665, %v2669
        %v2672 = vshrl.u32 %v2248, 16
        %v2674 = vrot.slane %v2672, 4
        %v2675 = vshll.u32 %v2248, 16
        %v2677 = vrot.slane %v2675, 5
        %v2678 = vor.u32 %v2674, %v2677
        %v2679 = vrot.slane %v2678, 4
        %v2681 = vshll.u32 %v2249, 16
        %v2683 = vrot.slane %v2681, 5
        %v2684 = vsel %vm2404, %v2679, %v2683
        %v2686 = vshrl.u32 %v2250, 16
        %v2688 = vrot.slane %v2686, 4
        %v2689 = vshll.u32 %v2250, 16
        %v2691 = vrot.slane %v2689, 5
        %v2692 = vor.u32 %v2688, %v2691
        %v2693 = vrot.slane %v2692, 4
        %v2695 = vshll.u32 %v2251, 16
        %v2697 = vrot.slane %v2695, 5
        %v2698 = vsel %vm2404, %v2693, %v2697
        %v2700 = vshrl.u32 %v2252, 16
        %v2702 = vrot.slane %v2700, 4
        %v2703 = vshll.u32 %v2252, 16
        %v2705 = vrot.slane %v2703, 5
        %v2706 = vor.u32 %v2702, %v2705
        %v2707 = vrot.slane %v2706, 4
        %v2709 = vshll.u32 %v2253, 16
        %v2711 = vrot.slane %v2709, 5
        %v2712 = vsel %vm2404, %v2707, %v2711
        %v2714 = vshrl.u32 %v2254, 16
        %v2716 = vrot.slane %v2714, 4
        %v2717 = vshll.u32 %v2254, 16
        %v2719 = vrot.slane %v2717, 5
        %v2720 = vor.u32 %v2716, %v2719
        %v2721 = vrot.slane %v2720, 4
        %v2723 = vshll.u32 %v2255, 16
        %v2725 = vrot.slane %v2723, 5
        %v2726 = vsel %vm2404, %v2721, %v2725
        %v2728 = vshrl.u32 %v2256, 16
        %v2730 = vrot.slane %v2728, 4
        %v2731 = vshll.u32 %v2256, 16
        %v2733 = vrot.slane %v2731, 5
        %v2734 = vor.u32 %v2730, %v2733
        %v2735 = vrot.slane %v2734, 4
        %v2737 = vshll.u32 %v2257, 16
        %v2739 = vrot.slane %v2737, 5
        %v2740 = vsel %vm2404, %v2735, %v2739
        %v2742 = vshrl.u32 %v2262, 16
        %v2744 = vrot.slane %v2742, 4
        %v2745 = vshll.u32 %v2262, 16
        %v2747 = vrot.slane %v2745, 5
        %v2748 = vor.u32 %v2744, %v2747
        %v2749 = vrot.slane %v2748, 4
        %v2751 = vshll.u32 %v2263, 16
        %v2753 = vrot.slane %v2751, 5
        %v2754 = vsel %vm2404, %v2749, %v2753
        %v2756 = vshrl.u32 %v2264, 16
        %v2758 = vrot.slane %v2756, 4
        %v2759 = vshll.u32 %v2264, 16
        %v2761 = vrot.slane %v2759, 5
        %v2762 = vor.u32 %v2758, %v2761
        %v2763 = vrot.slane %v2762, 4
        %v2765 = vshll.u32 %v2265, 16
        %v2767 = vrot.slane %v2765, 5
        %v2768 = vsel %vm2404, %v2763, %v2767
        %v2770 = vshrl.u32 %v2266, 16
        %v2772 = vrot.slane %v2770, 4
        %v2773 = vshll.u32 %v2266, 16
        %v2775 = vrot.slane %v2773, 5
        %v2776 = vor.u32 %v2772, %v2775
        %v2777 = vrot.slane %v2776, 4
        %v2779 = vshll.u32 %v2267, 16
        %v2781 = vrot.slane %v2779, 5
        %v2782 = vsel %vm2404, %v2777, %v2781
        %v2784 = vshrl.u32 %v2268, 16
        %v2786 = vrot.slane %v2784, 4
        %v2787 = vshll.u32 %v2268, 16
        %v2789 = vrot.slane %v2787, 5
        %v2790 = vor.u32 %v2786, %v2789
        %v2791 = vrot.slane %v2790, 4
        %v2793 = vshll.u32 %v2269, 16
        %v2795 = vrot.slane %v2793, 5
        %v2796 = vsel %vm2404, %v2791, %v2795
        %v2798 = vshrl.u32 %v2270, 16
        %v2800 = vrot.slane %v2798, 4
        %v2801 = vshll.u32 %v2270, 16
        %v2803 = vrot.slane %v2801, 5
        %v2804 = vor.u32 %v2800, %v2803
        %v2805 = vrot.slane %v2804, 4
        %v2807 = vshll.u32 %v2271, 16
        %v2809 = vrot.slane %v2807, 5
        %v2810 = vsel %vm2404, %v2805, %v2809
        %v2812 = vshrl.u32 %v2272, 16
        %v2814 = vrot.slane %v2812, 4
        %v2815 = vshll.u32 %v2272, 16
        %v2817 = vrot.slane %v2815, 5
        %v2818 = vor.u32 %v2814, %v2817
        %v2819 = vrot.slane %v2818, 4
        %v2821 = vshll.u32 %v2273, 16
        %v2823 = vrot.slane %v2821, 5
        %v2824 = vsel %vm2404, %v2819, %v2823
        %v2826 = vshrl.u32 %v2274, 16
        %v2828 = vrot.slane %v2826, 4
        %v2829 = vshll.u32 %v2274, 16
        %v2831 = vrot.slane %v2829, 5
        %v2832 = vor.u32 %v2828, %v2831
        %v2833 = vrot.slane %v2832, 4
        %v2835 = vshll.u32 %v2275, 16
        %v2837 = vrot.slane %v2835, 5
        %v2838 = vsel %vm2404, %v2833, %v2837
        %v2840 = vshrl.u32 %v2276, 16
        %v2842 = vrot.slane %v2840, 4
        %v2843 = vshll.u32 %v2276, 16
        %v2845 = vrot.slane %v2843, 5
        %v2846 = vor.u32 %v2842, %v2845
        %v2847 = vrot.slane %v2846, 4
        %v2849 = vshll.u32 %v2277, 16
        %v2851 = vrot.slane %v2849, 5
        %v2852 = vsel %vm2404, %v2847, %v2851
        %v2854 = vshrl.u32 %v2282, 16
        %v2856 = vrot.slane %v2854, 4
        %v2857 = vshll.u32 %v2282, 16
        %v2859 = vrot.slane %v2857, 5
        %v2860 = vor.u32 %v2856, %v2859
        %v2861 = vrot.slane %v2860, 4
        %v2863 = vshll.u32 %v2283, 16
        %v2865 = vrot.slane %v2863, 5
        %v2866 = vsel %vm2404, %v2861, %v2865
        %v2868 = vshrl.u32 %v2284, 16
        %v2870 = vrot.slane %v2868, 4
        %v2871 = vshll.u32 %v2284, 16
        %v2873 = vrot.slane %v2871, 5
        %v2874 = vor.u32 %v2870, %v2873
        %v2875 = vrot.slane %v2874, 4
        %v2877 = vshll.u32 %v2285, 16
        %v2879 = vrot.slane %v2877, 5
        %v2880 = vsel %vm2404, %v2875, %v2879
        %v2882 = vshrl.u32 %v2286, 16
        %v2884 = vrot.slane %v2882, 4
        %v2885 = vshll.u32 %v2286, 16
        %v2887 = vrot.slane %v2885, 5
        %v2888 = vor.u32 %v2884, %v2887
        %v2889 = vrot.slane %v2888, 4
        %v2891 = vshll.u32 %v2287, 16
        %v2893 = vrot.slane %v2891, 5
        %v2894 = vsel %vm2404, %v2889, %v2893
        %v2896 = vshrl.u32 %v2288, 16
        %v2898 = vrot.slane %v2896, 4
        %v2899 = vshll.u32 %v2288, 16
        %v2901 = vrot.slane %v2899, 5
        %v2902 = vor.u32 %v2898, %v2901
        %v2903 = vrot.slane %v2902, 4
        %v2905 = vshll.u32 %v2289, 16
        %v2907 = vrot.slane %v2905, 5
        %v2908 = vsel %vm2404, %v2903, %v2907
        %v2910 = vshrl.u32 %v2290, 16
        %v2912 = vrot.slane %v2910, 4
        %v2913 = vshll.u32 %v2290, 16
        %v2915 = vrot.slane %v2913, 5
        %v2916 = vor.u32 %v2912, %v2915
        %v2917 = vrot.slane %v2916, 4
        %v2919 = vshll.u32 %v2291, 16
        %v2921 = vrot.slane %v2919, 5
        %v2922 = vsel %vm2404, %v2917, %v2921
        %v2924 = vshrl.u32 %v2292, 16
        %v2926 = vrot.slane %v2924, 4
        %v2927 = vshll.u32 %v2292, 16
        %v2929 = vrot.slane %v2927, 5
        %v2930 = vor.u32 %v2926, %v2929
        %v2931 = vrot.slane %v2930, 4
        %v2933 = vshll.u32 %v2293, 16
        %v2935 = vrot.slane %v2933, 5
        %v2936 = vsel %vm2404, %v2931, %v2935
        %v2938 = vshrl.u32 %v2294, 16
        %v2940 = vrot.slane %v2938, 4
        %v2941 = vshll.u32 %v2294, 16
        %v2943 = vrot.slane %v2941, 5
        %v2944 = vor.u32 %v2940, %v2943
        %v2945 = vrot.slane %v2944, 4
        %v2947 = vshll.u32 %v2295, 16
        %v2949 = vrot.slane %v2947, 5
        %v2950 = vsel %vm2404, %v2945, %v2949
        %v2952 = vshrl.u32 %v2296, 16
        %v2954 = vrot.slane %v2952, 4
        %v2955 = vshll.u32 %v2296, 16
        %v2957 = vrot.slane %v2955, 5
        %v2958 = vor.u32 %v2954, %v2957
        %v2959 = vrot.slane %v2958, 4
        %v2961 = vshll.u32 %v2297, 16
        %v2963 = vrot.slane %v2961, 5
        %v2964 = vsel %vm2404, %v2959, %v2963
        %v2966 = vshrl.u32 %v2302, 16
        %v2968 = vrot.slane %v2966, 4
        %v2969 = vshll.u32 %v2302, 16
        %v2971 = vrot.slane %v2969, 5
        %v2972 = vor.u32 %v2968, %v2971
        %v2973 = vrot.slane %v2972, 4
        %v2975 = vshll.u32 %v2303, 16
        %v2977 = vrot.slane %v2975, 5
        %v2978 = vsel %vm2404, %v2973, %v2977
        %v2980 = vshrl.u32 %v2304, 16
        %v2982 = vrot.slane %v2980, 4
        %v2983 = vshll.u32 %v2304, 16
        %v2985 = vrot.slane %v2983, 5
        %v2986 = vor.u32 %v2982, %v2985
        %v2987 = vrot.slane %v2986, 4
        %v2989 = vshll.u32 %v2305, 16
        %v2991 = vrot.slane %v2989, 5
        %v2992 = vsel %vm2404, %v2987, %v2991
        %v2994 = vshrl.u32 %v2306, 16
        %v2996 = vrot.slane %v2994, 4
        %v2997 = vshll.u32 %v2306, 16
        %v2999 = vrot.slane %v2997, 5
        %v3000 = vor.u32 %v2996, %v2999
        %v3001 = vrot.slane %v3000, 4
        %v3003 = vshll.u32 %v2307, 16
        %v3005 = vrot.slane %v3003, 5
        %v3006 = vsel %vm2404, %v3001, %v3005
        %v3008 = vshrl.u32 %v2308, 16
        %v3010 = vrot.slane %v3008, 4
        %v3011 = vshll.u32 %v2308, 16
        %v3013 = vrot.slane %v3011, 5
        %v3014 = vor.u32 %v3010, %v3013
        %v3015 = vrot.slane %v3014, 4
        %v3017 = vshll.u32 %v2309, 16
        %v3019 = vrot.slane %v3017, 5
        %v3020 = vsel %vm2404, %v3015, %v3019
        %v3022 = vshrl.u32 %v2310, 16
        %v3024 = vrot.slane %v3022, 4
        %v3025 = vshll.u32 %v2310, 16
        %v3027 = vrot.slane %v3025, 5
        %v3028 = vor.u32 %v3024, %v3027
        %v3029 = vrot.slane %v3028, 4
        %v3031 = vshll.u32 %v2311, 16
        %v3033 = vrot.slane %v3031, 5
        %v3034 = vsel %vm2404, %v3029, %v3033
        %v3036 = vshrl.u32 %v2312, 16
        %v3038 = vrot.slane %v3036, 4
        %v3039 = vshll.u32 %v2312, 16
        %v3041 = vrot.slane %v3039, 5
        %v3042 = vor.u32 %v3038, %v3041
        %v3043 = vrot.slane %v3042, 4
        %v3045 = vshll.u32 %v2313, 16
        %v3047 = vrot.slane %v3045, 5
        %v3048 = vsel %vm2404, %v3043, %v3047
        %v3050 = vshrl.u32 %v2314, 16
        %v3052 = vrot.slane %v3050, 4
        %v3053 = vshll.u32 %v2314, 16
        %v3055 = vrot.slane %v3053, 5
        %v3056 = vor.u32 %v3052, %v3055
        %v3057 = vrot.slane %v3056, 4
        %v3059 = vshll.u32 %v2315, 16
        %v3061 = vrot.slane %v3059, 5
        %v3062 = vsel %vm2404, %v3057, %v3061
        %v3064 = vshrl.u32 %v2316, 16
        %v3066 = vrot.slane %v3064, 4
        %v3067 = vshll.u32 %v2316, 16
        %v3069 = vrot.slane %v3067, 5
        %v3070 = vor.u32 %v3066, %v3069
        %v3071 = vrot.slane %v3070, 4
        %v3073 = vshll.u32 %v2317, 16
        %v3075 = vrot.slane %v3073, 5
        %v3076 = vsel %vm2404, %v3071, %v3075
        %v3078 = vshrl.u32 %v2322, 16
        %v3080 = vrot.slane %v3078, 4
        %v3081 = vshll.u32 %v2322, 16
        %v3083 = vrot.slane %v3081, 5
        %v3084 = vor.u32 %v3080, %v3083
        %v3085 = vrot.slane %v3084, 4
        %v3087 = vshll.u32 %v2323, 16
        %v3089 = vrot.slane %v3087, 5
        %v3090 = vsel %vm2404, %v3085, %v3089
        %v3092 = vshrl.u32 %v2324, 16
        %v3094 = vrot.slane %v3092, 4
        %v3095 = vshll.u32 %v2324, 16
        %v3097 = vrot.slane %v3095, 5
        %v3098 = vor.u32 %v3094, %v3097
        %v3099 = vrot.slane %v3098, 4
        %v3101 = vshll.u32 %v2325, 16
        %v3103 = vrot.slane %v3101, 5
        %v3104 = vsel %vm2404, %v3099, %v3103
        %v3106 = vshrl.u32 %v2326, 16
        %v3108 = vrot.slane %v3106, 4
        %v3109 = vshll.u32 %v2326, 16
        %v3111 = vrot.slane %v3109, 5
        %v3112 = vor.u32 %v3108, %v3111
        %v3113 = vrot.slane %v3112, 4
        %v3115 = vshll.u32 %v2327, 16
        %v3117 = vrot.slane %v3115, 5
        %v3118 = vsel %vm2404, %v3113, %v3117
        %v3120 = vshrl.u32 %v2328, 16
        %v3122 = vrot.slane %v3120, 4
        %v3123 = vshll.u32 %v2328, 16
        %v3125 = vrot.slane %v3123, 5
        %v3126 = vor.u32 %v3122, %v3125
        %v3127 = vrot.slane %v3126, 4
        %v3129 = vshll.u32 %v2329, 16
        %v3131 = vrot.slane %v3129, 5
        %v3132 = vsel %vm2404, %v3127, %v3131
        %v3134 = vshrl.u32 %v2330, 16
        %v3136 = vrot.slane %v3134, 4
        %v3137 = vshll.u32 %v2330, 16
        %v3139 = vrot.slane %v3137, 5
        %v3140 = vor.u32 %v3136, %v3139
        %v3141 = vrot.slane %v3140, 4
        %v3143 = vshll.u32 %v2331, 16
        %v3145 = vrot.slane %v3143, 5
        %v3146 = vsel %vm2404, %v3141, %v3145
        %v3148 = vshrl.u32 %v2332, 16
        %v3150 = vrot.slane %v3148, 4
        %v3151 = vshll.u32 %v2332, 16
        %v3153 = vrot.slane %v3151, 5
        %v3154 = vor.u32 %v3150, %v3153
        %v3155 = vrot.slane %v3154, 4
        %v3157 = vshll.u32 %v2333, 16
        %v3159 = vrot.slane %v3157, 5
        %v3160 = vsel %vm2404, %v3155, %v3159
        %v3162 = vshrl.u32 %v2334, 16
        %v3164 = vrot.slane %v3162, 4
        %v3165 = vshll.u32 %v2334, 16
        %v3167 = vrot.slane %v3165, 5
        %v3168 = vor.u32 %v3164, %v3167
        %v3169 = vrot.slane %v3168, 4
        %v3171 = vshll.u32 %v2335, 16
        %v3173 = vrot.slane %v3171, 5
        %v3174 = vsel %vm2404, %v3169, %v3173
        %v3176 = vshrl.u32 %v2336, 16
        %v3178 = vrot.slane %v3176, 4
        %v3179 = vshll.u32 %v2336, 16
        %v3181 = vrot.slane %v3179, 5
        %v3182 = vor.u32 %v3178, %v3181
        %v3183 = vrot.slane %v3182, 4
        %v3185 = vshll.u32 %v2337, 16
        %v3187 = vrot.slane %v3185, 5
        %v3188 = vsel %vm2404, %v3183, %v3187
        %v3190 = vshrl.u32 %v2342, 16
        %v3192 = vrot.slane %v3190, 4
        %v3193 = vshll.u32 %v2342, 16
        %v3195 = vrot.slane %v3193, 5
        %v3196 = vor.u32 %v3192, %v3195
        %v3197 = vrot.slane %v3196, 4
        %v3199 = vshll.u32 %v2343, 16
        %v3201 = vrot.slane %v3199, 5
        %v3202 = vsel %vm2404, %v3197, %v3201
        %v3204 = vshrl.u32 %v2344, 16
        %v3206 = vrot.slane %v3204, 4
        %v3207 = vshll.u32 %v2344, 16
        %v3209 = vrot.slane %v3207, 5
        %v3210 = vor.u32 %v3206, %v3209
        %v3211 = vrot.slane %v3210, 4
        %v3213 = vshll.u32 %v2345, 16
        %v3215 = vrot.slane %v3213, 5
        %v3216 = vsel %vm2404, %v3211, %v3215
        %v3218 = vshrl.u32 %v2346, 16
        %v3220 = vrot.slane %v3218, 4
        %v3221 = vshll.u32 %v2346, 16
        %v3223 = vrot.slane %v3221, 5
        %v3224 = vor.u32 %v3220, %v3223
        %v3225 = vrot.slane %v3224, 4
        %v3227 = vshll.u32 %v2347, 16
        %v3229 = vrot.slane %v3227, 5
        %v3230 = vsel %vm2404, %v3225, %v3229
        %v3232 = vshrl.u32 %v2348, 16
        %v3234 = vrot.slane %v3232, 4
        %v3235 = vshll.u32 %v2348, 16
        %v3237 = vrot.slane %v3235, 5
        %v3238 = vor.u32 %v3234, %v3237
        %v3239 = vrot.slane %v3238, 4
        %v3241 = vshll.u32 %v2349, 16
        %v3243 = vrot.slane %v3241, 5
        %v3244 = vsel %vm2404, %v3239, %v3243
        %v3246 = vshrl.u32 %v2350, 16
        %v3248 = vrot.slane %v3246, 4
        %v3249 = vshll.u32 %v2350, 16
        %v3251 = vrot.slane %v3249, 5
        %v3252 = vor.u32 %v3248, %v3251
        %v3253 = vrot.slane %v3252, 4
        %v3255 = vshll.u32 %v2351, 16
        %v3257 = vrot.slane %v3255, 5
        %v3258 = vsel %vm2404, %v3253, %v3257
        %v3260 = vshrl.u32 %v2352, 16
        %v3262 = vrot.slane %v3260, 4
        %v3263 = vshll.u32 %v2352, 16
        %v3265 = vrot.slane %v3263, 5
        %v3266 = vor.u32 %v3262, %v3265
        %v3267 = vrot.slane %v3266, 4
        %v3269 = vshll.u32 %v2353, 16
        %v3271 = vrot.slane %v3269, 5
        %v3272 = vsel %vm2404, %v3267, %v3271
        %v3274 = vshrl.u32 %v2354, 16
        %v3276 = vrot.slane %v3274, 4
        %v3277 = vshll.u32 %v2354, 16
        %v3279 = vrot.slane %v3277, 5
        %v3280 = vor.u32 %v3276, %v3279
        %v3281 = vrot.slane %v3280, 4
        %v3283 = vshll.u32 %v2355, 16
        %v3285 = vrot.slane %v3283, 5
        %v3286 = vsel %vm2404, %v3281, %v3285
        %v3288 = vshrl.u32 %v2356, 16
        %v3290 = vrot.slane %v3288, 4
        %v3291 = vshll.u32 %v2356, 16
        %v3293 = vrot.slane %v3291, 5
        %v3294 = vor.u32 %v3290, %v3293
        %v3295 = vrot.slane %v3294, 4
        %v3297 = vshll.u32 %v2357, 16
        %v3299 = vrot.slane %v3297, 5
        %v3300 = vsel %vm2404, %v3295, %v3299
        %vm3429 = vcmask 1042432
        %vm3430 = vcmask 1046532
        %vm3431 = vmor %vm3429, %vm3430
        %v3432 = vrot.slane %v2202, 5
        %v3433 = vrot.slane %v3432, 4
        %v3434 = vrot.slane %v2203, 5
        %v3435 = vsel %vm3431, %v3433, %v3434
        %v3436 = vrot.slane %v2204, 5
        %v3437 = vrot.slane %v3436, 4
        %v3438 = vrot.slane %v2205, 5
        %v3439 = vsel %vm3431, %v3437, %v3438
        %v3440 = vrot.slane %v2206, 5
        %v3441 = vrot.slane %v3440, 4
        %v3442 = vrot.slane %v2207, 5
        %v3443 = vsel %vm3431, %v3441, %v3442
        %v3444 = vrot.slane %v2208, 5
        %v3445 = vrot.slane %v3444, 4
        %v3446 = vrot.slane %v2209, 5
        %v3447 = vsel %vm3431, %v3445, %v3446
        %v3448 = vrot.slane %v2210, 5
        %v3449 = vrot.slane %v3448, 4
        %v3450 = vrot.slane %v2211, 5
        %v3451 = vsel %vm3431, %v3449, %v3450
        %v3452 = vrot.slane %v2212, 5
        %v3453 = vrot.slane %v3452, 4
        %v3454 = vrot.slane %v2213, 5
        %v3455 = vsel %vm3431, %v3453, %v3454
        %v3456 = vrot.slane %v2214, 5
        %v3457 = vrot.slane %v3456, 4
        %v3458 = vrot.slane %v2215, 5
        %v3459 = vsel %vm3431, %v3457, %v3458
        %v3460 = vrot.slane %v2216, 5
        %v3461 = vrot.slane %v3460, 4
        %v3462 = vrot.slane %v2217, 5
        %v3463 = vsel %vm3431, %v3461, %v3462
        %v3464 = vrot.slane %v2222, 5
        %v3465 = vrot.slane %v3464, 4
        %v3466 = vrot.slane %v2223, 5
        %v3467 = vsel %vm3431, %v3465, %v3466
        %v3468 = vrot.slane %v2224, 5
        %v3469 = vrot.slane %v3468, 4
        %v3470 = vrot.slane %v2225, 5
        %v3471 = vsel %vm3431, %v3469, %v3470
        %v3472 = vrot.slane %v2226, 5
        %v3473 = vrot.slane %v3472, 4
        %v3474 = vrot.slane %v2227, 5
        %v3475 = vsel %vm3431, %v3473, %v3474
        %v3476 = vrot.slane %v2228, 5
        %v3477 = vrot.slane %v3476, 4
        %v3478 = vrot.slane %v2229, 5
        %v3479 = vsel %vm3431, %v3477, %v3478
        %v3480 = vrot.slane %v2230, 5
        %v3481 = vrot.slane %v3480, 4
        %v3482 = vrot.slane %v2231, 5
        %v3483 = vsel %vm3431, %v3481, %v3482
        %v3484 = vrot.slane %v2232, 5
        %v3485 = vrot.slane %v3484, 4
        %v3486 = vrot.slane %v2233, 5
        %v3487 = vsel %vm3431, %v3485, %v3486
        %v3488 = vrot.slane %v2234, 5
        %v3489 = vrot.slane %v3488, 4
        %v3490 = vrot.slane %v2235, 5
        %v3491 = vsel %vm3431, %v3489, %v3490
        %v3492 = vrot.slane %v2236, 5
        %v3493 = vrot.slane %v3492, 4
        %v3494 = vrot.slane %v2237, 5
        %v3495 = vsel %vm3431, %v3493, %v3494
        %v3496 = vrot.slane %v2242, 5
        %v3497 = vrot.slane %v3496, 4
        %v3498 = vrot.slane %v2243, 5
        %v3499 = vsel %vm3431, %v3497, %v3498
        %v3500 = vrot.slane %v2244, 5
        %v3501 = vrot.slane %v3500, 4
        %v3502 = vrot.slane %v2245, 5
        %v3503 = vsel %vm3431, %v3501, %v3502
        %v3504 = vrot.slane %v2246, 5
        %v3505 = vrot.slane %v3504, 4
        %v3506 = vrot.slane %v2247, 5
        %v3507 = vsel %vm3431, %v3505, %v3506
        %v3508 = vrot.slane %v2248, 5
        %v3509 = vrot.slane %v3508, 4
        %v3510 = vrot.slane %v2249, 5
        %v3511 = vsel %vm3431, %v3509, %v3510
        %v3512 = vrot.slane %v2250, 5
        %v3513 = vrot.slane %v3512, 4
        %v3514 = vrot.slane %v2251, 5
        %v3515 = vsel %vm3431, %v3513, %v3514
        %v3516 = vrot.slane %v2252, 5
        %v3517 = vrot.slane %v3516, 4
        %v3518 = vrot.slane %v2253, 5
        %v3519 = vsel %vm3431, %v3517, %v3518
        %v3520 = vrot.slane %v2254, 5
        %v3521 = vrot.slane %v3520, 4
        %v3522 = vrot.slane %v2255, 5
        %v3523 = vsel %vm3431, %v3521, %v3522
        %v3524 = vrot.slane %v2256, 5
        %v3525 = vrot.slane %v3524, 4
        %v3526 = vrot.slane %v2257, 5
        %v3527 = vsel %vm3431, %v3525, %v3526
        %v3528 = vrot.slane %v2262, 5
        %v3529 = vrot.slane %v3528, 4
        %v3530 = vrot.slane %v2263, 5
        %v3531 = vsel %vm3431, %v3529, %v3530
        %v3532 = vrot.slane %v2264, 5
        %v3533 = vrot.slane %v3532, 4
        %v3534 = vrot.slane %v2265, 5
        %v3535 = vsel %vm3431, %v3533, %v3534
        %v3536 = vrot.slane %v2266, 5
        %v3537 = vrot.slane %v3536, 4
        %v3538 = vrot.slane %v2267, 5
        %v3539 = vsel %vm3431, %v3537, %v3538
        %v3540 = vrot.slane %v2268, 5
        %v3541 = vrot.slane %v3540, 4
        %v3542 = vrot.slane %v2269, 5
        %v3543 = vsel %vm3431, %v3541, %v3542
        %v3544 = vrot.slane %v2270, 5
        %v3545 = vrot.slane %v3544, 4
        %v3546 = vrot.slane %v2271, 5
        %v3547 = vsel %vm3431, %v3545, %v3546
        %v3548 = vrot.slane %v2272, 5
        %v3549 = vrot.slane %v3548, 4
        %v3550 = vrot.slane %v2273, 5
        %v3551 = vsel %vm3431, %v3549, %v3550
        %v3552 = vrot.slane %v2274, 5
        %v3553 = vrot.slane %v3552, 4
        %v3554 = vrot.slane %v2275, 5
        %v3555 = vsel %vm3431, %v3553, %v3554
        %v3556 = vrot.slane %v2276, 5
        %v3557 = vrot.slane %v3556, 4
        %v3558 = vrot.slane %v2277, 5
        %v3559 = vsel %vm3431, %v3557, %v3558
        %v3560 = vrot.slane %v2282, 5
        %v3561 = vrot.slane %v3560, 4
        %v3562 = vrot.slane %v2283, 5
        %v3563 = vsel %vm3431, %v3561, %v3562
        %v3564 = vrot.slane %v2284, 5
        %v3565 = vrot.slane %v3564, 4
        %v3566 = vrot.slane %v2285, 5
        %v3567 = vsel %vm3431, %v3565, %v3566
        %v3568 = vrot.slane %v2286, 5
        %v3569 = vrot.slane %v3568, 4
        %v3570 = vrot.slane %v2287, 5
        %v3571 = vsel %vm3431, %v3569, %v3570
        %v3572 = vrot.slane %v2288, 5
        %v3573 = vrot.slane %v3572, 4
        %v3574 = vrot.slane %v2289, 5
        %v3575 = vsel %vm3431, %v3573, %v3574
        %v3576 = vrot.slane %v2290, 5
        %v3577 = vrot.slane %v3576, 4
        %v3578 = vrot.slane %v2291, 5
        %v3579 = vsel %vm3431, %v3577, %v3578
        %v3580 = vrot.slane %v2292, 5
        %v3581 = vrot.slane %v3580, 4
        %v3582 = vrot.slane %v2293, 5
        %v3583 = vsel %vm3431, %v3581, %v3582
        %v3584 = vrot.slane %v2294, 5
        %v3585 = vrot.slane %v3584, 4
        %v3586 = vrot.slane %v2295, 5
        %v3587 = vsel %vm3431, %v3585, %v3586
        %v3588 = vrot.slane %v2296, 5
        %v3589 = vrot.slane %v3588, 4
        %v3590 = vrot.slane %v2297, 5
        %v3591 = vsel %vm3431, %v3589, %v3590
        %v3592 = vrot.slane %v2302, 5
        %v3593 = vrot.slane %v3592, 4
        %v3594 = vrot.slane %v2303, 5
        %v3595 = vsel %vm3431, %v3593, %v3594
        %v3596 = vrot.slane %v2304, 5
        %v3597 = vrot.slane %v3596, 4
        %v3598 = vrot.slane %v2305, 5
        %v3599 = vsel %vm3431, %v3597, %v3598
        %v3600 = vrot.slane %v2306, 5
        %v3601 = vrot.slane %v3600, 4
        %v3602 = vrot.slane %v2307, 5
        %v3603 = vsel %vm3431, %v3601, %v3602
        %v3604 = vrot.slane %v2308, 5
        %v3605 = vrot.slane %v3604, 4
        %v3606 = vrot.slane %v2309, 5
        %v3607 = vsel %vm3431, %v3605, %v3606
        %v3608 = vrot.slane %v2310, 5
        %v3609 = vrot.slane %v3608, 4
        %v3610 = vrot.slane %v2311, 5
        %v3611 = vsel %vm3431, %v3609, %v3610
        %v3612 = vrot.slane %v2312, 5
        %v3613 = vrot.slane %v3612, 4
        %v3614 = vrot.slane %v2313, 5
        %v3615 = vsel %vm3431, %v3613, %v3614
        %v3616 = vrot.slane %v2314, 5
        %v3617 = vrot.slane %v3616, 4
        %v3618 = vrot.slane %v2315, 5
        %v3619 = vsel %vm3431, %v3617, %v3618
        %v3620 = vrot.slane %v2316, 5
        %v3621 = vrot.slane %v3620, 4
        %v3622 = vrot.slane %v2317, 5
        %v3623 = vsel %vm3431, %v3621, %v3622
        %v3624 = vrot.slane %v2322, 5
        %v3625 = vrot.slane %v3624, 4
        %v3626 = vrot.slane %v2323, 5
        %v3627 = vsel %vm3431, %v3625, %v3626
        %v3628 = vrot.slane %v2324, 5
        %v3629 = vrot.slane %v3628, 4
        %v3630 = vrot.slane %v2325, 5
        %v3631 = vsel %vm3431, %v3629, %v3630
        %v3632 = vrot.slane %v2326, 5
        %v3633 = vrot.slane %v3632, 4
        %v3634 = vrot.slane %v2327, 5
        %v3635 = vsel %vm3431, %v3633, %v3634
        %v3636 = vrot.slane %v2328, 5
        %v3637 = vrot.slane %v3636, 4
        %v3638 = vrot.slane %v2329, 5
        %v3639 = vsel %vm3431, %v3637, %v3638
        %v3640 = vrot.slane %v2330, 5
        %v3641 = vrot.slane %v3640, 4
        %v3642 = vrot.slane %v2331, 5
        %v3643 = vsel %vm3431, %v3641, %v3642
        %v3644 = vrot.slane %v2332, 5
        %v3645 = vrot.slane %v3644, 4
        %v3646 = vrot.slane %v2333, 5
        %v3647 = vsel %vm3431, %v3645, %v3646
        %v3648 = vrot.slane %v2334, 5
        %v3649 = vrot.slane %v3648, 4
        %v3650 = vrot.slane %v2335, 5
        %v3651 = vsel %vm3431, %v3649, %v3650
        %v3652 = vrot.slane %v2336, 5
        %v3653 = vrot.slane %v3652, 4
        %v3654 = vrot.slane %v2337, 5
        %v3655 = vsel %vm3431, %v3653, %v3654
        %v3656 = vrot.slane %v2342, 5
        %v3657 = vrot.slane %v3656, 4
        %v3658 = vrot.slane %v2343, 5
        %v3659 = vsel %vm3431, %v3657, %v3658
        %v3660 = vrot.slane %v2344, 5
        %v3661 = vrot.slane %v3660, 4
        %v3662 = vrot.slane %v2345, 5
        %v3663 = vsel %vm3431, %v3661, %v3662
        %v3664 = vrot.slane %v2346, 5
        %v3665 = vrot.slane %v3664, 4
        %v3666 = vrot.slane %v2347, 5
        %v3667 = vsel %vm3431, %v3665, %v3666
        %v3668 = vrot.slane %v2348, 5
        %v3669 = vrot.slane %v3668, 4
        %v3670 = vrot.slane %v2349, 5
        %v3671 = vsel %vm3431, %v3669, %v3670
        %v3672 = vrot.slane %v2350, 5
        %v3673 = vrot.slane %v3672, 4
        %v3674 = vrot.slane %v2351, 5
        %v3675 = vsel %vm3431, %v3673, %v3674
        %v3676 = vrot.slane %v2352, 5
        %v3677 = vrot.slane %v3676, 4
        %v3678 = vrot.slane %v2353, 5
        %v3679 = vsel %vm3431, %v3677, %v3678
        %v3680 = vrot.slane %v2354, 5
        %v3681 = vrot.slane %v3680, 4
        %v3682 = vrot.slane %v2355, 5
        %v3683 = vsel %vm3431, %v3681, %v3682
        %v3684 = vrot.slane %v2356, 5
        %v3685 = vrot.slane %v3684, 4
        %v3686 = vrot.slane %v2357, 5
        %v3687 = vsel %vm3431, %v3685, %v3686
        %v3688 = vunpack.c.l.b16 %v2202
        %v3689 = vunpack.c.l.b16 %v2204
        %v3690 = vunpack.c.l.b16 %v2206
        %v3691 = vunpack.c.l.b16 %v2208
        %v3692 = vunpack.c.l.b16 %v2210
        %v3693 = vunpack.c.l.b16 %v2212
        %v3694 = vunpack.c.l.b16 %v2214
        %v3695 = vunpack.c.l.b16 %v2216
        %v3696 = vunpack.c.l.b16 %v2222
        %v3697 = vunpack.c.l.b16 %v2224
        %v3698 = vunpack.c.l.b16 %v2226
        %v3699 = vunpack.c.l.b16 %v2228
        %v3700 = vunpack.c.l.b16 %v2230
        %v3701 = vunpack.c.l.b16 %v2232
        %v3702 = vunpack.c.l.b16 %v2234
        %v3703 = vunpack.c.l.b16 %v2236
        %v3704 = vunpack.c.l.b16 %v2242
        %v3705 = vunpack.c.l.b16 %v2244
        %v3706 = vunpack.c.l.b16 %v2246
        %v3707 = vunpack.c.l.b16 %v2248
        %v3708 = vunpack.c.l.b16 %v2250
        %v3709 = vunpack.c.l.b16 %v2252
        %v3710 = vunpack.c.l.b16 %v2254
        %v3711 = vunpack.c.l.b16 %v2256
        %v3712 = vunpack.c.l.b16 %v2262
        %v3713 = vunpack.c.l.b16 %v2264
        %v3714 = vunpack.c.l.b16 %v2266
        %v3715 = vunpack.c.l.b16 %v2268
        %v3716 = vunpack.c.l.b16 %v2270
        %v3717 = vunpack.c.l.b16 %v2272
        %v3718 = vunpack.c.l.b16 %v2274
        %v3719 = vunpack.c.l.b16 %v2276
        %v3720 = vunpack.c.l.b16 %v2282
        %v3721 = vunpack.c.l.b16 %v2284
        %v3722 = vunpack.c.l.b16 %v2286
        %v3723 = vunpack.c.l.b16 %v2288
        %v3724 = vunpack.c.l.b16 %v2290
        %v3725 = vunpack.c.l.b16 %v2292
        %v3726 = vunpack.c.l.b16 %v2294
        %v3727 = vunpack.c.l.b16 %v2296
        %v3728 = vunpack.c.l.b16 %v2302
        %v3729 = vunpack.c.l.b16 %v2304
        %v3730 = vunpack.c.l.b16 %v2306
        %v3731 = vunpack.c.l.b16 %v2308
        %v3732 = vunpack.c.l.b16 %v2310
        %v3733 = vunpack.c.l.b16 %v2312
        %v3734 = vunpack.c.l.b16 %v2314
        %v3735 = vunpack.c.l.b16 %v2316
        %v3736 = vunpack.c.l.b16 %v2322
        %v3737 = vunpack.c.l.b16 %v2324
        %v3738 = vunpack.c.l.b16 %v2326
        %v3739 = vunpack.c.l.b16 %v2328
        %v3740 = vunpack.c.l.b16 %v2330
        %v3741 = vunpack.c.l.b16 %v2332
        %v3742 = vunpack.c.l.b16 %v2334
        %v3743 = vunpack.c.l.b16 %v2336
        %v3744 = vunpack.c.l.b16 %v2342
        %v3745 = vunpack.c.l.b16 %v2344
        %v3746 = vunpack.c.l.b16 %v2346
        %v3747 = vunpack.c.l.b16 %v2348
        %v3748 = vunpack.c.l.b16 %v2350
        %v3749 = vunpack.c.l.b16 %v2352
        %v3750 = vunpack.c.l.b16 %v2354
        %v3751 = vunpack.c.l.b16 %v2356
        %v3752 = vpack.c.b16 %v3689, %v3688
        %v3753 = vpack.c.b16 %v3691, %v3690
        %v3754 = vpack.c.b16 %v3693, %v3692
        %v3755 = vpack.c.b16 %v3695, %v3694
        %v3756 = vpack.c.b16 %v3697, %v3696
        %v3757 = vpack.c.b16 %v3699, %v3698
        %v3758 = vpack.c.b16 %v3701, %v3700
        %v3759 = vpack.c.b16 %v3703, %v3702
        %v3760 = vpack.c.b16 %v3705, %v3704
        %v3761 = vpack.c.b16 %v3707, %v3706
        %v3762 = vpack.c.b16 %v3709, %v3708
        %v3763 = vpack.c.b16 %v3711, %v3710
        %v3764 = vpack.c.b16 %v3713, %v3712
        %v3765 = vpack.c.b16 %v3715, %v3714
        %v3766 = vpack.c.b16 %v3717, %v3716
        %v3767 = vpack.c.b16 %v3719, %v3718
        %v3768 = vpack.c.b16 %v3721, %v3720
        %v3769 = vpack.c.b16 %v3723, %v3722
        %v3770 = vpack.c.b16 %v3725, %v3724
        %v3771 = vpack.c.b16 %v3727, %v3726
        %v3772 = vpack.c.b16 %v3729, %v3728
        %v3773 = vpack.c.b16 %v3731, %v3730
        %v3774 = vpack.c.b16 %v3733, %v3732
        %v3775 = vpack.c.b16 %v3735, %v3734
        %v3776 = vpack.c.b16 %v3737, %v3736
        %v3777 = vpack.c.b16 %v3739, %v3738
        %v3778 = vpack.c.b16 %v3741, %v3740
        %v3779 = vpack.c.b16 %v3743, %v3742
        %v3780 = vpack.c.b16 %v3745, %v3744
        %v3781 = vpack.c.b16 %v3747, %v3746
        %v3782 = vpack.c.b16 %v3749, %v3748
        %v3783 = vpack.c.b16 %v3751, %v3750
        %v3816 = vunpack.c.l.b16 %v2418
        %v3817 = vunpack.c.l.b16 %v2432
        %v3818 = vunpack.c.l.b16 %v2446
        %v3819 = vunpack.c.l.b16 %v2460
        %v3820 = vunpack.c.l.b16 %v2474
        %v3821 = vunpack.c.l.b16 %v2488
        %v3822 = vunpack.c.l.b16 %v2502
        %v3823 = vunpack.c.l.b16 %v2516
        %v3824 = vunpack.c.l.b16 %v2530
        %v3825 = vunpack.c.l.b16 %v2544
        %v3826 = vunpack.c.l.b16 %v2558
        %v3827 = vunpack.c.l.b16 %v2572
        %v3828 = vunpack.c.l.b16 %v2586
        %v3829 = vunpack.c.l.b16 %v2600
        %v3830 = vunpack.c.l.b16 %v2614
        %v3831 = vunpack.c.l.b16 %v2628
        %v3832 = vunpack.c.l.b16 %v2642
        %v3833 = vunpack.c.l.b16 %v2656
        %v3834 = vunpack.c.l.b16 %v2670
        %v3835 = vunpack.c.l.b16 %v2684
        %v3836 = vunpack.c.l.b16 %v2698
        %v3837 = vunpack.c.l.b16 %v2712
        %v3838 = vunpack.c.l.b16 %v2726
        %v3839 = vunpack.c.l.b16 %v2740
        %v3840 = vunpack.c.l.b16 %v2754
        %v3841 = vunpack.c.l.b16 %v2768
        %v3842 = vunpack.c.l.b16 %v2782
        %v3843 = vunpack.c.l.b16 %v2796
        %v3844 = vunpack.c.l.b16 %v2810
        %v3845 = vunpack.c.l.b16 %v2824
        %v3846 = vunpack.c.l.b16 %v2838
        %v3847 = vunpack.c.l.b16 %v2852
        %v3848 = vunpack.c.l.b16 %v2866
        %v3849 = vunpack.c.l.b16 %v2880
        %v3850 = vunpack.c.l.b16 %v2894
        %v3851 = vunpack.c.l.b16 %v2908
        %v3852 = vunpack.c.l.b16 %v2922
        %v3853 = vunpack.c.l.b16 %v2936
        %v3854 = vunpack.c.l.b16 %v2950
        %v3855 = vunpack.c.l.b16 %v2964
        %v3856 = vunpack.c.l.b16 %v2978
        %v3857 = vunpack.c.l.b16 %v2992
        %v3858 = vunpack.c.l.b16 %v3006
        %v3859 = vunpack.c.l.b16 %v3020
        %v3860 = vunpack.c.l.b16 %v3034
        %v3861 = vunpack.c.l.b16 %v3048
        %v3862 = vunpack.c.l.b16 %v3062
        %v3863 = vunpack.c.l.b16 %v3076
        %v3864 = vunpack.c.l.b16 %v3090
        %v3865 = vunpack.c.l.b16 %v3104
        %v3866 = vunpack.c.l.b16 %v3118
        %v3867 = vunpack.c.l.b16 %v3132
        %v3868 = vunpack.c.l.b16 %v3146
        %v3869 = vunpack.c.l.b16 %v3160
        %v3870 = vunpack.c.l.b16 %v3174
        %v3871 = vunpack.c.l.b16 %v3188
        %v3872 = vunpack.c.l.b16 %v3202
        %v3873 = vunpack.c.l.b16 %v3216
        %v3874 = vunpack.c.l.b16 %v3230
        %v3875 = vunpack.c.l.b16 %v3244
        %v3876 = vunpack.c.l.b16 %v3258
        %v3877 = vunpack.c.l.b16 %v3272
        %v3878 = vunpack.c.l.b16 %v3286
        %v3879 = vunpack.c.l.b16 %v3300
        %v3880 = vpack.c.b16 %v3817, %v3816
        %v3881 = vpack.c.b16 %v3819, %v3818
        %v3882 = vpack.c.b16 %v3821, %v3820
        %v3883 = vpack.c.b16 %v3823, %v3822
        %v3884 = vpack.c.b16 %v3825, %v3824
        %v3885 = vpack.c.b16 %v3827, %v3826
        %v3886 = vpack.c.b16 %v3829, %v3828
        %v3887 = vpack.c.b16 %v3831, %v3830
        %v3888 = vpack.c.b16 %v3833, %v3832
        %v3889 = vpack.c.b16 %v3835, %v3834
        %v3890 = vpack.c.b16 %v3837, %v3836
        %v3891 = vpack.c.b16 %v3839, %v3838
        %v3892 = vpack.c.b16 %v3841, %v3840
        %v3893 = vpack.c.b16 %v3843, %v3842
        %v3894 = vpack.c.b16 %v3845, %v3844
        %v3895 = vpack.c.b16 %v3847, %v3846
        %v3896 = vpack.c.b16 %v3849, %v3848
        %v3897 = vpack.c.b16 %v3851, %v3850
        %v3898 = vpack.c.b16 %v3853, %v3852
        %v3899 = vpack.c.b16 %v3855, %v3854
        %v3900 = vpack.c.b16 %v3857, %v3856
        %v3901 = vpack.c.b16 %v3859, %v3858
        %v3902 = vpack.c.b16 %v3861, %v3860
        %v3903 = vpack.c.b16 %v3863, %v3862
        %v3904 = vpack.c.b16 %v3865, %v3864
        %v3905 = vpack.c.b16 %v3867, %v3866
        %v3906 = vpack.c.b16 %v3869, %v3868
        %v3907 = vpack.c.b16 %v3871, %v3870
        %v3908 = vpack.c.b16 %v3873, %v3872
        %v3909 = vpack.c.b16 %v3875, %v3874
        %v3910 = vpack.c.b16 %v3877, %v3876
        %v3911 = vpack.c.b16 %v3879, %v3878
        %v3944 = vunpack.c.l.b16 %v3435
        %v3945 = vunpack.c.l.b16 %v3439
        %v3946 = vunpack.c.l.b16 %v3443
        %v3947 = vunpack.c.l.b16 %v3447
        %v3948 = vunpack.c.l.b16 %v3451
        %v3949 = vunpack.c.l.b16 %v3455
        %v3950 = vunpack.c.l.b16 %v3459
        %v3951 = vunpack.c.l.b16 %v3463
        %v3952 = vunpack.c.l.b16 %v3467
        %v3953 = vunpack.c.l.b16 %v3471
        %v3954 = vunpack.c.l.b16 %v3475
        %v3955 = vunpack.c.l.b16 %v3479
        %v3956 = vunpack.c.l.b16 %v3483
        %v3957 = vunpack.c.l.b16 %v3487
        %v3958 = vunpack.c.l.b16 %v3491
        %v3959 = vunpack.c.l.b16 %v3495
        %v3960 = vunpack.c.l.b16 %v3499
        %v3961 = vunpack.c.l.b16 %v3503
        %v3962 = vunpack.c.l.b16 %v3507
        %v3963 = vunpack.c.l.b16 %v3511
        %v3964 = vunpack.c.l.b16 %v3515
        %v3965 = vunpack.c.l.b16 %v3519
        %v3966 = vunpack.c.l.b16 %v3523
        %v3967 = vunpack.c.l.b16 %v3527
        %v3968 = vunpack.c.l.b16 %v3531
        %v3969 = vunpack.c.l.b16 %v3535
        %v3970 = vunpack.c.l.b16 %v3539
        %v3971 = vunpack.c.l.b16 %v3543
        %v3972 = vunpack.c.l.b16 %v3547
        %v3973 = vunpack.c.l.b16 %v3551
        %v3974 = vunpack.c.l.b16 %v3555
        %v3975 = vunpack.c.l.b16 %v3559
        %v3976 = vunpack.c.l.b16 %v3563
        %v3977 = vunpack.c.l.b16 %v3567
        %v3978 = vunpack.c.l.b16 %v3571
        %v3979 = vunpack.c.l.b16 %v3575
        %v3980 = vunpack.c.l.b16 %v3579
        %v3981 = vunpack.c.l.b16 %v3583
        %v3982 = vunpack.c.l.b16 %v3587
        %v3983 = vunpack.c.l.b16 %v3591
        %v3984 = vunpack.c.l.b16 %v3595
        %v3985 = vunpack.c.l.b16 %v3599
        %v3986 = vunpack.c.l.b16 %v3603
        %v3987 = vunpack.c.l.b16 %v3607
        %v3988 = vunpack.c.l.b16 %v3611
        %v3989 = vunpack.c.l.b16 %v3615
        %v3990 = vunpack.c.l.b16 %v3619
        %v3991 = vunpack.c.l.b16 %v3623
        %v3992 = vunpack.c.l.b16 %v3627
        %v3993 = vunpack.c.l.b16 %v3631
        %v3994 = vunpack.c.l.b16 %v3635
        %v3995 = vunpack.c.l.b16 %v3639
        %v3996 = vunpack.c.l.b16 %v3643
        %v3997 = vunpack.c.l.b16 %v3647
        %v3998 = vunpack.c.l.b16 %v3651
        %v3999 = vunpack.c.l.b16 %v3655
        %v4000 = vunpack.c.l.b16 %v3659
        %v4001 = vunpack.c.l.b16 %v3663
        %v4002 = vunpack.c.l.b16 %v3667
        %v4003 = vunpack.c.l.b16 %v3671
        %v4004 = vunpack.c.l.b16 %v3675
        %v4005 = vunpack.c.l.b16 %v3679
        %v4006 = vunpack.c.l.b16 %v3683
        %v4007 = vunpack.c.l.b16 %v3687
        %v4008 = vpack.c.b16 %v3945, %v3944
        %v4009 = vpack.c.b16 %v3947, %v3946
        %v4010 = vpack.c.b16 %v3949, %v3948
        %v4011 = vpack.c.b16 %v3951, %v3950
        %v4012 = vpack.c.b16 %v3953, %v3952
        %v4013 = vpack.c.b16 %v3955, %v3954
        %v4014 = vpack.c.b16 %v3957, %v3956
        %v4015 = vpack.c.b16 %v3959, %v3958
        %v4016 = vpack.c.b16 %v3961, %v3960
        %v4017 = vpack.c.b16 %v3963, %v3962
        %v4018 = vpack.c.b16 %v3965, %v3964
        %v4019 = vpack.c.b16 %v3967, %v3966
        %v4020 = vpack.c.b16 %v3969, %v3968
        %v4021 = vpack.c.b16 %v3971, %v3970
        %v4022 = vpack.c.b16 %v3973, %v3972
        %v4023 = vpack.c.b16 %v3975, %v3974
        %v4024 = vpack.c.b16 %v3977, %v3976
        %v4025 = vpack.c.b16 %v3979, %v3978
        %v4026 = vpack.c.b16 %v3981, %v3980
        %v4027 = vpack.c.b16 %v3983, %v3982
        %v4028 = vpack.c.b16 %v3985, %v3984
        %v4029 = vpack.c.b16 %v3987, %v3986
        %v4030 = vpack.c.b16 %v3989, %v3988
        %v4031 = vpack.c.b16 %v3991, %v3990
        %v4032 = vpack.c.b16 %v3993, %v3992
        %v4033 = vpack.c.b16 %v3995, %v3994
        %v4034 = vpack.c.b16 %v3997, %v3996
        %v4035 = vpack.c.b16 %v3999, %v3998
        %v4036 = vpack.c.b16 %v4001, %v4000
        %v4037 = vpack.c.b16 %v4003, %v4002
        %v4038 = vpack.c.b16 %v4005, %v4004
        %v4039 = vpack.c.b16 %v4007, %v4006
        %v4072 = vld [vmem:[#allocation8] sm:$0xf]
        %v4073 = vld [vmem:[#allocation8 + $0x4] sm:$0xf]
        %v4074 = vld [vmem:[#allocation8 + $0x8] sm:$0xf]
        %v4075 = vld [vmem:[#allocation8 + $0xc] sm:$0xf]
        %v4076 = vld [vmem:[#allocation8 + $0x10] sm:$0xf]
        %v4077 = vld [vmem:[#allocation8 + $0x14] sm:$0xf]
        %v4078 = vld [vmem:[#allocation8 + $0x18] sm:$0xf]
        %v4079 = vld [vmem:[#allocation8 + $0x1c] sm:$0xf]
        %v4080 = vld [vmem:[#allocation8 + $0x20] sm:$0xf]
        %v4081 = vld [vmem:[#allocation8 + $0x24] sm:$0xf]
        %v4082 = vld [vmem:[#allocation8 + $0x28] sm:$0xf]
        %v4083 = vld [vmem:[#allocation8 + $0x2c] sm:$0xf]
        %v4084 = vld [vmem:[#allocation8 + $0x30] sm:$0xf]
        %v4085 = vld [vmem:[#allocation8 + $0x34] sm:$0xf]
        %v4086 = vld [vmem:[#allocation8 + $0x38] sm:$0xf]
        %v4087 = vld [vmem:[#allocation8 + $0x3c] sm:$0xf]
        %v4088 = vld [vmem:[#allocation8 + $0x40] sm:$0xf]
        %v4089 = vld [vmem:[#allocation8 + $0x44] sm:$0xf]
        %v4090 = vld [vmem:[#allocation8 + $0x48] sm:$0xf]
        %v4091 = vld [vmem:[#allocation8 + $0x4c] sm:$0xf]
        %v4092 = vld [vmem:[#allocation8 + $0x50] sm:$0xf]
        %v4093 = vld [vmem:[#allocation8 + $0x54] sm:$0xf]
        %v4094 = vld [vmem:[#allocation8 + $0x58] sm:$0xf]
        %v4095 = vld [vmem:[#allocation8 + $0x5c] sm:$0xf]
        %v4096 = vld [vmem:[#allocation8 + $0x60] sm:$0xf]
        %v4097 = vld [vmem:[#allocation8 + $0x64] sm:$0xf]
        %v4098 = vld [vmem:[#allocation8 + $0x68] sm:$0xf]
        %v4099 = vld [vmem:[#allocation8 + $0x6c] sm:$0xf]
        %v4100 = vld [vmem:[#allocation8 + $0x70] sm:$0xf]
        %v4101 = vld [vmem:[#allocation8 + $0x74] sm:$0xf]
        %v4102 = vld [vmem:[#allocation8 + $0x78] sm:$0xf]
        %v4103 = vld [vmem:[#allocation8 + $0x7c] sm:$0xf]
        %v4104 = vld [vmem:[#allocation8 + $0x80] sm:$0xf]
        %v4105 = vld [vmem:[#allocation8 + $0x84] sm:$0xf]
        %v4106 = vld [vmem:[#allocation8 + $0x88] sm:$0xf]
        %v4107 = vld [vmem:[#allocation8 + $0x8c] sm:$0xf]
        %v4108 = vld [vmem:[#allocation8 + $0x90] sm:$0xf]
        %v4109 = vld [vmem:[#allocation8 + $0x94] sm:$0xf]
        %v4110 = vld [vmem:[#allocation8 + $0x98] sm:$0xf]
        %v4111 = vld [vmem:[#allocation8 + $0x9c] sm:$0xf]
        %v4112 = vld [vmem:[#allocation8 + $0xa0] sm:$0xf]
        %v4113 = vld [vmem:[#allocation8 + $0xa4] sm:$0xf]
        %v4114 = vld [vmem:[#allocation8 + $0xa8] sm:$0xf]
        %v4115 = vld [vmem:[#allocation8 + $0xac] sm:$0xf]
        %v4116 = vld [vmem:[#allocation8 + $0xb0] sm:$0xf]
        %v4117 = vld [vmem:[#allocation8 + $0xb4] sm:$0xf]
        %v4118 = vld [vmem:[#allocation8 + $0xb8] sm:$0xf]
        %v4119 = vld [vmem:[#allocation8 + $0xbc] sm:$0xf]
        %v4121 = vshrl.u32 %v2218, 16
        %v4123 = vrot.slane %v4121, 4
        %v4124 = vshll.u32 %v2218, 16
        %v4126 = vrot.slane %v4124, 5
        %v4127 = vor.u32 %v4123, %v4126
        %v4128 = vrot.slane %v4127, 4
        %v4130 = vshll.u32 %v2219, 16
        %v4132 = vrot.slane %v4130, 5
        %v4133 = vsel %vm2404, %v4128, %v4132
        %v4135 = vshrl.u32 %v2238, 16
        %v4137 = vrot.slane %v4135, 4
        %v4138 = vshll.u32 %v2238, 16
        %v4140 = vrot.slane %v4138, 5
        %v4141 = vor.u32 %v4137, %v4140
        %v4142 = vrot.slane %v4141, 4
        %v4144 = vshll.u32 %v2239, 16
        %v4146 = vrot.slane %v4144, 5
        %v4147 = vsel %vm2404, %v4142, %v4146
        %v4149 = vshrl.u32 %v2258, 16
        %v4151 = vrot.slane %v4149, 4
        %v4152 = vshll.u32 %v2258, 16
        %v4154 = vrot.slane %v4152, 5
        %v4155 = vor.u32 %v4151, %v4154
        %v4156 = vrot.slane %v4155, 4
        %v4158 = vshll.u32 %v2259, 16
        %v4160 = vrot.slane %v4158, 5
        %v4161 = vsel %vm2404, %v4156, %v4160
        %v4163 = vshrl.u32 %v2278, 16
        %v4165 = vrot.slane %v4163, 4
        %v4166 = vshll.u32 %v2278, 16
        %v4168 = vrot.slane %v4166, 5
        %v4169 = vor.u32 %v4165, %v4168
        %v4170 = vrot.slane %v4169, 4
        %v4172 = vshll.u32 %v2279, 16
        %v4174 = vrot.slane %v4172, 5
        %v4175 = vsel %vm2404, %v4170, %v4174
        %v4177 = vshrl.u32 %v2298, 16
        %v4179 = vrot.slane %v4177, 4
        %v4180 = vshll.u32 %v2298, 16
        %v4182 = vrot.slane %v4180, 5
        %v4183 = vor.u32 %v4179, %v4182
        %v4184 = vrot.slane %v4183, 4
        %v4186 = vshll.u32 %v2299, 16
        %v4188 = vrot.slane %v4186, 5
        %v4189 = vsel %vm2404, %v4184, %v4188
        %v4191 = vshrl.u32 %v2318, 16
        %v4193 = vrot.slane %v4191, 4
        %v4194 = vshll.u32 %v2318, 16
        %v4196 = vrot.slane %v4194, 5
        %v4197 = vor.u32 %v4193, %v4196
        %v4198 = vrot.slane %v4197, 4
        %v4200 = vshll.u32 %v2319, 16
        %v4202 = vrot.slane %v4200, 5
        %v4203 = vsel %vm2404, %v4198, %v4202
        %v4205 = vshrl.u32 %v2338, 16
        %v4207 = vrot.slane %v4205, 4
        %v4208 = vshll.u32 %v2338, 16
        %v4210 = vrot.slane %v4208, 5
        %v4211 = vor.u32 %v4207, %v4210
        %v4212 = vrot.slane %v4211, 4
        %v4214 = vshll.u32 %v2339, 16
        %v4216 = vrot.slane %v4214, 5
        %v4217 = vsel %vm2404, %v4212, %v4216
        %v4219 = vshrl.u32 %v2358, 16
        %v4221 = vrot.slane %v4219, 4
        %v4222 = vshll.u32 %v2358, 16
        %v4224 = vrot.slane %v4222, 5
        %v4225 = vor.u32 %v4221, %v4224
        %v4226 = vrot.slane %v4225, 4
        %v4228 = vshll.u32 %v2359, 16
        %v4230 = vrot.slane %v4228, 5
        %v4231 = vsel %vm2404, %v4226, %v4230
        %v4248 = vrot.slane %v2218, 5
        %v4249 = vrot.slane %v4248, 4
        %v4250 = vrot.slane %v2219, 5
        %v4251 = vsel %vm3431, %v4249, %v4250
        %v4252 = vrot.slane %v2238, 5
        %v4253 = vrot.slane %v4252, 4
        %v4254 = vrot.slane %v2239, 5
        %v4255 = vsel %vm3431, %v4253, %v4254
        %v4256 = vrot.slane %v2258, 5
        %v4257 = vrot.slane %v4256, 4
        %v4258 = vrot.slane %v2259, 5
        %v4259 = vsel %vm3431, %v4257, %v4258
        %v4260 = vrot.slane %v2278, 5
        %v4261 = vrot.slane %v4260, 4
        %v4262 = vrot.slane %v2279, 5
        %v4263 = vsel %vm3431, %v4261, %v4262
        %v4264 = vrot.slane %v2298, 5
        %v4265 = vrot.slane %v4264, 4
        %v4266 = vrot.slane %v2299, 5
        %v4267 = vsel %vm3431, %v4265, %v4266
        %v4268 = vrot.slane %v2318, 5
        %v4269 = vrot.slane %v4268, 4
        %v4270 = vrot.slane %v2319, 5
        %v4271 = vsel %vm3431, %v4269, %v4270
        %v4272 = vrot.slane %v2338, 5
        %v4273 = vrot.slane %v4272, 4
        %v4274 = vrot.slane %v2339, 5
        %v4275 = vsel %vm3431, %v4273, %v4274
        %v4276 = vrot.slane %v2358, 5
        %v4277 = vrot.slane %v4276, 4
        %v4278 = vrot.slane %v2359, 5
        %v4279 = vsel %vm3431, %v4277, %v4278
        %v4280 = vunpack.c.l.b16 %v2218
        %v4281 = vunpack.c.l.b16 %v2238
        %v4282 = vunpack.c.l.b16 %v2258
        %v4283 = vunpack.c.l.b16 %v2278
        %v4284 = vunpack.c.l.b16 %v2298
        %v4285 = vunpack.c.l.b16 %v2318
        %v4286 = vunpack.c.l.b16 %v2338
        %v4287 = vunpack.c.l.b16 %v2358
        %v4288 = vpack.c.b16 %v3690, %v3689
        %v4289 = vpack.c.b16 %v3692, %v3691
        %v4290 = vpack.c.b16 %v3694, %v3693
        %v4291 = vpack.c.b16 %v4280, %v3695
        %v4292 = vpack.c.b16 %v3698, %v3697
        %v4293 = vpack.c.b16 %v3700, %v3699
        %v4294 = vpack.c.b16 %v3702, %v3701
        %v4295 = vpack.c.b16 %v4281, %v3703
        %v4296 = vpack.c.b16 %v3706, %v3705
        %v4297 = vpack.c.b16 %v3708, %v3707
        %v4298 = vpack.c.b16 %v3710, %v3709
        %v4299 = vpack.c.b16 %v4282, %v3711
        %v4300 = vpack.c.b16 %v3714, %v3713
        %v4301 = vpack.c.b16 %v3716, %v3715
        %v4302 = vpack.c.b16 %v3718, %v3717
        %v4303 = vpack.c.b16 %v4283, %v3719
        %v4304 = vpack.c.b16 %v3722, %v3721
        %v4305 = vpack.c.b16 %v3724, %v3723
        %v4306 = vpack.c.b16 %v3726, %v3725
        %v4307 = vpack.c.b16 %v4284, %v3727
        %v4308 = vpack.c.b16 %v3730, %v3729
        %v4309 = vpack.c.b16 %v3732, %v3731
        %v4310 = vpack.c.b16 %v3734, %v3733
        %v4311 = vpack.c.b16 %v4285, %v3735
        %v4312 = vpack.c.b16 %v3738, %v3737
        %v4313 = vpack.c.b16 %v3740, %v3739
        %v4314 = vpack.c.b16 %v3742, %v3741
        %v4315 = vpack.c.b16 %v4286, %v3743
        %v4316 = vpack.c.b16 %v3746, %v3745
        %v4317 = vpack.c.b16 %v3748, %v3747
        %v4318 = vpack.c.b16 %v3750, %v3749
        %v4319 = vpack.c.b16 %v4287, %v3751
        %v4352 = vunpack.c.l.b16 %v4133
        %v4353 = vunpack.c.l.b16 %v4147
        %v4354 = vunpack.c.l.b16 %v4161
        %v4355 = vunpack.c.l.b16 %v4175
        %v4356 = vunpack.c.l.b16 %v4189
        %v4357 = vunpack.c.l.b16 %v4203
        %v4358 = vunpack.c.l.b16 %v4217
        %v4359 = vunpack.c.l.b16 %v4231
        %v4360 = vpack.c.b16 %v3818, %v3817
        %v4361 = vpack.c.b16 %v3820, %v3819
        %v4362 = vpack.c.b16 %v3822, %v3821
        %v4363 = vpack.c.b16 %v4352, %v3823
        %v4364 = vpack.c.b16 %v3826, %v3825
        %v4365 = vpack.c.b16 %v3828, %v3827
        %v4366 = vpack.c.b16 %v3830, %v3829
        %v4367 = vpack.c.b16 %v4353, %v3831
        %v4368 = vpack.c.b16 %v3834, %v3833
        %v4369 = vpack.c.b16 %v3836, %v3835
        %v4370 = vpack.c.b16 %v3838, %v3837
        %v4371 = vpack.c.b16 %v4354, %v3839
        %v4372 = vpack.c.b16 %v3842, %v3841
        %v4373 = vpack.c.b16 %v3844, %v3843
        %v4374 = vpack.c.b16 %v3846, %v3845
        %v4375 = vpack.c.b16 %v4355, %v3847
        %v4376 = vpack.c.b16 %v3850, %v3849
        %v4377 = vpack.c.b16 %v3852, %v3851
        %v4378 = vpack.c.b16 %v3854, %v3853
        %v4379 = vpack.c.b16 %v4356, %v3855
        %v4380 = vpack.c.b16 %v3858, %v3857
        %v4381 = vpack.c.b16 %v3860, %v3859
        %v4382 = vpack.c.b16 %v3862, %v3861
        %v4383 = vpack.c.b16 %v4357, %v3863
        %v4384 = vpack.c.b16 %v3866, %v3865
        %v4385 = vpack.c.b16 %v3868, %v3867
        %v4386 = vpack.c.b16 %v3870, %v3869
        %v4387 = vpack.c.b16 %v4358, %v3871
        %v4388 = vpack.c.b16 %v3874, %v3873
        %v4389 = vpack.c.b16 %v3876, %v3875
        %v4390 = vpack.c.b16 %v3878, %v3877
        %v4391 = vpack.c.b16 %v4359, %v3879
        %v4424 = vunpack.c.l.b16 %v4251
        %v4425 = vunpack.c.l.b16 %v4255
        %v4426 = vunpack.c.l.b16 %v4259
        %v4427 = vunpack.c.l.b16 %v4263
        %v4428 = vunpack.c.l.b16 %v4267
        %v4429 = vunpack.c.l.b16 %v4271
        %v4430 = vunpack.c.l.b16 %v4275
        %v4431 = vunpack.c.l.b16 %v4279
        %v4432 = vpack.c.b16 %v3946, %v3945
        %v4433 = vpack.c.b16 %v3948, %v3947
        %v4434 = vpack.c.b16 %v3950, %v3949
        %v4435 = vpack.c.b16 %v4424, %v3951
        %v4436 = vpack.c.b16 %v3954, %v3953
        %v4437 = vpack.c.b16 %v3956, %v3955
        %v4438 = vpack.c.b16 %v3958, %v3957
        %v4439 = vpack.c.b16 %v4425, %v3959
        %v4440 = vpack.c.b16 %v3962, %v3961
        %v4441 = vpack.c.b16 %v3964, %v3963
        %v4442 = vpack.c.b16 %v3966, %v3965
        %v4443 = vpack.c.b16 %v4426, %v3967
        %v4444 = vpack.c.b16 %v3970, %v3969
        %v4445 = vpack.c.b16 %v3972, %v3971
        %v4446 = vpack.c.b16 %v3974, %v3973
        %v4447 = vpack.c.b16 %v4427, %v3975
        %v4448 = vpack.c.b16 %v3978, %v3977
        %v4449 = vpack.c.b16 %v3980, %v3979
        %v4450 = vpack.c.b16 %v3982, %v3981
        %v4451 = vpack.c.b16 %v4428, %v3983
        %v4452 = vpack.c.b16 %v3986, %v3985
        %v4453 = vpack.c.b16 %v3988, %v3987
        %v4454 = vpack.c.b16 %v3990, %v3989
        %v4455 = vpack.c.b16 %v4429, %v3991
        %v4456 = vpack.c.b16 %v3994, %v3993
        %v4457 = vpack.c.b16 %v3996, %v3995
        %v4458 = vpack.c.b16 %v3998, %v3997
        %v4459 = vpack.c.b16 %v4430, %v3999
        %v4460 = vpack.c.b16 %v4002, %v4001
        %v4461 = vpack.c.b16 %v4004, %v4003
        %v4462 = vpack.c.b16 %v4006, %v4005
        %v4463 = vpack.c.b16 %v4431, %v4007
        %s4496 = scalar_lea.vmem [#allocation8], 192
        %v4497 = vld [vmem:[%s4496] sm:$0xf]
        %v4498 = vld [vmem:[%s4496 + $0x4] sm:$0xf]
        %v4499 = vld [vmem:[%s4496 + $0x8] sm:$0xf]
        %v4500 = vld [vmem:[%s4496 + $0xc] sm:$0xf]
        %v4501 = vld [vmem:[%s4496 + $0x10] sm:$0xf]
        %v4502 = vld [vmem:[%s4496 + $0x14] sm:$0xf]
        %v4503 = vld [vmem:[%s4496 + $0x18] sm:$0xf]
        %v4504 = vld [vmem:[%s4496 + $0x1c] sm:$0xf]
        %v4505 = vld [vmem:[%s4496 + $0x20] sm:$0xf]
        %v4506 = vld [vmem:[%s4496 + $0x24] sm:$0xf]
        %v4507 = vld [vmem:[%s4496 + $0x28] sm:$0xf]
        %v4508 = vld [vmem:[%s4496 + $0x2c] sm:$0xf]
        %v4509 = vld [vmem:[%s4496 + $0x30] sm:$0xf]
        %v4510 = vld [vmem:[%s4496 + $0x34] sm:$0xf]
        %v4511 = vld [vmem:[%s4496 + $0x38] sm:$0xf]
        %v4512 = vld [vmem:[%s4496 + $0x3c] sm:$0xf]
        %v4513 = vld [vmem:[%s4496 + $0x40] sm:$0xf]
        %v4514 = vld [vmem:[%s4496 + $0x44] sm:$0xf]
        %v4515 = vld [vmem:[%s4496 + $0x48] sm:$0xf]
        %v4516 = vld [vmem:[%s4496 + $0x4c] sm:$0xf]
        %v4517 = vld [vmem:[%s4496 + $0x50] sm:$0xf]
        %v4518 = vld [vmem:[%s4496 + $0x54] sm:$0xf]
        %v4519 = vld [vmem:[%s4496 + $0x58] sm:$0xf]
        %v4520 = vld [vmem:[%s4496 + $0x5c] sm:$0xf]
        %v4521 = vld [vmem:[%s4496 + $0x60] sm:$0xf]
        %v4522 = vld [vmem:[%s4496 + $0x64] sm:$0xf]
        %v4523 = vld [vmem:[%s4496 + $0x68] sm:$0xf]
        %v4524 = vld [vmem:[%s4496 + $0x6c] sm:$0xf]
        %v4525 = vld [vmem:[%s4496 + $0x70] sm:$0xf]
        %v4526 = vld [vmem:[%s4496 + $0x74] sm:$0xf]
        %v4527 = vld [vmem:[%s4496 + $0x78] sm:$0xf]
        %v4528 = vld [vmem:[%s4496 + $0x7c] sm:$0xf]
        %v4529 = vld [vmem:[%s4496 + $0x80] sm:$0xf]
        %v4530 = vld [vmem:[%s4496 + $0x84] sm:$0xf]
        %v4531 = vld [vmem:[%s4496 + $0x88] sm:$0xf]
        %v4532 = vld [vmem:[%s4496 + $0x8c] sm:$0xf]
        %v4533 = vld [vmem:[%s4496 + $0x90] sm:$0xf]
        %v4534 = vld [vmem:[%s4496 + $0x94] sm:$0xf]
        %v4535 = vld [vmem:[%s4496 + $0x98] sm:$0xf]
        %v4536 = vld [vmem:[%s4496 + $0x9c] sm:$0xf]
        %v4537 = vld [vmem:[%s4496 + $0xa0] sm:$0xf]
        %v4538 = vld [vmem:[%s4496 + $0xa4] sm:$0xf]
        %v4539 = vld [vmem:[%s4496 + $0xa8] sm:$0xf]
        %v4540 = vld [vmem:[%s4496 + $0xac] sm:$0xf]
        %v4541 = vld [vmem:[%s4496 + $0xb0] sm:$0xf]
        %v4542 = vld [vmem:[%s4496 + $0xb4] sm:$0xf]
        %v4543 = vld [vmem:[%s4496 + $0xb8] sm:$0xf]
        %v4544 = vld [vmem:[%s4496 + $0xbc] sm:$0xf]
        %v4593 = vunpack.c.l.b16 %v4497
        %v4594 = vunpack.c.l.b16 %v4498
        %v4595 = vunpack.c.l.b16 %v4499
        %v4596 = vunpack.c.l.b16 %v4500
        %v4597 = vunpack.c.l.b16 %v4501
        %v4598 = vunpack.c.l.b16 %v4502
        %v4599 = vunpack.c.l.b16 %v4503
        %v4600 = vunpack.c.l.b16 %v4504
        %v4601 = vunpack.c.l.b16 %v4505
        %v4602 = vunpack.c.l.b16 %v4506
        %v4603 = vunpack.c.l.b16 %v4507
        %v4604 = vunpack.c.l.b16 %v4508
        %v4605 = vunpack.c.l.b16 %v4509
        %v4606 = vunpack.c.l.b16 %v4510
        %v4607 = vunpack.c.l.b16 %v4511
        %v4608 = vunpack.c.l.b16 %v4512
        %v4609 = vunpack.c.l.b16 %v4513
        %v4610 = vunpack.c.l.b16 %v4514
        %v4611 = vunpack.c.l.b16 %v4515
        %v4612 = vunpack.c.l.b16 %v4516
        %v4613 = vunpack.c.l.b16 %v4517
        %v4614 = vunpack.c.l.b16 %v4518
        %v4615 = vunpack.c.l.b16 %v4519
        %v4616 = vunpack.c.l.b16 %v4520
        %v4617 = vunpack.c.l.b16 %v4521
        %v4618 = vunpack.c.l.b16 %v4522
        %v4619 = vunpack.c.l.b16 %v4523
        %v4620 = vunpack.c.l.b16 %v4524
        %v4621 = vunpack.c.l.b16 %v4525
        %v4622 = vunpack.c.l.b16 %v4526
        %v4623 = vunpack.c.l.b16 %v4527
        %v4624 = vunpack.c.l.b16 %v4528
        %v4625 = vunpack.c.l.b16 %v4529
        %v4626 = vunpack.c.l.b16 %v4530
        %v4627 = vunpack.c.l.b16 %v4531
        %v4628 = vunpack.c.l.b16 %v4532
        %v4629 = vunpack.c.l.b16 %v4533
        %v4630 = vunpack.c.l.b16 %v4534
        %v4631 = vunpack.c.l.b16 %v4535
        %v4632 = vunpack.c.l.b16 %v4536
        %v4633 = vunpack.c.l.b16 %v4537
        %v4634 = vunpack.c.l.b16 %v4538
        %v4635 = vunpack.c.l.b16 %v4539
        %v4636 = vunpack.c.l.b16 %v4540
        %v4637 = vunpack.c.l.b16 %v4541
        %v4638 = vunpack.c.l.b16 %v4542
        %v4639 = vunpack.c.l.b16 %v4543
        %v4640 = vunpack.c.l.b16 %v4544
        %v4641 = vpack.c.b16 %v4594, %v4593
        %v4642 = vpack.c.b16 %v4596, %v4595
        %v4643 = vpack.c.b16 %v4598, %v4597
        %v4644 = vpack.c.b16 %v4600, %v4599
        %v4645 = vpack.c.b16 %v4602, %v4601
        %v4646 = vpack.c.b16 %v4604, %v4603
        %v4647 = vpack.c.b16 %v4606, %v4605
        %v4648 = vpack.c.b16 %v4608, %v4607
        %v4649 = vpack.c.b16 %v4610, %v4609
        %v4650 = vpack.c.b16 %v4612, %v4611
        %v4651 = vpack.c.b16 %v4614, %v4613
        %v4652 = vpack.c.b16 %v4616, %v4615
        %v4653 = vpack.c.b16 %v4618, %v4617
        %v4654 = vpack.c.b16 %v4620, %v4619
        %v4655 = vpack.c.b16 %v4622, %v4621
        %v4656 = vpack.c.b16 %v4624, %v4623
        %v4657 = vpack.c.b16 %v4626, %v4625
        %v4658 = vpack.c.b16 %v4628, %v4627
        %v4659 = vpack.c.b16 %v4630, %v4629
        %v4660 = vpack.c.b16 %v4632, %v4631
        %v4661 = vpack.c.b16 %v4634, %v4633
        %v4662 = vpack.c.b16 %v4636, %v4635
        %v4663 = vpack.c.b16 %v4638, %v4637
        %v4664 = vpack.c.b16 %v4640, %v4639
        %4689 = vmatpush.bf16.msra.mxu0 %v4648
        %4690 = vmatpush.bf16.msra.mxu0 %v4647
        %4691 = vmatpush.bf16.msra.mxu0 %v4646
        %4692 = vmatpush.bf16.msra.mxu0 %v4645
        %4693 = vmatpush.bf16.msra.mxu0 %v4644
        %4694 = vmatpush.bf16.msra.mxu0 %v4643
        %4695 = vmatpush.bf16.msra.mxu0 %v4642
        %4696 = vmatpush.bf16.msra.mxu0 %v4641
        %4697 = vmatmul.bf16.gmra.mxu0 %v4288
        %v4698 = vpop.f32.mrf.mxu0
        %v4699 = vadd.f32 0.0, %v4698
        %v4700 = vpop.f32.mrf.mxu0
        %v4701 = vadd.f32 0.0, %v4700
        %4702 = vmatmul.bf16.gmra.mxu0 %v4289
        %v4703 = vpop.f32.mrf.mxu0
        %v4704 = vadd.f32 0.0, %v4703
        %v4705 = vpop.f32.mrf.mxu0
        %v4706 = vadd.f32 0.0, %v4705
        %4707 = vmatmul.bf16.gmra.mxu0 %v4290
        %v4708 = vpop.f32.mrf.mxu0
        %v4709 = vadd.f32 0.0, %v4708
        %v4710 = vpop.f32.mrf.mxu0
        %v4711 = vadd.f32 0.0, %v4710
        %4712 = vmatmul.bf16.gmra.mxu0 %v4291
        %v4713 = vpop.f32.mrf.mxu0
        %v4714 = vadd.f32 0.0, %v4713
        %v4715 = vpop.f32.mrf.mxu0
        %v4716 = vadd.f32 0.0, %v4715
        %4717 = vmatmul.bf16.gmra.mxu0 %v4292
        %v4718 = vpop.f32.mrf.mxu0
        %v4719 = vadd.f32 0.0, %v4718
        %v4720 = vpop.f32.mrf.mxu0
        %v4721 = vadd.f32 0.0, %v4720
        %4722 = vmatmul.bf16.gmra.mxu0 %v4293
        %v4723 = vpop.f32.mrf.mxu0
        %v4724 = vadd.f32 0.0, %v4723
        %v4725 = vpop.f32.mrf.mxu0
        %v4726 = vadd.f32 0.0, %v4725
        %4727 = vmatmul.bf16.gmra.mxu0 %v4294
        %v4728 = vpop.f32.mrf.mxu0
        %v4729 = vadd.f32 0.0, %v4728
        %v4730 = vpop.f32.mrf.mxu0
        %v4731 = vadd.f32 0.0, %v4730
        %4732 = vmatmul.bf16.gmra.mxu0 %v4295
        %v4733 = vpop.f32.mrf.mxu0
        %v4734 = vadd.f32 0.0, %v4733
        %v4735 = vpop.f32.mrf.mxu0
        %v4736 = vadd.f32 0.0, %v4735
        %4737 = vmatmul.bf16.gmra.mxu0 %v4296
        %v4738 = vpop.f32.mrf.mxu0
        %v4739 = vadd.f32 0.0, %v4738
        %v4740 = vpop.f32.mrf.mxu0
        %v4741 = vadd.f32 0.0, %v4740
        %4742 = vmatmul.bf16.gmra.mxu0 %v4297
        %v4743 = vpop.f32.mrf.mxu0
        %v4744 = vadd.f32 0.0, %v4743
        %v4745 = vpop.f32.mrf.mxu0
        %v4746 = vadd.f32 0.0, %v4745
        %4747 = vmatmul.bf16.gmra.mxu0 %v4298
        %v4748 = vpop.f32.mrf.mxu0
        %v4749 = vadd.f32 0.0, %v4748
        %v4750 = vpop.f32.mrf.mxu0
        %v4751 = vadd.f32 0.0, %v4750
        %4752 = vmatmul.bf16.gmra.mxu0 %v4299
        %v4753 = vpop.f32.mrf.mxu0
        %v4754 = vadd.f32 0.0, %v4753
        %v4755 = vpop.f32.mrf.mxu0
        %v4756 = vadd.f32 0.0, %v4755
        %4757 = vmatmul.bf16.gmra.mxu0 %v4300
        %v4758 = vpop.f32.mrf.mxu0
        %v4759 = vadd.f32 0.0, %v4758
        %v4760 = vpop.f32.mrf.mxu0
        %v4761 = vadd.f32 0.0, %v4760
        %4762 = vmatmul.bf16.gmra.mxu0 %v4301
        %v4763 = vpop.f32.mrf.mxu0
        %v4764 = vadd.f32 0.0, %v4763
        %v4765 = vpop.f32.mrf.mxu0
        %v4766 = vadd.f32 0.0, %v4765
        %4767 = vmatmul.bf16.gmra.mxu0 %v4302
        %v4768 = vpop.f32.mrf.mxu0
        %v4769 = vadd.f32 0.0, %v4768
        %v4770 = vpop.f32.mrf.mxu0
        %v4771 = vadd.f32 0.0, %v4770
        %4772 = vmatmul.bf16.gmra.mxu0 %v4303
        %v4773 = vpop.f32.mrf.mxu0
        %v4774 = vadd.f32 0.0, %v4773
        %v4775 = vpop.f32.mrf.mxu0
        %v4776 = vadd.f32 0.0, %v4775
        %4777 = vmatmul.bf16.gmra.mxu0 %v4304
        %v4778 = vpop.f32.mrf.mxu0
        %v4779 = vadd.f32 0.0, %v4778
        %v4780 = vpop.f32.mrf.mxu0
        %v4781 = vadd.f32 0.0, %v4780
        %4782 = vmatmul.bf16.gmra.mxu0 %v4305
        %v4783 = vpop.f32.mrf.mxu0
        %v4784 = vadd.f32 0.0, %v4783
        %v4785 = vpop.f32.mrf.mxu0
        %v4786 = vadd.f32 0.0, %v4785
        %4787 = vmatmul.bf16.gmra.mxu0 %v4306
        %v4788 = vpop.f32.mrf.mxu0
        %v4789 = vadd.f32 0.0, %v4788
        %v4790 = vpop.f32.mrf.mxu0
        %v4791 = vadd.f32 0.0, %v4790
        %4792 = vmatmul.bf16.gmra.mxu0 %v4307
        %v4793 = vpop.f32.mrf.mxu0
        %v4794 = vadd.f32 0.0, %v4793
        %v4795 = vpop.f32.mrf.mxu0
        %v4796 = vadd.f32 0.0, %v4795
        %4797 = vmatmul.bf16.gmra.mxu0 %v4308
        %v4798 = vpop.f32.mrf.mxu0
        %v4799 = vadd.f32 0.0, %v4798
        %v4800 = vpop.f32.mrf.mxu0
        %v4801 = vadd.f32 0.0, %v4800
        %4802 = vmatmul.bf16.gmra.mxu0 %v4309
        %v4803 = vpop.f32.mrf.mxu0
        %v4804 = vadd.f32 0.0, %v4803
        %v4805 = vpop.f32.mrf.mxu0
        %v4806 = vadd.f32 0.0, %v4805
        %4807 = vmatmul.bf16.gmra.mxu0 %v4310
        %v4808 = vpop.f32.mrf.mxu0
        %v4809 = vadd.f32 0.0, %v4808
        %v4810 = vpop.f32.mrf.mxu0
        %v4811 = vadd.f32 0.0, %v4810
        %4812 = vmatmul.bf16.gmra.mxu0 %v4311
        %v4813 = vpop.f32.mrf.mxu0
        %v4814 = vadd.f32 0.0, %v4813
        %v4815 = vpop.f32.mrf.mxu0
        %v4816 = vadd.f32 0.0, %v4815
        %4817 = vmatmul.bf16.gmra.mxu0 %v4312
        %v4818 = vpop.f32.mrf.mxu0
        %v4819 = vadd.f32 0.0, %v4818
        %v4820 = vpop.f32.mrf.mxu0
        %v4821 = vadd.f32 0.0, %v4820
        %4822 = vmatmul.bf16.gmra.mxu0 %v4313
        %v4823 = vpop.f32.mrf.mxu0
        %v4824 = vadd.f32 0.0, %v4823
        %v4825 = vpop.f32.mrf.mxu0
        %v4826 = vadd.f32 0.0, %v4825
        %4827 = vmatmul.bf16.gmra.mxu0 %v4314
        %v4828 = vpop.f32.mrf.mxu0
        %v4829 = vadd.f32 0.0, %v4828
        %v4830 = vpop.f32.mrf.mxu0
        %v4831 = vadd.f32 0.0, %v4830
        %4832 = vmatmul.bf16.gmra.mxu0 %v4315
        %v4833 = vpop.f32.mrf.mxu0
        %v4834 = vadd.f32 0.0, %v4833
        %v4835 = vpop.f32.mrf.mxu0
        %v4836 = vadd.f32 0.0, %v4835
        %4837 = vmatmul.bf16.gmra.mxu0 %v4316
        %v4838 = vpop.f32.mrf.mxu0
        %v4839 = vadd.f32 0.0, %v4838
        %v4840 = vpop.f32.mrf.mxu0
        %v4841 = vadd.f32 0.0, %v4840
        %4842 = vmatmul.bf16.gmra.mxu0 %v4317
        %v4843 = vpop.f32.mrf.mxu0
        %v4844 = vadd.f32 0.0, %v4843
        %v4845 = vpop.f32.mrf.mxu0
        %v4846 = vadd.f32 0.0, %v4845
        %4847 = vmatmul.bf16.gmra.mxu0 %v4318
        %v4848 = vpop.f32.mrf.mxu0
        %v4849 = vadd.f32 0.0, %v4848
        %v4850 = vpop.f32.mrf.mxu0
        %v4851 = vadd.f32 0.0, %v4850
        %4852 = vmatmul.bf16.gmra.mxu0 %v4319
        %v4853 = vpop.f32.mrf.mxu0
        %v4854 = vadd.f32 0.0, %v4853
        %v4855 = vpop.f32.mrf.mxu0
        %v4856 = vadd.f32 0.0, %v4855
        %4857 = vdwg.mxu0
        %4858 = vmatpush.bf16.msra.mxu0 %v4656
        %4859 = vmatpush.bf16.msra.mxu0 %v4655
        %4860 = vmatpush.bf16.msra.mxu0 %v4654
        %4861 = vmatpush.bf16.msra.mxu0 %v4653
        %4862 = vmatpush.bf16.msra.mxu0 %v4652
        %4863 = vmatpush.bf16.msra.mxu0 %v4651
        %4864 = vmatpush.bf16.msra.mxu0 %v4650
        %4865 = vmatpush.bf16.msra.mxu0 %v4649
        %4866 = vmatmul.bf16.gmra.mxu0 %v4360
        %v4867 = vpop.f32.mrf.mxu0
        %v4868 = vadd.f32 %v4699, %v4867
        %v4869 = vpop.f32.mrf.mxu0
        %v4870 = vadd.f32 %v4701, %v4869
        %4871 = vmatmul.bf16.gmra.mxu0 %v4361
        %v4872 = vpop.f32.mrf.mxu0
        %v4873 = vadd.f32 %v4704, %v4872
        %v4874 = vpop.f32.mrf.mxu0
        %v4875 = vadd.f32 %v4706, %v4874
        %4876 = vmatmul.bf16.gmra.mxu0 %v4362
        %v4877 = vpop.f32.mrf.mxu0
        %v4878 = vadd.f32 %v4709, %v4877
        %v4879 = vpop.f32.mrf.mxu0
        %v4880 = vadd.f32 %v4711, %v4879
        %4881 = vmatmul.bf16.gmra.mxu0 %v4363
        %v4882 = vpop.f32.mrf.mxu0
        %v4883 = vadd.f32 %v4714, %v4882
        %v4884 = vpop.f32.mrf.mxu0
        %v4885 = vadd.f32 %v4716, %v4884
        %4886 = vmatmul.bf16.gmra.mxu0 %v4364
        %v4887 = vpop.f32.mrf.mxu0
        %v4888 = vadd.f32 %v4719, %v4887
        %v4889 = vpop.f32.mrf.mxu0
        %v4890 = vadd.f32 %v4721, %v4889
        %4891 = vmatmul.bf16.gmra.mxu0 %v4365
        %v4892 = vpop.f32.mrf.mxu0
        %v4893 = vadd.f32 %v4724, %v4892
        %v4894 = vpop.f32.mrf.mxu0
        %v4895 = vadd.f32 %v4726, %v4894
        %4896 = vmatmul.bf16.gmra.mxu0 %v4366
        %v4897 = vpop.f32.mrf.mxu0
        %v4898 = vadd.f32 %v4729, %v4897
        %v4899 = vpop.f32.mrf.mxu0
        %v4900 = vadd.f32 %v4731, %v4899
        %4901 = vmatmul.bf16.gmra.mxu0 %v4367
        %v4902 = vpop.f32.mrf.mxu0
        %v4903 = vadd.f32 %v4734, %v4902
        %v4904 = vpop.f32.mrf.mxu0
        %v4905 = vadd.f32 %v4736, %v4904
        %4906 = vmatmul.bf16.gmra.mxu0 %v4368
        %v4907 = vpop.f32.mrf.mxu0
        %v4908 = vadd.f32 %v4739, %v4907
        %v4909 = vpop.f32.mrf.mxu0
        %v4910 = vadd.f32 %v4741, %v4909
        %4911 = vmatmul.bf16.gmra.mxu0 %v4369
        %v4912 = vpop.f32.mrf.mxu0
        %v4913 = vadd.f32 %v4744, %v4912
        %v4914 = vpop.f32.mrf.mxu0
        %v4915 = vadd.f32 %v4746, %v4914
        %4916 = vmatmul.bf16.gmra.mxu0 %v4370
        %v4917 = vpop.f32.mrf.mxu0
        %v4918 = vadd.f32 %v4749, %v4917
        %v4919 = vpop.f32.mrf.mxu0
        %v4920 = vadd.f32 %v4751, %v4919
        %4921 = vmatmul.bf16.gmra.mxu0 %v4371
        %v4922 = vpop.f32.mrf.mxu0
        %v4923 = vadd.f32 %v4754, %v4922
        %v4924 = vpop.f32.mrf.mxu0
        %v4925 = vadd.f32 %v4756, %v4924
        %4926 = vmatmul.bf16.gmra.mxu0 %v4372
        %v4927 = vpop.f32.mrf.mxu0
        %v4928 = vadd.f32 %v4759, %v4927
        %v4929 = vpop.f32.mrf.mxu0
        %v4930 = vadd.f32 %v4761, %v4929
        %4931 = vmatmul.bf16.gmra.mxu0 %v4373
        %v4932 = vpop.f32.mrf.mxu0
        %v4933 = vadd.f32 %v4764, %v4932
        %v4934 = vpop.f32.mrf.mxu0
        %v4935 = vadd.f32 %v4766, %v4934
        %4936 = vmatmul.bf16.gmra.mxu0 %v4374
        %v4937 = vpop.f32.mrf.mxu0
        %v4938 = vadd.f32 %v4769, %v4937
        %v4939 = vpop.f32.mrf.mxu0
        %v4940 = vadd.f32 %v4771, %v4939
        %4941 = vmatmul.bf16.gmra.mxu0 %v4375
        %v4942 = vpop.f32.mrf.mxu0
        %v4943 = vadd.f32 %v4774, %v4942
        %v4944 = vpop.f32.mrf.mxu0
        %v4945 = vadd.f32 %v4776, %v4944
        %4946 = vmatmul.bf16.gmra.mxu0 %v4376
        %v4947 = vpop.f32.mrf.mxu0
        %v4948 = vadd.f32 %v4779, %v4947
        %v4949 = vpop.f32.mrf.mxu0
        %v4950 = vadd.f32 %v4781, %v4949
        %4951 = vmatmul.bf16.gmra.mxu0 %v4377
        %v4952 = vpop.f32.mrf.mxu0
        %v4953 = vadd.f32 %v4784, %v4952
        %v4954 = vpop.f32.mrf.mxu0
        %v4955 = vadd.f32 %v4786, %v4954
        %4956 = vmatmul.bf16.gmra.mxu0 %v4378
        %v4957 = vpop.f32.mrf.mxu0
        %v4958 = vadd.f32 %v4789, %v4957
        %v4959 = vpop.f32.mrf.mxu0
        %v4960 = vadd.f32 %v4791, %v4959
        %4961 = vmatmul.bf16.gmra.mxu0 %v4379
        %v4962 = vpop.f32.mrf.mxu0
        %v4963 = vadd.f32 %v4794, %v4962
        %v4964 = vpop.f32.mrf.mxu0
        %v4965 = vadd.f32 %v4796, %v4964
        %4966 = vmatmul.bf16.gmra.mxu0 %v4380
        %v4967 = vpop.f32.mrf.mxu0
        %v4968 = vadd.f32 %v4799, %v4967
        %v4969 = vpop.f32.mrf.mxu0
        %v4970 = vadd.f32 %v4801, %v4969
        %4971 = vmatmul.bf16.gmra.mxu0 %v4381
        %v4972 = vpop.f32.mrf.mxu0
        %v4973 = vadd.f32 %v4804, %v4972
        %v4974 = vpop.f32.mrf.mxu0
        %v4975 = vadd.f32 %v4806, %v4974
        %4976 = vmatmul.bf16.gmra.mxu0 %v4382
        %v4977 = vpop.f32.mrf.mxu0
        %v4978 = vadd.f32 %v4809, %v4977
        %v4979 = vpop.f32.mrf.mxu0
        %v4980 = vadd.f32 %v4811, %v4979
        %4981 = vmatmul.bf16.gmra.mxu0 %v4383
        %v4982 = vpop.f32.mrf.mxu0
        %v4983 = vadd.f32 %v4814, %v4982
        %v4984 = vpop.f32.mrf.mxu0
        %v4985 = vadd.f32 %v4816, %v4984
        %4986 = vmatmul.bf16.gmra.mxu0 %v4384
        %v4987 = vpop.f32.mrf.mxu0
        %v4988 = vadd.f32 %v4819, %v4987
        %v4989 = vpop.f32.mrf.mxu0
        %v4990 = vadd.f32 %v4821, %v4989
        %4991 = vmatmul.bf16.gmra.mxu0 %v4385
        %v4992 = vpop.f32.mrf.mxu0
        %v4993 = vadd.f32 %v4824, %v4992
        %v4994 = vpop.f32.mrf.mxu0
        %v4995 = vadd.f32 %v4826, %v4994
        %4996 = vmatmul.bf16.gmra.mxu0 %v4386
        %v4997 = vpop.f32.mrf.mxu0
        %v4998 = vadd.f32 %v4829, %v4997
        %v4999 = vpop.f32.mrf.mxu0
        %v5000 = vadd.f32 %v4831, %v4999
        %5001 = vmatmul.bf16.gmra.mxu0 %v4387
        %v5002 = vpop.f32.mrf.mxu0
        %v5003 = vadd.f32 %v4834, %v5002
        %v5004 = vpop.f32.mrf.mxu0
        %v5005 = vadd.f32 %v4836, %v5004
        %5006 = vmatmul.bf16.gmra.mxu0 %v4388
        %v5007 = vpop.f32.mrf.mxu0
        %v5008 = vadd.f32 %v4839, %v5007
        %v5009 = vpop.f32.mrf.mxu0
        %v5010 = vadd.f32 %v4841, %v5009
        %5011 = vmatmul.bf16.gmra.mxu0 %v4389
        %v5012 = vpop.f32.mrf.mxu0
        %v5013 = vadd.f32 %v4844, %v5012
        %v5014 = vpop.f32.mrf.mxu0
        %v5015 = vadd.f32 %v4846, %v5014
        %5016 = vmatmul.bf16.gmra.mxu0 %v4390
        %v5017 = vpop.f32.mrf.mxu0
        %v5018 = vadd.f32 %v4849, %v5017
        %v5019 = vpop.f32.mrf.mxu0
        %v5020 = vadd.f32 %v4851, %v5019
        %5021 = vmatmul.bf16.gmra.mxu0 %v4391
        %v5022 = vpop.f32.mrf.mxu0
        %v5023 = vadd.f32 %v4854, %v5022
        %v5024 = vpop.f32.mrf.mxu0
        %v5025 = vadd.f32 %v4856, %v5024
        %5026 = vdwg.mxu0
        %5027 = vmatpush.bf16.msra.mxu0 %v4664
        %5028 = vmatpush.bf16.msra.mxu0 %v4663
        %5029 = vmatpush.bf16.msra.mxu0 %v4662
        %5030 = vmatpush.bf16.msra.mxu0 %v4661
        %5031 = vmatpush.bf16.msra.mxu0 %v4660
        %5032 = vmatpush.bf16.msra.mxu0 %v4659
        %5033 = vmatpush.bf16.msra.mxu0 %v4658
        %5034 = vmatpush.bf16.msra.mxu0 %v4657
        %5035 = vmatmul.bf16.gmra.mxu0 %v4432
        %v5036 = vpop.f32.mrf.mxu0
        %v5037 = vadd.f32 %v4868, %v5036
        %v5038 = vpop.f32.mrf.mxu0
        %v5039 = vadd.f32 %v4870, %v5038
        %5040 = vmatmul.bf16.gmra.mxu0 %v4433
        %v5041 = vpop.f32.mrf.mxu0
        %v5042 = vadd.f32 %v4873, %v5041
        %v5043 = vpop.f32.mrf.mxu0
        %v5044 = vadd.f32 %v4875, %v5043
        %5045 = vmatmul.bf16.gmra.mxu0 %v4434
        %v5046 = vpop.f32.mrf.mxu0
        %v5047 = vadd.f32 %v4878, %v5046
        %v5048 = vpop.f32.mrf.mxu0
        %v5049 = vadd.f32 %v4880, %v5048
        %5050 = vmatmul.bf16.gmra.mxu0 %v4435
        %v5051 = vpop.f32.mrf.mxu0
        %v5052 = vadd.f32 %v4883, %v5051
        %v5053 = vpop.f32.mrf.mxu0
        %v5054 = vadd.f32 %v4885, %v5053
        %5055 = vmatmul.bf16.gmra.mxu0 %v4436
        %v5056 = vpop.f32.mrf.mxu0
        %v5057 = vadd.f32 %v4888, %v5056
        %v5058 = vpop.f32.mrf.mxu0
        %v5059 = vadd.f32 %v4890, %v5058
        %5060 = vmatmul.bf16.gmra.mxu0 %v4437
        %v5061 = vpop.f32.mrf.mxu0
        %v5062 = vadd.f32 %v4893, %v5061
        %v5063 = vpop.f32.mrf.mxu0
        %v5064 = vadd.f32 %v4895, %v5063
        %5065 = vmatmul.bf16.gmra.mxu0 %v4438
        %v5066 = vpop.f32.mrf.mxu0
        %v5067 = vadd.f32 %v4898, %v5066
        %v5068 = vpop.f32.mrf.mxu0
        %v5069 = vadd.f32 %v4900, %v5068
        %5070 = vmatmul.bf16.gmra.mxu0 %v4439
        %v5071 = vpop.f32.mrf.mxu0
        %v5072 = vadd.f32 %v4903, %v5071
        %v5073 = vpop.f32.mrf.mxu0
        %v5074 = vadd.f32 %v4905, %v5073
        %5075 = vmatmul.bf16.gmra.mxu0 %v4440
        %v5076 = vpop.f32.mrf.mxu0
        %v5077 = vadd.f32 %v4908, %v5076
        %v5078 = vpop.f32.mrf.mxu0
        %v5079 = vadd.f32 %v4910, %v5078
        %5080 = vmatmul.bf16.gmra.mxu0 %v4441
        %v5081 = vpop.f32.mrf.mxu0
        %v5082 = vadd.f32 %v4913, %v5081
        %v5083 = vpop.f32.mrf.mxu0
        %v5084 = vadd.f32 %v4915, %v5083
        %5085 = vmatmul.bf16.gmra.mxu0 %v4442
        %v5086 = vpop.f32.mrf.mxu0
        %v5087 = vadd.f32 %v4918, %v5086
        %v5088 = vpop.f32.mrf.mxu0
        %v5089 = vadd.f32 %v4920, %v5088
        %5090 = vmatmul.bf16.gmra.mxu0 %v4443
        %v5091 = vpop.f32.mrf.mxu0
        %v5092 = vadd.f32 %v4923, %v5091
        %v5093 = vpop.f32.mrf.mxu0
        %v5094 = vadd.f32 %v4925, %v5093
        %5095 = vmatmul.bf16.gmra.mxu0 %v4444
        %v5096 = vpop.f32.mrf.mxu0
        %v5097 = vadd.f32 %v4928, %v5096
        %v5098 = vpop.f32.mrf.mxu0
        %v5099 = vadd.f32 %v4930, %v5098
        %5100 = vmatmul.bf16.gmra.mxu0 %v4445
        %v5101 = vpop.f32.mrf.mxu0
        %v5102 = vadd.f32 %v4933, %v5101
        %v5103 = vpop.f32.mrf.mxu0
        %v5104 = vadd.f32 %v4935, %v5103
        %5105 = vmatmul.bf16.gmra.mxu0 %v4446
        %v5106 = vpop.f32.mrf.mxu0
        %v5107 = vadd.f32 %v4938, %v5106
        %v5108 = vpop.f32.mrf.mxu0
        %v5109 = vadd.f32 %v4940, %v5108
        %5110 = vmatmul.bf16.gmra.mxu0 %v4447
        %v5111 = vpop.f32.mrf.mxu0
        %v5112 = vadd.f32 %v4943, %v5111
        %v5113 = vpop.f32.mrf.mxu0
        %v5114 = vadd.f32 %v4945, %v5113
        %5115 = vmatmul.bf16.gmra.mxu0 %v4448
        %v5116 = vpop.f32.mrf.mxu0
        %v5117 = vadd.f32 %v4948, %v5116
        %v5118 = vpop.f32.mrf.mxu0
        %v5119 = vadd.f32 %v4950, %v5118
        %5120 = vmatmul.bf16.gmra.mxu0 %v4449
        %v5121 = vpop.f32.mrf.mxu0
        %v5122 = vadd.f32 %v4953, %v5121
        %v5123 = vpop.f32.mrf.mxu0
        %v5124 = vadd.f32 %v4955, %v5123
        %5125 = vmatmul.bf16.gmra.mxu0 %v4450
        %v5126 = vpop.f32.mrf.mxu0
        %v5127 = vadd.f32 %v4958, %v5126
        %v5128 = vpop.f32.mrf.mxu0
        %v5129 = vadd.f32 %v4960, %v5128
        %5130 = vmatmul.bf16.gmra.mxu0 %v4451
        %v5131 = vpop.f32.mrf.mxu0
        %v5132 = vadd.f32 %v4963, %v5131
        %v5133 = vpop.f32.mrf.mxu0
        %v5134 = vadd.f32 %v4965, %v5133
        %5135 = vmatmul.bf16.gmra.mxu0 %v4452
        %v5136 = vpop.f32.mrf.mxu0
        %v5137 = vadd.f32 %v4968, %v5136
        %v5138 = vpop.f32.mrf.mxu0
        %v5139 = vadd.f32 %v4970, %v5138
        %5140 = vmatmul.bf16.gmra.mxu0 %v4453
        %v5141 = vpop.f32.mrf.mxu0
        %v5142 = vadd.f32 %v4973, %v5141
        %v5143 = vpop.f32.mrf.mxu0
        %v5144 = vadd.f32 %v4975, %v5143
        %5145 = vmatmul.bf16.gmra.mxu0 %v4454
        %v5146 = vpop.f32.mrf.mxu0
        %v5147 = vadd.f32 %v4978, %v5146
        %v5148 = vpop.f32.mrf.mxu0
        %v5149 = vadd.f32 %v4980, %v5148
        %5150 = vmatmul.bf16.gmra.mxu0 %v4455
        %v5151 = vpop.f32.mrf.mxu0
        %v5152 = vadd.f32 %v4983, %v5151
        %v5153 = vpop.f32.mrf.mxu0
        %v5154 = vadd.f32 %v4985, %v5153
        %5155 = vmatmul.bf16.gmra.mxu0 %v4456
        %v5156 = vpop.f32.mrf.mxu0
        %v5157 = vadd.f32 %v4988, %v5156
        %v5158 = vpop.f32.mrf.mxu0
        %v5159 = vadd.f32 %v4990, %v5158
        %5160 = vmatmul.bf16.gmra.mxu0 %v4457
        %v5161 = vpop.f32.mrf.mxu0
        %v5162 = vadd.f32 %v4993, %v5161
        %v5163 = vpop.f32.mrf.mxu0
        %v5164 = vadd.f32 %v4995, %v5163
        %5165 = vmatmul.bf16.gmra.mxu0 %v4458
        %v5166 = vpop.f32.mrf.mxu0
        %v5167 = vadd.f32 %v4998, %v5166
        %v5168 = vpop.f32.mrf.mxu0
        %v5169 = vadd.f32 %v5000, %v5168
        %5170 = vmatmul.bf16.gmra.mxu0 %v4459
        %v5171 = vpop.f32.mrf.mxu0
        %v5172 = vadd.f32 %v5003, %v5171
        %v5173 = vpop.f32.mrf.mxu0
        %v5174 = vadd.f32 %v5005, %v5173
        %5175 = vmatmul.bf16.gmra.mxu0 %v4460
        %v5176 = vpop.f32.mrf.mxu0
        %v5177 = vadd.f32 %v5008, %v5176
        %v5178 = vpop.f32.mrf.mxu0
        %v5179 = vadd.f32 %v5010, %v5178
        %5180 = vmatmul.bf16.gmra.mxu0 %v4461
        %v5181 = vpop.f32.mrf.mxu0
        %v5182 = vadd.f32 %v5013, %v5181
        %v5183 = vpop.f32.mrf.mxu0
        %v5184 = vadd.f32 %v5015, %v5183
        %5185 = vmatmul.bf16.gmra.mxu0 %v4462
        %v5186 = vpop.f32.mrf.mxu0
        %v5187 = vadd.f32 %v5018, %v5186
        %v5188 = vpop.f32.mrf.mxu0
        %v5189 = vadd.f32 %v5020, %v5188
        %5190 = vmatmul.bf16.gmra.mxu0 %v4463
        %v5191 = vpop.f32.mrf.mxu0
        %v5192 = vadd.f32 %v5023, %v5191
        %v5193 = vpop.f32.mrf.mxu0
        %v5194 = vadd.f32 %v5025, %v5193
        %5195 = vdwg.mxu0
        %v5244 = vunpack.c.l.b16 %v4072
        %v5245 = vunpack.c.l.b16 %v4073
        %v5246 = vunpack.c.l.b16 %v4074
        %v5247 = vunpack.c.l.b16 %v4075
        %v5248 = vunpack.c.l.b16 %v4076
        %v5249 = vunpack.c.l.b16 %v4077
        %v5250 = vunpack.c.l.b16 %v4078
        %v5251 = vunpack.c.l.b16 %v4079
        %v5252 = vunpack.c.l.b16 %v4080
        %v5253 = vunpack.c.l.b16 %v4081
        %v5254 = vunpack.c.l.b16 %v4082
        %v5255 = vunpack.c.l.b16 %v4083
        %v5256 = vunpack.c.l.b16 %v4084
        %v5257 = vunpack.c.l.b16 %v4085
        %v5258 = vunpack.c.l.b16 %v4086
        %v5259 = vunpack.c.l.b16 %v4087
        %v5260 = vunpack.c.l.b16 %v4088
        %v5261 = vunpack.c.l.b16 %v4089
        %v5262 = vunpack.c.l.b16 %v4090
        %v5263 = vunpack.c.l.b16 %v4091
        %v5264 = vunpack.c.l.b16 %v4092
        %v5265 = vunpack.c.l.b16 %v4093
        %v5266 = vunpack.c.l.b16 %v4094
        %v5267 = vunpack.c.l.b16 %v4095
        %v5268 = vunpack.c.l.b16 %v4096
        %v5269 = vunpack.c.l.b16 %v4097
        %v5270 = vunpack.c.l.b16 %v4098
        %v5271 = vunpack.c.l.b16 %v4099
        %v5272 = vunpack.c.l.b16 %v4100
        %v5273 = vunpack.c.l.b16 %v4101
        %v5274 = vunpack.c.l.b16 %v4102
        %v5275 = vunpack.c.l.b16 %v4103
        %v5276 = vunpack.c.l.b16 %v4104
        %v5277 = vunpack.c.l.b16 %v4105
        %v5278 = vunpack.c.l.b16 %v4106
        %v5279 = vunpack.c.l.b16 %v4107
        %v5280 = vunpack.c.l.b16 %v4108
        %v5281 = vunpack.c.l.b16 %v4109
        %v5282 = vunpack.c.l.b16 %v4110
        %v5283 = vunpack.c.l.b16 %v4111
        %v5284 = vunpack.c.l.b16 %v4112
        %v5285 = vunpack.c.l.b16 %v4113
        %v5286 = vunpack.c.l.b16 %v4114
        %v5287 = vunpack.c.l.b16 %v4115
        %v5288 = vunpack.c.l.b16 %v4116
        %v5289 = vunpack.c.l.b16 %v4117
        %v5290 = vunpack.c.l.b16 %v4118
        %v5291 = vunpack.c.l.b16 %v4119
        %v5292 = vpack.c.b16 %v5245, %v5244
        %v5293 = vpack.c.b16 %v5247, %v5246
        %v5294 = vpack.c.b16 %v5249, %v5248
        %v5295 = vpack.c.b16 %v5251, %v5250
        %v5296 = vpack.c.b16 %v5253, %v5252
        %v5297 = vpack.c.b16 %v5255, %v5254
        %v5298 = vpack.c.b16 %v5257, %v5256
        %v5299 = vpack.c.b16 %v5259, %v5258
        %v5300 = vpack.c.b16 %v5261, %v5260
        %v5301 = vpack.c.b16 %v5263, %v5262
        %v5302 = vpack.c.b16 %v5265, %v5264
        %v5303 = vpack.c.b16 %v5267, %v5266
        %v5304 = vpack.c.b16 %v5269, %v5268
        %v5305 = vpack.c.b16 %v5271, %v5270
        %v5306 = vpack.c.b16 %v5273, %v5272
        %v5307 = vpack.c.b16 %v5275, %v5274
        %v5308 = vpack.c.b16 %v5277, %v5276
        %v5309 = vpack.c.b16 %v5279, %v5278
        %v5310 = vpack.c.b16 %v5281, %v5280
        %v5311 = vpack.c.b16 %v5283, %v5282
        %v5312 = vpack.c.b16 %v5285, %v5284
        %v5313 = vpack.c.b16 %v5287, %v5286
        %v5314 = vpack.c.b16 %v5289, %v5288
        %v5315 = vpack.c.b16 %v5291, %v5290
        %5340 = vmatpush.bf16.msra.mxu0 %v5299
        %5341 = vmatpush.bf16.msra.mxu0 %v5298
        %5342 = vmatpush.bf16.msra.mxu0 %v5297
        %5343 = vmatpush.bf16.msra.mxu0 %v5296
        %5344 = vmatpush.bf16.msra.mxu0 %v5295
        %5345 = vmatpush.bf16.msra.mxu0 %v5294
        %5346 = vmatpush.bf16.msra.mxu0 %v5293
        %5347 = vmatpush.bf16.msra.mxu0 %v5292
        %5348 = vmatmul.bf16.gmra.mxu0 %v3752
        %v5349 = vpop.f32.mrf.mxu0
        %v5350 = vadd.f32 %v5037, %v5349
        %v5351 = vpop.f32.mrf.mxu0
        %v5352 = vadd.f32 %v5039, %v5351
        %5353 = vmatmul.bf16.gmra.mxu0 %v3753
        %v5354 = vpop.f32.mrf.mxu0
        %v5355 = vadd.f32 %v5042, %v5354
        %v5356 = vpop.f32.mrf.mxu0
        %v5357 = vadd.f32 %v5044, %v5356
        %5358 = vmatmul.bf16.gmra.mxu0 %v3754
        %v5359 = vpop.f32.mrf.mxu0
        %v5360 = vadd.f32 %v5047, %v5359
        %v5361 = vpop.f32.mrf.mxu0
        %v5362 = vadd.f32 %v5049, %v5361
        %5363 = vmatmul.bf16.gmra.mxu0 %v3755
        %v5364 = vpop.f32.mrf.mxu0
        %v5365 = vadd.f32 %v5052, %v5364
        %v5366 = vpop.f32.mrf.mxu0
        %v5367 = vadd.f32 %v5054, %v5366
        %5368 = vmatmul.bf16.gmra.mxu0 %v3756
        %v5369 = vpop.f32.mrf.mxu0
        %v5370 = vadd.f32 %v5057, %v5369
        %v5371 = vpop.f32.mrf.mxu0
        %v5372 = vadd.f32 %v5059, %v5371
        %5373 = vmatmul.bf16.gmra.mxu0 %v3757
        %v5374 = vpop.f32.mrf.mxu0
        %v5375 = vadd.f32 %v5062, %v5374
        %v5376 = vpop.f32.mrf.mxu0
        %v5377 = vadd.f32 %v5064, %v5376
        %5378 = vmatmul.bf16.gmra.mxu0 %v3758
        %v5379 = vpop.f32.mrf.mxu0
        %v5380 = vadd.f32 %v5067, %v5379
        %v5381 = vpop.f32.mrf.mxu0
        %v5382 = vadd.f32 %v5069, %v5381
        %5383 = vmatmul.bf16.gmra.mxu0 %v3759
        %v5384 = vpop.f32.mrf.mxu0
        %v5385 = vadd.f32 %v5072, %v5384
        %v5386 = vpop.f32.mrf.mxu0
        %v5387 = vadd.f32 %v5074, %v5386
        %5388 = vmatmul.bf16.gmra.mxu0 %v3760
        %v5389 = vpop.f32.mrf.mxu0
        %v5390 = vadd.f32 %v5077, %v5389
        %v5391 = vpop.f32.mrf.mxu0
        %v5392 = vadd.f32 %v5079, %v5391
        %5393 = vmatmul.bf16.gmra.mxu0 %v3761
        %v5394 = vpop.f32.mrf.mxu0
        %v5395 = vadd.f32 %v5082, %v5394
        %v5396 = vpop.f32.mrf.mxu0
        %v5397 = vadd.f32 %v5084, %v5396
        %5398 = vmatmul.bf16.gmra.mxu0 %v3762
        %v5399 = vpop.f32.mrf.mxu0
        %v5400 = vadd.f32 %v5087, %v5399
        %v5401 = vpop.f32.mrf.mxu0
        %v5402 = vadd.f32 %v5089, %v5401
        %5403 = vmatmul.bf16.gmra.mxu0 %v3763
        %v5404 = vpop.f32.mrf.mxu0
        %v5405 = vadd.f32 %v5092, %v5404
        %v5406 = vpop.f32.mrf.mxu0
        %v5407 = vadd.f32 %v5094, %v5406
        %5408 = vmatmul.bf16.gmra.mxu0 %v3764
        %v5409 = vpop.f32.mrf.mxu0
        %v5410 = vadd.f32 %v5097, %v5409
        %v5411 = vpop.f32.mrf.mxu0
        %v5412 = vadd.f32 %v5099, %v5411
        %5413 = vmatmul.bf16.gmra.mxu0 %v3765
        %v5414 = vpop.f32.mrf.mxu0
        %v5415 = vadd.f32 %v5102, %v5414
        %v5416 = vpop.f32.mrf.mxu0
        %v5417 = vadd.f32 %v5104, %v5416
        %5418 = vmatmul.bf16.gmra.mxu0 %v3766
        %v5419 = vpop.f32.mrf.mxu0
        %v5420 = vadd.f32 %v5107, %v5419
        %v5421 = vpop.f32.mrf.mxu0
        %v5422 = vadd.f32 %v5109, %v5421
        %5423 = vmatmul.bf16.gmra.mxu0 %v3767
        %v5424 = vpop.f32.mrf.mxu0
        %v5425 = vadd.f32 %v5112, %v5424
        %v5426 = vpop.f32.mrf.mxu0
        %v5427 = vadd.f32 %v5114, %v5426
        %5428 = vmatmul.bf16.gmra.mxu0 %v3768
        %v5429 = vpop.f32.mrf.mxu0
        %v5430 = vadd.f32 %v5117, %v5429
        %v5431 = vpop.f32.mrf.mxu0
        %v5432 = vadd.f32 %v5119, %v5431
        %5433 = vmatmul.bf16.gmra.mxu0 %v3769
        %v5434 = vpop.f32.mrf.mxu0
        %v5435 = vadd.f32 %v5122, %v5434
        %v5436 = vpop.f32.mrf.mxu0
        %v5437 = vadd.f32 %v5124, %v5436
        %5438 = vmatmul.bf16.gmra.mxu0 %v3770
        %v5439 = vpop.f32.mrf.mxu0
        %v5440 = vadd.f32 %v5127, %v5439
        %v5441 = vpop.f32.mrf.mxu0
        %v5442 = vadd.f32 %v5129, %v5441
        %5443 = vmatmul.bf16.gmra.mxu0 %v3771
        %v5444 = vpop.f32.mrf.mxu0
        %v5445 = vadd.f32 %v5132, %v5444
        %v5446 = vpop.f32.mrf.mxu0
        %v5447 = vadd.f32 %v5134, %v5446
        %5448 = vmatmul.bf16.gmra.mxu0 %v3772
        %v5449 = vpop.f32.mrf.mxu0
        %v5450 = vadd.f32 %v5137, %v5449
        %v5451 = vpop.f32.mrf.mxu0
        %v5452 = vadd.f32 %v5139, %v5451
        %5453 = vmatmul.bf16.gmra.mxu0 %v3773
        %v5454 = vpop.f32.mrf.mxu0
        %v5455 = vadd.f32 %v5142, %v5454
        %v5456 = vpop.f32.mrf.mxu0
        %v5457 = vadd.f32 %v5144, %v5456
        %5458 = vmatmul.bf16.gmra.mxu0 %v3774
        %v5459 = vpop.f32.mrf.mxu0
        %v5460 = vadd.f32 %v5147, %v5459
        %v5461 = vpop.f32.mrf.mxu0
        %v5462 = vadd.f32 %v5149, %v5461
        %5463 = vmatmul.bf16.gmra.mxu0 %v3775
        %v5464 = vpop.f32.mrf.mxu0
        %v5465 = vadd.f32 %v5152, %v5464
        %v5466 = vpop.f32.mrf.mxu0
        %v5467 = vadd.f32 %v5154, %v5466
        %5468 = vmatmul.bf16.gmra.mxu0 %v3776
        %v5469 = vpop.f32.mrf.mxu0
        %v5470 = vadd.f32 %v5157, %v5469
        %v5471 = vpop.f32.mrf.mxu0
        %v5472 = vadd.f32 %v5159, %v5471
        %5473 = vmatmul.bf16.gmra.mxu0 %v3777
        %v5474 = vpop.f32.mrf.mxu0
        %v5475 = vadd.f32 %v5162, %v5474
        %v5476 = vpop.f32.mrf.mxu0
        %v5477 = vadd.f32 %v5164, %v5476
        %5478 = vmatmul.bf16.gmra.mxu0 %v3778
        %v5479 = vpop.f32.mrf.mxu0
        %v5480 = vadd.f32 %v5167, %v5479
        %v5481 = vpop.f32.mrf.mxu0
        %v5482 = vadd.f32 %v5169, %v5481
        %5483 = vmatmul.bf16.gmra.mxu0 %v3779
        %v5484 = vpop.f32.mrf.mxu0
        %v5485 = vadd.f32 %v5172, %v5484
        %v5486 = vpop.f32.mrf.mxu0
        %v5487 = vadd.f32 %v5174, %v5486
        %5488 = vmatmul.bf16.gmra.mxu0 %v3780
        %v5489 = vpop.f32.mrf.mxu0
        %v5490 = vadd.f32 %v5177, %v5489
        %v5491 = vpop.f32.mrf.mxu0
        %v5492 = vadd.f32 %v5179, %v5491
        %5493 = vmatmul.bf16.gmra.mxu0 %v3781
        %v5494 = vpop.f32.mrf.mxu0
        %v5495 = vadd.f32 %v5182, %v5494
        %v5496 = vpop.f32.mrf.mxu0
        %v5497 = vadd.f32 %v5184, %v5496
        %5498 = vmatmul.bf16.gmra.mxu0 %v3782
        %v5499 = vpop.f32.mrf.mxu0
        %v5500 = vadd.f32 %v5187, %v5499
        %v5501 = vpop.f32.mrf.mxu0
        %v5502 = vadd.f32 %v5189, %v5501
        %5503 = vmatmul.bf16.gmra.mxu0 %v3783
        %v5504 = vpop.f32.mrf.mxu0
        %v5505 = vadd.f32 %v5192, %v5504
        %v5506 = vpop.f32.mrf.mxu0
        %v5507 = vadd.f32 %v5194, %v5506
        %5508 = vdwg.mxu0
        %5509 = vmatpush.bf16.msra.mxu0 %v5307
        %5510 = vmatpush.bf16.msra.mxu0 %v5306
        %5511 = vmatpush.bf16.msra.mxu0 %v5305
        %5512 = vmatpush.bf16.msra.mxu0 %v5304
        %5513 = vmatpush.bf16.msra.mxu0 %v5303
        %5514 = vmatpush.bf16.msra.mxu0 %v5302
        %5515 = vmatpush.bf16.msra.mxu0 %v5301
        %5516 = vmatpush.bf16.msra.mxu0 %v5300
        %5517 = vmatmul.bf16.gmra.mxu0 %v3880
        %v5518 = vpop.f32.mrf.mxu0
        %v5519 = vadd.f32 %v5350, %v5518
        %v5520 = vpop.f32.mrf.mxu0
        %v5521 = vadd.f32 %v5352, %v5520
        %5522 = vmatmul.bf16.gmra.mxu0 %v3881
        %v5523 = vpop.f32.mrf.mxu0
        %v5524 = vadd.f32 %v5355, %v5523
        %v5525 = vpop.f32.mrf.mxu0
        %v5526 = vadd.f32 %v5357, %v5525
        %5527 = vmatmul.bf16.gmra.mxu0 %v3882
        %v5528 = vpop.f32.mrf.mxu0
        %v5529 = vadd.f32 %v5360, %v5528
        %v5530 = vpop.f32.mrf.mxu0
        %v5531 = vadd.f32 %v5362, %v5530
        %5532 = vmatmul.bf16.gmra.mxu0 %v3883
        %v5533 = vpop.f32.mrf.mxu0
        %v5534 = vadd.f32 %v5365, %v5533
        %v5535 = vpop.f32.mrf.mxu0
        %v5536 = vadd.f32 %v5367, %v5535
        %5537 = vmatmul.bf16.gmra.mxu0 %v3884
        %v5538 = vpop.f32.mrf.mxu0
        %v5539 = vadd.f32 %v5370, %v5538
        %v5540 = vpop.f32.mrf.mxu0
        %v5541 = vadd.f32 %v5372, %v5540
        %5542 = vmatmul.bf16.gmra.mxu0 %v3885
        %v5543 = vpop.f32.mrf.mxu0
        %v5544 = vadd.f32 %v5375, %v5543
        %v5545 = vpop.f32.mrf.mxu0
        %v5546 = vadd.f32 %v5377, %v5545
        %5547 = vmatmul.bf16.gmra.mxu0 %v3886
        %v5548 = vpop.f32.mrf.mxu0
        %v5549 = vadd.f32 %v5380, %v5548
        %v5550 = vpop.f32.mrf.mxu0
        %v5551 = vadd.f32 %v5382, %v5550
        %5552 = vmatmul.bf16.gmra.mxu0 %v3887
        %v5553 = vpop.f32.mrf.mxu0
        %v5554 = vadd.f32 %v5385, %v5553
        %v5555 = vpop.f32.mrf.mxu0
        %v5556 = vadd.f32 %v5387, %v5555
        %5557 = vmatmul.bf16.gmra.mxu0 %v3888
        %v5558 = vpop.f32.mrf.mxu0
        %v5559 = vadd.f32 %v5390, %v5558
        %v5560 = vpop.f32.mrf.mxu0
        %v5561 = vadd.f32 %v5392, %v5560
        %5562 = vmatmul.bf16.gmra.mxu0 %v3889
        %v5563 = vpop.f32.mrf.mxu0
        %v5564 = vadd.f32 %v5395, %v5563
        %v5565 = vpop.f32.mrf.mxu0
        %v5566 = vadd.f32 %v5397, %v5565
        %5567 = vmatmul.bf16.gmra.mxu0 %v3890
        %v5568 = vpop.f32.mrf.mxu0
        %v5569 = vadd.f32 %v5400, %v5568
        %v5570 = vpop.f32.mrf.mxu0
        %v5571 = vadd.f32 %v5402, %v5570
        %5572 = vmatmul.bf16.gmra.mxu0 %v3891
        %v5573 = vpop.f32.mrf.mxu0
        %v5574 = vadd.f32 %v5405, %v5573
        %v5575 = vpop.f32.mrf.mxu0
        %v5576 = vadd.f32 %v5407, %v5575
        %5577 = vmatmul.bf16.gmra.mxu0 %v3892
        %v5578 = vpop.f32.mrf.mxu0
        %v5579 = vadd.f32 %v5410, %v5578
        %v5580 = vpop.f32.mrf.mxu0
        %v5581 = vadd.f32 %v5412, %v5580
        %5582 = vmatmul.bf16.gmra.mxu0 %v3893
        %v5583 = vpop.f32.mrf.mxu0
        %v5584 = vadd.f32 %v5415, %v5583
        %v5585 = vpop.f32.mrf.mxu0
        %v5586 = vadd.f32 %v5417, %v5585
        %5587 = vmatmul.bf16.gmra.mxu0 %v3894
        %v5588 = vpop.f32.mrf.mxu0
        %v5589 = vadd.f32 %v5420, %v5588
        %v5590 = vpop.f32.mrf.mxu0
        %v5591 = vadd.f32 %v5422, %v5590
        %5592 = vmatmul.bf16.gmra.mxu0 %v3895
        %v5593 = vpop.f32.mrf.mxu0
        %v5594 = vadd.f32 %v5425, %v5593
        %v5595 = vpop.f32.mrf.mxu0
        %v5596 = vadd.f32 %v5427, %v5595
        %5597 = vmatmul.bf16.gmra.mxu0 %v3896
        %v5598 = vpop.f32.mrf.mxu0
        %v5599 = vadd.f32 %v5430, %v5598
        %v5600 = vpop.f32.mrf.mxu0
        %v5601 = vadd.f32 %v5432, %v5600
        %5602 = vmatmul.bf16.gmra.mxu0 %v3897
        %v5603 = vpop.f32.mrf.mxu0
        %v5604 = vadd.f32 %v5435, %v5603
        %v5605 = vpop.f32.mrf.mxu0
        %v5606 = vadd.f32 %v5437, %v5605
        %5607 = vmatmul.bf16.gmra.mxu0 %v3898
        %v5608 = vpop.f32.mrf.mxu0
        %v5609 = vadd.f32 %v5440, %v5608
        %v5610 = vpop.f32.mrf.mxu0
        %v5611 = vadd.f32 %v5442, %v5610
        %5612 = vmatmul.bf16.gmra.mxu0 %v3899
        %v5613 = vpop.f32.mrf.mxu0
        %v5614 = vadd.f32 %v5445, %v5613
        %v5615 = vpop.f32.mrf.mxu0
        %v5616 = vadd.f32 %v5447, %v5615
        %5617 = vmatmul.bf16.gmra.mxu0 %v3900
        %v5618 = vpop.f32.mrf.mxu0
        %v5619 = vadd.f32 %v5450, %v5618
        %v5620 = vpop.f32.mrf.mxu0
        %v5621 = vadd.f32 %v5452, %v5620
        %5622 = vmatmul.bf16.gmra.mxu0 %v3901
        %v5623 = vpop.f32.mrf.mxu0
        %v5624 = vadd.f32 %v5455, %v5623
        %v5625 = vpop.f32.mrf.mxu0
        %v5626 = vadd.f32 %v5457, %v5625
        %5627 = vmatmul.bf16.gmra.mxu0 %v3902
        %v5628 = vpop.f32.mrf.mxu0
        %v5629 = vadd.f32 %v5460, %v5628
        %v5630 = vpop.f32.mrf.mxu0
        %v5631 = vadd.f32 %v5462, %v5630
        %5632 = vmatmul.bf16.gmra.mxu0 %v3903
        %v5633 = vpop.f32.mrf.mxu0
        %v5634 = vadd.f32 %v5465, %v5633
        %v5635 = vpop.f32.mrf.mxu0
        %v5636 = vadd.f32 %v5467, %v5635
        %5637 = vmatmul.bf16.gmra.mxu0 %v3904
        %v5638 = vpop.f32.mrf.mxu0
        %v5639 = vadd.f32 %v5470, %v5638
        %v5640 = vpop.f32.mrf.mxu0
        %v5641 = vadd.f32 %v5472, %v5640
        %5642 = vmatmul.bf16.gmra.mxu0 %v3905
        %v5643 = vpop.f32.mrf.mxu0
        %v5644 = vadd.f32 %v5475, %v5643
        %v5645 = vpop.f32.mrf.mxu0
        %v5646 = vadd.f32 %v5477, %v5645
        %5647 = vmatmul.bf16.gmra.mxu0 %v3906
        %v5648 = vpop.f32.mrf.mxu0
        %v5649 = vadd.f32 %v5480, %v5648
        %v5650 = vpop.f32.mrf.mxu0
        %v5651 = vadd.f32 %v5482, %v5650
        %5652 = vmatmul.bf16.gmra.mxu0 %v3907
        %v5653 = vpop.f32.mrf.mxu0
        %v5654 = vadd.f32 %v5485, %v5653
        %v5655 = vpop.f32.mrf.mxu0
        %v5656 = vadd.f32 %v5487, %v5655
        %5657 = vmatmul.bf16.gmra.mxu0 %v3908
        %v5658 = vpop.f32.mrf.mxu0
        %v5659 = vadd.f32 %v5490, %v5658
        %v5660 = vpop.f32.mrf.mxu0
        %v5661 = vadd.f32 %v5492, %v5660
        %5662 = vmatmul.bf16.gmra.mxu0 %v3909
        %v5663 = vpop.f32.mrf.mxu0
        %v5664 = vadd.f32 %v5495, %v5663
        %v5665 = vpop.f32.mrf.mxu0
        %v5666 = vadd.f32 %v5497, %v5665
        %5667 = vmatmul.bf16.gmra.mxu0 %v3910
        %v5668 = vpop.f32.mrf.mxu0
        %v5669 = vadd.f32 %v5500, %v5668
        %v5670 = vpop.f32.mrf.mxu0
        %v5671 = vadd.f32 %v5502, %v5670
        %5672 = vmatmul.bf16.gmra.mxu0 %v3911
        %v5673 = vpop.f32.mrf.mxu0
        %v5674 = vadd.f32 %v5505, %v5673
        %v5675 = vpop.f32.mrf.mxu0
        %v5676 = vadd.f32 %v5507, %v5675
        %5677 = vdwg.mxu0
        %5678 = vmatpush.bf16.msra.mxu0 %v5315
        %5679 = vmatpush.bf16.msra.mxu0 %v5314
        %5680 = vmatpush.bf16.msra.mxu0 %v5313
        %5681 = vmatpush.bf16.msra.mxu0 %v5312
        %5682 = vmatpush.bf16.msra.mxu0 %v5311
        %5683 = vmatpush.bf16.msra.mxu0 %v5310
        %5684 = vmatpush.bf16.msra.mxu0 %v5309
        %5685 = vmatpush.bf16.msra.mxu0 %v5308
        %5686 = vmatmul.bf16.gmra.mxu0 %v4008
        %v5687 = vpop.f32.mrf.mxu0
        %v5688 = vadd.f32 %v5519, %v5687
        %v5689 = vpop.f32.mrf.mxu0
        %v5690 = vadd.f32 %v5521, %v5689
        %5691 = vmatmul.bf16.gmra.mxu0 %v4009
        %v5692 = vpop.f32.mrf.mxu0
        %v5693 = vadd.f32 %v5524, %v5692
        %v5694 = vpop.f32.mrf.mxu0
        %v5695 = vadd.f32 %v5526, %v5694
        %5696 = vmatmul.bf16.gmra.mxu0 %v4010
        %v5697 = vpop.f32.mrf.mxu0
        %v5698 = vadd.f32 %v5529, %v5697
        %v5699 = vpop.f32.mrf.mxu0
        %v5700 = vadd.f32 %v5531, %v5699
        %5701 = vmatmul.bf16.gmra.mxu0 %v4011
        %v5702 = vpop.f32.mrf.mxu0
        %v5703 = vadd.f32 %v5534, %v5702
        %v5704 = vpop.f32.mrf.mxu0
        %v5705 = vadd.f32 %v5536, %v5704
        %5706 = vmatmul.bf16.gmra.mxu0 %v4012
        %v5707 = vpop.f32.mrf.mxu0
        %v5708 = vadd.f32 %v5539, %v5707
        %v5709 = vpop.f32.mrf.mxu0
        %v5710 = vadd.f32 %v5541, %v5709
        %5711 = vmatmul.bf16.gmra.mxu0 %v4013
        %v5712 = vpop.f32.mrf.mxu0
        %v5713 = vadd.f32 %v5544, %v5712
        %v5714 = vpop.f32.mrf.mxu0
        %v5715 = vadd.f32 %v5546, %v5714
        %5716 = vmatmul.bf16.gmra.mxu0 %v4014
        %v5717 = vpop.f32.mrf.mxu0
        %v5718 = vadd.f32 %v5549, %v5717
        %v5719 = vpop.f32.mrf.mxu0
        %v5720 = vadd.f32 %v5551, %v5719
        %5721 = vmatmul.bf16.gmra.mxu0 %v4015
        %v5722 = vpop.f32.mrf.mxu0
        %v5723 = vadd.f32 %v5554, %v5722
        %v5724 = vpop.f32.mrf.mxu0
        %v5725 = vadd.f32 %v5556, %v5724
        %5726 = vmatmul.bf16.gmra.mxu0 %v4016
        %v5727 = vpop.f32.mrf.mxu0
        %v5728 = vadd.f32 %v5559, %v5727
        %v5729 = vpop.f32.mrf.mxu0
        %v5730 = vadd.f32 %v5561, %v5729
        %5731 = vmatmul.bf16.gmra.mxu0 %v4017
        %v5732 = vpop.f32.mrf.mxu0
        %v5733 = vadd.f32 %v5564, %v5732
        %v5734 = vpop.f32.mrf.mxu0
        %v5735 = vadd.f32 %v5566, %v5734
        %5736 = vmatmul.bf16.gmra.mxu0 %v4018
        %v5737 = vpop.f32.mrf.mxu0
        %v5738 = vadd.f32 %v5569, %v5737
        %v5739 = vpop.f32.mrf.mxu0
        %v5740 = vadd.f32 %v5571, %v5739
        %5741 = vmatmul.bf16.gmra.mxu0 %v4019
        %v5742 = vpop.f32.mrf.mxu0
        %v5743 = vadd.f32 %v5574, %v5742
        %v5744 = vpop.f32.mrf.mxu0
        %v5745 = vadd.f32 %v5576, %v5744
        %5746 = vmatmul.bf16.gmra.mxu0 %v4020
        %v5747 = vpop.f32.mrf.mxu0
        %v5748 = vadd.f32 %v5579, %v5747
        %v5749 = vpop.f32.mrf.mxu0
        %v5750 = vadd.f32 %v5581, %v5749
        %5751 = vmatmul.bf16.gmra.mxu0 %v4021
        %v5752 = vpop.f32.mrf.mxu0
        %v5753 = vadd.f32 %v5584, %v5752
        %v5754 = vpop.f32.mrf.mxu0
        %v5755 = vadd.f32 %v5586, %v5754
        %5756 = vmatmul.bf16.gmra.mxu0 %v4022
        %v5757 = vpop.f32.mrf.mxu0
        %v5758 = vadd.f32 %v5589, %v5757
        %v5759 = vpop.f32.mrf.mxu0
        %v5760 = vadd.f32 %v5591, %v5759
        %5761 = vmatmul.bf16.gmra.mxu0 %v4023
        %v5762 = vpop.f32.mrf.mxu0
        %v5763 = vadd.f32 %v5594, %v5762
        %v5764 = vpop.f32.mrf.mxu0
        %v5765 = vadd.f32 %v5596, %v5764
        %5766 = vmatmul.bf16.gmra.mxu0 %v4024
        %v5767 = vpop.f32.mrf.mxu0
        %v5768 = vadd.f32 %v5599, %v5767
        %v5769 = vpop.f32.mrf.mxu0
        %v5770 = vadd.f32 %v5601, %v5769
        %5771 = vmatmul.bf16.gmra.mxu0 %v4025
        %v5772 = vpop.f32.mrf.mxu0
        %v5773 = vadd.f32 %v5604, %v5772
        %v5774 = vpop.f32.mrf.mxu0
        %v5775 = vadd.f32 %v5606, %v5774
        %5776 = vmatmul.bf16.gmra.mxu0 %v4026
        %v5777 = vpop.f32.mrf.mxu0
        %v5778 = vadd.f32 %v5609, %v5777
        %v5779 = vpop.f32.mrf.mxu0
        %v5780 = vadd.f32 %v5611, %v5779
        %5781 = vmatmul.bf16.gmra.mxu0 %v4027
        %v5782 = vpop.f32.mrf.mxu0
        %v5783 = vadd.f32 %v5614, %v5782
        %v5784 = vpop.f32.mrf.mxu0
        %v5785 = vadd.f32 %v5616, %v5784
        %5786 = vmatmul.bf16.gmra.mxu0 %v4028
        %v5787 = vpop.f32.mrf.mxu0
        %v5788 = vadd.f32 %v5619, %v5787
        %v5789 = vpop.f32.mrf.mxu0
        %v5790 = vadd.f32 %v5621, %v5789
        %5791 = vmatmul.bf16.gmra.mxu0 %v4029
        %v5792 = vpop.f32.mrf.mxu0
        %v5793 = vadd.f32 %v5624, %v5792
        %v5794 = vpop.f32.mrf.mxu0
        %v5795 = vadd.f32 %v5626, %v5794
        %5796 = vmatmul.bf16.gmra.mxu0 %v4030
        %v5797 = vpop.f32.mrf.mxu0
        %v5798 = vadd.f32 %v5629, %v5797
        %v5799 = vpop.f32.mrf.mxu0
        %v5800 = vadd.f32 %v5631, %v5799
        %5801 = vmatmul.bf16.gmra.mxu0 %v4031
        %v5802 = vpop.f32.mrf.mxu0
        %v5803 = vadd.f32 %v5634, %v5802
        %v5804 = vpop.f32.mrf.mxu0
        %v5805 = vadd.f32 %v5636, %v5804
        %5806 = vmatmul.bf16.gmra.mxu0 %v4032
        %v5807 = vpop.f32.mrf.mxu0
        %v5808 = vadd.f32 %v5639, %v5807
        %v5809 = vpop.f32.mrf.mxu0
        %v5810 = vadd.f32 %v5641, %v5809
        %5811 = vmatmul.bf16.gmra.mxu0 %v4033
        %v5812 = vpop.f32.mrf.mxu0
        %v5813 = vadd.f32 %v5644, %v5812
        %v5814 = vpop.f32.mrf.mxu0
        %v5815 = vadd.f32 %v5646, %v5814
        %5816 = vmatmul.bf16.gmra.mxu0 %v4034
        %v5817 = vpop.f32.mrf.mxu0
        %v5818 = vadd.f32 %v5649, %v5817
        %v5819 = vpop.f32.mrf.mxu0
        %v5820 = vadd.f32 %v5651, %v5819
        %5821 = vmatmul.bf16.gmra.mxu0 %v4035
        %v5822 = vpop.f32.mrf.mxu0
        %v5823 = vadd.f32 %v5654, %v5822
        %v5824 = vpop.f32.mrf.mxu0
        %v5825 = vadd.f32 %v5656, %v5824
        %5826 = vmatmul.bf16.gmra.mxu0 %v4036
        %v5827 = vpop.f32.mrf.mxu0
        %v5828 = vadd.f32 %v5659, %v5827
        %v5829 = vpop.f32.mrf.mxu0
        %v5830 = vadd.f32 %v5661, %v5829
        %5831 = vmatmul.bf16.gmra.mxu0 %v4037
        %v5832 = vpop.f32.mrf.mxu0
        %v5833 = vadd.f32 %v5664, %v5832
        %v5834 = vpop.f32.mrf.mxu0
        %v5835 = vadd.f32 %v5666, %v5834
        %5836 = vmatmul.bf16.gmra.mxu0 %v4038
        %v5837 = vpop.f32.mrf.mxu0
        %v5838 = vadd.f32 %v5669, %v5837
        %v5839 = vpop.f32.mrf.mxu0
        %v5840 = vadd.f32 %v5671, %v5839
        %5841 = vmatmul.bf16.gmra.mxu0 %v4039
        %v5842 = vpop.f32.mrf.mxu0
        %v5843 = vadd.f32 %v5674, %v5842
        %v5844 = vpop.f32.mrf.mxu0
        %v5845 = vadd.f32 %v5676, %v5844
        %5846 = vdwg.mxu0
        %v5848 = vshrl.u32 %v2220, 16
        %v5850 = vrot.slane %v5848, 4
        %v5851 = vshll.u32 %v2220, 16
        %v5853 = vrot.slane %v5851, 5
        %v5854 = vor.u32 %v5850, %v5853
        %v5855 = vrot.slane %v5854, 4
        %v5857 = vshll.u32 %v2221, 16
        %v5859 = vrot.slane %v5857, 5
        %v5860 = vsel %vm2404, %v5855, %v5859
        %v5862 = vshrl.u32 %v2240, 16
        %v5864 = vrot.slane %v5862, 4
        %v5865 = vshll.u32 %v2240, 16
        %v5867 = vrot.slane %v5865, 5
        %v5868 = vor.u32 %v5864, %v5867
        %v5869 = vrot.slane %v5868, 4
        %v5871 = vshll.u32 %v2241, 16
        %v5873 = vrot.slane %v5871, 5
        %v5874 = vsel %vm2404, %v5869, %v5873
        %v5876 = vshrl.u32 %v2260, 16
        %v5878 = vrot.slane %v5876, 4
        %v5879 = vshll.u32 %v2260, 16
        %v5881 = vrot.slane %v5879, 5
        %v5882 = vor.u32 %v5878, %v5881
        %v5883 = vrot.slane %v5882, 4
        %v5885 = vshll.u32 %v2261, 16
        %v5887 = vrot.slane %v5885, 5
        %v5888 = vsel %vm2404, %v5883, %v5887
        %v5890 = vshrl.u32 %v2280, 16
        %v5892 = vrot.slane %v5890, 4
        %v5893 = vshll.u32 %v2280, 16
        %v5895 = vrot.slane %v5893, 5
        %v5896 = vor.u32 %v5892, %v5895
        %v5897 = vrot.slane %v5896, 4
        %v5899 = vshll.u32 %v2281, 16
        %v5901 = vrot.slane %v5899, 5
        %v5902 = vsel %vm2404, %v5897, %v5901
        %v5904 = vshrl.u32 %v2300, 16
        %v5906 = vrot.slane %v5904, 4
        %v5907 = vshll.u32 %v2300, 16
        %v5909 = vrot.slane %v5907, 5
        %v5910 = vor.u32 %v5906, %v5909
        %v5911 = vrot.slane %v5910, 4
        %v5913 = vshll.u32 %v2301, 16
        %v5915 = vrot.slane %v5913, 5
        %v5916 = vsel %vm2404, %v5911, %v5915
        %v5918 = vshrl.u32 %v2320, 16
        %v5920 = vrot.slane %v5918, 4
        %v5921 = vshll.u32 %v2320, 16
        %v5923 = vrot.slane %v5921, 5
        %v5924 = vor.u32 %v5920, %v5923
        %v5925 = vrot.slane %v5924, 4
        %v5927 = vshll.u32 %v2321, 16
        %v5929 = vrot.slane %v5927, 5
        %v5930 = vsel %vm2404, %v5925, %v5929
        %v5932 = vshrl.u32 %v2340, 16
        %v5934 = vrot.slane %v5932, 4
        %v5935 = vshll.u32 %v2340, 16
        %v5937 = vrot.slane %v5935, 5
        %v5938 = vor.u32 %v5934, %v5937
        %v5939 = vrot.slane %v5938, 4
        %v5941 = vshll.u32 %v2341, 16
        %v5943 = vrot.slane %v5941, 5
        %v5944 = vsel %vm2404, %v5939, %v5943
        %v5946 = vshrl.u32 %v2360, 16
        %v5948 = vrot.slane %v5946, 4
        %v5949 = vshll.u32 %v2360, 16
        %v5951 = vrot.slane %v5949, 5
        %v5952 = vor.u32 %v5948, %v5951
        %v5953 = vrot.slane %v5952, 4
        %v5955 = vshll.u32 %v2361, 16
        %v5957 = vrot.slane %v5955, 5
        %v5958 = vsel %vm2404, %v5953, %v5957
        %v5975 = vrot.slane %v2220, 5
        %v5976 = vrot.slane %v5975, 4
        %v5977 = vrot.slane %v2221, 5
        %v5978 = vsel %vm3431, %v5976, %v5977
        %v5979 = vrot.slane %v2240, 5
        %v5980 = vrot.slane %v5979, 4
        %v5981 = vrot.slane %v2241, 5
        %v5982 = vsel %vm3431, %v5980, %v5981
        %v5983 = vrot.slane %v2260, 5
        %v5984 = vrot.slane %v5983, 4
        %v5985 = vrot.slane %v2261, 5
        %v5986 = vsel %vm3431, %v5984, %v5985
        %v5987 = vrot.slane %v2280, 5
        %v5988 = vrot.slane %v5987, 4
        %v5989 = vrot.slane %v2281, 5
        %v5990 = vsel %vm3431, %v5988, %v5989
        %v5991 = vrot.slane %v2300, 5
        %v5992 = vrot.slane %v5991, 4
        %v5993 = vrot.slane %v2301, 5
        %v5994 = vsel %vm3431, %v5992, %v5993
        %v5995 = vrot.slane %v2320, 5
        %v5996 = vrot.slane %v5995, 4
        %v5997 = vrot.slane %v2321, 5
        %v5998 = vsel %vm3431, %v5996, %v5997
        %v5999 = vrot.slane %v2340, 5
        %v6000 = vrot.slane %v5999, 4
        %v6001 = vrot.slane %v2341, 5
        %v6002 = vsel %vm3431, %v6000, %v6001
        %v6003 = vrot.slane %v2360, 5
        %v6004 = vrot.slane %v6003, 4
        %v6005 = vrot.slane %v2361, 5
        %v6006 = vsel %vm3431, %v6004, %v6005
        %v6007 = vunpack.c.l.b16 %v2220
        %v6008 = vunpack.c.l.b16 %v2240
        %v6009 = vunpack.c.l.b16 %v2260
        %v6010 = vunpack.c.l.b16 %v2280
        %v6011 = vunpack.c.l.b16 %v2300
        %v6012 = vunpack.c.l.b16 %v2320
        %v6013 = vunpack.c.l.b16 %v2340
        %v6014 = vunpack.c.l.b16 %v2360
        %v6015 = vpack.c.b16 %v6007, %v4280
        %v6016 = vpack.c.b16 %v6008, %v4281
        %v6017 = vpack.c.b16 %v6009, %v4282
        %v6018 = vpack.c.b16 %v6010, %v4283
        %v6019 = vpack.c.b16 %v6011, %v4284
        %v6020 = vpack.c.b16 %v6012, %v4285
        %v6021 = vpack.c.b16 %v6013, %v4286
        %v6022 = vpack.c.b16 %v6014, %v4287
        %v6031 = vunpack.c.l.b16 %v5860
        %v6032 = vunpack.c.l.b16 %v5874
        %v6033 = vunpack.c.l.b16 %v5888
        %v6034 = vunpack.c.l.b16 %v5902
        %v6035 = vunpack.c.l.b16 %v5916
        %v6036 = vunpack.c.l.b16 %v5930
        %v6037 = vunpack.c.l.b16 %v5944
        %v6038 = vunpack.c.l.b16 %v5958
        %v6039 = vpack.c.b16 %v6031, %v4352
        %v6040 = vpack.c.b16 %v6032, %v4353
        %v6041 = vpack.c.b16 %v6033, %v4354
        %v6042 = vpack.c.b16 %v6034, %v4355
        %v6043 = vpack.c.b16 %v6035, %v4356
        %v6044 = vpack.c.b16 %v6036, %v4357
        %v6045 = vpack.c.b16 %v6037, %v4358
        %v6046 = vpack.c.b16 %v6038, %v4359
        %v6055 = vunpack.c.l.b16 %v5978
        %v6056 = vunpack.c.l.b16 %v5982
        %v6057 = vunpack.c.l.b16 %v5986
        %v6058 = vunpack.c.l.b16 %v5990
        %v6059 = vunpack.c.l.b16 %v5994
        %v6060 = vunpack.c.l.b16 %v5998
        %v6061 = vunpack.c.l.b16 %v6002
        %v6062 = vunpack.c.l.b16 %v6006
        %v6063 = vpack.c.b16 %v6055, %v4424
        %v6064 = vpack.c.b16 %v6056, %v4425
        %v6065 = vpack.c.b16 %v6057, %v4426
        %v6066 = vpack.c.b16 %v6058, %v4427
        %v6067 = vpack.c.b16 %v6059, %v4428
        %v6068 = vpack.c.b16 %v6060, %v4429
        %v6069 = vpack.c.b16 %v6061, %v4430
        %v6070 = vpack.c.b16 %v6062, %v4431
        %s6079 = scalar_lea.vmem [#allocation8], 384
        %v6080 = vld [vmem:[%s6079] sm:$0xf]
        %v6081 = vld [vmem:[%s6079 + $0x4] sm:$0xf]
        %v6082 = vld [vmem:[%s6079 + $0x8] sm:$0xf]
        %v6083 = vld [vmem:[%s6079 + $0xc] sm:$0xf]
        %v6084 = vld [vmem:[%s6079 + $0x10] sm:$0xf]
        %v6085 = vld [vmem:[%s6079 + $0x14] sm:$0xf]
        %v6086 = vld [vmem:[%s6079 + $0x18] sm:$0xf]
        %v6087 = vld [vmem:[%s6079 + $0x1c] sm:$0xf]
        %v6088 = vld [vmem:[%s6079 + $0x20] sm:$0xf]
        %v6089 = vld [vmem:[%s6079 + $0x24] sm:$0xf]
        %v6090 = vld [vmem:[%s6079 + $0x28] sm:$0xf]
        %v6091 = vld [vmem:[%s6079 + $0x2c] sm:$0xf]
        %v6092 = vld [vmem:[%s6079 + $0x30] sm:$0xf]
        %v6093 = vld [vmem:[%s6079 + $0x34] sm:$0xf]
        %v6094 = vld [vmem:[%s6079 + $0x38] sm:$0xf]
        %v6095 = vld [vmem:[%s6079 + $0x3c] sm:$0xf]
        %v6096 = vld [vmem:[%s6079 + $0x40] sm:$0xf]
        %v6097 = vld [vmem:[%s6079 + $0x44] sm:$0xf]
        %v6098 = vld [vmem:[%s6079 + $0x48] sm:$0xf]
        %v6099 = vld [vmem:[%s6079 + $0x4c] sm:$0xf]
        %v6100 = vld [vmem:[%s6079 + $0x50] sm:$0xf]
        %v6101 = vld [vmem:[%s6079 + $0x54] sm:$0xf]
        %v6102 = vld [vmem:[%s6079 + $0x58] sm:$0xf]
        %v6103 = vld [vmem:[%s6079 + $0x5c] sm:$0xf]
        %v6104 = vld [vmem:[%s6079 + $0x60] sm:$0xf]
        %v6105 = vld [vmem:[%s6079 + $0x64] sm:$0xf]
        %v6106 = vld [vmem:[%s6079 + $0x68] sm:$0xf]
        %v6107 = vld [vmem:[%s6079 + $0x6c] sm:$0xf]
        %v6108 = vld [vmem:[%s6079 + $0x70] sm:$0xf]
        %v6109 = vld [vmem:[%s6079 + $0x74] sm:$0xf]
        %v6110 = vld [vmem:[%s6079 + $0x78] sm:$0xf]
        %v6111 = vld [vmem:[%s6079 + $0x7c] sm:$0xf]
        %v6112 = vld [vmem:[%s6079 + $0x80] sm:$0xf]
        %v6113 = vld [vmem:[%s6079 + $0x84] sm:$0xf]
        %v6114 = vld [vmem:[%s6079 + $0x88] sm:$0xf]
        %v6115 = vld [vmem:[%s6079 + $0x8c] sm:$0xf]
        %v6116 = vld [vmem:[%s6079 + $0x90] sm:$0xf]
        %v6117 = vld [vmem:[%s6079 + $0x94] sm:$0xf]
        %v6118 = vld [vmem:[%s6079 + $0x98] sm:$0xf]
        %v6119 = vld [vmem:[%s6079 + $0x9c] sm:$0xf]
        %v6120 = vld [vmem:[%s6079 + $0xa0] sm:$0xf]
        %v6121 = vld [vmem:[%s6079 + $0xa4] sm:$0xf]
        %v6122 = vld [vmem:[%s6079 + $0xa8] sm:$0xf]
        %v6123 = vld [vmem:[%s6079 + $0xac] sm:$0xf]
        %v6124 = vld [vmem:[%s6079 + $0xb0] sm:$0xf]
        %v6125 = vld [vmem:[%s6079 + $0xb4] sm:$0xf]
        %v6126 = vld [vmem:[%s6079 + $0xb8] sm:$0xf]
        %v6127 = vld [vmem:[%s6079 + $0xbc] sm:$0xf]
        %v6176 = vunpack.c.l.b16 %v6080
        %v6177 = vunpack.c.l.b16 %v6081
        %v6178 = vunpack.c.l.b16 %v6082
        %v6179 = vunpack.c.l.b16 %v6083
        %v6180 = vunpack.c.l.b16 %v6084
        %v6181 = vunpack.c.l.b16 %v6085
        %v6182 = vunpack.c.l.b16 %v6086
        %v6183 = vunpack.c.l.b16 %v6087
        %v6184 = vunpack.c.l.b16 %v6088
        %v6185 = vunpack.c.l.b16 %v6089
        %v6186 = vunpack.c.l.b16 %v6090
        %v6187 = vunpack.c.l.b16 %v6091
        %v6188 = vunpack.c.l.b16 %v6092
        %v6189 = vunpack.c.l.b16 %v6093
        %v6190 = vunpack.c.l.b16 %v6094
        %v6191 = vunpack.c.l.b16 %v6095
        %v6192 = vunpack.c.l.b16 %v6096
        %v6193 = vunpack.c.l.b16 %v6097
        %v6194 = vunpack.c.l.b16 %v6098
        %v6195 = vunpack.c.l.b16 %v6099
        %v6196 = vunpack.c.l.b16 %v6100
        %v6197 = vunpack.c.l.b16 %v6101
        %v6198 = vunpack.c.l.b16 %v6102
        %v6199 = vunpack.c.l.b16 %v6103
        %v6200 = vunpack.c.l.b16 %v6104
        %v6201 = vunpack.c.l.b16 %v6105
        %v6202 = vunpack.c.l.b16 %v6106
        %v6203 = vunpack.c.l.b16 %v6107
        %v6204 = vunpack.c.l.b16 %v6108
        %v6205 = vunpack.c.l.b16 %v6109
        %v6206 = vunpack.c.l.b16 %v6110
        %v6207 = vunpack.c.l.b16 %v6111
        %v6208 = vunpack.c.l.b16 %v6112
        %v6209 = vunpack.c.l.b16 %v6113
        %v6210 = vunpack.c.l.b16 %v6114
        %v6211 = vunpack.c.l.b16 %v6115
        %v6212 = vunpack.c.l.b16 %v6116
        %v6213 = vunpack.c.l.b16 %v6117
        %v6214 = vunpack.c.l.b16 %v6118
        %v6215 = vunpack.c.l.b16 %v6119
        %v6216 = vunpack.c.l.b16 %v6120
        %v6217 = vunpack.c.l.b16 %v6121
        %v6218 = vunpack.c.l.b16 %v6122
        %v6219 = vunpack.c.l.b16 %v6123
        %v6220 = vunpack.c.l.b16 %v6124
        %v6221 = vunpack.c.l.b16 %v6125
        %v6222 = vunpack.c.l.b16 %v6126
        %v6223 = vunpack.c.l.b16 %v6127
        %v6224 = vpack.c.b16 %v6177, %v6176
        %v6225 = vpack.c.b16 %v6179, %v6178
        %v6226 = vpack.c.b16 %v6181, %v6180
        %v6227 = vpack.c.b16 %v6183, %v6182
        %v6228 = vpack.c.b16 %v6185, %v6184
        %v6229 = vpack.c.b16 %v6187, %v6186
        %v6230 = vpack.c.b16 %v6189, %v6188
        %v6231 = vpack.c.b16 %v6191, %v6190
        %v6232 = vpack.c.b16 %v6193, %v6192
        %v6233 = vpack.c.b16 %v6195, %v6194
        %v6234 = vpack.c.b16 %v6197, %v6196
        %v6235 = vpack.c.b16 %v6199, %v6198
        %v6236 = vpack.c.b16 %v6201, %v6200
        %v6237 = vpack.c.b16 %v6203, %v6202
        %v6238 = vpack.c.b16 %v6205, %v6204
        %v6239 = vpack.c.b16 %v6207, %v6206
        %v6240 = vpack.c.b16 %v6209, %v6208
        %v6241 = vpack.c.b16 %v6211, %v6210
        %v6242 = vpack.c.b16 %v6213, %v6212
        %v6243 = vpack.c.b16 %v6215, %v6214
        %v6244 = vpack.c.b16 %v6217, %v6216
        %v6245 = vpack.c.b16 %v6219, %v6218
        %v6246 = vpack.c.b16 %v6221, %v6220
        %v6247 = vpack.c.b16 %v6223, %v6222
        %6272 = vmatpush.bf16.msra.mxu0 %v6231
        %6273 = vmatpush.bf16.msra.mxu0 %v6230
        %6274 = vmatpush.bf16.msra.mxu0 %v6229
        %6275 = vmatpush.bf16.msra.mxu0 %v6228
        %6276 = vmatpush.bf16.msra.mxu0 %v6227
        %6277 = vmatpush.bf16.msra.mxu0 %v6226
        %6278 = vmatpush.bf16.msra.mxu0 %v6225
        %6279 = vmatpush.bf16.msra.mxu0 %v6224
        %6280 = vmatmul.bf16.gmra.mxu0 %v3753
        %v6281 = vpop.f32.mrf.mxu0
        %v6282 = vadd.f32 0.0, %v6281
        %v6283 = vpop.f32.mrf.mxu0
        %v6284 = vadd.f32 0.0, %v6283
        %6285 = vmatmul.bf16.gmra.mxu0 %v3754
        %v6286 = vpop.f32.mrf.mxu0
        %v6287 = vadd.f32 0.0, %v6286
        %v6288 = vpop.f32.mrf.mxu0
        %v6289 = vadd.f32 0.0, %v6288
        %6290 = vmatmul.bf16.gmra.mxu0 %v3755
        %v6291 = vpop.f32.mrf.mxu0
        %v6292 = vadd.f32 0.0, %v6291
        %v6293 = vpop.f32.mrf.mxu0
        %v6294 = vadd.f32 0.0, %v6293
        %6295 = vmatmul.bf16.gmra.mxu0 %v6015
        %v6296 = vpop.f32.mrf.mxu0
        %v6297 = vadd.f32 0.0, %v6296
        %v6298 = vpop.f32.mrf.mxu0
        %v6299 = vadd.f32 0.0, %v6298
        %6300 = vmatmul.bf16.gmra.mxu0 %v3757
        %v6301 = vpop.f32.mrf.mxu0
        %v6302 = vadd.f32 0.0, %v6301
        %v6303 = vpop.f32.mrf.mxu0
        %v6304 = vadd.f32 0.0, %v6303
        %6305 = vmatmul.bf16.gmra.mxu0 %v3758
        %v6306 = vpop.f32.mrf.mxu0
        %v6307 = vadd.f32 0.0, %v6306
        %v6308 = vpop.f32.mrf.mxu0
        %v6309 = vadd.f32 0.0, %v6308
        %6310 = vmatmul.bf16.gmra.mxu0 %v3759
        %v6311 = vpop.f32.mrf.mxu0
        %v6312 = vadd.f32 0.0, %v6311
        %v6313 = vpop.f32.mrf.mxu0
        %v6314 = vadd.f32 0.0, %v6313
        %6315 = vmatmul.bf16.gmra.mxu0 %v6016
        %v6316 = vpop.f32.mrf.mxu0
        %v6317 = vadd.f32 0.0, %v6316
        %v6318 = vpop.f32.mrf.mxu0
        %v6319 = vadd.f32 0.0, %v6318
        %6320 = vmatmul.bf16.gmra.mxu0 %v3761
        %v6321 = vpop.f32.mrf.mxu0
        %v6322 = vadd.f32 0.0, %v6321
        %v6323 = vpop.f32.mrf.mxu0
        %v6324 = vadd.f32 0.0, %v6323
        %6325 = vmatmul.bf16.gmra.mxu0 %v3762
        %v6326 = vpop.f32.mrf.mxu0
        %v6327 = vadd.f32 0.0, %v6326
        %v6328 = vpop.f32.mrf.mxu0
        %v6329 = vadd.f32 0.0, %v6328
        %6330 = vmatmul.bf16.gmra.mxu0 %v3763
        %v6331 = vpop.f32.mrf.mxu0
        %v6332 = vadd.f32 0.0, %v6331
        %v6333 = vpop.f32.mrf.mxu0
        %v6334 = vadd.f32 0.0, %v6333
        %6335 = vmatmul.bf16.gmra.mxu0 %v6017
        %v6336 = vpop.f32.mrf.mxu0
        %v6337 = vadd.f32 0.0, %v6336
        %v6338 = vpop.f32.mrf.mxu0
        %v6339 = vadd.f32 0.0, %v6338
        %6340 = vmatmul.bf16.gmra.mxu0 %v3765
        %v6341 = vpop.f32.mrf.mxu0
        %v6342 = vadd.f32 0.0, %v6341
        %v6343 = vpop.f32.mrf.mxu0
        %v6344 = vadd.f32 0.0, %v6343
        %6345 = vmatmul.bf16.gmra.mxu0 %v3766
        %v6346 = vpop.f32.mrf.mxu0
        %v6347 = vadd.f32 0.0, %v6346
        %v6348 = vpop.f32.mrf.mxu0
        %v6349 = vadd.f32 0.0, %v6348
        %6350 = vmatmul.bf16.gmra.mxu0 %v3767
        %v6351 = vpop.f32.mrf.mxu0
        %v6352 = vadd.f32 0.0, %v6351
        %v6353 = vpop.f32.mrf.mxu0
        %v6354 = vadd.f32 0.0, %v6353
        %6355 = vmatmul.bf16.gmra.mxu0 %v6018
        %v6356 = vpop.f32.mrf.mxu0
        %v6357 = vadd.f32 0.0, %v6356
        %v6358 = vpop.f32.mrf.mxu0
        %v6359 = vadd.f32 0.0, %v6358
        %6360 = vmatmul.bf16.gmra.mxu0 %v3769
        %v6361 = vpop.f32.mrf.mxu0
        %v6362 = vadd.f32 0.0, %v6361
        %v6363 = vpop.f32.mrf.mxu0
        %v6364 = vadd.f32 0.0, %v6363
        %6365 = vmatmul.bf16.gmra.mxu0 %v3770
        %v6366 = vpop.f32.mrf.mxu0
        %v6367 = vadd.f32 0.0, %v6366
        %v6368 = vpop.f32.mrf.mxu0
        %v6369 = vadd.f32 0.0, %v6368
        %6370 = vmatmul.bf16.gmra.mxu0 %v3771
        %v6371 = vpop.f32.mrf.mxu0
        %v6372 = vadd.f32 0.0, %v6371
        %v6373 = vpop.f32.mrf.mxu0
        %v6374 = vadd.f32 0.0, %v6373
        %6375 = vmatmul.bf16.gmra.mxu0 %v6019
        %v6376 = vpop.f32.mrf.mxu0
        %v6377 = vadd.f32 0.0, %v6376
        %v6378 = vpop.f32.mrf.mxu0
        %v6379 = vadd.f32 0.0, %v6378
        %6380 = vmatmul.bf16.gmra.mxu0 %v3773
        %v6381 = vpop.f32.mrf.mxu0
        %v6382 = vadd.f32 0.0, %v6381
        %v6383 = vpop.f32.mrf.mxu0
        %v6384 = vadd.f32 0.0, %v6383
        %6385 = vmatmul.bf16.gmra.mxu0 %v3774
        %v6386 = vpop.f32.mrf.mxu0
        %v6387 = vadd.f32 0.0, %v6386
        %v6388 = vpop.f32.mrf.mxu0
        %v6389 = vadd.f32 0.0, %v6388
        %6390 = vmatmul.bf16.gmra.mxu0 %v3775
        %v6391 = vpop.f32.mrf.mxu0
        %v6392 = vadd.f32 0.0, %v6391
        %v6393 = vpop.f32.mrf.mxu0
        %v6394 = vadd.f32 0.0, %v6393
        %6395 = vmatmul.bf16.gmra.mxu0 %v6020
        %v6396 = vpop.f32.mrf.mxu0
        %v6397 = vadd.f32 0.0, %v6396
        %v6398 = vpop.f32.mrf.mxu0
        %v6399 = vadd.f32 0.0, %v6398
        %6400 = vmatmul.bf16.gmra.mxu0 %v3777
        %v6401 = vpop.f32.mrf.mxu0
        %v6402 = vadd.f32 0.0, %v6401
        %v6403 = vpop.f32.mrf.mxu0
        %v6404 = vadd.f32 0.0, %v6403
        %6405 = vmatmul.bf16.gmra.mxu0 %v3778
        %v6406 = vpop.f32.mrf.mxu0
        %v6407 = vadd.f32 0.0, %v6406
        %v6408 = vpop.f32.mrf.mxu0
        %v6409 = vadd.f32 0.0, %v6408
        %6410 = vmatmul.bf16.gmra.mxu0 %v3779
        %v6411 = vpop.f32.mrf.mxu0
        %v6412 = vadd.f32 0.0, %v6411
        %v6413 = vpop.f32.mrf.mxu0
        %v6414 = vadd.f32 0.0, %v6413
        %6415 = vmatmul.bf16.gmra.mxu0 %v6021
        %v6416 = vpop.f32.mrf.mxu0
        %v6417 = vadd.f32 0.0, %v6416
        %v6418 = vpop.f32.mrf.mxu0
        %v6419 = vadd.f32 0.0, %v6418
        %6420 = vmatmul.bf16.gmra.mxu0 %v3781
        %v6421 = vpop.f32.mrf.mxu0
        %v6422 = vadd.f32 0.0, %v6421
        %v6423 = vpop.f32.mrf.mxu0
        %v6424 = vadd.f32 0.0, %v6423
        %6425 = vmatmul.bf16.gmra.mxu0 %v3782
        %v6426 = vpop.f32.mrf.mxu0
        %v6427 = vadd.f32 0.0, %v6426
        %v6428 = vpop.f32.mrf.mxu0
        %v6429 = vadd.f32 0.0, %v6428
        %6430 = vmatmul.bf16.gmra.mxu0 %v3783
        %v6431 = vpop.f32.mrf.mxu0
        %v6432 = vadd.f32 0.0, %v6431
        %v6433 = vpop.f32.mrf.mxu0
        %v6434 = vadd.f32 0.0, %v6433
        %6435 = vmatmul.bf16.gmra.mxu0 %v6022
        %v6436 = vpop.f32.mrf.mxu0
        %v6437 = vadd.f32 0.0, %v6436
        %v6438 = vpop.f32.mrf.mxu0
        %v6439 = vadd.f32 0.0, %v6438
        %6440 = vdwg.mxu0
        %6441 = vmatpush.bf16.msra.mxu0 %v6239
        %6442 = vmatpush.bf16.msra.mxu0 %v6238
        %6443 = vmatpush.bf16.msra.mxu0 %v6237
        %6444 = vmatpush.bf16.msra.mxu0 %v6236
        %6445 = vmatpush.bf16.msra.mxu0 %v6235
        %6446 = vmatpush.bf16.msra.mxu0 %v6234
        %6447 = vmatpush.bf16.msra.mxu0 %v6233
        %6448 = vmatpush.bf16.msra.mxu0 %v6232
        %6449 = vmatmul.bf16.gmra.mxu0 %v3881
        %v6450 = vpop.f32.mrf.mxu0
        %v6451 = vadd.f32 %v6282, %v6450
        %v6452 = vpop.f32.mrf.mxu0
        %v6453 = vadd.f32 %v6284, %v6452
        %6454 = vmatmul.bf16.gmra.mxu0 %v3882
        %v6455 = vpop.f32.mrf.mxu0
        %v6456 = vadd.f32 %v6287, %v6455
        %v6457 = vpop.f32.mrf.mxu0
        %v6458 = vadd.f32 %v6289, %v6457
        %6459 = vmatmul.bf16.gmra.mxu0 %v3883
        %v6460 = vpop.f32.mrf.mxu0
        %v6461 = vadd.f32 %v6292, %v6460
        %v6462 = vpop.f32.mrf.mxu0
        %v6463 = vadd.f32 %v6294, %v6462
        %6464 = vmatmul.bf16.gmra.mxu0 %v6039
        %v6465 = vpop.f32.mrf.mxu0
        %v6466 = vadd.f32 %v6297, %v6465
        %v6467 = vpop.f32.mrf.mxu0
        %v6468 = vadd.f32 %v6299, %v6467
        %6469 = vmatmul.bf16.gmra.mxu0 %v3885
        %v6470 = vpop.f32.mrf.mxu0
        %v6471 = vadd.f32 %v6302, %v6470
        %v6472 = vpop.f32.mrf.mxu0
        %v6473 = vadd.f32 %v6304, %v6472
        %6474 = vmatmul.bf16.gmra.mxu0 %v3886
        %v6475 = vpop.f32.mrf.mxu0
        %v6476 = vadd.f32 %v6307, %v6475
        %v6477 = vpop.f32.mrf.mxu0
        %v6478 = vadd.f32 %v6309, %v6477
        %6479 = vmatmul.bf16.gmra.mxu0 %v3887
        %v6480 = vpop.f32.mrf.mxu0
        %v6481 = vadd.f32 %v6312, %v6480
        %v6482 = vpop.f32.mrf.mxu0
        %v6483 = vadd.f32 %v6314, %v6482
        %6484 = vmatmul.bf16.gmra.mxu0 %v6040
        %v6485 = vpop.f32.mrf.mxu0
        %v6486 = vadd.f32 %v6317, %v6485
        %v6487 = vpop.f32.mrf.mxu0
        %v6488 = vadd.f32 %v6319, %v6487
        %6489 = vmatmul.bf16.gmra.mxu0 %v3889
        %v6490 = vpop.f32.mrf.mxu0
        %v6491 = vadd.f32 %v6322, %v6490
        %v6492 = vpop.f32.mrf.mxu0
        %v6493 = vadd.f32 %v6324, %v6492
        %6494 = vmatmul.bf16.gmra.mxu0 %v3890
        %v6495 = vpop.f32.mrf.mxu0
        %v6496 = vadd.f32 %v6327, %v6495
        %v6497 = vpop.f32.mrf.mxu0
        %v6498 = vadd.f32 %v6329, %v6497
        %6499 = vmatmul.bf16.gmra.mxu0 %v3891
        %v6500 = vpop.f32.mrf.mxu0
        %v6501 = vadd.f32 %v6332, %v6500
        %v6502 = vpop.f32.mrf.mxu0
        %v6503 = vadd.f32 %v6334, %v6502
        %6504 = vmatmul.bf16.gmra.mxu0 %v6041
        %v6505 = vpop.f32.mrf.mxu0
        %v6506 = vadd.f32 %v6337, %v6505
        %v6507 = vpop.f32.mrf.mxu0
        %v6508 = vadd.f32 %v6339, %v6507
        %6509 = vmatmul.bf16.gmra.mxu0 %v3893
        %v6510 = vpop.f32.mrf.mxu0
        %v6511 = vadd.f32 %v6342, %v6510
        %v6512 = vpop.f32.mrf.mxu0
        %v6513 = vadd.f32 %v6344, %v6512
        %6514 = vmatmul.bf16.gmra.mxu0 %v3894
        %v6515 = vpop.f32.mrf.mxu0
        %v6516 = vadd.f32 %v6347, %v6515
        %v6517 = vpop.f32.mrf.mxu0
        %v6518 = vadd.f32 %v6349, %v6517
        %6519 = vmatmul.bf16.gmra.mxu0 %v3895
        %v6520 = vpop.f32.mrf.mxu0
        %v6521 = vadd.f32 %v6352, %v6520
        %v6522 = vpop.f32.mrf.mxu0
        %v6523 = vadd.f32 %v6354, %v6522
        %6524 = vmatmul.bf16.gmra.mxu0 %v6042
        %v6525 = vpop.f32.mrf.mxu0
        %v6526 = vadd.f32 %v6357, %v6525
        %v6527 = vpop.f32.mrf.mxu0
        %v6528 = vadd.f32 %v6359, %v6527
        %6529 = vmatmul.bf16.gmra.mxu0 %v3897
        %v6530 = vpop.f32.mrf.mxu0
        %v6531 = vadd.f32 %v6362, %v6530
        %v6532 = vpop.f32.mrf.mxu0
        %v6533 = vadd.f32 %v6364, %v6532
        %6534 = vmatmul.bf16.gmra.mxu0 %v3898
        %v6535 = vpop.f32.mrf.mxu0
        %v6536 = vadd.f32 %v6367, %v6535
        %v6537 = vpop.f32.mrf.mxu0
        %v6538 = vadd.f32 %v6369, %v6537
        %6539 = vmatmul.bf16.gmra.mxu0 %v3899
        %v6540 = vpop.f32.mrf.mxu0
        %v6541 = vadd.f32 %v6372, %v6540
        %v6542 = vpop.f32.mrf.mxu0
        %v6543 = vadd.f32 %v6374, %v6542
        %6544 = vmatmul.bf16.gmra.mxu0 %v6043
        %v6545 = vpop.f32.mrf.mxu0
        %v6546 = vadd.f32 %v6377, %v6545
        %v6547 = vpop.f32.mrf.mxu0
        %v6548 = vadd.f32 %v6379, %v6547
        %6549 = vmatmul.bf16.gmra.mxu0 %v3901
        %v6550 = vpop.f32.mrf.mxu0
        %v6551 = vadd.f32 %v6382, %v6550
        %v6552 = vpop.f32.mrf.mxu0
        %v6553 = vadd.f32 %v6384, %v6552
        %6554 = vmatmul.bf16.gmra.mxu0 %v3902
        %v6555 = vpop.f32.mrf.mxu0
        %v6556 = vadd.f32 %v6387, %v6555
        %v6557 = vpop.f32.mrf.mxu0
        %v6558 = vadd.f32 %v6389, %v6557
        %6559 = vmatmul.bf16.gmra.mxu0 %v3903
        %v6560 = vpop.f32.mrf.mxu0
        %v6561 = vadd.f32 %v6392, %v6560
        %v6562 = vpop.f32.mrf.mxu0
        %v6563 = vadd.f32 %v6394, %v6562
        %6564 = vmatmul.bf16.gmra.mxu0 %v6044
        %v6565 = vpop.f32.mrf.mxu0
        %v6566 = vadd.f32 %v6397, %v6565
        %v6567 = vpop.f32.mrf.mxu0
        %v6568 = vadd.f32 %v6399, %v6567
        %6569 = vmatmul.bf16.gmra.mxu0 %v3905
        %v6570 = vpop.f32.mrf.mxu0
        %v6571 = vadd.f32 %v6402, %v6570
        %v6572 = vpop.f32.mrf.mxu0
        %v6573 = vadd.f32 %v6404, %v6572
        %6574 = vmatmul.bf16.gmra.mxu0 %v3906
        %v6575 = vpop.f32.mrf.mxu0
        %v6576 = vadd.f32 %v6407, %v6575
        %v6577 = vpop.f32.mrf.mxu0
        %v6578 = vadd.f32 %v6409, %v6577
        %6579 = vmatmul.bf16.gmra.mxu0 %v3907
        %v6580 = vpop.f32.mrf.mxu0
        %v6581 = vadd.f32 %v6412, %v6580
        %v6582 = vpop.f32.mrf.mxu0
        %v6583 = vadd.f32 %v6414, %v6582
        %6584 = vmatmul.bf16.gmra.mxu0 %v6045
        %v6585 = vpop.f32.mrf.mxu0
        %v6586 = vadd.f32 %v6417, %v6585
        %v6587 = vpop.f32.mrf.mxu0
        %v6588 = vadd.f32 %v6419, %v6587
        %6589 = vmatmul.bf16.gmra.mxu0 %v3909
        %v6590 = vpop.f32.mrf.mxu0
        %v6591 = vadd.f32 %v6422, %v6590
        %v6592 = vpop.f32.mrf.mxu0
        %v6593 = vadd.f32 %v6424, %v6592
        %6594 = vmatmul.bf16.gmra.mxu0 %v3910
        %v6595 = vpop.f32.mrf.mxu0
        %v6596 = vadd.f32 %v6427, %v6595
        %v6597 = vpop.f32.mrf.mxu0
        %v6598 = vadd.f32 %v6429, %v6597
        %6599 = vmatmul.bf16.gmra.mxu0 %v3911
        %v6600 = vpop.f32.mrf.mxu0
        %v6601 = vadd.f32 %v6432, %v6600
        %v6602 = vpop.f32.mrf.mxu0
        %v6603 = vadd.f32 %v6434, %v6602
        %6604 = vmatmul.bf16.gmra.mxu0 %v6046
        %v6605 = vpop.f32.mrf.mxu0
        %v6606 = vadd.f32 %v6437, %v6605
        %v6607 = vpop.f32.mrf.mxu0
        %v6608 = vadd.f32 %v6439, %v6607
        %6609 = vdwg.mxu0
        %6610 = vmatpush.bf16.msra.mxu0 %v6247
        %6611 = vmatpush.bf16.msra.mxu0 %v6246
        %6612 = vmatpush.bf16.msra.mxu0 %v6245
        %6613 = vmatpush.bf16.msra.mxu0 %v6244
        %6614 = vmatpush.bf16.msra.mxu0 %v6243
        %6615 = vmatpush.bf16.msra.mxu0 %v6242
        %6616 = vmatpush.bf16.msra.mxu0 %v6241
        %6617 = vmatpush.bf16.msra.mxu0 %v6240
        %6618 = vmatmul.bf16.gmra.mxu0 %v4009
        %v6619 = vpop.f32.mrf.mxu0
        %v6620 = vadd.f32 %v6451, %v6619
        %v6621 = vpop.f32.mrf.mxu0
        %v6622 = vadd.f32 %v6453, %v6621
        %6623 = vmatmul.bf16.gmra.mxu0 %v4010
        %v6624 = vpop.f32.mrf.mxu0
        %v6625 = vadd.f32 %v6456, %v6624
        %v6626 = vpop.f32.mrf.mxu0
        %v6627 = vadd.f32 %v6458, %v6626
        %6628 = vmatmul.bf16.gmra.mxu0 %v4011
        %v6629 = vpop.f32.mrf.mxu0
        %v6630 = vadd.f32 %v6461, %v6629
        %v6631 = vpop.f32.mrf.mxu0
        %v6632 = vadd.f32 %v6463, %v6631
        %6633 = vmatmul.bf16.gmra.mxu0 %v6063
        %v6634 = vpop.f32.mrf.mxu0
        %v6635 = vadd.f32 %v6466, %v6634
        %v6636 = vpop.f32.mrf.mxu0
        %v6637 = vadd.f32 %v6468, %v6636
        %6638 = vmatmul.bf16.gmra.mxu0 %v4013
        %v6639 = vpop.f32.mrf.mxu0
        %v6640 = vadd.f32 %v6471, %v6639
        %v6641 = vpop.f32.mrf.mxu0
        %v6642 = vadd.f32 %v6473, %v6641
        %6643 = vmatmul.bf16.gmra.mxu0 %v4014
        %v6644 = vpop.f32.mrf.mxu0
        %v6645 = vadd.f32 %v6476, %v6644
        %v6646 = vpop.f32.mrf.mxu0
        %v6647 = vadd.f32 %v6478, %v6646
        %6648 = vmatmul.bf16.gmra.mxu0 %v4015
        %v6649 = vpop.f32.mrf.mxu0
        %v6650 = vadd.f32 %v6481, %v6649
        %v6651 = vpop.f32.mrf.mxu0
        %v6652 = vadd.f32 %v6483, %v6651
        %6653 = vmatmul.bf16.gmra.mxu0 %v6064
        %v6654 = vpop.f32.mrf.mxu0
        %v6655 = vadd.f32 %v6486, %v6654
        %v6656 = vpop.f32.mrf.mxu0
        %v6657 = vadd.f32 %v6488, %v6656
        %6658 = vmatmul.bf16.gmra.mxu0 %v4017
        %v6659 = vpop.f32.mrf.mxu0
        %v6660 = vadd.f32 %v6491, %v6659
        %v6661 = vpop.f32.mrf.mxu0
        %v6662 = vadd.f32 %v6493, %v6661
        %6663 = vmatmul.bf16.gmra.mxu0 %v4018
        %v6664 = vpop.f32.mrf.mxu0
        %v6665 = vadd.f32 %v6496, %v6664
        %v6666 = vpop.f32.mrf.mxu0
        %v6667 = vadd.f32 %v6498, %v6666
        %6668 = vmatmul.bf16.gmra.mxu0 %v4019
        %v6669 = vpop.f32.mrf.mxu0
        %v6670 = vadd.f32 %v6501, %v6669
        %v6671 = vpop.f32.mrf.mxu0
        %v6672 = vadd.f32 %v6503, %v6671
        %6673 = vmatmul.bf16.gmra.mxu0 %v6065
        %v6674 = vpop.f32.mrf.mxu0
        %v6675 = vadd.f32 %v6506, %v6674
        %v6676 = vpop.f32.mrf.mxu0
        %v6677 = vadd.f32 %v6508, %v6676
        %6678 = vmatmul.bf16.gmra.mxu0 %v4021
        %v6679 = vpop.f32.mrf.mxu0
        %v6680 = vadd.f32 %v6511, %v6679
        %v6681 = vpop.f32.mrf.mxu0
        %v6682 = vadd.f32 %v6513, %v6681
        %6683 = vmatmul.bf16.gmra.mxu0 %v4022
        %v6684 = vpop.f32.mrf.mxu0
        %v6685 = vadd.f32 %v6516, %v6684
        %v6686 = vpop.f32.mrf.mxu0
        %v6687 = vadd.f32 %v6518, %v6686
        %6688 = vmatmul.bf16.gmra.mxu0 %v4023
        %v6689 = vpop.f32.mrf.mxu0
        %v6690 = vadd.f32 %v6521, %v6689
        %v6691 = vpop.f32.mrf.mxu0
        %v6692 = vadd.f32 %v6523, %v6691
        %6693 = vmatmul.bf16.gmra.mxu0 %v6066
        %v6694 = vpop.f32.mrf.mxu0
        %v6695 = vadd.f32 %v6526, %v6694
        %v6696 = vpop.f32.mrf.mxu0
        %v6697 = vadd.f32 %v6528, %v6696
        %6698 = vmatmul.bf16.gmra.mxu0 %v4025
        %v6699 = vpop.f32.mrf.mxu0
        %v6700 = vadd.f32 %v6531, %v6699
        %v6701 = vpop.f32.mrf.mxu0
        %v6702 = vadd.f32 %v6533, %v6701
        %6703 = vmatmul.bf16.gmra.mxu0 %v4026
        %v6704 = vpop.f32.mrf.mxu0
        %v6705 = vadd.f32 %v6536, %v6704
        %v6706 = vpop.f32.mrf.mxu0
        %v6707 = vadd.f32 %v6538, %v6706
        %6708 = vmatmul.bf16.gmra.mxu0 %v4027
        %v6709 = vpop.f32.mrf.mxu0
        %v6710 = vadd.f32 %v6541, %v6709
        %v6711 = vpop.f32.mrf.mxu0
        %v6712 = vadd.f32 %v6543, %v6711
        %6713 = vmatmul.bf16.gmra.mxu0 %v6067
        %v6714 = vpop.f32.mrf.mxu0
        %v6715 = vadd.f32 %v6546, %v6714
        %v6716 = vpop.f32.mrf.mxu0
        %v6717 = vadd.f32 %v6548, %v6716
        %6718 = vmatmul.bf16.gmra.mxu0 %v4029
        %v6719 = vpop.f32.mrf.mxu0
        %v6720 = vadd.f32 %v6551, %v6719
        %v6721 = vpop.f32.mrf.mxu0
        %v6722 = vadd.f32 %v6553, %v6721
        %6723 = vmatmul.bf16.gmra.mxu0 %v4030
        %v6724 = vpop.f32.mrf.mxu0
        %v6725 = vadd.f32 %v6556, %v6724
        %v6726 = vpop.f32.mrf.mxu0
        %v6727 = vadd.f32 %v6558, %v6726
        %6728 = vmatmul.bf16.gmra.mxu0 %v4031
        %v6729 = vpop.f32.mrf.mxu0
        %v6730 = vadd.f32 %v6561, %v6729
        %v6731 = vpop.f32.mrf.mxu0
        %v6732 = vadd.f32 %v6563, %v6731
        %6733 = vmatmul.bf16.gmra.mxu0 %v6068
        %v6734 = vpop.f32.mrf.mxu0
        %v6735 = vadd.f32 %v6566, %v6734
        %v6736 = vpop.f32.mrf.mxu0
        %v6737 = vadd.f32 %v6568, %v6736
        %6738 = vmatmul.bf16.gmra.mxu0 %v4033
        %v6739 = vpop.f32.mrf.mxu0
        %v6740 = vadd.f32 %v6571, %v6739
        %v6741 = vpop.f32.mrf.mxu0
        %v6742 = vadd.f32 %v6573, %v6741
        %6743 = vmatmul.bf16.gmra.mxu0 %v4034
        %v6744 = vpop.f32.mrf.mxu0
        %v6745 = vadd.f32 %v6576, %v6744
        %v6746 = vpop.f32.mrf.mxu0
        %v6747 = vadd.f32 %v6578, %v6746
        %6748 = vmatmul.bf16.gmra.mxu0 %v4035
        %v6749 = vpop.f32.mrf.mxu0
        %v6750 = vadd.f32 %v6581, %v6749
        %v6751 = vpop.f32.mrf.mxu0
        %v6752 = vadd.f32 %v6583, %v6751
        %6753 = vmatmul.bf16.gmra.mxu0 %v6069
        %v6754 = vpop.f32.mrf.mxu0
        %v6755 = vadd.f32 %v6586, %v6754
        %v6756 = vpop.f32.mrf.mxu0
        %v6757 = vadd.f32 %v6588, %v6756
        %6758 = vmatmul.bf16.gmra.mxu0 %v4037
        %v6759 = vpop.f32.mrf.mxu0
        %v6760 = vadd.f32 %v6591, %v6759
        %v6761 = vpop.f32.mrf.mxu0
        %v6762 = vadd.f32 %v6593, %v6761
        %6763 = vmatmul.bf16.gmra.mxu0 %v4038
        %v6764 = vpop.f32.mrf.mxu0
        %v6765 = vadd.f32 %v6596, %v6764
        %v6766 = vpop.f32.mrf.mxu0
        %v6767 = vadd.f32 %v6598, %v6766
        %6768 = vmatmul.bf16.gmra.mxu0 %v4039
        %v6769 = vpop.f32.mrf.mxu0
        %v6770 = vadd.f32 %v6601, %v6769
        %v6771 = vpop.f32.mrf.mxu0
        %v6772 = vadd.f32 %v6603, %v6771
        %6773 = vmatmul.bf16.gmra.mxu0 %v6070
        %v6774 = vpop.f32.mrf.mxu0
        %v6775 = vadd.f32 %v6606, %v6774
        %v6776 = vpop.f32.mrf.mxu0
        %v6777 = vadd.f32 %v6608, %v6776
        %6778 = vdwg.mxu0
        %v6779 = vadd.f32 %v5688, %v6620
        %v6780 = vadd.f32 %v5690, %v6622
        %v6781 = vadd.f32 %v5693, %v6625
        %v6782 = vadd.f32 %v5695, %v6627
        %v6783 = vadd.f32 %v5698, %v6630
        %v6784 = vadd.f32 %v5700, %v6632
        %v6785 = vadd.f32 %v5703, %v6635
        %v6786 = vadd.f32 %v5705, %v6637
        %v6787 = vadd.f32 %v5708, %v6640
        %v6788 = vadd.f32 %v5710, %v6642
        %v6789 = vadd.f32 %v5713, %v6645
        %v6790 = vadd.f32 %v5715, %v6647
        %v6791 = vadd.f32 %v5718, %v6650
        %v6792 = vadd.f32 %v5720, %v6652
        %v6793 = vadd.f32 %v5723, %v6655
        %v6794 = vadd.f32 %v5725, %v6657
        %v6795 = vadd.f32 %v5728, %v6660
        %v6796 = vadd.f32 %v5730, %v6662
        %v6797 = vadd.f32 %v5733, %v6665
        %v6798 = vadd.f32 %v5735, %v6667
        %v6799 = vadd.f32 %v5738, %v6670
        %v6800 = vadd.f32 %v5740, %v6672
        %v6801 = vadd.f32 %v5743, %v6675
        %v6802 = vadd.f32 %v5745, %v6677
        %v6803 = vadd.f32 %v5748, %v6680
        %v6804 = vadd.f32 %v5750, %v6682
        %v6805 = vadd.f32 %v5753, %v6685
        %v6806 = vadd.f32 %v5755, %v6687
        %v6807 = vadd.f32 %v5758, %v6690
        %v6808 = vadd.f32 %v5760, %v6692
        %v6809 = vadd.f32 %v5763, %v6695
        %v6810 = vadd.f32 %v5765, %v6697
        %v6811 = vadd.f32 %v5768, %v6700
        %v6812 = vadd.f32 %v5770, %v6702
        %v6813 = vadd.f32 %v5773, %v6705
        %v6814 = vadd.f32 %v5775, %v6707
        %v6815 = vadd.f32 %v5778, %v6710
        %v6816 = vadd.f32 %v5780, %v6712
        %v6817 = vadd.f32 %v5783, %v6715
        %v6818 = vadd.f32 %v5785, %v6717
        %v6819 = vadd.f32 %v5788, %v6720
        %v6820 = vadd.f32 %v5790, %v6722
        %v6821 = vadd.f32 %v5793, %v6725
        %v6822 = vadd.f32 %v5795, %v6727
        %v6823 = vadd.f32 %v5798, %v6730
        %v6824 = vadd.f32 %v5800, %v6732
        %v6825 = vadd.f32 %v5803, %v6735
        %v6826 = vadd.f32 %v5805, %v6737
        %v6827 = vadd.f32 %v5808, %v6740
        %v6828 = vadd.f32 %v5810, %v6742
        %v6829 = vadd.f32 %v5813, %v6745
        %v6830 = vadd.f32 %v5815, %v6747
        %v6831 = vadd.f32 %v5818, %v6750
        %v6832 = vadd.f32 %v5820, %v6752
        %v6833 = vadd.f32 %v5823, %v6755
        %v6834 = vadd.f32 %v5825, %v6757
        %v6835 = vadd.f32 %v5828, %v6760
        %v6836 = vadd.f32 %v5830, %v6762
        %v6837 = vadd.f32 %v5833, %v6765
        %v6838 = vadd.f32 %v5835, %v6767
        %v6839 = vadd.f32 %v5838, %v6770
        %v6840 = vadd.f32 %v5840, %v6772
        %v6841 = vadd.f32 %v5843, %v6775
        %v6842 = vadd.f32 %v5845, %v6777
        %v6844 = vshrl.u32 %v2362, 16
        %v6846 = vrot.slane %v6844, 4
        %v6847 = vshll.u32 %v2362, 16
        %v6849 = vrot.slane %v6847, 5
        %v6850 = vor.u32 %v6846, %v6849
        %v6851 = vrot.slane %v6850, 4
        %v6853 = vshll.u32 %v2363, 16
        %v6855 = vrot.slane %v6853, 5
        %v6856 = vsel %vm2404, %v6851, %v6855
        %v6858 = vshrl.u32 %v2364, 16
        %v6860 = vrot.slane %v6858, 4
        %v6861 = vshll.u32 %v2364, 16
        %v6863 = vrot.slane %v6861, 5
        %v6864 = vor.u32 %v6860, %v6863
        %v6865 = vrot.slane %v6864, 4
        %v6867 = vshll.u32 %v2365, 16
        %v6869 = vrot.slane %v6867, 5
        %v6870 = vsel %vm2404, %v6865, %v6869
        %v6872 = vshrl.u32 %v2366, 16
        %v6874 = vrot.slane %v6872, 4
        %v6875 = vshll.u32 %v2366, 16
        %v6877 = vrot.slane %v6875, 5
        %v6878 = vor.u32 %v6874, %v6877
        %v6879 = vrot.slane %v6878, 4
        %v6881 = vshll.u32 %v2367, 16
        %v6883 = vrot.slane %v6881, 5
        %v6884 = vsel %vm2404, %v6879, %v6883
        %v6886 = vshrl.u32 %v2368, 16
        %v6888 = vrot.slane %v6886, 4
        %v6889 = vshll.u32 %v2368, 16
        %v6891 = vrot.slane %v6889, 5
        %v6892 = vor.u32 %v6888, %v6891
        %v6893 = vrot.slane %v6892, 4
        %v6895 = vshll.u32 %v2369, 16
        %v6897 = vrot.slane %v6895, 5
        %v6898 = vsel %vm2404, %v6893, %v6897
        %v6900 = vshrl.u32 %v2370, 16
        %v6902 = vrot.slane %v6900, 4
        %v6903 = vshll.u32 %v2370, 16
        %v6905 = vrot.slane %v6903, 5
        %v6906 = vor.u32 %v6902, %v6905
        %v6907 = vrot.slane %v6906, 4
        %v6909 = vshll.u32 %v2371, 16
        %v6911 = vrot.slane %v6909, 5
        %v6912 = vsel %vm2404, %v6907, %v6911
        %v6914 = vshrl.u32 %v2372, 16
        %v6916 = vrot.slane %v6914, 4
        %v6917 = vshll.u32 %v2372, 16
        %v6919 = vrot.slane %v6917, 5
        %v6920 = vor.u32 %v6916, %v6919
        %v6921 = vrot.slane %v6920, 4
        %v6923 = vshll.u32 %v2373, 16
        %v6925 = vrot.slane %v6923, 5
        %v6926 = vsel %vm2404, %v6921, %v6925
        %v6928 = vshrl.u32 %v2374, 16
        %v6930 = vrot.slane %v6928, 4
        %v6931 = vshll.u32 %v2374, 16
        %v6933 = vrot.slane %v6931, 5
        %v6934 = vor.u32 %v6930, %v6933
        %v6935 = vrot.slane %v6934, 4
        %v6937 = vshll.u32 %v2375, 16
        %v6939 = vrot.slane %v6937, 5
        %v6940 = vsel %vm2404, %v6935, %v6939
        %v6942 = vshrl.u32 %v2376, 16
        %v6944 = vrot.slane %v6942, 4
        %v6945 = vshll.u32 %v2376, 16
        %v6947 = vrot.slane %v6945, 5
        %v6948 = vor.u32 %v6944, %v6947
        %v6949 = vrot.slane %v6948, 4
        %v6951 = vshll.u32 %v2377, 16
        %v6953 = vrot.slane %v6951, 5
        %v6954 = vsel %vm2404, %v6949, %v6953
        %v6971 = vrot.slane %v2362, 5
        %v6972 = vrot.slane %v6971, 4
        %v6973 = vrot.slane %v2363, 5
        %v6974 = vsel %vm3431, %v6972, %v6973
        %v6975 = vrot.slane %v2364, 5
        %v6976 = vrot.slane %v6975, 4
        %v6977 = vrot.slane %v2365, 5
        %v6978 = vsel %vm3431, %v6976, %v6977
        %v6979 = vrot.slane %v2366, 5
        %v6980 = vrot.slane %v6979, 4
        %v6981 = vrot.slane %v2367, 5
        %v6982 = vsel %vm3431, %v6980, %v6981
        %v6983 = vrot.slane %v2368, 5
        %v6984 = vrot.slane %v6983, 4
        %v6985 = vrot.slane %v2369, 5
        %v6986 = vsel %vm3431, %v6984, %v6985
        %v6987 = vrot.slane %v2370, 5
        %v6988 = vrot.slane %v6987, 4
        %v6989 = vrot.slane %v2371, 5
        %v6990 = vsel %vm3431, %v6988, %v6989
        %v6991 = vrot.slane %v2372, 5
        %v6992 = vrot.slane %v6991, 4
        %v6993 = vrot.slane %v2373, 5
        %v6994 = vsel %vm3431, %v6992, %v6993
        %v6995 = vrot.slane %v2374, 5
        %v6996 = vrot.slane %v6995, 4
        %v6997 = vrot.slane %v2375, 5
        %v6998 = vsel %vm3431, %v6996, %v6997
        %v6999 = vrot.slane %v2376, 5
        %v7000 = vrot.slane %v6999, 4
        %v7001 = vrot.slane %v2377, 5
        %v7002 = vsel %vm3431, %v7000, %v7001
        %v7003 = vunpack.c.l.b16 %v2362
        %v7004 = vunpack.c.l.b16 %v2364
        %v7005 = vunpack.c.l.b16 %v2366
        %v7006 = vunpack.c.l.b16 %v2368
        %v7007 = vunpack.c.l.b16 %v2370
        %v7008 = vunpack.c.l.b16 %v2372
        %v7009 = vunpack.c.l.b16 %v2374
        %v7010 = vunpack.c.l.b16 %v2376
        %v7011 = vpack.c.b16 %v7004, %v7003
        %v7012 = vpack.c.b16 %v7006, %v7005
        %v7013 = vpack.c.b16 %v7008, %v7007
        %v7014 = vpack.c.b16 %v7010, %v7009
        %v7019 = vunpack.c.l.b16 %v6856
        %v7020 = vunpack.c.l.b16 %v6870
        %v7021 = vunpack.c.l.b16 %v6884
        %v7022 = vunpack.c.l.b16 %v6898
        %v7023 = vunpack.c.l.b16 %v6912
        %v7024 = vunpack.c.l.b16 %v6926
        %v7025 = vunpack.c.l.b16 %v6940
        %v7026 = vunpack.c.l.b16 %v6954
        %v7027 = vpack.c.b16 %v7020, %v7019
        %v7028 = vpack.c.b16 %v7022, %v7021
        %v7029 = vpack.c.b16 %v7024, %v7023
        %v7030 = vpack.c.b16 %v7026, %v7025
        %v7035 = vunpack.c.l.b16 %v6974
        %v7036 = vunpack.c.l.b16 %v6978
        %v7037 = vunpack.c.l.b16 %v6982
        %v7038 = vunpack.c.l.b16 %v6986
        %v7039 = vunpack.c.l.b16 %v6990
        %v7040 = vunpack.c.l.b16 %v6994
        %v7041 = vunpack.c.l.b16 %v6998
        %v7042 = vunpack.c.l.b16 %v7002
        %v7043 = vpack.c.b16 %v7036, %v7035
        %v7044 = vpack.c.b16 %v7038, %v7037
        %v7045 = vpack.c.b16 %v7040, %v7039
        %v7046 = vpack.c.b16 %v7042, %v7041
        %s7051 = scalar_lea.vmem [#allocation8], 576
        %v7052 = vld [vmem:[%s7051] sm:$0xf]
        %v7053 = vld [vmem:[%s7051 + $0x4] sm:$0xf]
        %v7054 = vld [vmem:[%s7051 + $0x8] sm:$0xf]
        %v7055 = vld [vmem:[%s7051 + $0xc] sm:$0xf]
        %v7056 = vld [vmem:[%s7051 + $0x10] sm:$0xf]
        %v7057 = vld [vmem:[%s7051 + $0x14] sm:$0xf]
        %v7058 = vld [vmem:[%s7051 + $0x18] sm:$0xf]
        %v7059 = vld [vmem:[%s7051 + $0x1c] sm:$0xf]
        %v7060 = vld [vmem:[%s7051 + $0x20] sm:$0xf]
        %v7061 = vld [vmem:[%s7051 + $0x24] sm:$0xf]
        %v7062 = vld [vmem:[%s7051 + $0x28] sm:$0xf]
        %v7063 = vld [vmem:[%s7051 + $0x2c] sm:$0xf]
        %v7064 = vld [vmem:[%s7051 + $0x30] sm:$0xf]
        %v7065 = vld [vmem:[%s7051 + $0x34] sm:$0xf]
        %v7066 = vld [vmem:[%s7051 + $0x38] sm:$0xf]
        %v7067 = vld [vmem:[%s7051 + $0x3c] sm:$0xf]
        %v7068 = vld [vmem:[%s7051 + $0x40] sm:$0xf]
        %v7069 = vld [vmem:[%s7051 + $0x44] sm:$0xf]
        %v7070 = vld [vmem:[%s7051 + $0x48] sm:$0xf]
        %v7071 = vld [vmem:[%s7051 + $0x4c] sm:$0xf]
        %v7072 = vld [vmem:[%s7051 + $0x50] sm:$0xf]
        %v7073 = vld [vmem:[%s7051 + $0x54] sm:$0xf]
        %v7074 = vld [vmem:[%s7051 + $0x58] sm:$0xf]
        %v7075 = vld [vmem:[%s7051 + $0x5c] sm:$0xf]
        %v7076 = vld [vmem:[%s7051 + $0x60] sm:$0xf]
        %v7077 = vld [vmem:[%s7051 + $0x64] sm:$0xf]
        %v7078 = vld [vmem:[%s7051 + $0x68] sm:$0xf]
        %v7079 = vld [vmem:[%s7051 + $0x6c] sm:$0xf]
        %v7080 = vld [vmem:[%s7051 + $0x70] sm:$0xf]
        %v7081 = vld [vmem:[%s7051 + $0x74] sm:$0xf]
        %v7082 = vld [vmem:[%s7051 + $0x78] sm:$0xf]
        %v7083 = vld [vmem:[%s7051 + $0x7c] sm:$0xf]
        %v7084 = vld [vmem:[%s7051 + $0x80] sm:$0xf]
        %v7085 = vld [vmem:[%s7051 + $0x84] sm:$0xf]
        %v7086 = vld [vmem:[%s7051 + $0x88] sm:$0xf]
        %v7087 = vld [vmem:[%s7051 + $0x8c] sm:$0xf]
        %v7088 = vld [vmem:[%s7051 + $0x90] sm:$0xf]
        %v7089 = vld [vmem:[%s7051 + $0x94] sm:$0xf]
        %v7090 = vld [vmem:[%s7051 + $0x98] sm:$0xf]
        %v7091 = vld [vmem:[%s7051 + $0x9c] sm:$0xf]
        %v7092 = vld [vmem:[%s7051 + $0xa0] sm:$0xf]
        %v7093 = vld [vmem:[%s7051 + $0xa4] sm:$0xf]
        %v7094 = vld [vmem:[%s7051 + $0xa8] sm:$0xf]
        %v7095 = vld [vmem:[%s7051 + $0xac] sm:$0xf]
        %v7096 = vld [vmem:[%s7051 + $0xb0] sm:$0xf]
        %v7097 = vld [vmem:[%s7051 + $0xb4] sm:$0xf]
        %v7098 = vld [vmem:[%s7051 + $0xb8] sm:$0xf]
        %v7099 = vld [vmem:[%s7051 + $0xbc] sm:$0xf]
        %v7148 = vunpack.c.l.b16 %v7052
        %v7149 = vunpack.c.l.b16 %v7053
        %v7150 = vunpack.c.l.b16 %v7054
        %v7151 = vunpack.c.l.b16 %v7055
        %v7152 = vunpack.c.l.b16 %v7056
        %v7153 = vunpack.c.l.b16 %v7057
        %v7154 = vunpack.c.l.b16 %v7058
        %v7155 = vunpack.c.l.b16 %v7059
        %v7156 = vunpack.c.l.b16 %v7060
        %v7157 = vunpack.c.l.b16 %v7061
        %v7158 = vunpack.c.l.b16 %v7062
        %v7159 = vunpack.c.l.b16 %v7063
        %v7160 = vunpack.c.l.b16 %v7064
        %v7161 = vunpack.c.l.b16 %v7065
        %v7162 = vunpack.c.l.b16 %v7066
        %v7163 = vunpack.c.l.b16 %v7067
        %v7164 = vunpack.c.l.b16 %v7068
        %v7165 = vunpack.c.l.b16 %v7069
        %v7166 = vunpack.c.l.b16 %v7070
        %v7167 = vunpack.c.l.b16 %v7071
        %v7168 = vunpack.c.l.b16 %v7072
        %v7169 = vunpack.c.l.b16 %v7073
        %v7170 = vunpack.c.l.b16 %v7074
        %v7171 = vunpack.c.l.b16 %v7075
        %v7172 = vunpack.c.l.b16 %v7076
        %v7173 = vunpack.c.l.b16 %v7077
        %v7174 = vunpack.c.l.b16 %v7078
        %v7175 = vunpack.c.l.b16 %v7079
        %v7176 = vunpack.c.l.b16 %v7080
        %v7177 = vunpack.c.l.b16 %v7081
        %v7178 = vunpack.c.l.b16 %v7082
        %v7179 = vunpack.c.l.b16 %v7083
        %v7180 = vunpack.c.l.b16 %v7084
        %v7181 = vunpack.c.l.b16 %v7085
        %v7182 = vunpack.c.l.b16 %v7086
        %v7183 = vunpack.c.l.b16 %v7087
        %v7184 = vunpack.c.l.b16 %v7088
        %v7185 = vunpack.c.l.b16 %v7089
        %v7186 = vunpack.c.l.b16 %v7090
        %v7187 = vunpack.c.l.b16 %v7091
        %v7188 = vunpack.c.l.b16 %v7092
        %v7189 = vunpack.c.l.b16 %v7093
        %v7190 = vunpack.c.l.b16 %v7094
        %v7191 = vunpack.c.l.b16 %v7095
        %v7192 = vunpack.c.l.b16 %v7096
        %v7193 = vunpack.c.l.b16 %v7097
        %v7194 = vunpack.c.l.b16 %v7098
        %v7195 = vunpack.c.l.b16 %v7099
        %v7196 = vpack.c.b16 %v7149, %v7148
        %v7197 = vpack.c.b16 %v7151, %v7150
        %v7198 = vpack.c.b16 %v7153, %v7152
        %v7199 = vpack.c.b16 %v7155, %v7154
        %v7200 = vpack.c.b16 %v7157, %v7156
        %v7201 = vpack.c.b16 %v7159, %v7158
        %v7202 = vpack.c.b16 %v7161, %v7160
        %v7203 = vpack.c.b16 %v7163, %v7162
        %v7204 = vpack.c.b16 %v7165, %v7164
        %v7205 = vpack.c.b16 %v7167, %v7166
        %v7206 = vpack.c.b16 %v7169, %v7168
        %v7207 = vpack.c.b16 %v7171, %v7170
        %v7208 = vpack.c.b16 %v7173, %v7172
        %v7209 = vpack.c.b16 %v7175, %v7174
        %v7210 = vpack.c.b16 %v7177, %v7176
        %v7211 = vpack.c.b16 %v7179, %v7178
        %v7212 = vpack.c.b16 %v7181, %v7180
        %v7213 = vpack.c.b16 %v7183, %v7182
        %v7214 = vpack.c.b16 %v7185, %v7184
        %v7215 = vpack.c.b16 %v7187, %v7186
        %v7216 = vpack.c.b16 %v7189, %v7188
        %v7217 = vpack.c.b16 %v7191, %v7190
        %v7218 = vpack.c.b16 %v7193, %v7192
        %v7219 = vpack.c.b16 %v7195, %v7194
        %7244 = vmatpush.bf16.msra.mxu0 %v7203
        %7245 = vmatpush.bf16.msra.mxu0 %v7202
        %7246 = vmatpush.bf16.msra.mxu0 %v7201
        %7247 = vmatpush.bf16.msra.mxu0 %v7200
        %7248 = vmatpush.bf16.msra.mxu0 %v7199
        %7249 = vmatpush.bf16.msra.mxu0 %v7198
        %7250 = vmatpush.bf16.msra.mxu0 %v7197
        %7251 = vmatpush.bf16.msra.mxu0 %v7196
        %7252 = vmatmul.bf16.gmra.mxu0 %v3756
        %v7253 = vpop.f32.mrf.mxu0
        %v7254 = vadd.f32 0.0, %v7253
        %v7255 = vpop.f32.mrf.mxu0
        %v7256 = vadd.f32 0.0, %v7255
        %7257 = vmatmul.bf16.gmra.mxu0 %v3757
        %v7258 = vpop.f32.mrf.mxu0
        %v7259 = vadd.f32 0.0, %v7258
        %v7260 = vpop.f32.mrf.mxu0
        %v7261 = vadd.f32 0.0, %v7260
        %7262 = vmatmul.bf16.gmra.mxu0 %v3758
        %v7263 = vpop.f32.mrf.mxu0
        %v7264 = vadd.f32 0.0, %v7263
        %v7265 = vpop.f32.mrf.mxu0
        %v7266 = vadd.f32 0.0, %v7265
        %7267 = vmatmul.bf16.gmra.mxu0 %v3759
        %v7268 = vpop.f32.mrf.mxu0
        %v7269 = vadd.f32 0.0, %v7268
        %v7270 = vpop.f32.mrf.mxu0
        %v7271 = vadd.f32 0.0, %v7270
        %7272 = vmatmul.bf16.gmra.mxu0 %v3760
        %v7273 = vpop.f32.mrf.mxu0
        %v7274 = vadd.f32 0.0, %v7273
        %v7275 = vpop.f32.mrf.mxu0
        %v7276 = vadd.f32 0.0, %v7275
        %7277 = vmatmul.bf16.gmra.mxu0 %v3761
        %v7278 = vpop.f32.mrf.mxu0
        %v7279 = vadd.f32 0.0, %v7278
        %v7280 = vpop.f32.mrf.mxu0
        %v7281 = vadd.f32 0.0, %v7280
        %7282 = vmatmul.bf16.gmra.mxu0 %v3762
        %v7283 = vpop.f32.mrf.mxu0
        %v7284 = vadd.f32 0.0, %v7283
        %v7285 = vpop.f32.mrf.mxu0
        %v7286 = vadd.f32 0.0, %v7285
        %7287 = vmatmul.bf16.gmra.mxu0 %v3763
        %v7288 = vpop.f32.mrf.mxu0
        %v7289 = vadd.f32 0.0, %v7288
        %v7290 = vpop.f32.mrf.mxu0
        %v7291 = vadd.f32 0.0, %v7290
        %7292 = vmatmul.bf16.gmra.mxu0 %v3764
        %v7293 = vpop.f32.mrf.mxu0
        %v7294 = vadd.f32 0.0, %v7293
        %v7295 = vpop.f32.mrf.mxu0
        %v7296 = vadd.f32 0.0, %v7295
        %7297 = vmatmul.bf16.gmra.mxu0 %v3765
        %v7298 = vpop.f32.mrf.mxu0
        %v7299 = vadd.f32 0.0, %v7298
        %v7300 = vpop.f32.mrf.mxu0
        %v7301 = vadd.f32 0.0, %v7300
        %7302 = vmatmul.bf16.gmra.mxu0 %v3766
        %v7303 = vpop.f32.mrf.mxu0
        %v7304 = vadd.f32 0.0, %v7303
        %v7305 = vpop.f32.mrf.mxu0
        %v7306 = vadd.f32 0.0, %v7305
        %7307 = vmatmul.bf16.gmra.mxu0 %v3767
        %v7308 = vpop.f32.mrf.mxu0
        %v7309 = vadd.f32 0.0, %v7308
        %v7310 = vpop.f32.mrf.mxu0
        %v7311 = vadd.f32 0.0, %v7310
        %7312 = vmatmul.bf16.gmra.mxu0 %v3768
        %v7313 = vpop.f32.mrf.mxu0
        %v7314 = vadd.f32 0.0, %v7313
        %v7315 = vpop.f32.mrf.mxu0
        %v7316 = vadd.f32 0.0, %v7315
        %7317 = vmatmul.bf16.gmra.mxu0 %v3769
        %v7318 = vpop.f32.mrf.mxu0
        %v7319 = vadd.f32 0.0, %v7318
        %v7320 = vpop.f32.mrf.mxu0
        %v7321 = vadd.f32 0.0, %v7320
        %7322 = vmatmul.bf16.gmra.mxu0 %v3770
        %v7323 = vpop.f32.mrf.mxu0
        %v7324 = vadd.f32 0.0, %v7323
        %v7325 = vpop.f32.mrf.mxu0
        %v7326 = vadd.f32 0.0, %v7325
        %7327 = vmatmul.bf16.gmra.mxu0 %v3771
        %v7328 = vpop.f32.mrf.mxu0
        %v7329 = vadd.f32 0.0, %v7328
        %v7330 = vpop.f32.mrf.mxu0
        %v7331 = vadd.f32 0.0, %v7330
        %7332 = vmatmul.bf16.gmra.mxu0 %v3772
        %v7333 = vpop.f32.mrf.mxu0
        %v7334 = vadd.f32 0.0, %v7333
        %v7335 = vpop.f32.mrf.mxu0
        %v7336 = vadd.f32 0.0, %v7335
        %7337 = vmatmul.bf16.gmra.mxu0 %v3773
        %v7338 = vpop.f32.mrf.mxu0
        %v7339 = vadd.f32 0.0, %v7338
        %v7340 = vpop.f32.mrf.mxu0
        %v7341 = vadd.f32 0.0, %v7340
        %7342 = vmatmul.bf16.gmra.mxu0 %v3774
        %v7343 = vpop.f32.mrf.mxu0
        %v7344 = vadd.f32 0.0, %v7343
        %v7345 = vpop.f32.mrf.mxu0
        %v7346 = vadd.f32 0.0, %v7345
        %7347 = vmatmul.bf16.gmra.mxu0 %v3775
        %v7348 = vpop.f32.mrf.mxu0
        %v7349 = vadd.f32 0.0, %v7348
        %v7350 = vpop.f32.mrf.mxu0
        %v7351 = vadd.f32 0.0, %v7350
        %7352 = vmatmul.bf16.gmra.mxu0 %v3776
        %v7353 = vpop.f32.mrf.mxu0
        %v7354 = vadd.f32 0.0, %v7353
        %v7355 = vpop.f32.mrf.mxu0
        %v7356 = vadd.f32 0.0, %v7355
        %7357 = vmatmul.bf16.gmra.mxu0 %v3777
        %v7358 = vpop.f32.mrf.mxu0
        %v7359 = vadd.f32 0.0, %v7358
        %v7360 = vpop.f32.mrf.mxu0
        %v7361 = vadd.f32 0.0, %v7360
        %7362 = vmatmul.bf16.gmra.mxu0 %v3778
        %v7363 = vpop.f32.mrf.mxu0
        %v7364 = vadd.f32 0.0, %v7363
        %v7365 = vpop.f32.mrf.mxu0
        %v7366 = vadd.f32 0.0, %v7365
        %7367 = vmatmul.bf16.gmra.mxu0 %v3779
        %v7368 = vpop.f32.mrf.mxu0
        %v7369 = vadd.f32 0.0, %v7368
        %v7370 = vpop.f32.mrf.mxu0
        %v7371 = vadd.f32 0.0, %v7370
        %7372 = vmatmul.bf16.gmra.mxu0 %v3780
        %v7373 = vpop.f32.mrf.mxu0
        %v7374 = vadd.f32 0.0, %v7373
        %v7375 = vpop.f32.mrf.mxu0
        %v7376 = vadd.f32 0.0, %v7375
        %7377 = vmatmul.bf16.gmra.mxu0 %v3781
        %v7378 = vpop.f32.mrf.mxu0
        %v7379 = vadd.f32 0.0, %v7378
        %v7380 = vpop.f32.mrf.mxu0
        %v7381 = vadd.f32 0.0, %v7380
        %7382 = vmatmul.bf16.gmra.mxu0 %v3782
        %v7383 = vpop.f32.mrf.mxu0
        %v7384 = vadd.f32 0.0, %v7383
        %v7385 = vpop.f32.mrf.mxu0
        %v7386 = vadd.f32 0.0, %v7385
        %7387 = vmatmul.bf16.gmra.mxu0 %v3783
        %v7388 = vpop.f32.mrf.mxu0
        %v7389 = vadd.f32 0.0, %v7388
        %v7390 = vpop.f32.mrf.mxu0
        %v7391 = vadd.f32 0.0, %v7390
        %7392 = vmatmul.bf16.gmra.mxu0 %v7011
        %v7393 = vpop.f32.mrf.mxu0
        %v7394 = vadd.f32 0.0, %v7393
        %v7395 = vpop.f32.mrf.mxu0
        %v7396 = vadd.f32 0.0, %v7395
        %7397 = vmatmul.bf16.gmra.mxu0 %v7012
        %v7398 = vpop.f32.mrf.mxu0
        %v7399 = vadd.f32 0.0, %v7398
        %v7400 = vpop.f32.mrf.mxu0
        %v7401 = vadd.f32 0.0, %v7400
        %7402 = vmatmul.bf16.gmra.mxu0 %v7013
        %v7403 = vpop.f32.mrf.mxu0
        %v7404 = vadd.f32 0.0, %v7403
        %v7405 = vpop.f32.mrf.mxu0
        %v7406 = vadd.f32 0.0, %v7405
        %7407 = vmatmul.bf16.gmra.mxu0 %v7014
        %v7408 = vpop.f32.mrf.mxu0
        %v7409 = vadd.f32 0.0, %v7408
        %v7410 = vpop.f32.mrf.mxu0
        %v7411 = vadd.f32 0.0, %v7410
        %7412 = vdwg.mxu0
        %7413 = vmatpush.bf16.msra.mxu0 %v7211
        %7414 = vmatpush.bf16.msra.mxu0 %v7210
        %7415 = vmatpush.bf16.msra.mxu0 %v7209
        %7416 = vmatpush.bf16.msra.mxu0 %v7208
        %7417 = vmatpush.bf16.msra.mxu0 %v7207
        %7418 = vmatpush.bf16.msra.mxu0 %v7206
        %7419 = vmatpush.bf16.msra.mxu0 %v7205
        %7420 = vmatpush.bf16.msra.mxu0 %v7204
        %7421 = vmatmul.bf16.gmra.mxu0 %v3884
        %v7422 = vpop.f32.mrf.mxu0
        %v7423 = vadd.f32 %v7254, %v7422
        %v7424 = vpop.f32.mrf.mxu0
        %v7425 = vadd.f32 %v7256, %v7424
        %7426 = vmatmul.bf16.gmra.mxu0 %v3885
        %v7427 = vpop.f32.mrf.mxu0
        %v7428 = vadd.f32 %v7259, %v7427
        %v7429 = vpop.f32.mrf.mxu0
        %v7430 = vadd.f32 %v7261, %v7429
        %7431 = vmatmul.bf16.gmra.mxu0 %v3886
        %v7432 = vpop.f32.mrf.mxu0
        %v7433 = vadd.f32 %v7264, %v7432
        %v7434 = vpop.f32.mrf.mxu0
        %v7435 = vadd.f32 %v7266, %v7434
        %7436 = vmatmul.bf16.gmra.mxu0 %v3887
        %v7437 = vpop.f32.mrf.mxu0
        %v7438 = vadd.f32 %v7269, %v7437
        %v7439 = vpop.f32.mrf.mxu0
        %v7440 = vadd.f32 %v7271, %v7439
        %7441 = vmatmul.bf16.gmra.mxu0 %v3888
        %v7442 = vpop.f32.mrf.mxu0
        %v7443 = vadd.f32 %v7274, %v7442
        %v7444 = vpop.f32.mrf.mxu0
        %v7445 = vadd.f32 %v7276, %v7444
        %7446 = vmatmul.bf16.gmra.mxu0 %v3889
        %v7447 = vpop.f32.mrf.mxu0
        %v7448 = vadd.f32 %v7279, %v7447
        %v7449 = vpop.f32.mrf.mxu0
        %v7450 = vadd.f32 %v7281, %v7449
        %7451 = vmatmul.bf16.gmra.mxu0 %v3890
        %v7452 = vpop.f32.mrf.mxu0
        %v7453 = vadd.f32 %v7284, %v7452
        %v7454 = vpop.f32.mrf.mxu0
        %v7455 = vadd.f32 %v7286, %v7454
        %7456 = vmatmul.bf16.gmra.mxu0 %v3891
        %v7457 = vpop.f32.mrf.mxu0
        %v7458 = vadd.f32 %v7289, %v7457
        %v7459 = vpop.f32.mrf.mxu0
        %v7460 = vadd.f32 %v7291, %v7459
        %7461 = vmatmul.bf16.gmra.mxu0 %v3892
        %v7462 = vpop.f32.mrf.mxu0
        %v7463 = vadd.f32 %v7294, %v7462
        %v7464 = vpop.f32.mrf.mxu0
        %v7465 = vadd.f32 %v7296, %v7464
        %7466 = vmatmul.bf16.gmra.mxu0 %v3893
        %v7467 = vpop.f32.mrf.mxu0
        %v7468 = vadd.f32 %v7299, %v7467
        %v7469 = vpop.f32.mrf.mxu0
        %v7470 = vadd.f32 %v7301, %v7469
        %7471 = vmatmul.bf16.gmra.mxu0 %v3894
        %v7472 = vpop.f32.mrf.mxu0
        %v7473 = vadd.f32 %v7304, %v7472
        %v7474 = vpop.f32.mrf.mxu0
        %v7475 = vadd.f32 %v7306, %v7474
        %7476 = vmatmul.bf16.gmra.mxu0 %v3895
        %v7477 = vpop.f32.mrf.mxu0
        %v7478 = vadd.f32 %v7309, %v7477
        %v7479 = vpop.f32.mrf.mxu0
        %v7480 = vadd.f32 %v7311, %v7479
        %7481 = vmatmul.bf16.gmra.mxu0 %v3896
        %v7482 = vpop.f32.mrf.mxu0
        %v7483 = vadd.f32 %v7314, %v7482
        %v7484 = vpop.f32.mrf.mxu0
        %v7485 = vadd.f32 %v7316, %v7484
        %7486 = vmatmul.bf16.gmra.mxu0 %v3897
        %v7487 = vpop.f32.mrf.mxu0
        %v7488 = vadd.f32 %v7319, %v7487
        %v7489 = vpop.f32.mrf.mxu0
        %v7490 = vadd.f32 %v7321, %v7489
        %7491 = vmatmul.bf16.gmra.mxu0 %v3898
        %v7492 = vpop.f32.mrf.mxu0
        %v7493 = vadd.f32 %v7324, %v7492
        %v7494 = vpop.f32.mrf.mxu0
        %v7495 = vadd.f32 %v7326, %v7494
        %7496 = vmatmul.bf16.gmra.mxu0 %v3899
        %v7497 = vpop.f32.mrf.mxu0
        %v7498 = vadd.f32 %v7329, %v7497
        %v7499 = vpop.f32.mrf.mxu0
        %v7500 = vadd.f32 %v7331, %v7499
        %7501 = vmatmul.bf16.gmra.mxu0 %v3900
        %v7502 = vpop.f32.mrf.mxu0
        %v7503 = vadd.f32 %v7334, %v7502
        %v7504 = vpop.f32.mrf.mxu0
        %v7505 = vadd.f32 %v7336, %v7504
        %7506 = vmatmul.bf16.gmra.mxu0 %v3901
        %v7507 = vpop.f32.mrf.mxu0
        %v7508 = vadd.f32 %v7339, %v7507
        %v7509 = vpop.f32.mrf.mxu0
        %v7510 = vadd.f32 %v7341, %v7509
        %7511 = vmatmul.bf16.gmra.mxu0 %v3902
        %v7512 = vpop.f32.mrf.mxu0
        %v7513 = vadd.f32 %v7344, %v7512
        %v7514 = vpop.f32.mrf.mxu0
        %v7515 = vadd.f32 %v7346, %v7514
        %7516 = vmatmul.bf16.gmra.mxu0 %v3903
        %v7517 = vpop.f32.mrf.mxu0
        %v7518 = vadd.f32 %v7349, %v7517
        %v7519 = vpop.f32.mrf.mxu0
        %v7520 = vadd.f32 %v7351, %v7519
        %7521 = vmatmul.bf16.gmra.mxu0 %v3904
        %v7522 = vpop.f32.mrf.mxu0
        %v7523 = vadd.f32 %v7354, %v7522
        %v7524 = vpop.f32.mrf.mxu0
        %v7525 = vadd.f32 %v7356, %v7524
        %7526 = vmatmul.bf16.gmra.mxu0 %v3905
        %v7527 = vpop.f32.mrf.mxu0
        %v7528 = vadd.f32 %v7359, %v7527
        %v7529 = vpop.f32.mrf.mxu0
        %v7530 = vadd.f32 %v7361, %v7529
        %7531 = vmatmul.bf16.gmra.mxu0 %v3906
        %v7532 = vpop.f32.mrf.mxu0
        %v7533 = vadd.f32 %v7364, %v7532
        %v7534 = vpop.f32.mrf.mxu0
        %v7535 = vadd.f32 %v7366, %v7534
        %7536 = vmatmul.bf16.gmra.mxu0 %v3907
        %v7537 = vpop.f32.mrf.mxu0
        %v7538 = vadd.f32 %v7369, %v7537
        %v7539 = vpop.f32.mrf.mxu0
        %v7540 = vadd.f32 %v7371, %v7539
        %7541 = vmatmul.bf16.gmra.mxu0 %v3908
        %v7542 = vpop.f32.mrf.mxu0
        %v7543 = vadd.f32 %v7374, %v7542
        %v7544 = vpop.f32.mrf.mxu0
        %v7545 = vadd.f32 %v7376, %v7544
        %7546 = vmatmul.bf16.gmra.mxu0 %v3909
        %v7547 = vpop.f32.mrf.mxu0
        %v7548 = vadd.f32 %v7379, %v7547
        %v7549 = vpop.f32.mrf.mxu0
        %v7550 = vadd.f32 %v7381, %v7549
        %7551 = vmatmul.bf16.gmra.mxu0 %v3910
        %v7552 = vpop.f32.mrf.mxu0
        %v7553 = vadd.f32 %v7384, %v7552
        %v7554 = vpop.f32.mrf.mxu0
        %v7555 = vadd.f32 %v7386, %v7554
        %7556 = vmatmul.bf16.gmra.mxu0 %v3911
        %v7557 = vpop.f32.mrf.mxu0
        %v7558 = vadd.f32 %v7389, %v7557
        %v7559 = vpop.f32.mrf.mxu0
        %v7560 = vadd.f32 %v7391, %v7559
        %7561 = vmatmul.bf16.gmra.mxu0 %v7027
        %v7562 = vpop.f32.mrf.mxu0
        %v7563 = vadd.f32 %v7394, %v7562
        %v7564 = vpop.f32.mrf.mxu0
        %v7565 = vadd.f32 %v7396, %v7564
        %7566 = vmatmul.bf16.gmra.mxu0 %v7028
        %v7567 = vpop.f32.mrf.mxu0
        %v7568 = vadd.f32 %v7399, %v7567
        %v7569 = vpop.f32.mrf.mxu0
        %v7570 = vadd.f32 %v7401, %v7569
        %7571 = vmatmul.bf16.gmra.mxu0 %v7029
        %v7572 = vpop.f32.mrf.mxu0
        %v7573 = vadd.f32 %v7404, %v7572
        %v7574 = vpop.f32.mrf.mxu0
        %v7575 = vadd.f32 %v7406, %v7574
        %7576 = vmatmul.bf16.gmra.mxu0 %v7030
        %v7577 = vpop.f32.mrf.mxu0
        %v7578 = vadd.f32 %v7409, %v7577
        %v7579 = vpop.f32.mrf.mxu0
        %v7580 = vadd.f32 %v7411, %v7579
        %7581 = vdwg.mxu0
        %7582 = vmatpush.bf16.msra.mxu0 %v7219
        %7583 = vmatpush.bf16.msra.mxu0 %v7218
        %7584 = vmatpush.bf16.msra.mxu0 %v7217
        %7585 = vmatpush.bf16.msra.mxu0 %v7216
        %7586 = vmatpush.bf16.msra.mxu0 %v7215
        %7587 = vmatpush.bf16.msra.mxu0 %v7214
        %7588 = vmatpush.bf16.msra.mxu0 %v7213
        %7589 = vmatpush.bf16.msra.mxu0 %v7212
        %7590 = vmatmul.bf16.gmra.mxu0 %v4012
        %v7591 = vpop.f32.mrf.mxu0
        %v7592 = vadd.f32 %v7423, %v7591
        %v7593 = vpop.f32.mrf.mxu0
        %v7594 = vadd.f32 %v7425, %v7593
        %7595 = vmatmul.bf16.gmra.mxu0 %v4013
        %v7596 = vpop.f32.mrf.mxu0
        %v7597 = vadd.f32 %v7428, %v7596
        %v7598 = vpop.f32.mrf.mxu0
        %v7599 = vadd.f32 %v7430, %v7598
        %7600 = vmatmul.bf16.gmra.mxu0 %v4014
        %v7601 = vpop.f32.mrf.mxu0
        %v7602 = vadd.f32 %v7433, %v7601
        %v7603 = vpop.f32.mrf.mxu0
        %v7604 = vadd.f32 %v7435, %v7603
        %7605 = vmatmul.bf16.gmra.mxu0 %v4015
        %v7606 = vpop.f32.mrf.mxu0
        %v7607 = vadd.f32 %v7438, %v7606
        %v7608 = vpop.f32.mrf.mxu0
        %v7609 = vadd.f32 %v7440, %v7608
        %7610 = vmatmul.bf16.gmra.mxu0 %v4016
        %v7611 = vpop.f32.mrf.mxu0
        %v7612 = vadd.f32 %v7443, %v7611
        %v7613 = vpop.f32.mrf.mxu0
        %v7614 = vadd.f32 %v7445, %v7613
        %7615 = vmatmul.bf16.gmra.mxu0 %v4017
        %v7616 = vpop.f32.mrf.mxu0
        %v7617 = vadd.f32 %v7448, %v7616
        %v7618 = vpop.f32.mrf.mxu0
        %v7619 = vadd.f32 %v7450, %v7618
        %7620 = vmatmul.bf16.gmra.mxu0 %v4018
        %v7621 = vpop.f32.mrf.mxu0
        %v7622 = vadd.f32 %v7453, %v7621
        %v7623 = vpop.f32.mrf.mxu0
        %v7624 = vadd.f32 %v7455, %v7623
        %7625 = vmatmul.bf16.gmra.mxu0 %v4019
        %v7626 = vpop.f32.mrf.mxu0
        %v7627 = vadd.f32 %v7458, %v7626
        %v7628 = vpop.f32.mrf.mxu0
        %v7629 = vadd.f32 %v7460, %v7628
        %7630 = vmatmul.bf16.gmra.mxu0 %v4020
        %v7631 = vpop.f32.mrf.mxu0
        %v7632 = vadd.f32 %v7463, %v7631
        %v7633 = vpop.f32.mrf.mxu0
        %v7634 = vadd.f32 %v7465, %v7633
        %7635 = vmatmul.bf16.gmra.mxu0 %v4021
        %v7636 = vpop.f32.mrf.mxu0
        %v7637 = vadd.f32 %v7468, %v7636
        %v7638 = vpop.f32.mrf.mxu0
        %v7639 = vadd.f32 %v7470, %v7638
        %7640 = vmatmul.bf16.gmra.mxu0 %v4022
        %v7641 = vpop.f32.mrf.mxu0
        %v7642 = vadd.f32 %v7473, %v7641
        %v7643 = vpop.f32.mrf.mxu0
        %v7644 = vadd.f32 %v7475, %v7643
        %7645 = vmatmul.bf16.gmra.mxu0 %v4023
        %v7646 = vpop.f32.mrf.mxu0
        %v7647 = vadd.f32 %v7478, %v7646
        %v7648 = vpop.f32.mrf.mxu0
        %v7649 = vadd.f32 %v7480, %v7648
        %7650 = vmatmul.bf16.gmra.mxu0 %v4024
        %v7651 = vpop.f32.mrf.mxu0
        %v7652 = vadd.f32 %v7483, %v7651
        %v7653 = vpop.f32.mrf.mxu0
        %v7654 = vadd.f32 %v7485, %v7653
        %7655 = vmatmul.bf16.gmra.mxu0 %v4025
        %v7656 = vpop.f32.mrf.mxu0
        %v7657 = vadd.f32 %v7488, %v7656
        %v7658 = vpop.f32.mrf.mxu0
        %v7659 = vadd.f32 %v7490, %v7658
        %7660 = vmatmul.bf16.gmra.mxu0 %v4026
        %v7661 = vpop.f32.mrf.mxu0
        %v7662 = vadd.f32 %v7493, %v7661
        %v7663 = vpop.f32.mrf.mxu0
        %v7664 = vadd.f32 %v7495, %v7663
        %7665 = vmatmul.bf16.gmra.mxu0 %v4027
        %v7666 = vpop.f32.mrf.mxu0
        %v7667 = vadd.f32 %v7498, %v7666
        %v7668 = vpop.f32.mrf.mxu0
        %v7669 = vadd.f32 %v7500, %v7668
        %7670 = vmatmul.bf16.gmra.mxu0 %v4028
        %v7671 = vpop.f32.mrf.mxu0
        %v7672 = vadd.f32 %v7503, %v7671
        %v7673 = vpop.f32.mrf.mxu0
        %v7674 = vadd.f32 %v7505, %v7673
        %7675 = vmatmul.bf16.gmra.mxu0 %v4029
        %v7676 = vpop.f32.mrf.mxu0
        %v7677 = vadd.f32 %v7508, %v7676
        %v7678 = vpop.f32.mrf.mxu0
        %v7679 = vadd.f32 %v7510, %v7678
        %7680 = vmatmul.bf16.gmra.mxu0 %v4030
        %v7681 = vpop.f32.mrf.mxu0
        %v7682 = vadd.f32 %v7513, %v7681
        %v7683 = vpop.f32.mrf.mxu0
        %v7684 = vadd.f32 %v7515, %v7683
        %7685 = vmatmul.bf16.gmra.mxu0 %v4031
        %v7686 = vpop.f32.mrf.mxu0
        %v7687 = vadd.f32 %v7518, %v7686
        %v7688 = vpop.f32.mrf.mxu0
        %v7689 = vadd.f32 %v7520, %v7688
        %7690 = vmatmul.bf16.gmra.mxu0 %v4032
        %v7691 = vpop.f32.mrf.mxu0
        %v7692 = vadd.f32 %v7523, %v7691
        %v7693 = vpop.f32.mrf.mxu0
        %v7694 = vadd.f32 %v7525, %v7693
        %7695 = vmatmul.bf16.gmra.mxu0 %v4033
        %v7696 = vpop.f32.mrf.mxu0
        %v7697 = vadd.f32 %v7528, %v7696
        %v7698 = vpop.f32.mrf.mxu0
        %v7699 = vadd.f32 %v7530, %v7698
        %7700 = vmatmul.bf16.gmra.mxu0 %v4034
        %v7701 = vpop.f32.mrf.mxu0
        %v7702 = vadd.f32 %v7533, %v7701
        %v7703 = vpop.f32.mrf.mxu0
        %v7704 = vadd.f32 %v7535, %v7703
        %7705 = vmatmul.bf16.gmra.mxu0 %v4035
        %v7706 = vpop.f32.mrf.mxu0
        %v7707 = vadd.f32 %v7538, %v7706
        %v7708 = vpop.f32.mrf.mxu0
        %v7709 = vadd.f32 %v7540, %v7708
        %7710 = vmatmul.bf16.gmra.mxu0 %v4036
        %v7711 = vpop.f32.mrf.mxu0
        %v7712 = vadd.f32 %v7543, %v7711
        %v7713 = vpop.f32.mrf.mxu0
        %v7714 = vadd.f32 %v7545, %v7713
        %7715 = vmatmul.bf16.gmra.mxu0 %v4037
        %v7716 = vpop.f32.mrf.mxu0
        %v7717 = vadd.f32 %v7548, %v7716
        %v7718 = vpop.f32.mrf.mxu0
        %v7719 = vadd.f32 %v7550, %v7718
        %7720 = vmatmul.bf16.gmra.mxu0 %v4038
        %v7721 = vpop.f32.mrf.mxu0
        %v7722 = vadd.f32 %v7553, %v7721
        %v7723 = vpop.f32.mrf.mxu0
        %v7724 = vadd.f32 %v7555, %v7723
        %7725 = vmatmul.bf16.gmra.mxu0 %v4039
        %v7726 = vpop.f32.mrf.mxu0
        %v7727 = vadd.f32 %v7558, %v7726
        %v7728 = vpop.f32.mrf.mxu0
        %v7729 = vadd.f32 %v7560, %v7728
        %7730 = vmatmul.bf16.gmra.mxu0 %v7043
        %v7731 = vpop.f32.mrf.mxu0
        %v7732 = vadd.f32 %v7563, %v7731
        %v7733 = vpop.f32.mrf.mxu0
        %v7734 = vadd.f32 %v7565, %v7733
        %7735 = vmatmul.bf16.gmra.mxu0 %v7044
        %v7736 = vpop.f32.mrf.mxu0
        %v7737 = vadd.f32 %v7568, %v7736
        %v7738 = vpop.f32.mrf.mxu0
        %v7739 = vadd.f32 %v7570, %v7738
        %7740 = vmatmul.bf16.gmra.mxu0 %v7045
        %v7741 = vpop.f32.mrf.mxu0
        %v7742 = vadd.f32 %v7573, %v7741
        %v7743 = vpop.f32.mrf.mxu0
        %v7744 = vadd.f32 %v7575, %v7743
        %7745 = vmatmul.bf16.gmra.mxu0 %v7046
        %v7746 = vpop.f32.mrf.mxu0
        %v7747 = vadd.f32 %v7578, %v7746
        %v7748 = vpop.f32.mrf.mxu0
        %v7749 = vadd.f32 %v7580, %v7748
        %7750 = vdwg.mxu0
        %v7751 = vadd.f32 %v6779, %v7592
        %v7752 = vadd.f32 %v6780, %v7594
        %v7753 = vadd.f32 %v6781, %v7597
        %v7754 = vadd.f32 %v6782, %v7599
        %v7755 = vadd.f32 %v6783, %v7602
        %v7756 = vadd.f32 %v6784, %v7604
        %v7757 = vadd.f32 %v6785, %v7607
        %v7758 = vadd.f32 %v6786, %v7609
        %v7759 = vadd.f32 %v6787, %v7612
        %v7760 = vadd.f32 %v6788, %v7614
        %v7761 = vadd.f32 %v6789, %v7617
        %v7762 = vadd.f32 %v6790, %v7619
        %v7763 = vadd.f32 %v6791, %v7622
        %v7764 = vadd.f32 %v6792, %v7624
        %v7765 = vadd.f32 %v6793, %v7627
        %v7766 = vadd.f32 %v6794, %v7629
        %v7767 = vadd.f32 %v6795, %v7632
        %v7768 = vadd.f32 %v6796, %v7634
        %v7769 = vadd.f32 %v6797, %v7637
        %v7770 = vadd.f32 %v6798, %v7639
        %v7771 = vadd.f32 %v6799, %v7642
        %v7772 = vadd.f32 %v6800, %v7644
        %v7773 = vadd.f32 %v6801, %v7647
        %v7774 = vadd.f32 %v6802, %v7649
        %v7775 = vadd.f32 %v6803, %v7652
        %v7776 = vadd.f32 %v6804, %v7654
        %v7777 = vadd.f32 %v6805, %v7657
        %v7778 = vadd.f32 %v6806, %v7659
        %v7779 = vadd.f32 %v6807, %v7662
        %v7780 = vadd.f32 %v6808, %v7664
        %v7781 = vadd.f32 %v6809, %v7667
        %v7782 = vadd.f32 %v6810, %v7669
        %v7783 = vadd.f32 %v6811, %v7672
        %v7784 = vadd.f32 %v6812, %v7674
        %v7785 = vadd.f32 %v6813, %v7677
        %v7786 = vadd.f32 %v6814, %v7679
        %v7787 = vadd.f32 %v6815, %v7682
        %v7788 = vadd.f32 %v6816, %v7684
        %v7789 = vadd.f32 %v6817, %v7687
        %v7790 = vadd.f32 %v6818, %v7689
        %v7791 = vadd.f32 %v6819, %v7692
        %v7792 = vadd.f32 %v6820, %v7694
        %v7793 = vadd.f32 %v6821, %v7697
        %v7794 = vadd.f32 %v6822, %v7699
        %v7795 = vadd.f32 %v6823, %v7702
        %v7796 = vadd.f32 %v6824, %v7704
        %v7797 = vadd.f32 %v6825, %v7707
        %v7798 = vadd.f32 %v6826, %v7709
        %v7799 = vadd.f32 %v6827, %v7712
        %v7800 = vadd.f32 %v6828, %v7714
        %v7801 = vadd.f32 %v6829, %v7717
        %v7802 = vadd.f32 %v6830, %v7719
        %v7803 = vadd.f32 %v6831, %v7722
        %v7804 = vadd.f32 %v6832, %v7724
        %v7805 = vadd.f32 %v6833, %v7727
        %v7806 = vadd.f32 %v6834, %v7729
        %v7807 = vadd.f32 %v6835, %v7732
        %v7808 = vadd.f32 %v6836, %v7734
        %v7809 = vadd.f32 %v6837, %v7737
        %v7810 = vadd.f32 %v6838, %v7739
        %v7811 = vadd.f32 %v6839, %v7742
        %v7812 = vadd.f32 %v6840, %v7744
        %v7813 = vadd.f32 %v6841, %v7747
        %v7814 = vadd.f32 %v6842, %v7749
        %v7816 = vshrl.u32 %v2378, 16
        %v7818 = vrot.slane %v7816, 4
        %v7819 = vshll.u32 %v2378, 16
        %v7821 = vrot.slane %v7819, 5
        %v7822 = vor.u32 %v7818, %v7821
        %v7823 = vrot.slane %v7822, 4
        %v7825 = vshll.u32 %v2379, 16
        %v7827 = vrot.slane %v7825, 5
        %v7828 = vsel %vm2404, %v7823, %v7827
        %v7831 = vrot.slane %v2378, 5
        %v7832 = vrot.slane %v7831, 4
        %v7833 = vrot.slane %v2379, 5
        %v7834 = vsel %vm3431, %v7832, %v7833
        %v7835 = vunpack.c.l.b16 %v2378
        %v7836 = vpack.c.b16 %v7005, %v7004
        %v7837 = vpack.c.b16 %v7007, %v7006
        %v7838 = vpack.c.b16 %v7009, %v7008
        %v7839 = vpack.c.b16 %v7835, %v7010
        %v7844 = vunpack.c.l.b16 %v7828
        %v7845 = vpack.c.b16 %v7021, %v7020
        %v7846 = vpack.c.b16 %v7023, %v7022
        %v7847 = vpack.c.b16 %v7025, %v7024
        %v7848 = vpack.c.b16 %v7844, %v7026
        %v7853 = vunpack.c.l.b16 %v7834
        %v7854 = vpack.c.b16 %v7037, %v7036
        %v7855 = vpack.c.b16 %v7039, %v7038
        %v7856 = vpack.c.b16 %v7041, %v7040
        %v7857 = vpack.c.b16 %v7853, %v7042
        %s7862 = scalar_lea.vmem [#allocation8], 768
        %v7863 = vld [vmem:[%s7862] sm:$0xf]
        %v7864 = vld [vmem:[%s7862 + $0x4] sm:$0xf]
        %v7865 = vld [vmem:[%s7862 + $0x8] sm:$0xf]
        %v7866 = vld [vmem:[%s7862 + $0xc] sm:$0xf]
        %v7867 = vld [vmem:[%s7862 + $0x10] sm:$0xf]
        %v7868 = vld [vmem:[%s7862 + $0x14] sm:$0xf]
        %v7869 = vld [vmem:[%s7862 + $0x18] sm:$0xf]
        %v7870 = vld [vmem:[%s7862 + $0x1c] sm:$0xf]
        %v7871 = vld [vmem:[%s7862 + $0x20] sm:$0xf]
        %v7872 = vld [vmem:[%s7862 + $0x24] sm:$0xf]
        %v7873 = vld [vmem:[%s7862 + $0x28] sm:$0xf]
        %v7874 = vld [vmem:[%s7862 + $0x2c] sm:$0xf]
        %v7875 = vld [vmem:[%s7862 + $0x30] sm:$0xf]
        %v7876 = vld [vmem:[%s7862 + $0x34] sm:$0xf]
        %v7877 = vld [vmem:[%s7862 + $0x38] sm:$0xf]
        %v7878 = vld [vmem:[%s7862 + $0x3c] sm:$0xf]
        %v7879 = vld [vmem:[%s7862 + $0x40] sm:$0xf]
        %v7880 = vld [vmem:[%s7862 + $0x44] sm:$0xf]
        %v7881 = vld [vmem:[%s7862 + $0x48] sm:$0xf]
        %v7882 = vld [vmem:[%s7862 + $0x4c] sm:$0xf]
        %v7883 = vld [vmem:[%s7862 + $0x50] sm:$0xf]
        %v7884 = vld [vmem:[%s7862 + $0x54] sm:$0xf]
        %v7885 = vld [vmem:[%s7862 + $0x58] sm:$0xf]
        %v7886 = vld [vmem:[%s7862 + $0x5c] sm:$0xf]
        %v7887 = vld [vmem:[%s7862 + $0x60] sm:$0xf]
        %v7888 = vld [vmem:[%s7862 + $0x64] sm:$0xf]
        %v7889 = vld [vmem:[%s7862 + $0x68] sm:$0xf]
        %v7890 = vld [vmem:[%s7862 + $0x6c] sm:$0xf]
        %v7891 = vld [vmem:[%s7862 + $0x70] sm:$0xf]
        %v7892 = vld [vmem:[%s7862 + $0x74] sm:$0xf]
        %v7893 = vld [vmem:[%s7862 + $0x78] sm:$0xf]
        %v7894 = vld [vmem:[%s7862 + $0x7c] sm:$0xf]
        %v7895 = vld [vmem:[%s7862 + $0x80] sm:$0xf]
        %v7896 = vld [vmem:[%s7862 + $0x84] sm:$0xf]
        %v7897 = vld [vmem:[%s7862 + $0x88] sm:$0xf]
        %v7898 = vld [vmem:[%s7862 + $0x8c] sm:$0xf]
        %v7899 = vld [vmem:[%s7862 + $0x90] sm:$0xf]
        %v7900 = vld [vmem:[%s7862 + $0x94] sm:$0xf]
        %v7901 = vld [vmem:[%s7862 + $0x98] sm:$0xf]
        %v7902 = vld [vmem:[%s7862 + $0x9c] sm:$0xf]
        %v7903 = vld [vmem:[%s7862 + $0xa0] sm:$0xf]
        %v7904 = vld [vmem:[%s7862 + $0xa4] sm:$0xf]
        %v7905 = vld [vmem:[%s7862 + $0xa8] sm:$0xf]
        %v7906 = vld [vmem:[%s7862 + $0xac] sm:$0xf]
        %v7907 = vld [vmem:[%s7862 + $0xb0] sm:$0xf]
        %v7908 = vld [vmem:[%s7862 + $0xb4] sm:$0xf]
        %v7909 = vld [vmem:[%s7862 + $0xb8] sm:$0xf]
        %v7910 = vld [vmem:[%s7862 + $0xbc] sm:$0xf]
        %v7959 = vunpack.c.l.b16 %v7863
        %v7960 = vunpack.c.l.b16 %v7864
        %v7961 = vunpack.c.l.b16 %v7865
        %v7962 = vunpack.c.l.b16 %v7866
        %v7963 = vunpack.c.l.b16 %v7867
        %v7964 = vunpack.c.l.b16 %v7868
        %v7965 = vunpack.c.l.b16 %v7869
        %v7966 = vunpack.c.l.b16 %v7870
        %v7967 = vunpack.c.l.b16 %v7871
        %v7968 = vunpack.c.l.b16 %v7872
        %v7969 = vunpack.c.l.b16 %v7873
        %v7970 = vunpack.c.l.b16 %v7874
        %v7971 = vunpack.c.l.b16 %v7875
        %v7972 = vunpack.c.l.b16 %v7876
        %v7973 = vunpack.c.l.b16 %v7877
        %v7974 = vunpack.c.l.b16 %v7878
        %v7975 = vunpack.c.l.b16 %v7879
        %v7976 = vunpack.c.l.b16 %v7880
        %v7977 = vunpack.c.l.b16 %v7881
        %v7978 = vunpack.c.l.b16 %v7882
        %v7979 = vunpack.c.l.b16 %v7883
        %v7980 = vunpack.c.l.b16 %v7884
        %v7981 = vunpack.c.l.b16 %v7885
        %v7982 = vunpack.c.l.b16 %v7886
        %v7983 = vunpack.c.l.b16 %v7887
        %v7984 = vunpack.c.l.b16 %v7888
        %v7985 = vunpack.c.l.b16 %v7889
        %v7986 = vunpack.c.l.b16 %v7890
        %v7987 = vunpack.c.l.b16 %v7891
        %v7988 = vunpack.c.l.b16 %v7892
        %v7989 = vunpack.c.l.b16 %v7893
        %v7990 = vunpack.c.l.b16 %v7894
        %v7991 = vunpack.c.l.b16 %v7895
        %v7992 = vunpack.c.l.b16 %v7896
        %v7993 = vunpack.c.l.b16 %v7897
        %v7994 = vunpack.c.l.b16 %v7898
        %v7995 = vunpack.c.l.b16 %v7899
        %v7996 = vunpack.c.l.b16 %v7900
        %v7997 = vunpack.c.l.b16 %v7901
        %v7998 = vunpack.c.l.b16 %v7902
        %v7999 = vunpack.c.l.b16 %v7903
        %v8000 = vunpack.c.l.b16 %v7904
        %v8001 = vunpack.c.l.b16 %v7905
        %v8002 = vunpack.c.l.b16 %v7906
        %v8003 = vunpack.c.l.b16 %v7907
        %v8004 = vunpack.c.l.b16 %v7908
        %v8005 = vunpack.c.l.b16 %v7909
        %v8006 = vunpack.c.l.b16 %v7910
        %v8007 = vpack.c.b16 %v7960, %v7959
        %v8008 = vpack.c.b16 %v7962, %v7961
        %v8009 = vpack.c.b16 %v7964, %v7963
        %v8010 = vpack.c.b16 %v7966, %v7965
        %v8011 = vpack.c.b16 %v7968, %v7967
        %v8012 = vpack.c.b16 %v7970, %v7969
        %v8013 = vpack.c.b16 %v7972, %v7971
        %v8014 = vpack.c.b16 %v7974, %v7973
        %v8015 = vpack.c.b16 %v7976, %v7975
        %v8016 = vpack.c.b16 %v7978, %v7977
        %v8017 = vpack.c.b16 %v7980, %v7979
        %v8018 = vpack.c.b16 %v7982, %v7981
        %v8019 = vpack.c.b16 %v7984, %v7983
        %v8020 = vpack.c.b16 %v7986, %v7985
        %v8021 = vpack.c.b16 %v7988, %v7987
        %v8022 = vpack.c.b16 %v7990, %v7989
        %v8023 = vpack.c.b16 %v7992, %v7991
        %v8024 = vpack.c.b16 %v7994, %v7993
        %v8025 = vpack.c.b16 %v7996, %v7995
        %v8026 = vpack.c.b16 %v7998, %v7997
        %v8027 = vpack.c.b16 %v8000, %v7999
        %v8028 = vpack.c.b16 %v8002, %v8001
        %v8029 = vpack.c.b16 %v8004, %v8003
        %v8030 = vpack.c.b16 %v8006, %v8005
        %8055 = vmatpush.bf16.msra.mxu0 %v8014
        %8056 = vmatpush.bf16.msra.mxu0 %v8013
        %8057 = vmatpush.bf16.msra.mxu0 %v8012
        %8058 = vmatpush.bf16.msra.mxu0 %v8011
        %8059 = vmatpush.bf16.msra.mxu0 %v8010
        %8060 = vmatpush.bf16.msra.mxu0 %v8009
        %8061 = vmatpush.bf16.msra.mxu0 %v8008
        %8062 = vmatpush.bf16.msra.mxu0 %v8007
        %8063 = vmatmul.bf16.gmra.mxu0 %v4292
        %v8064 = vpop.f32.mrf.mxu0
        %v8065 = vadd.f32 0.0, %v8064
        %v8066 = vpop.f32.mrf.mxu0
        %v8067 = vadd.f32 0.0, %v8066
        %8068 = vmatmul.bf16.gmra.mxu0 %v4293
        %v8069 = vpop.f32.mrf.mxu0
        %v8070 = vadd.f32 0.0, %v8069
        %v8071 = vpop.f32.mrf.mxu0
        %v8072 = vadd.f32 0.0, %v8071
        %8073 = vmatmul.bf16.gmra.mxu0 %v4294
        %v8074 = vpop.f32.mrf.mxu0
        %v8075 = vadd.f32 0.0, %v8074
        %v8076 = vpop.f32.mrf.mxu0
        %v8077 = vadd.f32 0.0, %v8076
        %8078 = vmatmul.bf16.gmra.mxu0 %v4295
        %v8079 = vpop.f32.mrf.mxu0
        %v8080 = vadd.f32 0.0, %v8079
        %v8081 = vpop.f32.mrf.mxu0
        %v8082 = vadd.f32 0.0, %v8081
        %8083 = vmatmul.bf16.gmra.mxu0 %v4296
        %v8084 = vpop.f32.mrf.mxu0
        %v8085 = vadd.f32 0.0, %v8084
        %v8086 = vpop.f32.mrf.mxu0
        %v8087 = vadd.f32 0.0, %v8086
        %8088 = vmatmul.bf16.gmra.mxu0 %v4297
        %v8089 = vpop.f32.mrf.mxu0
        %v8090 = vadd.f32 0.0, %v8089
        %v8091 = vpop.f32.mrf.mxu0
        %v8092 = vadd.f32 0.0, %v8091
        %8093 = vmatmul.bf16.gmra.mxu0 %v4298
        %v8094 = vpop.f32.mrf.mxu0
        %v8095 = vadd.f32 0.0, %v8094
        %v8096 = vpop.f32.mrf.mxu0
        %v8097 = vadd.f32 0.0, %v8096
        %8098 = vmatmul.bf16.gmra.mxu0 %v4299
        %v8099 = vpop.f32.mrf.mxu0
        %v8100 = vadd.f32 0.0, %v8099
        %v8101 = vpop.f32.mrf.mxu0
        %v8102 = vadd.f32 0.0, %v8101
        %8103 = vmatmul.bf16.gmra.mxu0 %v4300
        %v8104 = vpop.f32.mrf.mxu0
        %v8105 = vadd.f32 0.0, %v8104
        %v8106 = vpop.f32.mrf.mxu0
        %v8107 = vadd.f32 0.0, %v8106
        %8108 = vmatmul.bf16.gmra.mxu0 %v4301
        %v8109 = vpop.f32.mrf.mxu0
        %v8110 = vadd.f32 0.0, %v8109
        %v8111 = vpop.f32.mrf.mxu0
        %v8112 = vadd.f32 0.0, %v8111
        %8113 = vmatmul.bf16.gmra.mxu0 %v4302
        %v8114 = vpop.f32.mrf.mxu0
        %v8115 = vadd.f32 0.0, %v8114
        %v8116 = vpop.f32.mrf.mxu0
        %v8117 = vadd.f32 0.0, %v8116
        %8118 = vmatmul.bf16.gmra.mxu0 %v4303
        %v8119 = vpop.f32.mrf.mxu0
        %v8120 = vadd.f32 0.0, %v8119
        %v8121 = vpop.f32.mrf.mxu0
        %v8122 = vadd.f32 0.0, %v8121
        %8123 = vmatmul.bf16.gmra.mxu0 %v4304
        %v8124 = vpop.f32.mrf.mxu0
        %v8125 = vadd.f32 0.0, %v8124
        %v8126 = vpop.f32.mrf.mxu0
        %v8127 = vadd.f32 0.0, %v8126
        %8128 = vmatmul.bf16.gmra.mxu0 %v4305
        %v8129 = vpop.f32.mrf.mxu0
        %v8130 = vadd.f32 0.0, %v8129
        %v8131 = vpop.f32.mrf.mxu0
        %v8132 = vadd.f32 0.0, %v8131
        %8133 = vmatmul.bf16.gmra.mxu0 %v4306
        %v8134 = vpop.f32.mrf.mxu0
        %v8135 = vadd.f32 0.0, %v8134
        %v8136 = vpop.f32.mrf.mxu0
        %v8137 = vadd.f32 0.0, %v8136
        %8138 = vmatmul.bf16.gmra.mxu0 %v4307
        %v8139 = vpop.f32.mrf.mxu0
        %v8140 = vadd.f32 0.0, %v8139
        %v8141 = vpop.f32.mrf.mxu0
        %v8142 = vadd.f32 0.0, %v8141
        %8143 = vmatmul.bf16.gmra.mxu0 %v4308
        %v8144 = vpop.f32.mrf.mxu0
        %v8145 = vadd.f32 0.0, %v8144
        %v8146 = vpop.f32.mrf.mxu0
        %v8147 = vadd.f32 0.0, %v8146
        %8148 = vmatmul.bf16.gmra.mxu0 %v4309
        %v8149 = vpop.f32.mrf.mxu0
        %v8150 = vadd.f32 0.0, %v8149
        %v8151 = vpop.f32.mrf.mxu0
        %v8152 = vadd.f32 0.0, %v8151
        %8153 = vmatmul.bf16.gmra.mxu0 %v4310
        %v8154 = vpop.f32.mrf.mxu0
        %v8155 = vadd.f32 0.0, %v8154
        %v8156 = vpop.f32.mrf.mxu0
        %v8157 = vadd.f32 0.0, %v8156
        %8158 = vmatmul.bf16.gmra.mxu0 %v4311
        %v8159 = vpop.f32.mrf.mxu0
        %v8160 = vadd.f32 0.0, %v8159
        %v8161 = vpop.f32.mrf.mxu0
        %v8162 = vadd.f32 0.0, %v8161
        %8163 = vmatmul.bf16.gmra.mxu0 %v4312
        %v8164 = vpop.f32.mrf.mxu0
        %v8165 = vadd.f32 0.0, %v8164
        %v8166 = vpop.f32.mrf.mxu0
        %v8167 = vadd.f32 0.0, %v8166
        %8168 = vmatmul.bf16.gmra.mxu0 %v4313
        %v8169 = vpop.f32.mrf.mxu0
        %v8170 = vadd.f32 0.0, %v8169
        %v8171 = vpop.f32.mrf.mxu0
        %v8172 = vadd.f32 0.0, %v8171
        %8173 = vmatmul.bf16.gmra.mxu0 %v4314
        %v8174 = vpop.f32.mrf.mxu0
        %v8175 = vadd.f32 0.0, %v8174
        %v8176 = vpop.f32.mrf.mxu0
        %v8177 = vadd.f32 0.0, %v8176
        %8178 = vmatmul.bf16.gmra.mxu0 %v4315
        %v8179 = vpop.f32.mrf.mxu0
        %v8180 = vadd.f32 0.0, %v8179
        %v8181 = vpop.f32.mrf.mxu0
        %v8182 = vadd.f32 0.0, %v8181
        %8183 = vmatmul.bf16.gmra.mxu0 %v4316
        %v8184 = vpop.f32.mrf.mxu0
        %v8185 = vadd.f32 0.0, %v8184
        %v8186 = vpop.f32.mrf.mxu0
        %v8187 = vadd.f32 0.0, %v8186
        %8188 = vmatmul.bf16.gmra.mxu0 %v4317
        %v8189 = vpop.f32.mrf.mxu0
        %v8190 = vadd.f32 0.0, %v8189
        %v8191 = vpop.f32.mrf.mxu0
        %v8192 = vadd.f32 0.0, %v8191
        %8193 = vmatmul.bf16.gmra.mxu0 %v4318
        %v8194 = vpop.f32.mrf.mxu0
        %v8195 = vadd.f32 0.0, %v8194
        %v8196 = vpop.f32.mrf.mxu0
        %v8197 = vadd.f32 0.0, %v8196
        %8198 = vmatmul.bf16.gmra.mxu0 %v4319
        %v8199 = vpop.f32.mrf.mxu0
        %v8200 = vadd.f32 0.0, %v8199
        %v8201 = vpop.f32.mrf.mxu0
        %v8202 = vadd.f32 0.0, %v8201
        %8203 = vmatmul.bf16.gmra.mxu0 %v7836
        %v8204 = vpop.f32.mrf.mxu0
        %v8205 = vadd.f32 0.0, %v8204
        %v8206 = vpop.f32.mrf.mxu0
        %v8207 = vadd.f32 0.0, %v8206
        %8208 = vmatmul.bf16.gmra.mxu0 %v7837
        %v8209 = vpop.f32.mrf.mxu0
        %v8210 = vadd.f32 0.0, %v8209
        %v8211 = vpop.f32.mrf.mxu0
        %v8212 = vadd.f32 0.0, %v8211
        %8213 = vmatmul.bf16.gmra.mxu0 %v7838
        %v8214 = vpop.f32.mrf.mxu0
        %v8215 = vadd.f32 0.0, %v8214
        %v8216 = vpop.f32.mrf.mxu0
        %v8217 = vadd.f32 0.0, %v8216
        %8218 = vmatmul.bf16.gmra.mxu0 %v7839
        %v8219 = vpop.f32.mrf.mxu0
        %v8220 = vadd.f32 0.0, %v8219
        %v8221 = vpop.f32.mrf.mxu0
        %v8222 = vadd.f32 0.0, %v8221
        %8223 = vdwg.mxu0
        %8224 = vmatpush.bf16.msra.mxu0 %v8022
        %8225 = vmatpush.bf16.msra.mxu0 %v8021
        %8226 = vmatpush.bf16.msra.mxu0 %v8020
        %8227 = vmatpush.bf16.msra.mxu0 %v8019
        %8228 = vmatpush.bf16.msra.mxu0 %v8018
        %8229 = vmatpush.bf16.msra.mxu0 %v8017
        %8230 = vmatpush.bf16.msra.mxu0 %v8016
        %8231 = vmatpush.bf16.msra.mxu0 %v8015
        %8232 = vmatmul.bf16.gmra.mxu0 %v4364
        %v8233 = vpop.f32.mrf.mxu0
        %v8234 = vadd.f32 %v8065, %v8233
        %v8235 = vpop.f32.mrf.mxu0
        %v8236 = vadd.f32 %v8067, %v8235
        %8237 = vmatmul.bf16.gmra.mxu0 %v4365
        %v8238 = vpop.f32.mrf.mxu0
        %v8239 = vadd.f32 %v8070, %v8238
        %v8240 = vpop.f32.mrf.mxu0
        %v8241 = vadd.f32 %v8072, %v8240
        %8242 = vmatmul.bf16.gmra.mxu0 %v4366
        %v8243 = vpop.f32.mrf.mxu0
        %v8244 = vadd.f32 %v8075, %v8243
        %v8245 = vpop.f32.mrf.mxu0
        %v8246 = vadd.f32 %v8077, %v8245
        %8247 = vmatmul.bf16.gmra.mxu0 %v4367
        %v8248 = vpop.f32.mrf.mxu0
        %v8249 = vadd.f32 %v8080, %v8248
        %v8250 = vpop.f32.mrf.mxu0
        %v8251 = vadd.f32 %v8082, %v8250
        %8252 = vmatmul.bf16.gmra.mxu0 %v4368
        %v8253 = vpop.f32.mrf.mxu0
        %v8254 = vadd.f32 %v8085, %v8253
        %v8255 = vpop.f32.mrf.mxu0
        %v8256 = vadd.f32 %v8087, %v8255
        %8257 = vmatmul.bf16.gmra.mxu0 %v4369
        %v8258 = vpop.f32.mrf.mxu0
        %v8259 = vadd.f32 %v8090, %v8258
        %v8260 = vpop.f32.mrf.mxu0
        %v8261 = vadd.f32 %v8092, %v8260
        %8262 = vmatmul.bf16.gmra.mxu0 %v4370
        %v8263 = vpop.f32.mrf.mxu0
        %v8264 = vadd.f32 %v8095, %v8263
        %v8265 = vpop.f32.mrf.mxu0
        %v8266 = vadd.f32 %v8097, %v8265
        %8267 = vmatmul.bf16.gmra.mxu0 %v4371
        %v8268 = vpop.f32.mrf.mxu0
        %v8269 = vadd.f32 %v8100, %v8268
        %v8270 = vpop.f32.mrf.mxu0
        %v8271 = vadd.f32 %v8102, %v8270
        %8272 = vmatmul.bf16.gmra.mxu0 %v4372
        %v8273 = vpop.f32.mrf.mxu0
        %v8274 = vadd.f32 %v8105, %v8273
        %v8275 = vpop.f32.mrf.mxu0
        %v8276 = vadd.f32 %v8107, %v8275
        %8277 = vmatmul.bf16.gmra.mxu0 %v4373
        %v8278 = vpop.f32.mrf.mxu0
        %v8279 = vadd.f32 %v8110, %v8278
        %v8280 = vpop.f32.mrf.mxu0
        %v8281 = vadd.f32 %v8112, %v8280
        %8282 = vmatmul.bf16.gmra.mxu0 %v4374
        %v8283 = vpop.f32.mrf.mxu0
        %v8284 = vadd.f32 %v8115, %v8283
        %v8285 = vpop.f32.mrf.mxu0
        %v8286 = vadd.f32 %v8117, %v8285
        %8287 = vmatmul.bf16.gmra.mxu0 %v4375
        %v8288 = vpop.f32.mrf.mxu0
        %v8289 = vadd.f32 %v8120, %v8288
        %v8290 = vpop.f32.mrf.mxu0
        %v8291 = vadd.f32 %v8122, %v8290
        %8292 = vmatmul.bf16.gmra.mxu0 %v4376
        %v8293 = vpop.f32.mrf.mxu0
        %v8294 = vadd.f32 %v8125, %v8293
        %v8295 = vpop.f32.mrf.mxu0
        %v8296 = vadd.f32 %v8127, %v8295
        %8297 = vmatmul.bf16.gmra.mxu0 %v4377
        %v8298 = vpop.f32.mrf.mxu0
        %v8299 = vadd.f32 %v8130, %v8298
        %v8300 = vpop.f32.mrf.mxu0
        %v8301 = vadd.f32 %v8132, %v8300
        %8302 = vmatmul.bf16.gmra.mxu0 %v4378
        %v8303 = vpop.f32.mrf.mxu0
        %v8304 = vadd.f32 %v8135, %v8303
        %v8305 = vpop.f32.mrf.mxu0
        %v8306 = vadd.f32 %v8137, %v8305
        %8307 = vmatmul.bf16.gmra.mxu0 %v4379
        %v8308 = vpop.f32.mrf.mxu0
        %v8309 = vadd.f32 %v8140, %v8308
        %v8310 = vpop.f32.mrf.mxu0
        %v8311 = vadd.f32 %v8142, %v8310
        %8312 = vmatmul.bf16.gmra.mxu0 %v4380
        %v8313 = vpop.f32.mrf.mxu0
        %v8314 = vadd.f32 %v8145, %v8313
        %v8315 = vpop.f32.mrf.mxu0
        %v8316 = vadd.f32 %v8147, %v8315
        %8317 = vmatmul.bf16.gmra.mxu0 %v4381
        %v8318 = vpop.f32.mrf.mxu0
        %v8319 = vadd.f32 %v8150, %v8318
        %v8320 = vpop.f32.mrf.mxu0
        %v8321 = vadd.f32 %v8152, %v8320
        %8322 = vmatmul.bf16.gmra.mxu0 %v4382
        %v8323 = vpop.f32.mrf.mxu0
        %v8324 = vadd.f32 %v8155, %v8323
        %v8325 = vpop.f32.mrf.mxu0
        %v8326 = vadd.f32 %v8157, %v8325
        %8327 = vmatmul.bf16.gmra.mxu0 %v4383
        %v8328 = vpop.f32.mrf.mxu0
        %v8329 = vadd.f32 %v8160, %v8328
        %v8330 = vpop.f32.mrf.mxu0
        %v8331 = vadd.f32 %v8162, %v8330
        %8332 = vmatmul.bf16.gmra.mxu0 %v4384
        %v8333 = vpop.f32.mrf.mxu0
        %v8334 = vadd.f32 %v8165, %v8333
        %v8335 = vpop.f32.mrf.mxu0
        %v8336 = vadd.f32 %v8167, %v8335
        %8337 = vmatmul.bf16.gmra.mxu0 %v4385
        %v8338 = vpop.f32.mrf.mxu0
        %v8339 = vadd.f32 %v8170, %v8338
        %v8340 = vpop.f32.mrf.mxu0
        %v8341 = vadd.f32 %v8172, %v8340
        %8342 = vmatmul.bf16.gmra.mxu0 %v4386
        %v8343 = vpop.f32.mrf.mxu0
        %v8344 = vadd.f32 %v8175, %v8343
        %v8345 = vpop.f32.mrf.mxu0
        %v8346 = vadd.f32 %v8177, %v8345
        %8347 = vmatmul.bf16.gmra.mxu0 %v4387
        %v8348 = vpop.f32.mrf.mxu0
        %v8349 = vadd.f32 %v8180, %v8348
        %v8350 = vpop.f32.mrf.mxu0
        %v8351 = vadd.f32 %v8182, %v8350
        %8352 = vmatmul.bf16.gmra.mxu0 %v4388
        %v8353 = vpop.f32.mrf.mxu0
        %v8354 = vadd.f32 %v8185, %v8353
        %v8355 = vpop.f32.mrf.mxu0
        %v8356 = vadd.f32 %v8187, %v8355
        %8357 = vmatmul.bf16.gmra.mxu0 %v4389
        %v8358 = vpop.f32.mrf.mxu0
        %v8359 = vadd.f32 %v8190, %v8358
        %v8360 = vpop.f32.mrf.mxu0
        %v8361 = vadd.f32 %v8192, %v8360
        %8362 = vmatmul.bf16.gmra.mxu0 %v4390
        %v8363 = vpop.f32.mrf.mxu0
        %v8364 = vadd.f32 %v8195, %v8363
        %v8365 = vpop.f32.mrf.mxu0
        %v8366 = vadd.f32 %v8197, %v8365
        %8367 = vmatmul.bf16.gmra.mxu0 %v4391
        %v8368 = vpop.f32.mrf.mxu0
        %v8369 = vadd.f32 %v8200, %v8368
        %v8370 = vpop.f32.mrf.mxu0
        %v8371 = vadd.f32 %v8202, %v8370
        %8372 = vmatmul.bf16.gmra.mxu0 %v7845
        %v8373 = vpop.f32.mrf.mxu0
        %v8374 = vadd.f32 %v8205, %v8373
        %v8375 = vpop.f32.mrf.mxu0
        %v8376 = vadd.f32 %v8207, %v8375
        %8377 = vmatmul.bf16.gmra.mxu0 %v7846
        %v8378 = vpop.f32.mrf.mxu0
        %v8379 = vadd.f32 %v8210, %v8378
        %v8380 = vpop.f32.mrf.mxu0
        %v8381 = vadd.f32 %v8212, %v8380
        %8382 = vmatmul.bf16.gmra.mxu0 %v7847
        %v8383 = vpop.f32.mrf.mxu0
        %v8384 = vadd.f32 %v8215, %v8383
        %v8385 = vpop.f32.mrf.mxu0
        %v8386 = vadd.f32 %v8217, %v8385
        %8387 = vmatmul.bf16.gmra.mxu0 %v7848
        %v8388 = vpop.f32.mrf.mxu0
        %v8389 = vadd.f32 %v8220, %v8388
        %v8390 = vpop.f32.mrf.mxu0
        %v8391 = vadd.f32 %v8222, %v8390
        %8392 = vdwg.mxu0
        %8393 = vmatpush.bf16.msra.mxu0 %v8030
        %8394 = vmatpush.bf16.msra.mxu0 %v8029
        %8395 = vmatpush.bf16.msra.mxu0 %v8028
        %8396 = vmatpush.bf16.msra.mxu0 %v8027
        %8397 = vmatpush.bf16.msra.mxu0 %v8026
        %8398 = vmatpush.bf16.msra.mxu0 %v8025
        %8399 = vmatpush.bf16.msra.mxu0 %v8024
        %8400 = vmatpush.bf16.msra.mxu0 %v8023
        %8401 = vmatmul.bf16.gmra.mxu0 %v4436
        %v8402 = vpop.f32.mrf.mxu0
        %v8403 = vadd.f32 %v8234, %v8402
        %v8404 = vpop.f32.mrf.mxu0
        %v8405 = vadd.f32 %v8236, %v8404
        %8406 = vmatmul.bf16.gmra.mxu0 %v4437
        %v8407 = vpop.f32.mrf.mxu0
        %v8408 = vadd.f32 %v8239, %v8407
        %v8409 = vpop.f32.mrf.mxu0
        %v8410 = vadd.f32 %v8241, %v8409
        %8411 = vmatmul.bf16.gmra.mxu0 %v4438
        %v8412 = vpop.f32.mrf.mxu0
        %v8413 = vadd.f32 %v8244, %v8412
        %v8414 = vpop.f32.mrf.mxu0
        %v8415 = vadd.f32 %v8246, %v8414
        %8416 = vmatmul.bf16.gmra.mxu0 %v4439
        %v8417 = vpop.f32.mrf.mxu0
        %v8418 = vadd.f32 %v8249, %v8417
        %v8419 = vpop.f32.mrf.mxu0
        %v8420 = vadd.f32 %v8251, %v8419
        %8421 = vmatmul.bf16.gmra.mxu0 %v4440
        %v8422 = vpop.f32.mrf.mxu0
        %v8423 = vadd.f32 %v8254, %v8422
        %v8424 = vpop.f32.mrf.mxu0
        %v8425 = vadd.f32 %v8256, %v8424
        %8426 = vmatmul.bf16.gmra.mxu0 %v4441
        %v8427 = vpop.f32.mrf.mxu0
        %v8428 = vadd.f32 %v8259, %v8427
        %v8429 = vpop.f32.mrf.mxu0
        %v8430 = vadd.f32 %v8261, %v8429
        %8431 = vmatmul.bf16.gmra.mxu0 %v4442
        %v8432 = vpop.f32.mrf.mxu0
        %v8433 = vadd.f32 %v8264, %v8432
        %v8434 = vpop.f32.mrf.mxu0
        %v8435 = vadd.f32 %v8266, %v8434
        %8436 = vmatmul.bf16.gmra.mxu0 %v4443
        %v8437 = vpop.f32.mrf.mxu0
        %v8438 = vadd.f32 %v8269, %v8437
        %v8439 = vpop.f32.mrf.mxu0
        %v8440 = vadd.f32 %v8271, %v8439
        %8441 = vmatmul.bf16.gmra.mxu0 %v4444
        %v8442 = vpop.f32.mrf.mxu0
        %v8443 = vadd.f32 %v8274, %v8442
        %v8444 = vpop.f32.mrf.mxu0
        %v8445 = vadd.f32 %v8276, %v8444
        %8446 = vmatmul.bf16.gmra.mxu0 %v4445
        %v8447 = vpop.f32.mrf.mxu0
        %v8448 = vadd.f32 %v8279, %v8447
        %v8449 = vpop.f32.mrf.mxu0
        %v8450 = vadd.f32 %v8281, %v8449
        %8451 = vmatmul.bf16.gmra.mxu0 %v4446
        %v8452 = vpop.f32.mrf.mxu0
        %v8453 = vadd.f32 %v8284, %v8452
        %v8454 = vpop.f32.mrf.mxu0
        %v8455 = vadd.f32 %v8286, %v8454
        %8456 = vmatmul.bf16.gmra.mxu0 %v4447
        %v8457 = vpop.f32.mrf.mxu0
        %v8458 = vadd.f32 %v8289, %v8457
        %v8459 = vpop.f32.mrf.mxu0
        %v8460 = vadd.f32 %v8291, %v8459
        %8461 = vmatmul.bf16.gmra.mxu0 %v4448
        %v8462 = vpop.f32.mrf.mxu0
        %v8463 = vadd.f32 %v8294, %v8462
        %v8464 = vpop.f32.mrf.mxu0
        %v8465 = vadd.f32 %v8296, %v8464
        %8466 = vmatmul.bf16.gmra.mxu0 %v4449
        %v8467 = vpop.f32.mrf.mxu0
        %v8468 = vadd.f32 %v8299, %v8467
        %v8469 = vpop.f32.mrf.mxu0
        %v8470 = vadd.f32 %v8301, %v8469
        %8471 = vmatmul.bf16.gmra.mxu0 %v4450
        %v8472 = vpop.f32.mrf.mxu0
        %v8473 = vadd.f32 %v8304, %v8472
        %v8474 = vpop.f32.mrf.mxu0
        %v8475 = vadd.f32 %v8306, %v8474
        %8476 = vmatmul.bf16.gmra.mxu0 %v4451
        %v8477 = vpop.f32.mrf.mxu0
        %v8478 = vadd.f32 %v8309, %v8477
        %v8479 = vpop.f32.mrf.mxu0
        %v8480 = vadd.f32 %v8311, %v8479
        %8481 = vmatmul.bf16.gmra.mxu0 %v4452
        %v8482 = vpop.f32.mrf.mxu0
        %v8483 = vadd.f32 %v8314, %v8482
        %v8484 = vpop.f32.mrf.mxu0
        %v8485 = vadd.f32 %v8316, %v8484
        %8486 = vmatmul.bf16.gmra.mxu0 %v4453
        %v8487 = vpop.f32.mrf.mxu0
        %v8488 = vadd.f32 %v8319, %v8487
        %v8489 = vpop.f32.mrf.mxu0
        %v8490 = vadd.f32 %v8321, %v8489
        %8491 = vmatmul.bf16.gmra.mxu0 %v4454
        %v8492 = vpop.f32.mrf.mxu0
        %v8493 = vadd.f32 %v8324, %v8492
        %v8494 = vpop.f32.mrf.mxu0
        %v8495 = vadd.f32 %v8326, %v8494
        %8496 = vmatmul.bf16.gmra.mxu0 %v4455
        %v8497 = vpop.f32.mrf.mxu0
        %v8498 = vadd.f32 %v8329, %v8497
        %v8499 = vpop.f32.mrf.mxu0
        %v8500 = vadd.f32 %v8331, %v8499
        %8501 = vmatmul.bf16.gmra.mxu0 %v4456
        %v8502 = vpop.f32.mrf.mxu0
        %v8503 = vadd.f32 %v8334, %v8502
        %v8504 = vpop.f32.mrf.mxu0
        %v8505 = vadd.f32 %v8336, %v8504
        %8506 = vmatmul.bf16.gmra.mxu0 %v4457
        %v8507 = vpop.f32.mrf.mxu0
        %v8508 = vadd.f32 %v8339, %v8507
        %v8509 = vpop.f32.mrf.mxu0
        %v8510 = vadd.f32 %v8341, %v8509
        %8511 = vmatmul.bf16.gmra.mxu0 %v4458
        %v8512 = vpop.f32.mrf.mxu0
        %v8513 = vadd.f32 %v8344, %v8512
        %v8514 = vpop.f32.mrf.mxu0
        %v8515 = vadd.f32 %v8346, %v8514
        %8516 = vmatmul.bf16.gmra.mxu0 %v4459
        %v8517 = vpop.f32.mrf.mxu0
        %v8518 = vadd.f32 %v8349, %v8517
        %v8519 = vpop.f32.mrf.mxu0
        %v8520 = vadd.f32 %v8351, %v8519
        %8521 = vmatmul.bf16.gmra.mxu0 %v4460
        %v8522 = vpop.f32.mrf.mxu0
        %v8523 = vadd.f32 %v8354, %v8522
        %v8524 = vpop.f32.mrf.mxu0
        %v8525 = vadd.f32 %v8356, %v8524
        %8526 = vmatmul.bf16.gmra.mxu0 %v4461
        %v8527 = vpop.f32.mrf.mxu0
        %v8528 = vadd.f32 %v8359, %v8527
        %v8529 = vpop.f32.mrf.mxu0
        %v8530 = vadd.f32 %v8361, %v8529
        %8531 = vmatmul.bf16.gmra.mxu0 %v4462
        %v8532 = vpop.f32.mrf.mxu0
        %v8533 = vadd.f32 %v8364, %v8532
        %v8534 = vpop.f32.mrf.mxu0
        %v8535 = vadd.f32 %v8366, %v8534
        %8536 = vmatmul.bf16.gmra.mxu0 %v4463
        %v8537 = vpop.f32.mrf.mxu0
        %v8538 = vadd.f32 %v8369, %v8537
        %v8539 = vpop.f32.mrf.mxu0
        %v8540 = vadd.f32 %v8371, %v8539
        %8541 = vmatmul.bf16.gmra.mxu0 %v7854
        %v8542 = vpop.f32.mrf.mxu0
        %v8543 = vadd.f32 %v8374, %v8542
        %v8544 = vpop.f32.mrf.mxu0
        %v8545 = vadd.f32 %v8376, %v8544
        %8546 = vmatmul.bf16.gmra.mxu0 %v7855
        %v8547 = vpop.f32.mrf.mxu0
        %v8548 = vadd.f32 %v8379, %v8547
        %v8549 = vpop.f32.mrf.mxu0
        %v8550 = vadd.f32 %v8381, %v8549
        %8551 = vmatmul.bf16.gmra.mxu0 %v7856
        %v8552 = vpop.f32.mrf.mxu0
        %v8553 = vadd.f32 %v8384, %v8552
        %v8554 = vpop.f32.mrf.mxu0
        %v8555 = vadd.f32 %v8386, %v8554
        %8556 = vmatmul.bf16.gmra.mxu0 %v7857
        %v8557 = vpop.f32.mrf.mxu0
        %v8558 = vadd.f32 %v8389, %v8557
        %v8559 = vpop.f32.mrf.mxu0
        %v8560 = vadd.f32 %v8391, %v8559
        %8561 = vdwg.mxu0
        %v8562 = vadd.f32 %v7751, %v8403
        %v8563 = vadd.f32 %v7752, %v8405
        %v8564 = vadd.f32 %v7753, %v8408
        %v8565 = vadd.f32 %v7754, %v8410
        %v8566 = vadd.f32 %v7755, %v8413
        %v8567 = vadd.f32 %v7756, %v8415
        %v8568 = vadd.f32 %v7757, %v8418
        %v8569 = vadd.f32 %v7758, %v8420
        %v8570 = vadd.f32 %v7759, %v8423
        %v8571 = vadd.f32 %v7760, %v8425
        %v8572 = vadd.f32 %v7761, %v8428
        %v8573 = vadd.f32 %v7762, %v8430
        %v8574 = vadd.f32 %v7763, %v8433
        %v8575 = vadd.f32 %v7764, %v8435
        %v8576 = vadd.f32 %v7765, %v8438
        %v8577 = vadd.f32 %v7766, %v8440
        %v8578 = vadd.f32 %v7767, %v8443
        %v8579 = vadd.f32 %v7768, %v8445
        %v8580 = vadd.f32 %v7769, %v8448
        %v8581 = vadd.f32 %v7770, %v8450
        %v8582 = vadd.f32 %v7771, %v8453
        %v8583 = vadd.f32 %v7772, %v8455
        %v8584 = vadd.f32 %v7773, %v8458
        %v8585 = vadd.f32 %v7774, %v8460
        %v8586 = vadd.f32 %v7775, %v8463
        %v8587 = vadd.f32 %v7776, %v8465
        %v8588 = vadd.f32 %v7777, %v8468
        %v8589 = vadd.f32 %v7778, %v8470
        %v8590 = vadd.f32 %v7779, %v8473
        %v8591 = vadd.f32 %v7780, %v8475
        %v8592 = vadd.f32 %v7781, %v8478
        %v8593 = vadd.f32 %v7782, %v8480
        %v8594 = vadd.f32 %v7783, %v8483
        %v8595 = vadd.f32 %v7784, %v8485
        %v8596 = vadd.f32 %v7785, %v8488
        %v8597 = vadd.f32 %v7786, %v8490
        %v8598 = vadd.f32 %v7787, %v8493
        %v8599 = vadd.f32 %v7788, %v8495
        %v8600 = vadd.f32 %v7789, %v8498
        %v8601 = vadd.f32 %v7790, %v8500
        %v8602 = vadd.f32 %v7791, %v8503
        %v8603 = vadd.f32 %v7792, %v8505
        %v8604 = vadd.f32 %v7793, %v8508
        %v8605 = vadd.f32 %v7794, %v8510
        %v8606 = vadd.f32 %v7795, %v8513
        %v8607 = vadd.f32 %v7796, %v8515
        %v8608 = vadd.f32 %v7797, %v8518
        %v8609 = vadd.f32 %v7798, %v8520
        %v8610 = vadd.f32 %v7799, %v8523
        %v8611 = vadd.f32 %v7800, %v8525
        %v8612 = vadd.f32 %v7801, %v8528
        %v8613 = vadd.f32 %v7802, %v8530
        %v8614 = vadd.f32 %v7803, %v8533
        %v8615 = vadd.f32 %v7804, %v8535
        %v8616 = vadd.f32 %v7805, %v8538
        %v8617 = vadd.f32 %v7806, %v8540
        %v8618 = vadd.f32 %v7807, %v8543
        %v8619 = vadd.f32 %v7808, %v8545
        %v8620 = vadd.f32 %v7809, %v8548
        %v8621 = vadd.f32 %v7810, %v8550
        %v8622 = vadd.f32 %v7811, %v8553
        %v8623 = vadd.f32 %v7812, %v8555
        %v8624 = vadd.f32 %v7813, %v8558
        %v8625 = vadd.f32 %v7814, %v8560
        %v8627 = vshrl.u32 %v2380, 16
        %v8629 = vrot.slane %v8627, 4
        %v8630 = vshll.u32 %v2380, 16
        %v8632 = vrot.slane %v8630, 5
        %v8633 = vor.u32 %v8629, %v8632
        %v8634 = vrot.slane %v8633, 4
        %v8636 = vshll.u32 %v2381, 16
        %v8638 = vrot.slane %v8636, 5
        %v8639 = vsel %vm2404, %v8634, %v8638
        %v8642 = vrot.slane %v2380, 5
        %v8643 = vrot.slane %v8642, 4
        %v8644 = vrot.slane %v2381, 5
        %v8645 = vsel %vm3431, %v8643, %v8644
        %v8646 = vunpack.c.l.b16 %v2380
        %v8647 = vpack.c.b16 %v8646, %v7835
        %v8649 = vunpack.c.l.b16 %v8639
        %v8650 = vpack.c.b16 %v8649, %v7844
        %v8652 = vunpack.c.l.b16 %v8645
        %v8653 = vpack.c.b16 %v8652, %v7853
        %s8655 = scalar_lea.vmem [#allocation8], 960
        %v8656 = vld [vmem:[%s8655] sm:$0xf]
        %v8657 = vld [vmem:[%s8655 + $0x4] sm:$0xf]
        %v8658 = vld [vmem:[%s8655 + $0x8] sm:$0xf]
        %v8659 = vld [vmem:[%s8655 + $0xc] sm:$0xf]
        %v8660 = vld [vmem:[%s8655 + $0x10] sm:$0xf]
        %v8661 = vld [vmem:[%s8655 + $0x14] sm:$0xf]
        %v8662 = vld [vmem:[%s8655 + $0x18] sm:$0xf]
        %v8663 = vld [vmem:[%s8655 + $0x1c] sm:$0xf]
        %v8664 = vld [vmem:[%s8655 + $0x20] sm:$0xf]
        %v8665 = vld [vmem:[%s8655 + $0x24] sm:$0xf]
        %v8666 = vld [vmem:[%s8655 + $0x28] sm:$0xf]
        %v8667 = vld [vmem:[%s8655 + $0x2c] sm:$0xf]
        %v8668 = vld [vmem:[%s8655 + $0x30] sm:$0xf]
        %v8669 = vld [vmem:[%s8655 + $0x34] sm:$0xf]
        %v8670 = vld [vmem:[%s8655 + $0x38] sm:$0xf]
        %v8671 = vld [vmem:[%s8655 + $0x3c] sm:$0xf]
        %v8672 = vld [vmem:[%s8655 + $0x40] sm:$0xf]
        %v8673 = vld [vmem:[%s8655 + $0x44] sm:$0xf]
        %v8674 = vld [vmem:[%s8655 + $0x48] sm:$0xf]
        %v8675 = vld [vmem:[%s8655 + $0x4c] sm:$0xf]
        %v8676 = vld [vmem:[%s8655 + $0x50] sm:$0xf]
        %v8677 = vld [vmem:[%s8655 + $0x54] sm:$0xf]
        %v8678 = vld [vmem:[%s8655 + $0x58] sm:$0xf]
        %v8679 = vld [vmem:[%s8655 + $0x5c] sm:$0xf]
        %v8680 = vld [vmem:[%s8655 + $0x60] sm:$0xf]
        %v8681 = vld [vmem:[%s8655 + $0x64] sm:$0xf]
        %v8682 = vld [vmem:[%s8655 + $0x68] sm:$0xf]
        %v8683 = vld [vmem:[%s8655 + $0x6c] sm:$0xf]
        %v8684 = vld [vmem:[%s8655 + $0x70] sm:$0xf]
        %v8685 = vld [vmem:[%s8655 + $0x74] sm:$0xf]
        %v8686 = vld [vmem:[%s8655 + $0x78] sm:$0xf]
        %v8687 = vld [vmem:[%s8655 + $0x7c] sm:$0xf]
        %v8688 = vld [vmem:[%s8655 + $0x80] sm:$0xf]
        %v8689 = vld [vmem:[%s8655 + $0x84] sm:$0xf]
        %v8690 = vld [vmem:[%s8655 + $0x88] sm:$0xf]
        %v8691 = vld [vmem:[%s8655 + $0x8c] sm:$0xf]
        %v8692 = vld [vmem:[%s8655 + $0x90] sm:$0xf]
        %v8693 = vld [vmem:[%s8655 + $0x94] sm:$0xf]
        %v8694 = vld [vmem:[%s8655 + $0x98] sm:$0xf]
        %v8695 = vld [vmem:[%s8655 + $0x9c] sm:$0xf]
        %v8696 = vld [vmem:[%s8655 + $0xa0] sm:$0xf]
        %v8697 = vld [vmem:[%s8655 + $0xa4] sm:$0xf]
        %v8698 = vld [vmem:[%s8655 + $0xa8] sm:$0xf]
        %v8699 = vld [vmem:[%s8655 + $0xac] sm:$0xf]
        %v8700 = vld [vmem:[%s8655 + $0xb0] sm:$0xf]
        %v8701 = vld [vmem:[%s8655 + $0xb4] sm:$0xf]
        %v8702 = vld [vmem:[%s8655 + $0xb8] sm:$0xf]
        %v8703 = vld [vmem:[%s8655 + $0xbc] sm:$0xf]
        %v8752 = vunpack.c.l.b16 %v8656
        %v8753 = vunpack.c.l.b16 %v8657
        %v8754 = vunpack.c.l.b16 %v8658
        %v8755 = vunpack.c.l.b16 %v8659
        %v8756 = vunpack.c.l.b16 %v8660
        %v8757 = vunpack.c.l.b16 %v8661
        %v8758 = vunpack.c.l.b16 %v8662
        %v8759 = vunpack.c.l.b16 %v8663
        %v8760 = vunpack.c.l.b16 %v8664
        %v8761 = vunpack.c.l.b16 %v8665
        %v8762 = vunpack.c.l.b16 %v8666
        %v8763 = vunpack.c.l.b16 %v8667
        %v8764 = vunpack.c.l.b16 %v8668
        %v8765 = vunpack.c.l.b16 %v8669
        %v8766 = vunpack.c.l.b16 %v8670
        %v8767 = vunpack.c.l.b16 %v8671
        %v8768 = vunpack.c.l.b16 %v8672
        %v8769 = vunpack.c.l.b16 %v8673
        %v8770 = vunpack.c.l.b16 %v8674
        %v8771 = vunpack.c.l.b16 %v8675
        %v8772 = vunpack.c.l.b16 %v8676
        %v8773 = vunpack.c.l.b16 %v8677
        %v8774 = vunpack.c.l.b16 %v8678
        %v8775 = vunpack.c.l.b16 %v8679
        %v8776 = vunpack.c.l.b16 %v8680
        %v8777 = vunpack.c.l.b16 %v8681
        %v8778 = vunpack.c.l.b16 %v8682
        %v8779 = vunpack.c.l.b16 %v8683
        %v8780 = vunpack.c.l.b16 %v8684
        %v8781 = vunpack.c.l.b16 %v8685
        %v8782 = vunpack.c.l.b16 %v8686
        %v8783 = vunpack.c.l.b16 %v8687
        %v8784 = vunpack.c.l.b16 %v8688
        %v8785 = vunpack.c.l.b16 %v8689
        %v8786 = vunpack.c.l.b16 %v8690
        %v8787 = vunpack.c.l.b16 %v8691
        %v8788 = vunpack.c.l.b16 %v8692
        %v8789 = vunpack.c.l.b16 %v8693
        %v8790 = vunpack.c.l.b16 %v8694
        %v8791 = vunpack.c.l.b16 %v8695
        %v8792 = vunpack.c.l.b16 %v8696
        %v8793 = vunpack.c.l.b16 %v8697
        %v8794 = vunpack.c.l.b16 %v8698
        %v8795 = vunpack.c.l.b16 %v8699
        %v8796 = vunpack.c.l.b16 %v8700
        %v8797 = vunpack.c.l.b16 %v8701
        %v8798 = vunpack.c.l.b16 %v8702
        %v8799 = vunpack.c.l.b16 %v8703
        %v8800 = vpack.c.b16 %v8753, %v8752
        %v8801 = vpack.c.b16 %v8755, %v8754
        %v8802 = vpack.c.b16 %v8757, %v8756
        %v8803 = vpack.c.b16 %v8759, %v8758
        %v8804 = vpack.c.b16 %v8761, %v8760
        %v8805 = vpack.c.b16 %v8763, %v8762
        %v8806 = vpack.c.b16 %v8765, %v8764
        %v8807 = vpack.c.b16 %v8767, %v8766
        %v8808 = vpack.c.b16 %v8769, %v8768
        %v8809 = vpack.c.b16 %v8771, %v8770
        %v8810 = vpack.c.b16 %v8773, %v8772
        %v8811 = vpack.c.b16 %v8775, %v8774
        %v8812 = vpack.c.b16 %v8777, %v8776
        %v8813 = vpack.c.b16 %v8779, %v8778
        %v8814 = vpack.c.b16 %v8781, %v8780
        %v8815 = vpack.c.b16 %v8783, %v8782
        %v8816 = vpack.c.b16 %v8785, %v8784
        %v8817 = vpack.c.b16 %v8787, %v8786
        %v8818 = vpack.c.b16 %v8789, %v8788
        %v8819 = vpack.c.b16 %v8791, %v8790
        %v8820 = vpack.c.b16 %v8793, %v8792
        %v8821 = vpack.c.b16 %v8795, %v8794
        %v8822 = vpack.c.b16 %v8797, %v8796
        %v8823 = vpack.c.b16 %v8799, %v8798
        %8848 = vmatpush.bf16.msra.mxu0 %v8807
        %8849 = vmatpush.bf16.msra.mxu0 %v8806
        %8850 = vmatpush.bf16.msra.mxu0 %v8805
        %8851 = vmatpush.bf16.msra.mxu0 %v8804
        %8852 = vmatpush.bf16.msra.mxu0 %v8803
        %8853 = vmatpush.bf16.msra.mxu0 %v8802
        %8854 = vmatpush.bf16.msra.mxu0 %v8801
        %8855 = vmatpush.bf16.msra.mxu0 %v8800
        %8856 = vmatmul.bf16.gmra.mxu0 %v3757
        %v8857 = vpop.f32.mrf.mxu0
        %v8858 = vadd.f32 0.0, %v8857
        %v8859 = vpop.f32.mrf.mxu0
        %v8860 = vadd.f32 0.0, %v8859
        %8861 = vmatmul.bf16.gmra.mxu0 %v3758
        %v8862 = vpop.f32.mrf.mxu0
        %v8863 = vadd.f32 0.0, %v8862
        %v8864 = vpop.f32.mrf.mxu0
        %v8865 = vadd.f32 0.0, %v8864
        %8866 = vmatmul.bf16.gmra.mxu0 %v3759
        %v8867 = vpop.f32.mrf.mxu0
        %v8868 = vadd.f32 0.0, %v8867
        %v8869 = vpop.f32.mrf.mxu0
        %v8870 = vadd.f32 0.0, %v8869
        %8871 = vmatmul.bf16.gmra.mxu0 %v6016
        %v8872 = vpop.f32.mrf.mxu0
        %v8873 = vadd.f32 0.0, %v8872
        %v8874 = vpop.f32.mrf.mxu0
        %v8875 = vadd.f32 0.0, %v8874
        %8876 = vmatmul.bf16.gmra.mxu0 %v3761
        %v8877 = vpop.f32.mrf.mxu0
        %v8878 = vadd.f32 0.0, %v8877
        %v8879 = vpop.f32.mrf.mxu0
        %v8880 = vadd.f32 0.0, %v8879
        %8881 = vmatmul.bf16.gmra.mxu0 %v3762
        %v8882 = vpop.f32.mrf.mxu0
        %v8883 = vadd.f32 0.0, %v8882
        %v8884 = vpop.f32.mrf.mxu0
        %v8885 = vadd.f32 0.0, %v8884
        %8886 = vmatmul.bf16.gmra.mxu0 %v3763
        %v8887 = vpop.f32.mrf.mxu0
        %v8888 = vadd.f32 0.0, %v8887
        %v8889 = vpop.f32.mrf.mxu0
        %v8890 = vadd.f32 0.0, %v8889
        %8891 = vmatmul.bf16.gmra.mxu0 %v6017
        %v8892 = vpop.f32.mrf.mxu0
        %v8893 = vadd.f32 0.0, %v8892
        %v8894 = vpop.f32.mrf.mxu0
        %v8895 = vadd.f32 0.0, %v8894
        %8896 = vmatmul.bf16.gmra.mxu0 %v3765
        %v8897 = vpop.f32.mrf.mxu0
        %v8898 = vadd.f32 0.0, %v8897
        %v8899 = vpop.f32.mrf.mxu0
        %v8900 = vadd.f32 0.0, %v8899
        %8901 = vmatmul.bf16.gmra.mxu0 %v3766
        %v8902 = vpop.f32.mrf.mxu0
        %v8903 = vadd.f32 0.0, %v8902
        %v8904 = vpop.f32.mrf.mxu0
        %v8905 = vadd.f32 0.0, %v8904
        %8906 = vmatmul.bf16.gmra.mxu0 %v3767
        %v8907 = vpop.f32.mrf.mxu0
        %v8908 = vadd.f32 0.0, %v8907
        %v8909 = vpop.f32.mrf.mxu0
        %v8910 = vadd.f32 0.0, %v8909
        %8911 = vmatmul.bf16.gmra.mxu0 %v6018
        %v8912 = vpop.f32.mrf.mxu0
        %v8913 = vadd.f32 0.0, %v8912
        %v8914 = vpop.f32.mrf.mxu0
        %v8915 = vadd.f32 0.0, %v8914
        %8916 = vmatmul.bf16.gmra.mxu0 %v3769
        %v8917 = vpop.f32.mrf.mxu0
        %v8918 = vadd.f32 0.0, %v8917
        %v8919 = vpop.f32.mrf.mxu0
        %v8920 = vadd.f32 0.0, %v8919
        %8921 = vmatmul.bf16.gmra.mxu0 %v3770
        %v8922 = vpop.f32.mrf.mxu0
        %v8923 = vadd.f32 0.0, %v8922
        %v8924 = vpop.f32.mrf.mxu0
        %v8925 = vadd.f32 0.0, %v8924
        %8926 = vmatmul.bf16.gmra.mxu0 %v3771
        %v8927 = vpop.f32.mrf.mxu0
        %v8928 = vadd.f32 0.0, %v8927
        %v8929 = vpop.f32.mrf.mxu0
        %v8930 = vadd.f32 0.0, %v8929
        %8931 = vmatmul.bf16.gmra.mxu0 %v6019
        %v8932 = vpop.f32.mrf.mxu0
        %v8933 = vadd.f32 0.0, %v8932
        %v8934 = vpop.f32.mrf.mxu0
        %v8935 = vadd.f32 0.0, %v8934
        %8936 = vmatmul.bf16.gmra.mxu0 %v3773
        %v8937 = vpop.f32.mrf.mxu0
        %v8938 = vadd.f32 0.0, %v8937
        %v8939 = vpop.f32.mrf.mxu0
        %v8940 = vadd.f32 0.0, %v8939
        %8941 = vmatmul.bf16.gmra.mxu0 %v3774
        %v8942 = vpop.f32.mrf.mxu0
        %v8943 = vadd.f32 0.0, %v8942
        %v8944 = vpop.f32.mrf.mxu0
        %v8945 = vadd.f32 0.0, %v8944
        %8946 = vmatmul.bf16.gmra.mxu0 %v3775
        %v8947 = vpop.f32.mrf.mxu0
        %v8948 = vadd.f32 0.0, %v8947
        %v8949 = vpop.f32.mrf.mxu0
        %v8950 = vadd.f32 0.0, %v8949
        %8951 = vmatmul.bf16.gmra.mxu0 %v6020
        %v8952 = vpop.f32.mrf.mxu0
        %v8953 = vadd.f32 0.0, %v8952
        %v8954 = vpop.f32.mrf.mxu0
        %v8955 = vadd.f32 0.0, %v8954
        %8956 = vmatmul.bf16.gmra.mxu0 %v3777
        %v8957 = vpop.f32.mrf.mxu0
        %v8958 = vadd.f32 0.0, %v8957
        %v8959 = vpop.f32.mrf.mxu0
        %v8960 = vadd.f32 0.0, %v8959
        %8961 = vmatmul.bf16.gmra.mxu0 %v3778
        %v8962 = vpop.f32.mrf.mxu0
        %v8963 = vadd.f32 0.0, %v8962
        %v8964 = vpop.f32.mrf.mxu0
        %v8965 = vadd.f32 0.0, %v8964
        %8966 = vmatmul.bf16.gmra.mxu0 %v3779
        %v8967 = vpop.f32.mrf.mxu0
        %v8968 = vadd.f32 0.0, %v8967
        %v8969 = vpop.f32.mrf.mxu0
        %v8970 = vadd.f32 0.0, %v8969
        %8971 = vmatmul.bf16.gmra.mxu0 %v6021
        %v8972 = vpop.f32.mrf.mxu0
        %v8973 = vadd.f32 0.0, %v8972
        %v8974 = vpop.f32.mrf.mxu0
        %v8975 = vadd.f32 0.0, %v8974
        %8976 = vmatmul.bf16.gmra.mxu0 %v3781
        %v8977 = vpop.f32.mrf.mxu0
        %v8978 = vadd.f32 0.0, %v8977
        %v8979 = vpop.f32.mrf.mxu0
        %v8980 = vadd.f32 0.0, %v8979
        %8981 = vmatmul.bf16.gmra.mxu0 %v3782
        %v8982 = vpop.f32.mrf.mxu0
        %v8983 = vadd.f32 0.0, %v8982
        %v8984 = vpop.f32.mrf.mxu0
        %v8985 = vadd.f32 0.0, %v8984
        %8986 = vmatmul.bf16.gmra.mxu0 %v3783
        %v8987 = vpop.f32.mrf.mxu0
        %v8988 = vadd.f32 0.0, %v8987
        %v8989 = vpop.f32.mrf.mxu0
        %v8990 = vadd.f32 0.0, %v8989
        %8991 = vmatmul.bf16.gmra.mxu0 %v6022
        %v8992 = vpop.f32.mrf.mxu0
        %v8993 = vadd.f32 0.0, %v8992
        %v8994 = vpop.f32.mrf.mxu0
        %v8995 = vadd.f32 0.0, %v8994
        %8996 = vmatmul.bf16.gmra.mxu0 %v7012
        %v8997 = vpop.f32.mrf.mxu0
        %v8998 = vadd.f32 0.0, %v8997
        %v8999 = vpop.f32.mrf.mxu0
        %v9000 = vadd.f32 0.0, %v8999
        %9001 = vmatmul.bf16.gmra.mxu0 %v7013
        %v9002 = vpop.f32.mrf.mxu0
        %v9003 = vadd.f32 0.0, %v9002
        %v9004 = vpop.f32.mrf.mxu0
        %v9005 = vadd.f32 0.0, %v9004
        %9006 = vmatmul.bf16.gmra.mxu0 %v7014
        %v9007 = vpop.f32.mrf.mxu0
        %v9008 = vadd.f32 0.0, %v9007
        %v9009 = vpop.f32.mrf.mxu0
        %v9010 = vadd.f32 0.0, %v9009
        %9011 = vmatmul.bf16.gmra.mxu0 %v8647
        %v9012 = vpop.f32.mrf.mxu0
        %v9013 = vadd.f32 0.0, %v9012
        %v9014 = vpop.f32.mrf.mxu0
        %v9015 = vadd.f32 0.0, %v9014
        %9016 = vdwg.mxu0
        %9017 = vmatpush.bf16.msra.mxu0 %v8815
        %9018 = vmatpush.bf16.msra.mxu0 %v8814
        %9019 = vmatpush.bf16.msra.mxu0 %v8813
        %9020 = vmatpush.bf16.msra.mxu0 %v8812
        %9021 = vmatpush.bf16.msra.mxu0 %v8811
        %9022 = vmatpush.bf16.msra.mxu0 %v8810
        %9023 = vmatpush.bf16.msra.mxu0 %v8809
        %9024 = vmatpush.bf16.msra.mxu0 %v8808
        %9025 = vmatmul.bf16.gmra.mxu0 %v3885
        %v9026 = vpop.f32.mrf.mxu0
        %v9027 = vadd.f32 %v8858, %v9026
        %v9028 = vpop.f32.mrf.mxu0
        %v9029 = vadd.f32 %v8860, %v9028
        %9030 = vmatmul.bf16.gmra.mxu0 %v3886
        %v9031 = vpop.f32.mrf.mxu0
        %v9032 = vadd.f32 %v8863, %v9031
        %v9033 = vpop.f32.mrf.mxu0
        %v9034 = vadd.f32 %v8865, %v9033
        %9035 = vmatmul.bf16.gmra.mxu0 %v3887
        %v9036 = vpop.f32.mrf.mxu0
        %v9037 = vadd.f32 %v8868, %v9036
        %v9038 = vpop.f32.mrf.mxu0
        %v9039 = vadd.f32 %v8870, %v9038
        %9040 = vmatmul.bf16.gmra.mxu0 %v6040
        %v9041 = vpop.f32.mrf.mxu0
        %v9042 = vadd.f32 %v8873, %v9041
        %v9043 = vpop.f32.mrf.mxu0
        %v9044 = vadd.f32 %v8875, %v9043
        %9045 = vmatmul.bf16.gmra.mxu0 %v3889
        %v9046 = vpop.f32.mrf.mxu0
        %v9047 = vadd.f32 %v8878, %v9046
        %v9048 = vpop.f32.mrf.mxu0
        %v9049 = vadd.f32 %v8880, %v9048
        %9050 = vmatmul.bf16.gmra.mxu0 %v3890
        %v9051 = vpop.f32.mrf.mxu0
        %v9052 = vadd.f32 %v8883, %v9051
        %v9053 = vpop.f32.mrf.mxu0
        %v9054 = vadd.f32 %v8885, %v9053
        %9055 = vmatmul.bf16.gmra.mxu0 %v3891
        %v9056 = vpop.f32.mrf.mxu0
        %v9057 = vadd.f32 %v8888, %v9056
        %v9058 = vpop.f32.mrf.mxu0
        %v9059 = vadd.f32 %v8890, %v9058
        %9060 = vmatmul.bf16.gmra.mxu0 %v6041
        %v9061 = vpop.f32.mrf.mxu0
        %v9062 = vadd.f32 %v8893, %v9061
        %v9063 = vpop.f32.mrf.mxu0
        %v9064 = vadd.f32 %v8895, %v9063
        %9065 = vmatmul.bf16.gmra.mxu0 %v3893
        %v9066 = vpop.f32.mrf.mxu0
        %v9067 = vadd.f32 %v8898, %v9066
        %v9068 = vpop.f32.mrf.mxu0
        %v9069 = vadd.f32 %v8900, %v9068
        %9070 = vmatmul.bf16.gmra.mxu0 %v3894
        %v9071 = vpop.f32.mrf.mxu0
        %v9072 = vadd.f32 %v8903, %v9071
        %v9073 = vpop.f32.mrf.mxu0
        %v9074 = vadd.f32 %v8905, %v9073
        %9075 = vmatmul.bf16.gmra.mxu0 %v3895
        %v9076 = vpop.f32.mrf.mxu0
        %v9077 = vadd.f32 %v8908, %v9076
        %v9078 = vpop.f32.mrf.mxu0
        %v9079 = vadd.f32 %v8910, %v9078
        %9080 = vmatmul.bf16.gmra.mxu0 %v6042
        %v9081 = vpop.f32.mrf.mxu0
        %v9082 = vadd.f32 %v8913, %v9081
        %v9083 = vpop.f32.mrf.mxu0
        %v9084 = vadd.f32 %v8915, %v9083
        %9085 = vmatmul.bf16.gmra.mxu0 %v3897
        %v9086 = vpop.f32.mrf.mxu0
        %v9087 = vadd.f32 %v8918, %v9086
        %v9088 = vpop.f32.mrf.mxu0
        %v9089 = vadd.f32 %v8920, %v9088
        %9090 = vmatmul.bf16.gmra.mxu0 %v3898
        %v9091 = vpop.f32.mrf.mxu0
        %v9092 = vadd.f32 %v8923, %v9091
        %v9093 = vpop.f32.mrf.mxu0
        %v9094 = vadd.f32 %v8925, %v9093
        %9095 = vmatmul.bf16.gmra.mxu0 %v3899
        %v9096 = vpop.f32.mrf.mxu0
        %v9097 = vadd.f32 %v8928, %v9096
        %v9098 = vpop.f32.mrf.mxu0
        %v9099 = vadd.f32 %v8930, %v9098
        %9100 = vmatmul.bf16.gmra.mxu0 %v6043
        %v9101 = vpop.f32.mrf.mxu0
        %v9102 = vadd.f32 %v8933, %v9101
        %v9103 = vpop.f32.mrf.mxu0
        %v9104 = vadd.f32 %v8935, %v9103
        %9105 = vmatmul.bf16.gmra.mxu0 %v3901
        %v9106 = vpop.f32.mrf.mxu0
        %v9107 = vadd.f32 %v8938, %v9106
        %v9108 = vpop.f32.mrf.mxu0
        %v9109 = vadd.f32 %v8940, %v9108
        %9110 = vmatmul.bf16.gmra.mxu0 %v3902
        %v9111 = vpop.f32.mrf.mxu0
        %v9112 = vadd.f32 %v8943, %v9111
        %v9113 = vpop.f32.mrf.mxu0
        %v9114 = vadd.f32 %v8945, %v9113
        %9115 = vmatmul.bf16.gmra.mxu0 %v3903
        %v9116 = vpop.f32.mrf.mxu0
        %v9117 = vadd.f32 %v8948, %v9116
        %v9118 = vpop.f32.mrf.mxu0
        %v9119 = vadd.f32 %v8950, %v9118
        %9120 = vmatmul.bf16.gmra.mxu0 %v6044
        %v9121 = vpop.f32.mrf.mxu0
        %v9122 = vadd.f32 %v8953, %v9121
        %v9123 = vpop.f32.mrf.mxu0
        %v9124 = vadd.f32 %v8955, %v9123
        %9125 = vmatmul.bf16.gmra.mxu0 %v3905
        %v9126 = vpop.f32.mrf.mxu0
        %v9127 = vadd.f32 %v8958, %v9126
        %v9128 = vpop.f32.mrf.mxu0
        %v9129 = vadd.f32 %v8960, %v9128
        %9130 = vmatmul.bf16.gmra.mxu0 %v3906
        %v9131 = vpop.f32.mrf.mxu0
        %v9132 = vadd.f32 %v8963, %v9131
        %v9133 = vpop.f32.mrf.mxu0
        %v9134 = vadd.f32 %v8965, %v9133
        %9135 = vmatmul.bf16.gmra.mxu0 %v3907
        %v9136 = vpop.f32.mrf.mxu0
        %v9137 = vadd.f32 %v8968, %v9136
        %v9138 = vpop.f32.mrf.mxu0
        %v9139 = vadd.f32 %v8970, %v9138
        %9140 = vmatmul.bf16.gmra.mxu0 %v6045
        %v9141 = vpop.f32.mrf.mxu0
        %v9142 = vadd.f32 %v8973, %v9141
        %v9143 = vpop.f32.mrf.mxu0
        %v9144 = vadd.f32 %v8975, %v9143
        %9145 = vmatmul.bf16.gmra.mxu0 %v3909
        %v9146 = vpop.f32.mrf.mxu0
        %v9147 = vadd.f32 %v8978, %v9146
        %v9148 = vpop.f32.mrf.mxu0
        %v9149 = vadd.f32 %v8980, %v9148
        %9150 = vmatmul.bf16.gmra.mxu0 %v3910
        %v9151 = vpop.f32.mrf.mxu0
        %v9152 = vadd.f32 %v8983, %v9151
        %v9153 = vpop.f32.mrf.mxu0
        %v9154 = vadd.f32 %v8985, %v9153
        %9155 = vmatmul.bf16.gmra.mxu0 %v3911
        %v9156 = vpop.f32.mrf.mxu0
        %v9157 = vadd.f32 %v8988, %v9156
        %v9158 = vpop.f32.mrf.mxu0
        %v9159 = vadd.f32 %v8990, %v9158
        %9160 = vmatmul.bf16.gmra.mxu0 %v6046
        %v9161 = vpop.f32.mrf.mxu0
        %v9162 = vadd.f32 %v8993, %v9161
        %v9163 = vpop.f32.mrf.mxu0
        %v9164 = vadd.f32 %v8995, %v9163
        %9165 = vmatmul.bf16.gmra.mxu0 %v7028
        %v9166 = vpop.f32.mrf.mxu0
        %v9167 = vadd.f32 %v8998, %v9166
        %v9168 = vpop.f32.mrf.mxu0
        %v9169 = vadd.f32 %v9000, %v9168
        %9170 = vmatmul.bf16.gmra.mxu0 %v7029
        %v9171 = vpop.f32.mrf.mxu0
        %v9172 = vadd.f32 %v9003, %v9171
        %v9173 = vpop.f32.mrf.mxu0
        %v9174 = vadd.f32 %v9005, %v9173
        %9175 = vmatmul.bf16.gmra.mxu0 %v7030
        %v9176 = vpop.f32.mrf.mxu0
        %v9177 = vadd.f32 %v9008, %v9176
        %v9178 = vpop.f32.mrf.mxu0
        %v9179 = vadd.f32 %v9010, %v9178
        %9180 = vmatmul.bf16.gmra.mxu0 %v8650
        %v9181 = vpop.f32.mrf.mxu0
        %v9182 = vadd.f32 %v9013, %v9181
        %v9183 = vpop.f32.mrf.mxu0
        %v9184 = vadd.f32 %v9015, %v9183
        %9185 = vdwg.mxu0
        %9186 = vmatpush.bf16.msra.mxu0 %v8823
        %9187 = vmatpush.bf16.msra.mxu0 %v8822
        %9188 = vmatpush.bf16.msra.mxu0 %v8821
        %9189 = vmatpush.bf16.msra.mxu0 %v8820
        %9190 = vmatpush.bf16.msra.mxu0 %v8819
        %9191 = vmatpush.bf16.msra.mxu0 %v8818
        %9192 = vmatpush.bf16.msra.mxu0 %v8817
        %9193 = vmatpush.bf16.msra.mxu0 %v8816
        %9194 = vmatmul.bf16.gmra.mxu0 %v4013
        %v9195 = vpop.f32.mrf.mxu0
        %v9196 = vadd.f32 %v9027, %v9195
        %v9197 = vpop.f32.mrf.mxu0
        %v9198 = vadd.f32 %v9029, %v9197
        %9199 = vmatmul.bf16.gmra.mxu0 %v4014
        %v9200 = vpop.f32.mrf.mxu0
        %v9201 = vadd.f32 %v9032, %v9200
        %v9202 = vpop.f32.mrf.mxu0
        %v9203 = vadd.f32 %v9034, %v9202
        %9204 = vmatmul.bf16.gmra.mxu0 %v4015
        %v9205 = vpop.f32.mrf.mxu0
        %v9206 = vadd.f32 %v9037, %v9205
        %v9207 = vpop.f32.mrf.mxu0
        %v9208 = vadd.f32 %v9039, %v9207
        %9209 = vmatmul.bf16.gmra.mxu0 %v6064
        %v9210 = vpop.f32.mrf.mxu0
        %v9211 = vadd.f32 %v9042, %v9210
        %v9212 = vpop.f32.mrf.mxu0
        %v9213 = vadd.f32 %v9044, %v9212
        %9214 = vmatmul.bf16.gmra.mxu0 %v4017
        %v9215 = vpop.f32.mrf.mxu0
        %v9216 = vadd.f32 %v9047, %v9215
        %v9217 = vpop.f32.mrf.mxu0
        %v9218 = vadd.f32 %v9049, %v9217
        %9219 = vmatmul.bf16.gmra.mxu0 %v4018
        %v9220 = vpop.f32.mrf.mxu0
        %v9221 = vadd.f32 %v9052, %v9220
        %v9222 = vpop.f32.mrf.mxu0
        %v9223 = vadd.f32 %v9054, %v9222
        %9224 = vmatmul.bf16.gmra.mxu0 %v4019
        %v9225 = vpop.f32.mrf.mxu0
        %v9226 = vadd.f32 %v9057, %v9225
        %v9227 = vpop.f32.mrf.mxu0
        %v9228 = vadd.f32 %v9059, %v9227
        %9229 = vmatmul.bf16.gmra.mxu0 %v6065
        %v9230 = vpop.f32.mrf.mxu0
        %v9231 = vadd.f32 %v9062, %v9230
        %v9232 = vpop.f32.mrf.mxu0
        %v9233 = vadd.f32 %v9064, %v9232
        %9234 = vmatmul.bf16.gmra.mxu0 %v4021
        %v9235 = vpop.f32.mrf.mxu0
        %v9236 = vadd.f32 %v9067, %v9235
        %v9237 = vpop.f32.mrf.mxu0
        %v9238 = vadd.f32 %v9069, %v9237
        %9239 = vmatmul.bf16.gmra.mxu0 %v4022
        %v9240 = vpop.f32.mrf.mxu0
        %v9241 = vadd.f32 %v9072, %v9240
        %v9242 = vpop.f32.mrf.mxu0
        %v9243 = vadd.f32 %v9074, %v9242
        %9244 = vmatmul.bf16.gmra.mxu0 %v4023
        %v9245 = vpop.f32.mrf.mxu0
        %v9246 = vadd.f32 %v9077, %v9245
        %v9247 = vpop.f32.mrf.mxu0
        %v9248 = vadd.f32 %v9079, %v9247
        %9249 = vmatmul.bf16.gmra.mxu0 %v6066
        %v9250 = vpop.f32.mrf.mxu0
        %v9251 = vadd.f32 %v9082, %v9250
        %v9252 = vpop.f32.mrf.mxu0
        %v9253 = vadd.f32 %v9084, %v9252
        %9254 = vmatmul.bf16.gmra.mxu0 %v4025
        %v9255 = vpop.f32.mrf.mxu0
        %v9256 = vadd.f32 %v9087, %v9255
        %v9257 = vpop.f32.mrf.mxu0
        %v9258 = vadd.f32 %v9089, %v9257
        %9259 = vmatmul.bf16.gmra.mxu0 %v4026
        %v9260 = vpop.f32.mrf.mxu0
        %v9261 = vadd.f32 %v9092, %v9260
        %v9262 = vpop.f32.mrf.mxu0
        %v9263 = vadd.f32 %v9094, %v9262
        %9264 = vmatmul.bf16.gmra.mxu0 %v4027
        %v9265 = vpop.f32.mrf.mxu0
        %v9266 = vadd.f32 %v9097, %v9265
        %v9267 = vpop.f32.mrf.mxu0
        %v9268 = vadd.f32 %v9099, %v9267
        %9269 = vmatmul.bf16.gmra.mxu0 %v6067
        %v9270 = vpop.f32.mrf.mxu0
        %v9271 = vadd.f32 %v9102, %v9270
        %v9272 = vpop.f32.mrf.mxu0
        %v9273 = vadd.f32 %v9104, %v9272
        %9274 = vmatmul.bf16.gmra.mxu0 %v4029
        %v9275 = vpop.f32.mrf.mxu0
        %v9276 = vadd.f32 %v9107, %v9275
        %v9277 = vpop.f32.mrf.mxu0
        %v9278 = vadd.f32 %v9109, %v9277
        %9279 = vmatmul.bf16.gmra.mxu0 %v4030
        %v9280 = vpop.f32.mrf.mxu0
        %v9281 = vadd.f32 %v9112, %v9280
        %v9282 = vpop.f32.mrf.mxu0
        %v9283 = vadd.f32 %v9114, %v9282
        %9284 = vmatmul.bf16.gmra.mxu0 %v4031
        %v9285 = vpop.f32.mrf.mxu0
        %v9286 = vadd.f32 %v9117, %v9285
        %v9287 = vpop.f32.mrf.mxu0
        %v9288 = vadd.f32 %v9119, %v9287
        %9289 = vmatmul.bf16.gmra.mxu0 %v6068
        %v9290 = vpop.f32.mrf.mxu0
        %v9291 = vadd.f32 %v9122, %v9290
        %v9292 = vpop.f32.mrf.mxu0
        %v9293 = vadd.f32 %v9124, %v9292
        %9294 = vmatmul.bf16.gmra.mxu0 %v4033
        %v9295 = vpop.f32.mrf.mxu0
        %v9296 = vadd.f32 %v9127, %v9295
        %v9297 = vpop.f32.mrf.mxu0
        %v9298 = vadd.f32 %v9129, %v9297
        %9299 = vmatmul.bf16.gmra.mxu0 %v4034
        %v9300 = vpop.f32.mrf.mxu0
        %v9301 = vadd.f32 %v9132, %v9300
        %v9302 = vpop.f32.mrf.mxu0
        %v9303 = vadd.f32 %v9134, %v9302
        %9304 = vmatmul.bf16.gmra.mxu0 %v4035
        %v9305 = vpop.f32.mrf.mxu0
        %v9306 = vadd.f32 %v9137, %v9305
        %v9307 = vpop.f32.mrf.mxu0
        %v9308 = vadd.f32 %v9139, %v9307
        %9309 = vmatmul.bf16.gmra.mxu0 %v6069
        %v9310 = vpop.f32.mrf.mxu0
        %v9311 = vadd.f32 %v9142, %v9310
        %v9312 = vpop.f32.mrf.mxu0
        %v9313 = vadd.f32 %v9144, %v9312
        %9314 = vmatmul.bf16.gmra.mxu0 %v4037
        %v9315 = vpop.f32.mrf.mxu0
        %v9316 = vadd.f32 %v9147, %v9315
        %v9317 = vpop.f32.mrf.mxu0
        %v9318 = vadd.f32 %v9149, %v9317
        %9319 = vmatmul.bf16.gmra.mxu0 %v4038
        %v9320 = vpop.f32.mrf.mxu0
        %v9321 = vadd.f32 %v9152, %v9320
        %v9322 = vpop.f32.mrf.mxu0
        %v9323 = vadd.f32 %v9154, %v9322
        %9324 = vmatmul.bf16.gmra.mxu0 %v4039
        %v9325 = vpop.f32.mrf.mxu0
        %v9326 = vadd.f32 %v9157, %v9325
        %v9327 = vpop.f32.mrf.mxu0
        %v9328 = vadd.f32 %v9159, %v9327
        %9329 = vmatmul.bf16.gmra.mxu0 %v6070
        %v9330 = vpop.f32.mrf.mxu0
        %v9331 = vadd.f32 %v9162, %v9330
        %v9332 = vpop.f32.mrf.mxu0
        %v9333 = vadd.f32 %v9164, %v9332
        %9334 = vmatmul.bf16.gmra.mxu0 %v7044
        %v9335 = vpop.f32.mrf.mxu0
        %v9336 = vadd.f32 %v9167, %v9335
        %v9337 = vpop.f32.mrf.mxu0
        %v9338 = vadd.f32 %v9169, %v9337
        %9339 = vmatmul.bf16.gmra.mxu0 %v7045
        %v9340 = vpop.f32.mrf.mxu0
        %v9341 = vadd.f32 %v9172, %v9340
        %v9342 = vpop.f32.mrf.mxu0
        %v9343 = vadd.f32 %v9174, %v9342
        %9344 = vmatmul.bf16.gmra.mxu0 %v7046
        %v9345 = vpop.f32.mrf.mxu0
        %v9346 = vadd.f32 %v9177, %v9345
        %v9347 = vpop.f32.mrf.mxu0
        %v9348 = vadd.f32 %v9179, %v9347
        %9349 = vmatmul.bf16.gmra.mxu0 %v8653
        %v9350 = vpop.f32.mrf.mxu0
        %v9351 = vadd.f32 %v9182, %v9350
        %v9352 = vpop.f32.mrf.mxu0
        %v9353 = vadd.f32 %v9184, %v9352
        %9354 = vdwg.mxu0
        %v9355 = vadd.f32 %v8562, %v9196
        %v9356 = vadd.f32 %v8563, %v9198
        %v9357 = vadd.f32 %v8564, %v9201
        %v9358 = vadd.f32 %v8565, %v9203
        %v9359 = vadd.f32 %v8566, %v9206
        %v9360 = vadd.f32 %v8567, %v9208
        %v9361 = vadd.f32 %v8568, %v9211
        %v9362 = vadd.f32 %v8569, %v9213
        %v9363 = vadd.f32 %v8570, %v9216
        %v9364 = vadd.f32 %v8571, %v9218
        %v9365 = vadd.f32 %v8572, %v9221
        %v9366 = vadd.f32 %v8573, %v9223
        %v9367 = vadd.f32 %v8574, %v9226
        %v9368 = vadd.f32 %v8575, %v9228
        %v9369 = vadd.f32 %v8576, %v9231
        %v9370 = vadd.f32 %v8577, %v9233
        %v9371 = vadd.f32 %v8578, %v9236
        %v9372 = vadd.f32 %v8579, %v9238
        %v9373 = vadd.f32 %v8580, %v9241
        %v9374 = vadd.f32 %v8581, %v9243
        %v9375 = vadd.f32 %v8582, %v9246
        %v9376 = vadd.f32 %v8583, %v9248
        %v9377 = vadd.f32 %v8584, %v9251
        %v9378 = vadd.f32 %v8585, %v9253
        %v9379 = vadd.f32 %v8586, %v9256
        %v9380 = vadd.f32 %v8587, %v9258
        %v9381 = vadd.f32 %v8588, %v9261
        %v9382 = vadd.f32 %v8589, %v9263
        %v9383 = vadd.f32 %v8590, %v9266
        %v9384 = vadd.f32 %v8591, %v9268
        %v9385 = vadd.f32 %v8592, %v9271
        %v9386 = vadd.f32 %v8593, %v9273
        %v9387 = vadd.f32 %v8594, %v9276
        %v9388 = vadd.f32 %v8595, %v9278
        %v9389 = vadd.f32 %v8596, %v9281
        %v9390 = vadd.f32 %v8597, %v9283
        %v9391 = vadd.f32 %v8598, %v9286
        %v9392 = vadd.f32 %v8599, %v9288
        %v9393 = vadd.f32 %v8600, %v9291
        %v9394 = vadd.f32 %v8601, %v9293
        %v9395 = vadd.f32 %v8602, %v9296
        %v9396 = vadd.f32 %v8603, %v9298
        %v9397 = vadd.f32 %v8604, %v9301
        %v9398 = vadd.f32 %v8605, %v9303
        %v9399 = vadd.f32 %v8606, %v9306
        %v9400 = vadd.f32 %v8607, %v9308
        %v9401 = vadd.f32 %v8608, %v9311
        %v9402 = vadd.f32 %v8609, %v9313
        %v9403 = vadd.f32 %v8610, %v9316
        %v9404 = vadd.f32 %v8611, %v9318
        %v9405 = vadd.f32 %v8612, %v9321
        %v9406 = vadd.f32 %v8613, %v9323
        %v9407 = vadd.f32 %v8614, %v9326
        %v9408 = vadd.f32 %v8615, %v9328
        %v9409 = vadd.f32 %v8616, %v9331
        %v9410 = vadd.f32 %v8617, %v9333
        %v9411 = vadd.f32 %v8618, %v9336
        %v9412 = vadd.f32 %v8619, %v9338
        %v9413 = vadd.f32 %v8620, %v9341
        %v9414 = vadd.f32 %v8621, %v9343
        %v9415 = vadd.f32 %v8622, %v9346
        %v9416 = vadd.f32 %v8623, %v9348
        %v9417 = vadd.f32 %v8624, %v9351
        %v9418 = vadd.f32 %v8625, %v9353
        %v9420 = vshrl.u32 %v2382, 16
        %v9422 = vrot.slane %v9420, 4
        %v9423 = vshll.u32 %v2382, 16
        %v9425 = vrot.slane %v9423, 5
        %v9426 = vor.u32 %v9422, %v9425
        %v9427 = vrot.slane %v9426, 4
        %v9429 = vshll.u32 %v2383, 16
        %v9431 = vrot.slane %v9429, 5
        %v9432 = vsel %vm2404, %v9427, %v9431
        %v9434 = vshrl.u32 %v2384, 16
        %v9436 = vrot.slane %v9434, 4
        %v9437 = vshll.u32 %v2384, 16
        %v9439 = vrot.slane %v9437, 5
        %v9440 = vor.u32 %v9436, %v9439
        %v9441 = vrot.slane %v9440, 4
        %v9443 = vshll.u32 %v2385, 16
        %v9445 = vrot.slane %v9443, 5
        %v9446 = vsel %vm2404, %v9441, %v9445
        %v9448 = vshrl.u32 %v2386, 16
        %v9450 = vrot.slane %v9448, 4
        %v9451 = vshll.u32 %v2386, 16
        %v9453 = vrot.slane %v9451, 5
        %v9454 = vor.u32 %v9450, %v9453
        %v9455 = vrot.slane %v9454, 4
        %v9457 = vshll.u32 %v2387, 16
        %v9459 = vrot.slane %v9457, 5
        %v9460 = vsel %vm2404, %v9455, %v9459
        %v9462 = vshrl.u32 %v2388, 16
        %v9464 = vrot.slane %v9462, 4
        %v9465 = vshll.u32 %v2388, 16
        %v9467 = vrot.slane %v9465, 5
        %v9468 = vor.u32 %v9464, %v9467
        %v9469 = vrot.slane %v9468, 4
        %v9471 = vshll.u32 %v2389, 16
        %v9473 = vrot.slane %v9471, 5
        %v9474 = vsel %vm2404, %v9469, %v9473
        %v9476 = vshrl.u32 %v2390, 16
        %v9478 = vrot.slane %v9476, 4
        %v9479 = vshll.u32 %v2390, 16
        %v9481 = vrot.slane %v9479, 5
        %v9482 = vor.u32 %v9478, %v9481
        %v9483 = vrot.slane %v9482, 4
        %v9485 = vshll.u32 %v2391, 16
        %v9487 = vrot.slane %v9485, 5
        %v9488 = vsel %vm2404, %v9483, %v9487
        %v9490 = vshrl.u32 %v2392, 16
        %v9492 = vrot.slane %v9490, 4
        %v9493 = vshll.u32 %v2392, 16
        %v9495 = vrot.slane %v9493, 5
        %v9496 = vor.u32 %v9492, %v9495
        %v9497 = vrot.slane %v9496, 4
        %v9499 = vshll.u32 %v2393, 16
        %v9501 = vrot.slane %v9499, 5
        %v9502 = vsel %vm2404, %v9497, %v9501
        %v9504 = vshrl.u32 %v2394, 16
        %v9506 = vrot.slane %v9504, 4
        %v9507 = vshll.u32 %v2394, 16
        %v9509 = vrot.slane %v9507, 5
        %v9510 = vor.u32 %v9506, %v9509
        %v9511 = vrot.slane %v9510, 4
        %v9513 = vshll.u32 %v2395, 16
        %v9515 = vrot.slane %v9513, 5
        %v9516 = vsel %vm2404, %v9511, %v9515
        %v9518 = vshrl.u32 %v2396, 16
        %v9520 = vrot.slane %v9518, 4
        %v9521 = vshll.u32 %v2396, 16
        %v9523 = vrot.slane %v9521, 5
        %v9524 = vor.u32 %v9520, %v9523
        %v9525 = vrot.slane %v9524, 4
        %v9527 = vshll.u32 %v2397, 16
        %v9529 = vrot.slane %v9527, 5
        %v9530 = vsel %vm2404, %v9525, %v9529
        %v9547 = vrot.slane %v2382, 5
        %v9548 = vrot.slane %v9547, 4
        %v9549 = vrot.slane %v2383, 5
        %v9550 = vsel %vm3431, %v9548, %v9549
        %v9551 = vrot.slane %v2384, 5
        %v9552 = vrot.slane %v9551, 4
        %v9553 = vrot.slane %v2385, 5
        %v9554 = vsel %vm3431, %v9552, %v9553
        %v9555 = vrot.slane %v2386, 5
        %v9556 = vrot.slane %v9555, 4
        %v9557 = vrot.slane %v2387, 5
        %v9558 = vsel %vm3431, %v9556, %v9557
        %v9559 = vrot.slane %v2388, 5
        %v9560 = vrot.slane %v9559, 4
        %v9561 = vrot.slane %v2389, 5
        %v9562 = vsel %vm3431, %v9560, %v9561
        %v9563 = vrot.slane %v2390, 5
        %v9564 = vrot.slane %v9563, 4
        %v9565 = vrot.slane %v2391, 5
        %v9566 = vsel %vm3431, %v9564, %v9565
        %v9567 = vrot.slane %v2392, 5
        %v9568 = vrot.slane %v9567, 4
        %v9569 = vrot.slane %v2393, 5
        %v9570 = vsel %vm3431, %v9568, %v9569
        %v9571 = vrot.slane %v2394, 5
        %v9572 = vrot.slane %v9571, 4
        %v9573 = vrot.slane %v2395, 5
        %v9574 = vsel %vm3431, %v9572, %v9573
        %v9575 = vrot.slane %v2396, 5
        %v9576 = vrot.slane %v9575, 4
        %v9577 = vrot.slane %v2397, 5
        %v9578 = vsel %vm3431, %v9576, %v9577
        %v9579 = vunpack.c.l.b16 %v2382
        %v9580 = vunpack.c.l.b16 %v2384
        %v9581 = vunpack.c.l.b16 %v2386
        %v9582 = vunpack.c.l.b16 %v2388
        %v9583 = vunpack.c.l.b16 %v2390
        %v9584 = vunpack.c.l.b16 %v2392
        %v9585 = vunpack.c.l.b16 %v2394
        %v9586 = vunpack.c.l.b16 %v2396
        %v9587 = vpack.c.b16 %v9580, %v9579
        %v9588 = vpack.c.b16 %v9582, %v9581
        %v9589 = vpack.c.b16 %v9584, %v9583
        %v9590 = vpack.c.b16 %v9586, %v9585
        %v9595 = vunpack.c.l.b16 %v9432
        %v9596 = vunpack.c.l.b16 %v9446
        %v9597 = vunpack.c.l.b16 %v9460
        %v9598 = vunpack.c.l.b16 %v9474
        %v9599 = vunpack.c.l.b16 %v9488
        %v9600 = vunpack.c.l.b16 %v9502
        %v9601 = vunpack.c.l.b16 %v9516
        %v9602 = vunpack.c.l.b16 %v9530
        %v9603 = vpack.c.b16 %v9596, %v9595
        %v9604 = vpack.c.b16 %v9598, %v9597
        %v9605 = vpack.c.b16 %v9600, %v9599
        %v9606 = vpack.c.b16 %v9602, %v9601
        %v9611 = vunpack.c.l.b16 %v9550
        %v9612 = vunpack.c.l.b16 %v9554
        %v9613 = vunpack.c.l.b16 %v9558
        %v9614 = vunpack.c.l.b16 %v9562
        %v9615 = vunpack.c.l.b16 %v9566
        %v9616 = vunpack.c.l.b16 %v9570
        %v9617 = vunpack.c.l.b16 %v9574
        %v9618 = vunpack.c.l.b16 %v9578
        %v9619 = vpack.c.b16 %v9612, %v9611
        %v9620 = vpack.c.b16 %v9614, %v9613
        %v9621 = vpack.c.b16 %v9616, %v9615
        %v9622 = vpack.c.b16 %v9618, %v9617
        %s9627 = scalar_lea.vmem [#allocation8], 1152
        %v9628 = vld [vmem:[%s9627] sm:$0xf]
        %v9629 = vld [vmem:[%s9627 + $0x4] sm:$0xf]
        %v9630 = vld [vmem:[%s9627 + $0x8] sm:$0xf]
        %v9631 = vld [vmem:[%s9627 + $0xc] sm:$0xf]
        %v9632 = vld [vmem:[%s9627 + $0x10] sm:$0xf]
        %v9633 = vld [vmem:[%s9627 + $0x14] sm:$0xf]
        %v9634 = vld [vmem:[%s9627 + $0x18] sm:$0xf]
        %v9635 = vld [vmem:[%s9627 + $0x1c] sm:$0xf]
        %v9636 = vld [vmem:[%s9627 + $0x20] sm:$0xf]
        %v9637 = vld [vmem:[%s9627 + $0x24] sm:$0xf]
        %v9638 = vld [vmem:[%s9627 + $0x28] sm:$0xf]
        %v9639 = vld [vmem:[%s9627 + $0x2c] sm:$0xf]
        %v9640 = vld [vmem:[%s9627 + $0x30] sm:$0xf]
        %v9641 = vld [vmem:[%s9627 + $0x34] sm:$0xf]
        %v9642 = vld [vmem:[%s9627 + $0x38] sm:$0xf]
        %v9643 = vld [vmem:[%s9627 + $0x3c] sm:$0xf]
        %v9644 = vld [vmem:[%s9627 + $0x40] sm:$0xf]
        %v9645 = vld [vmem:[%s9627 + $0x44] sm:$0xf]
        %v9646 = vld [vmem:[%s9627 + $0x48] sm:$0xf]
        %v9647 = vld [vmem:[%s9627 + $0x4c] sm:$0xf]
        %v9648 = vld [vmem:[%s9627 + $0x50] sm:$0xf]
        %v9649 = vld [vmem:[%s9627 + $0x54] sm:$0xf]
        %v9650 = vld [vmem:[%s9627 + $0x58] sm:$0xf]
        %v9651 = vld [vmem:[%s9627 + $0x5c] sm:$0xf]
        %v9652 = vld [vmem:[%s9627 + $0x60] sm:$0xf]
        %v9653 = vld [vmem:[%s9627 + $0x64] sm:$0xf]
        %v9654 = vld [vmem:[%s9627 + $0x68] sm:$0xf]
        %v9655 = vld [vmem:[%s9627 + $0x6c] sm:$0xf]
        %v9656 = vld [vmem:[%s9627 + $0x70] sm:$0xf]
        %v9657 = vld [vmem:[%s9627 + $0x74] sm:$0xf]
        %v9658 = vld [vmem:[%s9627 + $0x78] sm:$0xf]
        %v9659 = vld [vmem:[%s9627 + $0x7c] sm:$0xf]
        %v9660 = vld [vmem:[%s9627 + $0x80] sm:$0xf]
        %v9661 = vld [vmem:[%s9627 + $0x84] sm:$0xf]
        %v9662 = vld [vmem:[%s9627 + $0x88] sm:$0xf]
        %v9663 = vld [vmem:[%s9627 + $0x8c] sm:$0xf]
        %v9664 = vld [vmem:[%s9627 + $0x90] sm:$0xf]
        %v9665 = vld [vmem:[%s9627 + $0x94] sm:$0xf]
        %v9666 = vld [vmem:[%s9627 + $0x98] sm:$0xf]
        %v9667 = vld [vmem:[%s9627 + $0x9c] sm:$0xf]
        %v9668 = vld [vmem:[%s9627 + $0xa0] sm:$0xf]
        %v9669 = vld [vmem:[%s9627 + $0xa4] sm:$0xf]
        %v9670 = vld [vmem:[%s9627 + $0xa8] sm:$0xf]
        %v9671 = vld [vmem:[%s9627 + $0xac] sm:$0xf]
        %v9672 = vld [vmem:[%s9627 + $0xb0] sm:$0xf]
        %v9673 = vld [vmem:[%s9627 + $0xb4] sm:$0xf]
        %v9674 = vld [vmem:[%s9627 + $0xb8] sm:$0xf]
        %v9675 = vld [vmem:[%s9627 + $0xbc] sm:$0xf]
        %v9724 = vunpack.c.l.b16 %v9628
        %v9725 = vunpack.c.l.b16 %v9629
        %v9726 = vunpack.c.l.b16 %v9630
        %v9727 = vunpack.c.l.b16 %v9631
        %v9728 = vunpack.c.l.b16 %v9632
        %v9729 = vunpack.c.l.b16 %v9633
        %v9730 = vunpack.c.l.b16 %v9634
        %v9731 = vunpack.c.l.b16 %v9635
        %v9732 = vunpack.c.l.b16 %v9636
        %v9733 = vunpack.c.l.b16 %v9637
        %v9734 = vunpack.c.l.b16 %v9638
        %v9735 = vunpack.c.l.b16 %v9639
        %v9736 = vunpack.c.l.b16 %v9640
        %v9737 = vunpack.c.l.b16 %v9641
        %v9738 = vunpack.c.l.b16 %v9642
        %v9739 = vunpack.c.l.b16 %v9643
        %v9740 = vunpack.c.l.b16 %v9644
        %v9741 = vunpack.c.l.b16 %v9645
        %v9742 = vunpack.c.l.b16 %v9646
        %v9743 = vunpack.c.l.b16 %v9647
        %v9744 = vunpack.c.l.b16 %v9648
        %v9745 = vunpack.c.l.b16 %v9649
        %v9746 = vunpack.c.l.b16 %v9650
        %v9747 = vunpack.c.l.b16 %v9651
        %v9748 = vunpack.c.l.b16 %v9652
        %v9749 = vunpack.c.l.b16 %v9653
        %v9750 = vunpack.c.l.b16 %v9654
        %v9751 = vunpack.c.l.b16 %v9655
        %v9752 = vunpack.c.l.b16 %v9656
        %v9753 = vunpack.c.l.b16 %v9657
        %v9754 = vunpack.c.l.b16 %v9658
        %v9755 = vunpack.c.l.b16 %v9659
        %v9756 = vunpack.c.l.b16 %v9660
        %v9757 = vunpack.c.l.b16 %v9661
        %v9758 = vunpack.c.l.b16 %v9662
        %v9759 = vunpack.c.l.b16 %v9663
        %v9760 = vunpack.c.l.b16 %v9664
        %v9761 = vunpack.c.l.b16 %v9665
        %v9762 = vunpack.c.l.b16 %v9666
        %v9763 = vunpack.c.l.b16 %v9667
        %v9764 = vunpack.c.l.b16 %v9668
        %v9765 = vunpack.c.l.b16 %v9669
        %v9766 = vunpack.c.l.b16 %v9670
        %v9767 = vunpack.c.l.b16 %v9671
        %v9768 = vunpack.c.l.b16 %v9672
        %v9769 = vunpack.c.l.b16 %v9673
        %v9770 = vunpack.c.l.b16 %v9674
        %v9771 = vunpack.c.l.b16 %v9675
        %v9772 = vpack.c.b16 %v9725, %v9724
        %v9773 = vpack.c.b16 %v9727, %v9726
        %v9774 = vpack.c.b16 %v9729, %v9728
        %v9775 = vpack.c.b16 %v9731, %v9730
        %v9776 = vpack.c.b16 %v9733, %v9732
        %v9777 = vpack.c.b16 %v9735, %v9734
        %v9778 = vpack.c.b16 %v9737, %v9736
        %v9779 = vpack.c.b16 %v9739, %v9738
        %v9780 = vpack.c.b16 %v9741, %v9740
        %v9781 = vpack.c.b16 %v9743, %v9742
        %v9782 = vpack.c.b16 %v9745, %v9744
        %v9783 = vpack.c.b16 %v9747, %v9746
        %v9784 = vpack.c.b16 %v9749, %v9748
        %v9785 = vpack.c.b16 %v9751, %v9750
        %v9786 = vpack.c.b16 %v9753, %v9752
        %v9787 = vpack.c.b16 %v9755, %v9754
        %v9788 = vpack.c.b16 %v9757, %v9756
        %v9789 = vpack.c.b16 %v9759, %v9758
        %v9790 = vpack.c.b16 %v9761, %v9760
        %v9791 = vpack.c.b16 %v9763, %v9762
        %v9792 = vpack.c.b16 %v9765, %v9764
        %v9793 = vpack.c.b16 %v9767, %v9766
        %v9794 = vpack.c.b16 %v9769, %v9768
        %v9795 = vpack.c.b16 %v9771, %v9770
        %9820 = vmatpush.bf16.msra.mxu0 %v9779
        %9821 = vmatpush.bf16.msra.mxu0 %v9778
        %9822 = vmatpush.bf16.msra.mxu0 %v9777
        %9823 = vmatpush.bf16.msra.mxu0 %v9776
        %9824 = vmatpush.bf16.msra.mxu0 %v9775
        %9825 = vmatpush.bf16.msra.mxu0 %v9774
        %9826 = vmatpush.bf16.msra.mxu0 %v9773
        %9827 = vmatpush.bf16.msra.mxu0 %v9772
        %9828 = vmatmul.bf16.gmra.mxu0 %v3760
        %v9829 = vpop.f32.mrf.mxu0
        %v9830 = vadd.f32 0.0, %v9829
        %v9831 = vpop.f32.mrf.mxu0
        %v9832 = vadd.f32 0.0, %v9831
        %9833 = vmatmul.bf16.gmra.mxu0 %v3761
        %v9834 = vpop.f32.mrf.mxu0
        %v9835 = vadd.f32 0.0, %v9834
        %v9836 = vpop.f32.mrf.mxu0
        %v9837 = vadd.f32 0.0, %v9836
        %9838 = vmatmul.bf16.gmra.mxu0 %v3762
        %v9839 = vpop.f32.mrf.mxu0
        %v9840 = vadd.f32 0.0, %v9839
        %v9841 = vpop.f32.mrf.mxu0
        %v9842 = vadd.f32 0.0, %v9841
        %9843 = vmatmul.bf16.gmra.mxu0 %v3763
        %v9844 = vpop.f32.mrf.mxu0
        %v9845 = vadd.f32 0.0, %v9844
        %v9846 = vpop.f32.mrf.mxu0
        %v9847 = vadd.f32 0.0, %v9846
        %9848 = vmatmul.bf16.gmra.mxu0 %v3764
        %v9849 = vpop.f32.mrf.mxu0
        %v9850 = vadd.f32 0.0, %v9849
        %v9851 = vpop.f32.mrf.mxu0
        %v9852 = vadd.f32 0.0, %v9851
        %9853 = vmatmul.bf16.gmra.mxu0 %v3765
        %v9854 = vpop.f32.mrf.mxu0
        %v9855 = vadd.f32 0.0, %v9854
        %v9856 = vpop.f32.mrf.mxu0
        %v9857 = vadd.f32 0.0, %v9856
        %9858 = vmatmul.bf16.gmra.mxu0 %v3766
        %v9859 = vpop.f32.mrf.mxu0
        %v9860 = vadd.f32 0.0, %v9859
        %v9861 = vpop.f32.mrf.mxu0
        %v9862 = vadd.f32 0.0, %v9861
        %9863 = vmatmul.bf16.gmra.mxu0 %v3767
        %v9864 = vpop.f32.mrf.mxu0
        %v9865 = vadd.f32 0.0, %v9864
        %v9866 = vpop.f32.mrf.mxu0
        %v9867 = vadd.f32 0.0, %v9866
        %9868 = vmatmul.bf16.gmra.mxu0 %v3768
        %v9869 = vpop.f32.mrf.mxu0
        %v9870 = vadd.f32 0.0, %v9869
        %v9871 = vpop.f32.mrf.mxu0
        %v9872 = vadd.f32 0.0, %v9871
        %9873 = vmatmul.bf16.gmra.mxu0 %v3769
        %v9874 = vpop.f32.mrf.mxu0
        %v9875 = vadd.f32 0.0, %v9874
        %v9876 = vpop.f32.mrf.mxu0
        %v9877 = vadd.f32 0.0, %v9876
        %9878 = vmatmul.bf16.gmra.mxu0 %v3770
        %v9879 = vpop.f32.mrf.mxu0
        %v9880 = vadd.f32 0.0, %v9879
        %v9881 = vpop.f32.mrf.mxu0
        %v9882 = vadd.f32 0.0, %v9881
        %9883 = vmatmul.bf16.gmra.mxu0 %v3771
        %v9884 = vpop.f32.mrf.mxu0
        %v9885 = vadd.f32 0.0, %v9884
        %v9886 = vpop.f32.mrf.mxu0
        %v9887 = vadd.f32 0.0, %v9886
        %9888 = vmatmul.bf16.gmra.mxu0 %v3772
        %v9889 = vpop.f32.mrf.mxu0
        %v9890 = vadd.f32 0.0, %v9889
        %v9891 = vpop.f32.mrf.mxu0
        %v9892 = vadd.f32 0.0, %v9891
        %9893 = vmatmul.bf16.gmra.mxu0 %v3773
        %v9894 = vpop.f32.mrf.mxu0
        %v9895 = vadd.f32 0.0, %v9894
        %v9896 = vpop.f32.mrf.mxu0
        %v9897 = vadd.f32 0.0, %v9896
        %9898 = vmatmul.bf16.gmra.mxu0 %v3774
        %v9899 = vpop.f32.mrf.mxu0
        %v9900 = vadd.f32 0.0, %v9899
        %v9901 = vpop.f32.mrf.mxu0
        %v9902 = vadd.f32 0.0, %v9901
        %9903 = vmatmul.bf16.gmra.mxu0 %v3775
        %v9904 = vpop.f32.mrf.mxu0
        %v9905 = vadd.f32 0.0, %v9904
        %v9906 = vpop.f32.mrf.mxu0
        %v9907 = vadd.f32 0.0, %v9906
        %9908 = vmatmul.bf16.gmra.mxu0 %v3776
        %v9909 = vpop.f32.mrf.mxu0
        %v9910 = vadd.f32 0.0, %v9909
        %v9911 = vpop.f32.mrf.mxu0
        %v9912 = vadd.f32 0.0, %v9911
        %9913 = vmatmul.bf16.gmra.mxu0 %v3777
        %v9914 = vpop.f32.mrf.mxu0
        %v9915 = vadd.f32 0.0, %v9914
        %v9916 = vpop.f32.mrf.mxu0
        %v9917 = vadd.f32 0.0, %v9916
        %9918 = vmatmul.bf16.gmra.mxu0 %v3778
        %v9919 = vpop.f32.mrf.mxu0
        %v9920 = vadd.f32 0.0, %v9919
        %v9921 = vpop.f32.mrf.mxu0
        %v9922 = vadd.f32 0.0, %v9921
        %9923 = vmatmul.bf16.gmra.mxu0 %v3779
        %v9924 = vpop.f32.mrf.mxu0
        %v9925 = vadd.f32 0.0, %v9924
        %v9926 = vpop.f32.mrf.mxu0
        %v9927 = vadd.f32 0.0, %v9926
        %9928 = vmatmul.bf16.gmra.mxu0 %v3780
        %v9929 = vpop.f32.mrf.mxu0
        %v9930 = vadd.f32 0.0, %v9929
        %v9931 = vpop.f32.mrf.mxu0
        %v9932 = vadd.f32 0.0, %v9931
        %9933 = vmatmul.bf16.gmra.mxu0 %v3781
        %v9934 = vpop.f32.mrf.mxu0
        %v9935 = vadd.f32 0.0, %v9934
        %v9936 = vpop.f32.mrf.mxu0
        %v9937 = vadd.f32 0.0, %v9936
        %9938 = vmatmul.bf16.gmra.mxu0 %v3782
        %v9939 = vpop.f32.mrf.mxu0
        %v9940 = vadd.f32 0.0, %v9939
        %v9941 = vpop.f32.mrf.mxu0
        %v9942 = vadd.f32 0.0, %v9941
        %9943 = vmatmul.bf16.gmra.mxu0 %v3783
        %v9944 = vpop.f32.mrf.mxu0
        %v9945 = vadd.f32 0.0, %v9944
        %v9946 = vpop.f32.mrf.mxu0
        %v9947 = vadd.f32 0.0, %v9946
        %9948 = vmatmul.bf16.gmra.mxu0 %v7011
        %v9949 = vpop.f32.mrf.mxu0
        %v9950 = vadd.f32 0.0, %v9949
        %v9951 = vpop.f32.mrf.mxu0
        %v9952 = vadd.f32 0.0, %v9951
        %9953 = vmatmul.bf16.gmra.mxu0 %v7012
        %v9954 = vpop.f32.mrf.mxu0
        %v9955 = vadd.f32 0.0, %v9954
        %v9956 = vpop.f32.mrf.mxu0
        %v9957 = vadd.f32 0.0, %v9956
        %9958 = vmatmul.bf16.gmra.mxu0 %v7013
        %v9959 = vpop.f32.mrf.mxu0
        %v9960 = vadd.f32 0.0, %v9959
        %v9961 = vpop.f32.mrf.mxu0
        %v9962 = vadd.f32 0.0, %v9961
        %9963 = vmatmul.bf16.gmra.mxu0 %v7014
        %v9964 = vpop.f32.mrf.mxu0
        %v9965 = vadd.f32 0.0, %v9964
        %v9966 = vpop.f32.mrf.mxu0
        %v9967 = vadd.f32 0.0, %v9966
        %9968 = vmatmul.bf16.gmra.mxu0 %v9587
        %v9969 = vpop.f32.mrf.mxu0
        %v9970 = vadd.f32 0.0, %v9969
        %v9971 = vpop.f32.mrf.mxu0
        %v9972 = vadd.f32 0.0, %v9971
        %9973 = vmatmul.bf16.gmra.mxu0 %v9588
        %v9974 = vpop.f32.mrf.mxu0
        %v9975 = vadd.f32 0.0, %v9974
        %v9976 = vpop.f32.mrf.mxu0
        %v9977 = vadd.f32 0.0, %v9976
        %9978 = vmatmul.bf16.gmra.mxu0 %v9589
        %v9979 = vpop.f32.mrf.mxu0
        %v9980 = vadd.f32 0.0, %v9979
        %v9981 = vpop.f32.mrf.mxu0
        %v9982 = vadd.f32 0.0, %v9981
        %9983 = vmatmul.bf16.gmra.mxu0 %v9590
        %v9984 = vpop.f32.mrf.mxu0
        %v9985 = vadd.f32 0.0, %v9984
        %v9986 = vpop.f32.mrf.mxu0
        %v9987 = vadd.f32 0.0, %v9986
        %9988 = vdwg.mxu0
        %9989 = vmatpush.bf16.msra.mxu0 %v9787
        %9990 = vmatpush.bf16.msra.mxu0 %v9786
        %9991 = vmatpush.bf16.msra.mxu0 %v9785
        %9992 = vmatpush.bf16.msra.mxu0 %v9784
        %9993 = vmatpush.bf16.msra.mxu0 %v9783
        %9994 = vmatpush.bf16.msra.mxu0 %v9782
        %9995 = vmatpush.bf16.msra.mxu0 %v9781
        %9996 = vmatpush.bf16.msra.mxu0 %v9780
        %9997 = vmatmul.bf16.gmra.mxu0 %v3888
        %v9998 = vpop.f32.mrf.mxu0
        %v9999 = vadd.f32 %v9830, %v9998
        %v10000 = vpop.f32.mrf.mxu0
        %v10001 = vadd.f32 %v9832, %v10000
        %10002 = vmatmul.bf16.gmra.mxu0 %v3889
        %v10003 = vpop.f32.mrf.mxu0
        %v10004 = vadd.f32 %v9835, %v10003
        %v10005 = vpop.f32.mrf.mxu0
        %v10006 = vadd.f32 %v9837, %v10005
        %10007 = vmatmul.bf16.gmra.mxu0 %v3890
        %v10008 = vpop.f32.mrf.mxu0
        %v10009 = vadd.f32 %v9840, %v10008
        %v10010 = vpop.f32.mrf.mxu0
        %v10011 = vadd.f32 %v9842, %v10010
        %10012 = vmatmul.bf16.gmra.mxu0 %v3891
        %v10013 = vpop.f32.mrf.mxu0
        %v10014 = vadd.f32 %v9845, %v10013
        %v10015 = vpop.f32.mrf.mxu0
        %v10016 = vadd.f32 %v9847, %v10015
        %10017 = vmatmul.bf16.gmra.mxu0 %v3892
        %v10018 = vpop.f32.mrf.mxu0
        %v10019 = vadd.f32 %v9850, %v10018
        %v10020 = vpop.f32.mrf.mxu0
        %v10021 = vadd.f32 %v9852, %v10020
        %10022 = vmatmul.bf16.gmra.mxu0 %v3893
        %v10023 = vpop.f32.mrf.mxu0
        %v10024 = vadd.f32 %v9855, %v10023
        %v10025 = vpop.f32.mrf.mxu0
        %v10026 = vadd.f32 %v9857, %v10025
        %10027 = vmatmul.bf16.gmra.mxu0 %v3894
        %v10028 = vpop.f32.mrf.mxu0
        %v10029 = vadd.f32 %v9860, %v10028
        %v10030 = vpop.f32.mrf.mxu0
        %v10031 = vadd.f32 %v9862, %v10030
        %10032 = vmatmul.bf16.gmra.mxu0 %v3895
        %v10033 = vpop.f32.mrf.mxu0
        %v10034 = vadd.f32 %v9865, %v10033
        %v10035 = vpop.f32.mrf.mxu0
        %v10036 = vadd.f32 %v9867, %v10035
        %10037 = vmatmul.bf16.gmra.mxu0 %v3896
        %v10038 = vpop.f32.mrf.mxu0
        %v10039 = vadd.f32 %v9870, %v10038
        %v10040 = vpop.f32.mrf.mxu0
        %v10041 = vadd.f32 %v9872, %v10040
        %10042 = vmatmul.bf16.gmra.mxu0 %v3897
        %v10043 = vpop.f32.mrf.mxu0
        %v10044 = vadd.f32 %v9875, %v10043
        %v10045 = vpop.f32.mrf.mxu0
        %v10046 = vadd.f32 %v9877, %v10045
        %10047 = vmatmul.bf16.gmra.mxu0 %v3898
        %v10048 = vpop.f32.mrf.mxu0
        %v10049 = vadd.f32 %v9880, %v10048
        %v10050 = vpop.f32.mrf.mxu0
        %v10051 = vadd.f32 %v9882, %v10050
        %10052 = vmatmul.bf16.gmra.mxu0 %v3899
        %v10053 = vpop.f32.mrf.mxu0
        %v10054 = vadd.f32 %v9885, %v10053
        %v10055 = vpop.f32.mrf.mxu0
        %v10056 = vadd.f32 %v9887, %v10055
        %10057 = vmatmul.bf16.gmra.mxu0 %v3900
        %v10058 = vpop.f32.mrf.mxu0
        %v10059 = vadd.f32 %v9890, %v10058
        %v10060 = vpop.f32.mrf.mxu0
        %v10061 = vadd.f32 %v9892, %v10060
        %10062 = vmatmul.bf16.gmra.mxu0 %v3901
        %v10063 = vpop.f32.mrf.mxu0
        %v10064 = vadd.f32 %v9895, %v10063
        %v10065 = vpop.f32.mrf.mxu0
        %v10066 = vadd.f32 %v9897, %v10065
        %10067 = vmatmul.bf16.gmra.mxu0 %v3902
        %v10068 = vpop.f32.mrf.mxu0
        %v10069 = vadd.f32 %v9900, %v10068
        %v10070 = vpop.f32.mrf.mxu0
        %v10071 = vadd.f32 %v9902, %v10070
        %10072 = vmatmul.bf16.gmra.mxu0 %v3903
        %v10073 = vpop.f32.mrf.mxu0
        %v10074 = vadd.f32 %v9905, %v10073
        %v10075 = vpop.f32.mrf.mxu0
        %v10076 = vadd.f32 %v9907, %v10075
        %10077 = vmatmul.bf16.gmra.mxu0 %v3904
        %v10078 = vpop.f32.mrf.mxu0
        %v10079 = vadd.f32 %v9910, %v10078
        %v10080 = vpop.f32.mrf.mxu0
        %v10081 = vadd.f32 %v9912, %v10080
        %10082 = vmatmul.bf16.gmra.mxu0 %v3905
        %v10083 = vpop.f32.mrf.mxu0
        %v10084 = vadd.f32 %v9915, %v10083
        %v10085 = vpop.f32.mrf.mxu0
        %v10086 = vadd.f32 %v9917, %v10085
        %10087 = vmatmul.bf16.gmra.mxu0 %v3906
        %v10088 = vpop.f32.mrf.mxu0
        %v10089 = vadd.f32 %v9920, %v10088
        %v10090 = vpop.f32.mrf.mxu0
        %v10091 = vadd.f32 %v9922, %v10090
        %10092 = vmatmul.bf16.gmra.mxu0 %v3907
        %v10093 = vpop.f32.mrf.mxu0
        %v10094 = vadd.f32 %v9925, %v10093
        %v10095 = vpop.f32.mrf.mxu0
        %v10096 = vadd.f32 %v9927, %v10095
        %10097 = vmatmul.bf16.gmra.mxu0 %v3908
        %v10098 = vpop.f32.mrf.mxu0
        %v10099 = vadd.f32 %v9930, %v10098
        %v10100 = vpop.f32.mrf.mxu0
        %v10101 = vadd.f32 %v9932, %v10100
        %10102 = vmatmul.bf16.gmra.mxu0 %v3909
        %v10103 = vpop.f32.mrf.mxu0
        %v10104 = vadd.f32 %v9935, %v10103
        %v10105 = vpop.f32.mrf.mxu0
        %v10106 = vadd.f32 %v9937, %v10105
        %10107 = vmatmul.bf16.gmra.mxu0 %v3910
        %v10108 = vpop.f32.mrf.mxu0
        %v10109 = vadd.f32 %v9940, %v10108
        %v10110 = vpop.f32.mrf.mxu0
        %v10111 = vadd.f32 %v9942, %v10110
        %10112 = vmatmul.bf16.gmra.mxu0 %v3911
        %v10113 = vpop.f32.mrf.mxu0
        %v10114 = vadd.f32 %v9945, %v10113
        %v10115 = vpop.f32.mrf.mxu0
        %v10116 = vadd.f32 %v9947, %v10115
        %10117 = vmatmul.bf16.gmra.mxu0 %v7027
        %v10118 = vpop.f32.mrf.mxu0
        %v10119 = vadd.f32 %v9950, %v10118
        %v10120 = vpop.f32.mrf.mxu0
        %v10121 = vadd.f32 %v9952, %v10120
        %10122 = vmatmul.bf16.gmra.mxu0 %v7028
        %v10123 = vpop.f32.mrf.mxu0
        %v10124 = vadd.f32 %v9955, %v10123
        %v10125 = vpop.f32.mrf.mxu0
        %v10126 = vadd.f32 %v9957, %v10125
        %10127 = vmatmul.bf16.gmra.mxu0 %v7029
        %v10128 = vpop.f32.mrf.mxu0
        %v10129 = vadd.f32 %v9960, %v10128
        %v10130 = vpop.f32.mrf.mxu0
        %v10131 = vadd.f32 %v9962, %v10130
        %10132 = vmatmul.bf16.gmra.mxu0 %v7030
        %v10133 = vpop.f32.mrf.mxu0
        %v10134 = vadd.f32 %v9965, %v10133
        %v10135 = vpop.f32.mrf.mxu0
        %v10136 = vadd.f32 %v9967, %v10135
        %10137 = vmatmul.bf16.gmra.mxu0 %v9603
        %v10138 = vpop.f32.mrf.mxu0
        %v10139 = vadd.f32 %v9970, %v10138
        %v10140 = vpop.f32.mrf.mxu0
        %v10141 = vadd.f32 %v9972, %v10140
        %10142 = vmatmul.bf16.gmra.mxu0 %v9604
        %v10143 = vpop.f32.mrf.mxu0
        %v10144 = vadd.f32 %v9975, %v10143
        %v10145 = vpop.f32.mrf.mxu0
        %v10146 = vadd.f32 %v9977, %v10145
        %10147 = vmatmul.bf16.gmra.mxu0 %v9605
        %v10148 = vpop.f32.mrf.mxu0
        %v10149 = vadd.f32 %v9980, %v10148
        %v10150 = vpop.f32.mrf.mxu0
        %v10151 = vadd.f32 %v9982, %v10150
        %10152 = vmatmul.bf16.gmra.mxu0 %v9606
        %v10153 = vpop.f32.mrf.mxu0
        %v10154 = vadd.f32 %v9985, %v10153
        %v10155 = vpop.f32.mrf.mxu0
        %v10156 = vadd.f32 %v9987, %v10155
        %10157 = vdwg.mxu0
        %10158 = vmatpush.bf16.msra.mxu0 %v9795
        %10159 = vmatpush.bf16.msra.mxu0 %v9794
        %10160 = vmatpush.bf16.msra.mxu0 %v9793
        %10161 = vmatpush.bf16.msra.mxu0 %v9792
        %10162 = vmatpush.bf16.msra.mxu0 %v9791
        %10163 = vmatpush.bf16.msra.mxu0 %v9790
        %10164 = vmatpush.bf16.msra.mxu0 %v9789
        %10165 = vmatpush.bf16.msra.mxu0 %v9788
        %10166 = vmatmul.bf16.gmra.mxu0 %v4016
        %v10167 = vpop.f32.mrf.mxu0
        %v10168 = vadd.f32 %v9999, %v10167
        %v10169 = vpop.f32.mrf.mxu0
        %v10170 = vadd.f32 %v10001, %v10169
        %10171 = vmatmul.bf16.gmra.mxu0 %v4017
        %v10172 = vpop.f32.mrf.mxu0
        %v10173 = vadd.f32 %v10004, %v10172
        %v10174 = vpop.f32.mrf.mxu0
        %v10175 = vadd.f32 %v10006, %v10174
        %10176 = vmatmul.bf16.gmra.mxu0 %v4018
        %v10177 = vpop.f32.mrf.mxu0
        %v10178 = vadd.f32 %v10009, %v10177
        %v10179 = vpop.f32.mrf.mxu0
        %v10180 = vadd.f32 %v10011, %v10179
        %10181 = vmatmul.bf16.gmra.mxu0 %v4019
        %v10182 = vpop.f32.mrf.mxu0
        %v10183 = vadd.f32 %v10014, %v10182
        %v10184 = vpop.f32.mrf.mxu0
        %v10185 = vadd.f32 %v10016, %v10184
        %10186 = vmatmul.bf16.gmra.mxu0 %v4020
        %v10187 = vpop.f32.mrf.mxu0
        %v10188 = vadd.f32 %v10019, %v10187
        %v10189 = vpop.f32.mrf.mxu0
        %v10190 = vadd.f32 %v10021, %v10189
        %10191 = vmatmul.bf16.gmra.mxu0 %v4021
        %v10192 = vpop.f32.mrf.mxu0
        %v10193 = vadd.f32 %v10024, %v10192
        %v10194 = vpop.f32.mrf.mxu0
        %v10195 = vadd.f32 %v10026, %v10194
        %10196 = vmatmul.bf16.gmra.mxu0 %v4022
        %v10197 = vpop.f32.mrf.mxu0
        %v10198 = vadd.f32 %v10029, %v10197
        %v10199 = vpop.f32.mrf.mxu0
        %v10200 = vadd.f32 %v10031, %v10199
        %10201 = vmatmul.bf16.gmra.mxu0 %v4023
        %v10202 = vpop.f32.mrf.mxu0
        %v10203 = vadd.f32 %v10034, %v10202
        %v10204 = vpop.f32.mrf.mxu0
        %v10205 = vadd.f32 %v10036, %v10204
        %10206 = vmatmul.bf16.gmra.mxu0 %v4024
        %v10207 = vpop.f32.mrf.mxu0
        %v10208 = vadd.f32 %v10039, %v10207
        %v10209 = vpop.f32.mrf.mxu0
        %v10210 = vadd.f32 %v10041, %v10209
        %10211 = vmatmul.bf16.gmra.mxu0 %v4025
        %v10212 = vpop.f32.mrf.mxu0
        %v10213 = vadd.f32 %v10044, %v10212
        %v10214 = vpop.f32.mrf.mxu0
        %v10215 = vadd.f32 %v10046, %v10214
        %10216 = vmatmul.bf16.gmra.mxu0 %v4026
        %v10217 = vpop.f32.mrf.mxu0
        %v10218 = vadd.f32 %v10049, %v10217
        %v10219 = vpop.f32.mrf.mxu0
        %v10220 = vadd.f32 %v10051, %v10219
        %10221 = vmatmul.bf16.gmra.mxu0 %v4027
        %v10222 = vpop.f32.mrf.mxu0
        %v10223 = vadd.f32 %v10054, %v10222
        %v10224 = vpop.f32.mrf.mxu0
        %v10225 = vadd.f32 %v10056, %v10224
        %10226 = vmatmul.bf16.gmra.mxu0 %v4028
        %v10227 = vpop.f32.mrf.mxu0
        %v10228 = vadd.f32 %v10059, %v10227
        %v10229 = vpop.f32.mrf.mxu0
        %v10230 = vadd.f32 %v10061, %v10229
        %10231 = vmatmul.bf16.gmra.mxu0 %v4029
        %v10232 = vpop.f32.mrf.mxu0
        %v10233 = vadd.f32 %v10064, %v10232
        %v10234 = vpop.f32.mrf.mxu0
        %v10235 = vadd.f32 %v10066, %v10234
        %10236 = vmatmul.bf16.gmra.mxu0 %v4030
        %v10237 = vpop.f32.mrf.mxu0
        %v10238 = vadd.f32 %v10069, %v10237
        %v10239 = vpop.f32.mrf.mxu0
        %v10240 = vadd.f32 %v10071, %v10239
        %10241 = vmatmul.bf16.gmra.mxu0 %v4031
        %v10242 = vpop.f32.mrf.mxu0
        %v10243 = vadd.f32 %v10074, %v10242
        %v10244 = vpop.f32.mrf.mxu0
        %v10245 = vadd.f32 %v10076, %v10244
        %10246 = vmatmul.bf16.gmra.mxu0 %v4032
        %v10247 = vpop.f32.mrf.mxu0
        %v10248 = vadd.f32 %v10079, %v10247
        %v10249 = vpop.f32.mrf.mxu0
        %v10250 = vadd.f32 %v10081, %v10249
        %10251 = vmatmul.bf16.gmra.mxu0 %v4033
        %v10252 = vpop.f32.mrf.mxu0
        %v10253 = vadd.f32 %v10084, %v10252
        %v10254 = vpop.f32.mrf.mxu0
        %v10255 = vadd.f32 %v10086, %v10254
        %10256 = vmatmul.bf16.gmra.mxu0 %v4034
        %v10257 = vpop.f32.mrf.mxu0
        %v10258 = vadd.f32 %v10089, %v10257
        %v10259 = vpop.f32.mrf.mxu0
        %v10260 = vadd.f32 %v10091, %v10259
        %10261 = vmatmul.bf16.gmra.mxu0 %v4035
        %v10262 = vpop.f32.mrf.mxu0
        %v10263 = vadd.f32 %v10094, %v10262
        %v10264 = vpop.f32.mrf.mxu0
        %v10265 = vadd.f32 %v10096, %v10264
        %10266 = vmatmul.bf16.gmra.mxu0 %v4036
        %v10267 = vpop.f32.mrf.mxu0
        %v10268 = vadd.f32 %v10099, %v10267
        %v10269 = vpop.f32.mrf.mxu0
        %v10270 = vadd.f32 %v10101, %v10269
        %10271 = vmatmul.bf16.gmra.mxu0 %v4037
        %v10272 = vpop.f32.mrf.mxu0
        %v10273 = vadd.f32 %v10104, %v10272
        %v10274 = vpop.f32.mrf.mxu0
        %v10275 = vadd.f32 %v10106, %v10274
        %10276 = vmatmul.bf16.gmra.mxu0 %v4038
        %v10277 = vpop.f32.mrf.mxu0
        %v10278 = vadd.f32 %v10109, %v10277
        %v10279 = vpop.f32.mrf.mxu0
        %v10280 = vadd.f32 %v10111, %v10279
        %10281 = vmatmul.bf16.gmra.mxu0 %v4039
        %v10282 = vpop.f32.mrf.mxu0
        %v10283 = vadd.f32 %v10114, %v10282
        %v10284 = vpop.f32.mrf.mxu0
        %v10285 = vadd.f32 %v10116, %v10284
        %10286 = vmatmul.bf16.gmra.mxu0 %v7043
        %v10287 = vpop.f32.mrf.mxu0
        %v10288 = vadd.f32 %v10119, %v10287
        %v10289 = vpop.f32.mrf.mxu0
        %v10290 = vadd.f32 %v10121, %v10289
        %10291 = vmatmul.bf16.gmra.mxu0 %v7044
        %v10292 = vpop.f32.mrf.mxu0
        %v10293 = vadd.f32 %v10124, %v10292
        %v10294 = vpop.f32.mrf.mxu0
        %v10295 = vadd.f32 %v10126, %v10294
        %10296 = vmatmul.bf16.gmra.mxu0 %v7045
        %v10297 = vpop.f32.mrf.mxu0
        %v10298 = vadd.f32 %v10129, %v10297
        %v10299 = vpop.f32.mrf.mxu0
        %v10300 = vadd.f32 %v10131, %v10299
        %10301 = vmatmul.bf16.gmra.mxu0 %v7046
        %v10302 = vpop.f32.mrf.mxu0
        %v10303 = vadd.f32 %v10134, %v10302
        %v10304 = vpop.f32.mrf.mxu0
        %v10305 = vadd.f32 %v10136, %v10304
        %10306 = vmatmul.bf16.gmra.mxu0 %v9619
        %v10307 = vpop.f32.mrf.mxu0
        %v10308 = vadd.f32 %v10139, %v10307
        %v10309 = vpop.f32.mrf.mxu0
        %v10310 = vadd.f32 %v10141, %v10309
        %10311 = vmatmul.bf16.gmra.mxu0 %v9620
        %v10312 = vpop.f32.mrf.mxu0
        %v10313 = vadd.f32 %v10144, %v10312
        %v10314 = vpop.f32.mrf.mxu0
        %v10315 = vadd.f32 %v10146, %v10314
        %10316 = vmatmul.bf16.gmra.mxu0 %v9621
        %v10317 = vpop.f32.mrf.mxu0
        %v10318 = vadd.f32 %v10149, %v10317
        %v10319 = vpop.f32.mrf.mxu0
        %v10320 = vadd.f32 %v10151, %v10319
        %10321 = vmatmul.bf16.gmra.mxu0 %v9622
        %v10322 = vpop.f32.mrf.mxu0
        %v10323 = vadd.f32 %v10154, %v10322
        %v10324 = vpop.f32.mrf.mxu0
        %v10325 = vadd.f32 %v10156, %v10324
        %10326 = vdwg.mxu0
        %v10327 = vadd.f32 %v9355, %v10168
        %v10328 = vadd.f32 %v9356, %v10170
        %v10329 = vadd.f32 %v9357, %v10173
        %v10330 = vadd.f32 %v9358, %v10175
        %v10331 = vadd.f32 %v9359, %v10178
        %v10332 = vadd.f32 %v9360, %v10180
        %v10333 = vadd.f32 %v9361, %v10183
        %v10334 = vadd.f32 %v9362, %v10185
        %v10335 = vadd.f32 %v9363, %v10188
        %v10336 = vadd.f32 %v9364, %v10190
        %v10337 = vadd.f32 %v9365, %v10193
        %v10338 = vadd.f32 %v9366, %v10195
        %v10339 = vadd.f32 %v9367, %v10198
        %v10340 = vadd.f32 %v9368, %v10200
        %v10341 = vadd.f32 %v9369, %v10203
        %v10342 = vadd.f32 %v9370, %v10205
        %v10343 = vadd.f32 %v9371, %v10208
        %v10344 = vadd.f32 %v9372, %v10210
        %v10345 = vadd.f32 %v9373, %v10213
        %v10346 = vadd.f32 %v9374, %v10215
        %v10347 = vadd.f32 %v9375, %v10218
        %v10348 = vadd.f32 %v9376, %v10220
        %v10349 = vadd.f32 %v9377, %v10223
        %v10350 = vadd.f32 %v9378, %v10225
        %v10351 = vadd.f32 %v9379, %v10228
        %v10352 = vadd.f32 %v9380, %v10230
        %v10353 = vadd.f32 %v9381, %v10233
        %v10354 = vadd.f32 %v9382, %v10235
        %v10355 = vadd.f32 %v9383, %v10238
        %v10356 = vadd.f32 %v9384, %v10240
        %v10357 = vadd.f32 %v9385, %v10243
        %v10358 = vadd.f32 %v9386, %v10245
        %v10359 = vadd.f32 %v9387, %v10248
        %v10360 = vadd.f32 %v9388, %v10250
        %v10361 = vadd.f32 %v9389, %v10253
        %v10362 = vadd.f32 %v9390, %v10255
        %v10363 = vadd.f32 %v9391, %v10258
        %v10364 = vadd.f32 %v9392, %v10260
        %v10365 = vadd.f32 %v9393, %v10263
        %v10366 = vadd.f32 %v9394, %v10265
        %v10367 = vadd.f32 %v9395, %v10268
        %v10368 = vadd.f32 %v9396, %v10270
        %v10369 = vadd.f32 %v9397, %v10273
        %v10370 = vadd.f32 %v9398, %v10275
        %v10371 = vadd.f32 %v9399, %v10278
        %v10372 = vadd.f32 %v9400, %v10280
        %v10373 = vadd.f32 %v9401, %v10283
        %v10374 = vadd.f32 %v9402, %v10285
        %v10375 = vadd.f32 %v9403, %v10288
        %v10376 = vadd.f32 %v9404, %v10290
        %v10377 = vadd.f32 %v9405, %v10293
        %v10378 = vadd.f32 %v9406, %v10295
        %v10379 = vadd.f32 %v9407, %v10298
        %v10380 = vadd.f32 %v9408, %v10300
        %v10381 = vadd.f32 %v9409, %v10303
        %v10382 = vadd.f32 %v9410, %v10305
        %v10383 = vadd.f32 %v9411, %v10308
        %v10384 = vadd.f32 %v9412, %v10310
        %v10385 = vadd.f32 %v9413, %v10313
        %v10386 = vadd.f32 %v9414, %v10315
        %v10387 = vadd.f32 %v9415, %v10318
        %v10388 = vadd.f32 %v9416, %v10320
        %v10389 = vadd.f32 %v9417, %v10323
        %v10390 = vadd.f32 %v9418, %v10325
        %v10392 = vshrl.u32 %v2398, 16
        %v10394 = vrot.slane %v10392, 4
        %v10395 = vshll.u32 %v2398, 16
        %v10397 = vrot.slane %v10395, 5
        %v10398 = vor.u32 %v10394, %v10397
        %v10399 = vrot.slane %v10398, 4
        %v10401 = vshll.u32 %v2399, 16
        %v10403 = vrot.slane %v10401, 5
        %v10404 = vsel %vm2404, %v10399, %v10403
        %v10407 = vrot.slane %v2398, 5
        %v10408 = vrot.slane %v10407, 4
        %v10409 = vrot.slane %v2399, 5
        %v10410 = vsel %vm3431, %v10408, %v10409
        %v10411 = vunpack.c.l.b16 %v2398
        %v10412 = vpack.c.b16 %v9581, %v9580
        %v10413 = vpack.c.b16 %v9583, %v9582
        %v10414 = vpack.c.b16 %v9585, %v9584
        %v10415 = vpack.c.b16 %v10411, %v9586
        %v10420 = vunpack.c.l.b16 %v10404
        %v10421 = vpack.c.b16 %v9597, %v9596
        %v10422 = vpack.c.b16 %v9599, %v9598
        %v10423 = vpack.c.b16 %v9601, %v9600
        %v10424 = vpack.c.b16 %v10420, %v9602
        %v10429 = vunpack.c.l.b16 %v10410
        %v10430 = vpack.c.b16 %v9613, %v9612
        %v10431 = vpack.c.b16 %v9615, %v9614
        %v10432 = vpack.c.b16 %v9617, %v9616
        %v10433 = vpack.c.b16 %v10429, %v9618
        %s10438 = scalar_lea.vmem [#allocation8], 1344
        %v10439 = vld [vmem:[%s10438] sm:$0xf]
        %v10440 = vld [vmem:[%s10438 + $0x4] sm:$0xf]
        %v10441 = vld [vmem:[%s10438 + $0x8] sm:$0xf]
        %v10442 = vld [vmem:[%s10438 + $0xc] sm:$0xf]
        %v10443 = vld [vmem:[%s10438 + $0x10] sm:$0xf]
        %v10444 = vld [vmem:[%s10438 + $0x14] sm:$0xf]
        %v10445 = vld [vmem:[%s10438 + $0x18] sm:$0xf]
        %v10446 = vld [vmem:[%s10438 + $0x1c] sm:$0xf]
        %v10447 = vld [vmem:[%s10438 + $0x20] sm:$0xf]
        %v10448 = vld [vmem:[%s10438 + $0x24] sm:$0xf]
        %v10449 = vld [vmem:[%s10438 + $0x28] sm:$0xf]
        %v10450 = vld [vmem:[%s10438 + $0x2c] sm:$0xf]
        %v10451 = vld [vmem:[%s10438 + $0x30] sm:$0xf]
        %v10452 = vld [vmem:[%s10438 + $0x34] sm:$0xf]
        %v10453 = vld [vmem:[%s10438 + $0x38] sm:$0xf]
        %v10454 = vld [vmem:[%s10438 + $0x3c] sm:$0xf]
        %v10455 = vld [vmem:[%s10438 + $0x40] sm:$0xf]
        %v10456 = vld [vmem:[%s10438 + $0x44] sm:$0xf]
        %v10457 = vld [vmem:[%s10438 + $0x48] sm:$0xf]
        %v10458 = vld [vmem:[%s10438 + $0x4c] sm:$0xf]
        %v10459 = vld [vmem:[%s10438 + $0x50] sm:$0xf]
        %v10460 = vld [vmem:[%s10438 + $0x54] sm:$0xf]
        %v10461 = vld [vmem:[%s10438 + $0x58] sm:$0xf]
        %v10462 = vld [vmem:[%s10438 + $0x5c] sm:$0xf]
        %v10463 = vld [vmem:[%s10438 + $0x60] sm:$0xf]
        %v10464 = vld [vmem:[%s10438 + $0x64] sm:$0xf]
        %v10465 = vld [vmem:[%s10438 + $0x68] sm:$0xf]
        %v10466 = vld [vmem:[%s10438 + $0x6c] sm:$0xf]
        %v10467 = vld [vmem:[%s10438 + $0x70] sm:$0xf]
        %v10468 = vld [vmem:[%s10438 + $0x74] sm:$0xf]
        %v10469 = vld [vmem:[%s10438 + $0x78] sm:$0xf]
        %v10470 = vld [vmem:[%s10438 + $0x7c] sm:$0xf]
        %v10471 = vld [vmem:[%s10438 + $0x80] sm:$0xf]
        %v10472 = vld [vmem:[%s10438 + $0x84] sm:$0xf]
        %v10473 = vld [vmem:[%s10438 + $0x88] sm:$0xf]
        %v10474 = vld [vmem:[%s10438 + $0x8c] sm:$0xf]
        %v10475 = vld [vmem:[%s10438 + $0x90] sm:$0xf]
        %v10476 = vld [vmem:[%s10438 + $0x94] sm:$0xf]
        %v10477 = vld [vmem:[%s10438 + $0x98] sm:$0xf]
        %v10478 = vld [vmem:[%s10438 + $0x9c] sm:$0xf]
        %v10479 = vld [vmem:[%s10438 + $0xa0] sm:$0xf]
        %v10480 = vld [vmem:[%s10438 + $0xa4] sm:$0xf]
        %v10481 = vld [vmem:[%s10438 + $0xa8] sm:$0xf]
        %v10482 = vld [vmem:[%s10438 + $0xac] sm:$0xf]
        %v10483 = vld [vmem:[%s10438 + $0xb0] sm:$0xf]
        %v10484 = vld [vmem:[%s10438 + $0xb4] sm:$0xf]
        %v10485 = vld [vmem:[%s10438 + $0xb8] sm:$0xf]
        %v10486 = vld [vmem:[%s10438 + $0xbc] sm:$0xf]
        %v10535 = vunpack.c.l.b16 %v10439
        %v10536 = vunpack.c.l.b16 %v10440
        %v10537 = vunpack.c.l.b16 %v10441
        %v10538 = vunpack.c.l.b16 %v10442
        %v10539 = vunpack.c.l.b16 %v10443
        %v10540 = vunpack.c.l.b16 %v10444
        %v10541 = vunpack.c.l.b16 %v10445
        %v10542 = vunpack.c.l.b16 %v10446
        %v10543 = vunpack.c.l.b16 %v10447
        %v10544 = vunpack.c.l.b16 %v10448
        %v10545 = vunpack.c.l.b16 %v10449
        %v10546 = vunpack.c.l.b16 %v10450
        %v10547 = vunpack.c.l.b16 %v10451
        %v10548 = vunpack.c.l.b16 %v10452
        %v10549 = vunpack.c.l.b16 %v10453
        %v10550 = vunpack.c.l.b16 %v10454
        %v10551 = vunpack.c.l.b16 %v10455
        %v10552 = vunpack.c.l.b16 %v10456
        %v10553 = vunpack.c.l.b16 %v10457
        %v10554 = vunpack.c.l.b16 %v10458
        %v10555 = vunpack.c.l.b16 %v10459
        %v10556 = vunpack.c.l.b16 %v10460
        %v10557 = vunpack.c.l.b16 %v10461
        %v10558 = vunpack.c.l.b16 %v10462
        %v10559 = vunpack.c.l.b16 %v10463
        %v10560 = vunpack.c.l.b16 %v10464
        %v10561 = vunpack.c.l.b16 %v10465
        %v10562 = vunpack.c.l.b16 %v10466
        %v10563 = vunpack.c.l.b16 %v10467
        %v10564 = vunpack.c.l.b16 %v10468
        %v10565 = vunpack.c.l.b16 %v10469
        %v10566 = vunpack.c.l.b16 %v10470
        %v10567 = vunpack.c.l.b16 %v10471
        %v10568 = vunpack.c.l.b16 %v10472
        %v10569 = vunpack.c.l.b16 %v10473
        %v10570 = vunpack.c.l.b16 %v10474
        %v10571 = vunpack.c.l.b16 %v10475
        %v10572 = vunpack.c.l.b16 %v10476
        %v10573 = vunpack.c.l.b16 %v10477
        %v10574 = vunpack.c.l.b16 %v10478
        %v10575 = vunpack.c.l.b16 %v10479
        %v10576 = vunpack.c.l.b16 %v10480
        %v10577 = vunpack.c.l.b16 %v10481
        %v10578 = vunpack.c.l.b16 %v10482
        %v10579 = vunpack.c.l.b16 %v10483
        %v10580 = vunpack.c.l.b16 %v10484
        %v10581 = vunpack.c.l.b16 %v10485
        %v10582 = vunpack.c.l.b16 %v10486
        %v10583 = vpack.c.b16 %v10536, %v10535
        %v10584 = vpack.c.b16 %v10538, %v10537
        %v10585 = vpack.c.b16 %v10540, %v10539
        %v10586 = vpack.c.b16 %v10542, %v10541
        %v10587 = vpack.c.b16 %v10544, %v10543
        %v10588 = vpack.c.b16 %v10546, %v10545
        %v10589 = vpack.c.b16 %v10548, %v10547
        %v10590 = vpack.c.b16 %v10550, %v10549
        %v10591 = vpack.c.b16 %v10552, %v10551
        %v10592 = vpack.c.b16 %v10554, %v10553
        %v10593 = vpack.c.b16 %v10556, %v10555
        %v10594 = vpack.c.b16 %v10558, %v10557
        %v10595 = vpack.c.b16 %v10560, %v10559
        %v10596 = vpack.c.b16 %v10562, %v10561
        %v10597 = vpack.c.b16 %v10564, %v10563
        %v10598 = vpack.c.b16 %v10566, %v10565
        %v10599 = vpack.c.b16 %v10568, %v10567
        %v10600 = vpack.c.b16 %v10570, %v10569
        %v10601 = vpack.c.b16 %v10572, %v10571
        %v10602 = vpack.c.b16 %v10574, %v10573
        %v10603 = vpack.c.b16 %v10576, %v10575
        %v10604 = vpack.c.b16 %v10578, %v10577
        %v10605 = vpack.c.b16 %v10580, %v10579
        %v10606 = vpack.c.b16 %v10582, %v10581
        %10631 = vmatpush.bf16.msra.mxu0 %v10590
        %10632 = vmatpush.bf16.msra.mxu0 %v10589
        %10633 = vmatpush.bf16.msra.mxu0 %v10588
        %10634 = vmatpush.bf16.msra.mxu0 %v10587
        %10635 = vmatpush.bf16.msra.mxu0 %v10586
        %10636 = vmatpush.bf16.msra.mxu0 %v10585
        %10637 = vmatpush.bf16.msra.mxu0 %v10584
        %10638 = vmatpush.bf16.msra.mxu0 %v10583
        %10639 = vmatmul.bf16.gmra.mxu0 %v4296
        %v10640 = vpop.f32.mrf.mxu0
        %v10641 = vadd.f32 0.0, %v10640
        %v10642 = vpop.f32.mrf.mxu0
        %v10643 = vadd.f32 0.0, %v10642
        %10644 = vmatmul.bf16.gmra.mxu0 %v4297
        %v10645 = vpop.f32.mrf.mxu0
        %v10646 = vadd.f32 0.0, %v10645
        %v10647 = vpop.f32.mrf.mxu0
        %v10648 = vadd.f32 0.0, %v10647
        %10649 = vmatmul.bf16.gmra.mxu0 %v4298
        %v10650 = vpop.f32.mrf.mxu0
        %v10651 = vadd.f32 0.0, %v10650
        %v10652 = vpop.f32.mrf.mxu0
        %v10653 = vadd.f32 0.0, %v10652
        %10654 = vmatmul.bf16.gmra.mxu0 %v4299
        %v10655 = vpop.f32.mrf.mxu0
        %v10656 = vadd.f32 0.0, %v10655
        %v10657 = vpop.f32.mrf.mxu0
        %v10658 = vadd.f32 0.0, %v10657
        %10659 = vmatmul.bf16.gmra.mxu0 %v4300
        %v10660 = vpop.f32.mrf.mxu0
        %v10661 = vadd.f32 0.0, %v10660
        %v10662 = vpop.f32.mrf.mxu0
        %v10663 = vadd.f32 0.0, %v10662
        %10664 = vmatmul.bf16.gmra.mxu0 %v4301
        %v10665 = vpop.f32.mrf.mxu0
        %v10666 = vadd.f32 0.0, %v10665
        %v10667 = vpop.f32.mrf.mxu0
        %v10668 = vadd.f32 0.0, %v10667
        %10669 = vmatmul.bf16.gmra.mxu0 %v4302
        %v10670 = vpop.f32.mrf.mxu0
        %v10671 = vadd.f32 0.0, %v10670
        %v10672 = vpop.f32.mrf.mxu0
        %v10673 = vadd.f32 0.0, %v10672
        %10674 = vmatmul.bf16.gmra.mxu0 %v4303
        %v10675 = vpop.f32.mrf.mxu0
        %v10676 = vadd.f32 0.0, %v10675
        %v10677 = vpop.f32.mrf.mxu0
        %v10678 = vadd.f32 0.0, %v10677
        %10679 = vmatmul.bf16.gmra.mxu0 %v4304
        %v10680 = vpop.f32.mrf.mxu0
        %v10681 = vadd.f32 0.0, %v10680
        %v10682 = vpop.f32.mrf.mxu0
        %v10683 = vadd.f32 0.0, %v10682
        %10684 = vmatmul.bf16.gmra.mxu0 %v4305
        %v10685 = vpop.f32.mrf.mxu0
        %v10686 = vadd.f32 0.0, %v10685
        %v10687 = vpop.f32.mrf.mxu0
        %v10688 = vadd.f32 0.0, %v10687
        %10689 = vmatmul.bf16.gmra.mxu0 %v4306
        %v10690 = vpop.f32.mrf.mxu0
        %v10691 = vadd.f32 0.0, %v10690
        %v10692 = vpop.f32.mrf.mxu0
        %v10693 = vadd.f32 0.0, %v10692
        %10694 = vmatmul.bf16.gmra.mxu0 %v4307
        %v10695 = vpop.f32.mrf.mxu0
        %v10696 = vadd.f32 0.0, %v10695
        %v10697 = vpop.f32.mrf.mxu0
        %v10698 = vadd.f32 0.0, %v10697
        %10699 = vmatmul.bf16.gmra.mxu0 %v4308
        %v10700 = vpop.f32.mrf.mxu0
        %v10701 = vadd.f32 0.0, %v10700
        %v10702 = vpop.f32.mrf.mxu0
        %v10703 = vadd.f32 0.0, %v10702
        %10704 = vmatmul.bf16.gmra.mxu0 %v4309
        %v10705 = vpop.f32.mrf.mxu0
        %v10706 = vadd.f32 0.0, %v10705
        %v10707 = vpop.f32.mrf.mxu0
        %v10708 = vadd.f32 0.0, %v10707
        %10709 = vmatmul.bf16.gmra.mxu0 %v4310
        %v10710 = vpop.f32.mrf.mxu0
        %v10711 = vadd.f32 0.0, %v10710
        %v10712 = vpop.f32.mrf.mxu0
        %v10713 = vadd.f32 0.0, %v10712
        %10714 = vmatmul.bf16.gmra.mxu0 %v4311
        %v10715 = vpop.f32.mrf.mxu0
        %v10716 = vadd.f32 0.0, %v10715
        %v10717 = vpop.f32.mrf.mxu0
        %v10718 = vadd.f32 0.0, %v10717
        %10719 = vmatmul.bf16.gmra.mxu0 %v4312
        %v10720 = vpop.f32.mrf.mxu0
        %v10721 = vadd.f32 0.0, %v10720
        %v10722 = vpop.f32.mrf.mxu0
        %v10723 = vadd.f32 0.0, %v10722
        %10724 = vmatmul.bf16.gmra.mxu0 %v4313
        %v10725 = vpop.f32.mrf.mxu0
        %v10726 = vadd.f32 0.0, %v10725
        %v10727 = vpop.f32.mrf.mxu0
        %v10728 = vadd.f32 0.0, %v10727
        %10729 = vmatmul.bf16.gmra.mxu0 %v4314
        %v10730 = vpop.f32.mrf.mxu0
        %v10731 = vadd.f32 0.0, %v10730
        %v10732 = vpop.f32.mrf.mxu0
        %v10733 = vadd.f32 0.0, %v10732
        %10734 = vmatmul.bf16.gmra.mxu0 %v4315
        %v10735 = vpop.f32.mrf.mxu0
        %v10736 = vadd.f32 0.0, %v10735
        %v10737 = vpop.f32.mrf.mxu0
        %v10738 = vadd.f32 0.0, %v10737
        %10739 = vmatmul.bf16.gmra.mxu0 %v4316
        %v10740 = vpop.f32.mrf.mxu0
        %v10741 = vadd.f32 0.0, %v10740
        %v10742 = vpop.f32.mrf.mxu0
        %v10743 = vadd.f32 0.0, %v10742
        %10744 = vmatmul.bf16.gmra.mxu0 %v4317
        %v10745 = vpop.f32.mrf.mxu0
        %v10746 = vadd.f32 0.0, %v10745
        %v10747 = vpop.f32.mrf.mxu0
        %v10748 = vadd.f32 0.0, %v10747
        %10749 = vmatmul.bf16.gmra.mxu0 %v4318
        %v10750 = vpop.f32.mrf.mxu0
        %v10751 = vadd.f32 0.0, %v10750
        %v10752 = vpop.f32.mrf.mxu0
        %v10753 = vadd.f32 0.0, %v10752
        %10754 = vmatmul.bf16.gmra.mxu0 %v4319
        %v10755 = vpop.f32.mrf.mxu0
        %v10756 = vadd.f32 0.0, %v10755
        %v10757 = vpop.f32.mrf.mxu0
        %v10758 = vadd.f32 0.0, %v10757
        %10759 = vmatmul.bf16.gmra.mxu0 %v7836
        %v10760 = vpop.f32.mrf.mxu0
        %v10761 = vadd.f32 0.0, %v10760
        %v10762 = vpop.f32.mrf.mxu0
        %v10763 = vadd.f32 0.0, %v10762
        %10764 = vmatmul.bf16.gmra.mxu0 %v7837
        %v10765 = vpop.f32.mrf.mxu0
        %v10766 = vadd.f32 0.0, %v10765
        %v10767 = vpop.f32.mrf.mxu0
        %v10768 = vadd.f32 0.0, %v10767
        %10769 = vmatmul.bf16.gmra.mxu0 %v7838
        %v10770 = vpop.f32.mrf.mxu0
        %v10771 = vadd.f32 0.0, %v10770
        %v10772 = vpop.f32.mrf.mxu0
        %v10773 = vadd.f32 0.0, %v10772
        %10774 = vmatmul.bf16.gmra.mxu0 %v7839
        %v10775 = vpop.f32.mrf.mxu0
        %v10776 = vadd.f32 0.0, %v10775
        %v10777 = vpop.f32.mrf.mxu0
        %v10778 = vadd.f32 0.0, %v10777
        %10779 = vmatmul.bf16.gmra.mxu0 %v10412
        %v10780 = vpop.f32.mrf.mxu0
        %v10781 = vadd.f32 0.0, %v10780
        %v10782 = vpop.f32.mrf.mxu0
        %v10783 = vadd.f32 0.0, %v10782
        %10784 = vmatmul.bf16.gmra.mxu0 %v10413
        %v10785 = vpop.f32.mrf.mxu0
        %v10786 = vadd.f32 0.0, %v10785
        %v10787 = vpop.f32.mrf.mxu0
        %v10788 = vadd.f32 0.0, %v10787
        %10789 = vmatmul.bf16.gmra.mxu0 %v10414
        %v10790 = vpop.f32.mrf.mxu0
        %v10791 = vadd.f32 0.0, %v10790
        %v10792 = vpop.f32.mrf.mxu0
        %v10793 = vadd.f32 0.0, %v10792
        %10794 = vmatmul.bf16.gmra.mxu0 %v10415
        %v10795 = vpop.f32.mrf.mxu0
        %v10796 = vadd.f32 0.0, %v10795
        %v10797 = vpop.f32.mrf.mxu0
        %v10798 = vadd.f32 0.0, %v10797
        %10799 = vdwg.mxu0
        %10800 = vmatpush.bf16.msra.mxu0 %v10598
        %10801 = vmatpush.bf16.msra.mxu0 %v10597
        %10802 = vmatpush.bf16.msra.mxu0 %v10596
        %10803 = vmatpush.bf16.msra.mxu0 %v10595
        %10804 = vmatpush.bf16.msra.mxu0 %v10594
        %10805 = vmatpush.bf16.msra.mxu0 %v10593
        %10806 = vmatpush.bf16.msra.mxu0 %v10592
        %10807 = vmatpush.bf16.msra.mxu0 %v10591
        %10808 = vmatmul.bf16.gmra.mxu0 %v4368
        %v10809 = vpop.f32.mrf.mxu0
        %v10810 = vadd.f32 %v10641, %v10809
        %v10811 = vpop.f32.mrf.mxu0
        %v10812 = vadd.f32 %v10643, %v10811
        %10813 = vmatmul.bf16.gmra.mxu0 %v4369
        %v10814 = vpop.f32.mrf.mxu0
        %v10815 = vadd.f32 %v10646, %v10814
        %v10816 = vpop.f32.mrf.mxu0
        %v10817 = vadd.f32 %v10648, %v10816
        %10818 = vmatmul.bf16.gmra.mxu0 %v4370
        %v10819 = vpop.f32.mrf.mxu0
        %v10820 = vadd.f32 %v10651, %v10819
        %v10821 = vpop.f32.mrf.mxu0
        %v10822 = vadd.f32 %v10653, %v10821
        %10823 = vmatmul.bf16.gmra.mxu0 %v4371
        %v10824 = vpop.f32.mrf.mxu0
        %v10825 = vadd.f32 %v10656, %v10824
        %v10826 = vpop.f32.mrf.mxu0
        %v10827 = vadd.f32 %v10658, %v10826
        %10828 = vmatmul.bf16.gmra.mxu0 %v4372
        %v10829 = vpop.f32.mrf.mxu0
        %v10830 = vadd.f32 %v10661, %v10829
        %v10831 = vpop.f32.mrf.mxu0
        %v10832 = vadd.f32 %v10663, %v10831
        %10833 = vmatmul.bf16.gmra.mxu0 %v4373
        %v10834 = vpop.f32.mrf.mxu0
        %v10835 = vadd.f32 %v10666, %v10834
        %v10836 = vpop.f32.mrf.mxu0
        %v10837 = vadd.f32 %v10668, %v10836
        %10838 = vmatmul.bf16.gmra.mxu0 %v4374
        %v10839 = vpop.f32.mrf.mxu0
        %v10840 = vadd.f32 %v10671, %v10839
        %v10841 = vpop.f32.mrf.mxu0
        %v10842 = vadd.f32 %v10673, %v10841
        %10843 = vmatmul.bf16.gmra.mxu0 %v4375
        %v10844 = vpop.f32.mrf.mxu0
        %v10845 = vadd.f32 %v10676, %v10844
        %v10846 = vpop.f32.mrf.mxu0
        %v10847 = vadd.f32 %v10678, %v10846
        %10848 = vmatmul.bf16.gmra.mxu0 %v4376
        %v10849 = vpop.f32.mrf.mxu0
        %v10850 = vadd.f32 %v10681, %v10849
        %v10851 = vpop.f32.mrf.mxu0
        %v10852 = vadd.f32 %v10683, %v10851
        %10853 = vmatmul.bf16.gmra.mxu0 %v4377
        %v10854 = vpop.f32.mrf.mxu0
        %v10855 = vadd.f32 %v10686, %v10854
        %v10856 = vpop.f32.mrf.mxu0
        %v10857 = vadd.f32 %v10688, %v10856
        %10858 = vmatmul.bf16.gmra.mxu0 %v4378
        %v10859 = vpop.f32.mrf.mxu0
        %v10860 = vadd.f32 %v10691, %v10859
        %v10861 = vpop.f32.mrf.mxu0
        %v10862 = vadd.f32 %v10693, %v10861
        %10863 = vmatmul.bf16.gmra.mxu0 %v4379
        %v10864 = vpop.f32.mrf.mxu0
        %v10865 = vadd.f32 %v10696, %v10864
        %v10866 = vpop.f32.mrf.mxu0
        %v10867 = vadd.f32 %v10698, %v10866
        %10868 = vmatmul.bf16.gmra.mxu0 %v4380
        %v10869 = vpop.f32.mrf.mxu0
        %v10870 = vadd.f32 %v10701, %v10869
        %v10871 = vpop.f32.mrf.mxu0
        %v10872 = vadd.f32 %v10703, %v10871
        %10873 = vmatmul.bf16.gmra.mxu0 %v4381
        %v10874 = vpop.f32.mrf.mxu0
        %v10875 = vadd.f32 %v10706, %v10874
        %v10876 = vpop.f32.mrf.mxu0
        %v10877 = vadd.f32 %v10708, %v10876
        %10878 = vmatmul.bf16.gmra.mxu0 %v4382
        %v10879 = vpop.f32.mrf.mxu0
        %v10880 = vadd.f32 %v10711, %v10879
        %v10881 = vpop.f32.mrf.mxu0
        %v10882 = vadd.f32 %v10713, %v10881
        %10883 = vmatmul.bf16.gmra.mxu0 %v4383
        %v10884 = vpop.f32.mrf.mxu0
        %v10885 = vadd.f32 %v10716, %v10884
        %v10886 = vpop.f32.mrf.mxu0
        %v10887 = vadd.f32 %v10718, %v10886
        %10888 = vmatmul.bf16.gmra.mxu0 %v4384
        %v10889 = vpop.f32.mrf.mxu0
        %v10890 = vadd.f32 %v10721, %v10889
        %v10891 = vpop.f32.mrf.mxu0
        %v10892 = vadd.f32 %v10723, %v10891
        %10893 = vmatmul.bf16.gmra.mxu0 %v4385
        %v10894 = vpop.f32.mrf.mxu0
        %v10895 = vadd.f32 %v10726, %v10894
        %v10896 = vpop.f32.mrf.mxu0
        %v10897 = vadd.f32 %v10728, %v10896
        %10898 = vmatmul.bf16.gmra.mxu0 %v4386
        %v10899 = vpop.f32.mrf.mxu0
        %v10900 = vadd.f32 %v10731, %v10899
        %v10901 = vpop.f32.mrf.mxu0
        %v10902 = vadd.f32 %v10733, %v10901
        %10903 = vmatmul.bf16.gmra.mxu0 %v4387
        %v10904 = vpop.f32.mrf.mxu0
        %v10905 = vadd.f32 %v10736, %v10904
        %v10906 = vpop.f32.mrf.mxu0
        %v10907 = vadd.f32 %v10738, %v10906
        %10908 = vmatmul.bf16.gmra.mxu0 %v4388
        %v10909 = vpop.f32.mrf.mxu0
        %v10910 = vadd.f32 %v10741, %v10909
        %v10911 = vpop.f32.mrf.mxu0
        %v10912 = vadd.f32 %v10743, %v10911
        %10913 = vmatmul.bf16.gmra.mxu0 %v4389
        %v10914 = vpop.f32.mrf.mxu0
        %v10915 = vadd.f32 %v10746, %v10914
        %v10916 = vpop.f32.mrf.mxu0
        %v10917 = vadd.f32 %v10748, %v10916
        %10918 = vmatmul.bf16.gmra.mxu0 %v4390
        %v10919 = vpop.f32.mrf.mxu0
        %v10920 = vadd.f32 %v10751, %v10919
        %v10921 = vpop.f32.mrf.mxu0
        %v10922 = vadd.f32 %v10753, %v10921
        %10923 = vmatmul.bf16.gmra.mxu0 %v4391
        %v10924 = vpop.f32.mrf.mxu0
        %v10925 = vadd.f32 %v10756, %v10924
        %v10926 = vpop.f32.mrf.mxu0
        %v10927 = vadd.f32 %v10758, %v10926
        %10928 = vmatmul.bf16.gmra.mxu0 %v7845
        %v10929 = vpop.f32.mrf.mxu0
        %v10930 = vadd.f32 %v10761, %v10929
        %v10931 = vpop.f32.mrf.mxu0
        %v10932 = vadd.f32 %v10763, %v10931
        %10933 = vmatmul.bf16.gmra.mxu0 %v7846
        %v10934 = vpop.f32.mrf.mxu0
        %v10935 = vadd.f32 %v10766, %v10934
        %v10936 = vpop.f32.mrf.mxu0
        %v10937 = vadd.f32 %v10768, %v10936
        %10938 = vmatmul.bf16.gmra.mxu0 %v7847
        %v10939 = vpop.f32.mrf.mxu0
        %v10940 = vadd.f32 %v10771, %v10939
        %v10941 = vpop.f32.mrf.mxu0
        %v10942 = vadd.f32 %v10773, %v10941
        %10943 = vmatmul.bf16.gmra.mxu0 %v7848
        %v10944 = vpop.f32.mrf.mxu0
        %v10945 = vadd.f32 %v10776, %v10944
        %v10946 = vpop.f32.mrf.mxu0
        %v10947 = vadd.f32 %v10778, %v10946
        %10948 = vmatmul.bf16.gmra.mxu0 %v10421
        %v10949 = vpop.f32.mrf.mxu0
        %v10950 = vadd.f32 %v10781, %v10949
        %v10951 = vpop.f32.mrf.mxu0
        %v10952 = vadd.f32 %v10783, %v10951
        %10953 = vmatmul.bf16.gmra.mxu0 %v10422
        %v10954 = vpop.f32.mrf.mxu0
        %v10955 = vadd.f32 %v10786, %v10954
        %v10956 = vpop.f32.mrf.mxu0
        %v10957 = vadd.f32 %v10788, %v10956
        %10958 = vmatmul.bf16.gmra.mxu0 %v10423
        %v10959 = vpop.f32.mrf.mxu0
        %v10960 = vadd.f32 %v10791, %v10959
        %v10961 = vpop.f32.mrf.mxu0
        %v10962 = vadd.f32 %v10793, %v10961
        %10963 = vmatmul.bf16.gmra.mxu0 %v10424
        %v10964 = vpop.f32.mrf.mxu0
        %v10965 = vadd.f32 %v10796, %v10964
        %v10966 = vpop.f32.mrf.mxu0
        %v10967 = vadd.f32 %v10798, %v10966
        %10968 = vdwg.mxu0
        %10969 = vmatpush.bf16.msra.mxu0 %v10606
        %10970 = vmatpush.bf16.msra.mxu0 %v10605
        %10971 = vmatpush.bf16.msra.mxu0 %v10604
        %10972 = vmatpush.bf16.msra.mxu0 %v10603
        %10973 = vmatpush.bf16.msra.mxu0 %v10602
        %10974 = vmatpush.bf16.msra.mxu0 %v10601
        %10975 = vmatpush.bf16.msra.mxu0 %v10600
        %10976 = vmatpush.bf16.msra.mxu0 %v10599
        %10977 = vmatmul.bf16.gmra.mxu0 %v4440
        %v10978 = vpop.f32.mrf.mxu0
        %v10979 = vadd.f32 %v10810, %v10978
        %v10980 = vpop.f32.mrf.mxu0
        %v10981 = vadd.f32 %v10812, %v10980
        %10982 = vmatmul.bf16.gmra.mxu0 %v4441
        %v10983 = vpop.f32.mrf.mxu0
        %v10984 = vadd.f32 %v10815, %v10983
        %v10985 = vpop.f32.mrf.mxu0
        %v10986 = vadd.f32 %v10817, %v10985
        %10987 = vmatmul.bf16.gmra.mxu0 %v4442
        %v10988 = vpop.f32.mrf.mxu0
        %v10989 = vadd.f32 %v10820, %v10988
        %v10990 = vpop.f32.mrf.mxu0
        %v10991 = vadd.f32 %v10822, %v10990
        %10992 = vmatmul.bf16.gmra.mxu0 %v4443
        %v10993 = vpop.f32.mrf.mxu0
        %v10994 = vadd.f32 %v10825, %v10993
        %v10995 = vpop.f32.mrf.mxu0
        %v10996 = vadd.f32 %v10827, %v10995
        %10997 = vmatmul.bf16.gmra.mxu0 %v4444
        %v10998 = vpop.f32.mrf.mxu0
        %v10999 = vadd.f32 %v10830, %v10998
        %v11000 = vpop.f32.mrf.mxu0
        %v11001 = vadd.f32 %v10832, %v11000
        %11002 = vmatmul.bf16.gmra.mxu0 %v4445
        %v11003 = vpop.f32.mrf.mxu0
        %v11004 = vadd.f32 %v10835, %v11003
        %v11005 = vpop.f32.mrf.mxu0
        %v11006 = vadd.f32 %v10837, %v11005
        %11007 = vmatmul.bf16.gmra.mxu0 %v4446
        %v11008 = vpop.f32.mrf.mxu0
        %v11009 = vadd.f32 %v10840, %v11008
        %v11010 = vpop.f32.mrf.mxu0
        %v11011 = vadd.f32 %v10842, %v11010
        %11012 = vmatmul.bf16.gmra.mxu0 %v4447
        %v11013 = vpop.f32.mrf.mxu0
        %v11014 = vadd.f32 %v10845, %v11013
        %v11015 = vpop.f32.mrf.mxu0
        %v11016 = vadd.f32 %v10847, %v11015
        %11017 = vmatmul.bf16.gmra.mxu0 %v4448
        %v11018 = vpop.f32.mrf.mxu0
        %v11019 = vadd.f32 %v10850, %v11018
        %v11020 = vpop.f32.mrf.mxu0
        %v11021 = vadd.f32 %v10852, %v11020
        %11022 = vmatmul.bf16.gmra.mxu0 %v4449
        %v11023 = vpop.f32.mrf.mxu0
        %v11024 = vadd.f32 %v10855, %v11023
        %v11025 = vpop.f32.mrf.mxu0
        %v11026 = vadd.f32 %v10857, %v11025
        %11027 = vmatmul.bf16.gmra.mxu0 %v4450
        %v11028 = vpop.f32.mrf.mxu0
        %v11029 = vadd.f32 %v10860, %v11028
        %v11030 = vpop.f32.mrf.mxu0
        %v11031 = vadd.f32 %v10862, %v11030
        %11032 = vmatmul.bf16.gmra.mxu0 %v4451
        %v11033 = vpop.f32.mrf.mxu0
        %v11034 = vadd.f32 %v10865, %v11033
        %v11035 = vpop.f32.mrf.mxu0
        %v11036 = vadd.f32 %v10867, %v11035
        %11037 = vmatmul.bf16.gmra.mxu0 %v4452
        %v11038 = vpop.f32.mrf.mxu0
        %v11039 = vadd.f32 %v10870, %v11038
        %v11040 = vpop.f32.mrf.mxu0
        %v11041 = vadd.f32 %v10872, %v11040
        %11042 = vmatmul.bf16.gmra.mxu0 %v4453
        %v11043 = vpop.f32.mrf.mxu0
        %v11044 = vadd.f32 %v10875, %v11043
        %v11045 = vpop.f32.mrf.mxu0
        %v11046 = vadd.f32 %v10877, %v11045
        %11047 = vmatmul.bf16.gmra.mxu0 %v4454
        %v11048 = vpop.f32.mrf.mxu0
        %v11049 = vadd.f32 %v10880, %v11048
        %v11050 = vpop.f32.mrf.mxu0
        %v11051 = vadd.f32 %v10882, %v11050
        %11052 = vmatmul.bf16.gmra.mxu0 %v4455
        %v11053 = vpop.f32.mrf.mxu0
        %v11054 = vadd.f32 %v10885, %v11053
        %v11055 = vpop.f32.mrf.mxu0
        %v11056 = vadd.f32 %v10887, %v11055
        %11057 = vmatmul.bf16.gmra.mxu0 %v4456
        %v11058 = vpop.f32.mrf.mxu0
        %v11059 = vadd.f32 %v10890, %v11058
        %v11060 = vpop.f32.mrf.mxu0
        %v11061 = vadd.f32 %v10892, %v11060
        %11062 = vmatmul.bf16.gmra.mxu0 %v4457
        %v11063 = vpop.f32.mrf.mxu0
        %v11064 = vadd.f32 %v10895, %v11063
        %v11065 = vpop.f32.mrf.mxu0
        %v11066 = vadd.f32 %v10897, %v11065
        %11067 = vmatmul.bf16.gmra.mxu0 %v4458
        %v11068 = vpop.f32.mrf.mxu0
        %v11069 = vadd.f32 %v10900, %v11068
        %v11070 = vpop.f32.mrf.mxu0
        %v11071 = vadd.f32 %v10902, %v11070
        %11072 = vmatmul.bf16.gmra.mxu0 %v4459
        %v11073 = vpop.f32.mrf.mxu0
        %v11074 = vadd.f32 %v10905, %v11073
        %v11075 = vpop.f32.mrf.mxu0
        %v11076 = vadd.f32 %v10907, %v11075
        %11077 = vmatmul.bf16.gmra.mxu0 %v4460
        %v11078 = vpop.f32.mrf.mxu0
        %v11079 = vadd.f32 %v10910, %v11078
        %v11080 = vpop.f32.mrf.mxu0
        %v11081 = vadd.f32 %v10912, %v11080
        %11082 = vmatmul.bf16.gmra.mxu0 %v4461
        %v11083 = vpop.f32.mrf.mxu0
        %v11084 = vadd.f32 %v10915, %v11083
        %v11085 = vpop.f32.mrf.mxu0
        %v11086 = vadd.f32 %v10917, %v11085
        %11087 = vmatmul.bf16.gmra.mxu0 %v4462
        %v11088 = vpop.f32.mrf.mxu0
        %v11089 = vadd.f32 %v10920, %v11088
        %v11090 = vpop.f32.mrf.mxu0
        %v11091 = vadd.f32 %v10922, %v11090
        %11092 = vmatmul.bf16.gmra.mxu0 %v4463
        %v11093 = vpop.f32.mrf.mxu0
        %v11094 = vadd.f32 %v10925, %v11093
        %v11095 = vpop.f32.mrf.mxu0
        %v11096 = vadd.f32 %v10927, %v11095
        %11097 = vmatmul.bf16.gmra.mxu0 %v7854
        %v11098 = vpop.f32.mrf.mxu0
        %v11099 = vadd.f32 %v10930, %v11098
        %v11100 = vpop.f32.mrf.mxu0
        %v11101 = vadd.f32 %v10932, %v11100
        %11102 = vmatmul.bf16.gmra.mxu0 %v7855
        %v11103 = vpop.f32.mrf.mxu0
        %v11104 = vadd.f32 %v10935, %v11103
        %v11105 = vpop.f32.mrf.mxu0
        %v11106 = vadd.f32 %v10937, %v11105
        %11107 = vmatmul.bf16.gmra.mxu0 %v7856
        %v11108 = vpop.f32.mrf.mxu0
        %v11109 = vadd.f32 %v10940, %v11108
        %v11110 = vpop.f32.mrf.mxu0
        %v11111 = vadd.f32 %v10942, %v11110
        %11112 = vmatmul.bf16.gmra.mxu0 %v7857
        %v11113 = vpop.f32.mrf.mxu0
        %v11114 = vadd.f32 %v10945, %v11113
        %v11115 = vpop.f32.mrf.mxu0
        %v11116 = vadd.f32 %v10947, %v11115
        %11117 = vmatmul.bf16.gmra.mxu0 %v10430
        %v11118 = vpop.f32.mrf.mxu0
        %v11119 = vadd.f32 %v10950, %v11118
        %v11120 = vpop.f32.mrf.mxu0
        %v11121 = vadd.f32 %v10952, %v11120
        %11122 = vmatmul.bf16.gmra.mxu0 %v10431
        %v11123 = vpop.f32.mrf.mxu0
        %v11124 = vadd.f32 %v10955, %v11123
        %v11125 = vpop.f32.mrf.mxu0
        %v11126 = vadd.f32 %v10957, %v11125
        %11127 = vmatmul.bf16.gmra.mxu0 %v10432
        %v11128 = vpop.f32.mrf.mxu0
        %v11129 = vadd.f32 %v10960, %v11128
        %v11130 = vpop.f32.mrf.mxu0
        %v11131 = vadd.f32 %v10962, %v11130
        %11132 = vmatmul.bf16.gmra.mxu0 %v10433
        %v11133 = vpop.f32.mrf.mxu0
        %v11134 = vadd.f32 %v10965, %v11133
        %v11135 = vpop.f32.mrf.mxu0
        %v11136 = vadd.f32 %v10967, %v11135
        %11137 = vdwg.mxu0
        %v11138 = vadd.f32 %v10327, %v10979
        %v11139 = vadd.f32 %v10328, %v10981
        %v11140 = vadd.f32 %v10329, %v10984
        %v11141 = vadd.f32 %v10330, %v10986
        %v11142 = vadd.f32 %v10331, %v10989
        %v11143 = vadd.f32 %v10332, %v10991
        %v11144 = vadd.f32 %v10333, %v10994
        %v11145 = vadd.f32 %v10334, %v10996
        %v11146 = vadd.f32 %v10335, %v10999
        %v11147 = vadd.f32 %v10336, %v11001
        %v11148 = vadd.f32 %v10337, %v11004
        %v11149 = vadd.f32 %v10338, %v11006
        %v11150 = vadd.f32 %v10339, %v11009
        %v11151 = vadd.f32 %v10340, %v11011
        %v11152 = vadd.f32 %v10341, %v11014
        %v11153 = vadd.f32 %v10342, %v11016
        %v11154 = vadd.f32 %v10343, %v11019
        %v11155 = vadd.f32 %v10344, %v11021
        %v11156 = vadd.f32 %v10345, %v11024
        %v11157 = vadd.f32 %v10346, %v11026
        %v11158 = vadd.f32 %v10347, %v11029
        %v11159 = vadd.f32 %v10348, %v11031
        %v11160 = vadd.f32 %v10349, %v11034
        %v11161 = vadd.f32 %v10350, %v11036
        %v11162 = vadd.f32 %v10351, %v11039
        %v11163 = vadd.f32 %v10352, %v11041
        %v11164 = vadd.f32 %v10353, %v11044
        %v11165 = vadd.f32 %v10354, %v11046
        %v11166 = vadd.f32 %v10355, %v11049
        %v11167 = vadd.f32 %v10356, %v11051
        %v11168 = vadd.f32 %v10357, %v11054
        %v11169 = vadd.f32 %v10358, %v11056
        %v11170 = vadd.f32 %v10359, %v11059
        %v11171 = vadd.f32 %v10360, %v11061
        %v11172 = vadd.f32 %v10361, %v11064
        %v11173 = vadd.f32 %v10362, %v11066
        %v11174 = vadd.f32 %v10363, %v11069
        %v11175 = vadd.f32 %v10364, %v11071
        %v11176 = vadd.f32 %v10365, %v11074
        %v11177 = vadd.f32 %v10366, %v11076
        %v11178 = vadd.f32 %v10367, %v11079
        %v11179 = vadd.f32 %v10368, %v11081
        %v11180 = vadd.f32 %v10369, %v11084
        %v11181 = vadd.f32 %v10370, %v11086
        %v11182 = vadd.f32 %v10371, %v11089
        %v11183 = vadd.f32 %v10372, %v11091
        %v11184 = vadd.f32 %v10373, %v11094
        %v11185 = vadd.f32 %v10374, %v11096
        %v11186 = vadd.f32 %v10375, %v11099
        %v11187 = vadd.f32 %v10376, %v11101
        %v11188 = vadd.f32 %v10377, %v11104
        %v11189 = vadd.f32 %v10378, %v11106
        %v11190 = vadd.f32 %v10379, %v11109
        %v11191 = vadd.f32 %v10380, %v11111
        %v11192 = vadd.f32 %v10381, %v11114
        %v11193 = vadd.f32 %v10382, %v11116
        %v11194 = vadd.f32 %v10383, %v11119
        %v11195 = vadd.f32 %v10384, %v11121
        %v11196 = vadd.f32 %v10385, %v11124
        %v11197 = vadd.f32 %v10386, %v11126
        %v11198 = vadd.f32 %v10387, %v11129
        %v11199 = vadd.f32 %v10388, %v11131
        %v11200 = vadd.f32 %v10389, %v11134
        %v11201 = vadd.f32 %v10390, %v11136
        %v11203 = vshrl.u32 %v2400, 16
        %v11205 = vrot.slane %v11203, 4
        %v11206 = vshll.u32 %v2400, 16
        %v11208 = vrot.slane %v11206, 5
        %v11209 = vor.u32 %v11205, %v11208
        %v11210 = vrot.slane %v11209, 4
        %v11212 = vshll.u32 %v2401, 16
        %v11214 = vrot.slane %v11212, 5
        %v11215 = vsel %vm2404, %v11210, %v11214
        %v11218 = vrot.slane %v2400, 5
        %v11219 = vrot.slane %v11218, 4
        %v11220 = vrot.slane %v2401, 5
        %v11221 = vsel %vm3431, %v11219, %v11220
        %v11222 = vunpack.c.l.b16 %v2400
        %v11223 = vpack.c.b16 %v11222, %v10411
        %v11225 = vunpack.c.l.b16 %v11215
        %v11226 = vpack.c.b16 %v11225, %v10420
        %v11228 = vunpack.c.l.b16 %v11221
        %v11229 = vpack.c.b16 %v11228, %v10429
        %s11231 = scalar_lea.vmem [#allocation8], 1536
        %v11232 = vld [vmem:[%s11231] sm:$0xf]
        %v11233 = vld [vmem:[%s11231 + $0x4] sm:$0xf]
        %v11234 = vld [vmem:[%s11231 + $0x8] sm:$0xf]
        %v11235 = vld [vmem:[%s11231 + $0xc] sm:$0xf]
        %v11236 = vld [vmem:[%s11231 + $0x10] sm:$0xf]
        %v11237 = vld [vmem:[%s11231 + $0x14] sm:$0xf]
        %v11238 = vld [vmem:[%s11231 + $0x18] sm:$0xf]
        %v11239 = vld [vmem:[%s11231 + $0x1c] sm:$0xf]
        %v11240 = vld [vmem:[%s11231 + $0x20] sm:$0xf]
        %v11241 = vld [vmem:[%s11231 + $0x24] sm:$0xf]
        %v11242 = vld [vmem:[%s11231 + $0x28] sm:$0xf]
        %v11243 = vld [vmem:[%s11231 + $0x2c] sm:$0xf]
        %v11244 = vld [vmem:[%s11231 + $0x30] sm:$0xf]
        %v11245 = vld [vmem:[%s11231 + $0x34] sm:$0xf]
        %v11246 = vld [vmem:[%s11231 + $0x38] sm:$0xf]
        %v11247 = vld [vmem:[%s11231 + $0x3c] sm:$0xf]
        %v11248 = vld [vmem:[%s11231 + $0x40] sm:$0xf]
        %v11249 = vld [vmem:[%s11231 + $0x44] sm:$0xf]
        %v11250 = vld [vmem:[%s11231 + $0x48] sm:$0xf]
        %v11251 = vld [vmem:[%s11231 + $0x4c] sm:$0xf]
        %v11252 = vld [vmem:[%s11231 + $0x50] sm:$0xf]
        %v11253 = vld [vmem:[%s11231 + $0x54] sm:$0xf]
        %v11254 = vld [vmem:[%s11231 + $0x58] sm:$0xf]
        %v11255 = vld [vmem:[%s11231 + $0x5c] sm:$0xf]
        %v11256 = vld [vmem:[%s11231 + $0x60] sm:$0xf]
        %v11257 = vld [vmem:[%s11231 + $0x64] sm:$0xf]
        %v11258 = vld [vmem:[%s11231 + $0x68] sm:$0xf]
        %v11259 = vld [vmem:[%s11231 + $0x6c] sm:$0xf]
        %v11260 = vld [vmem:[%s11231 + $0x70] sm:$0xf]
        %v11261 = vld [vmem:[%s11231 + $0x74] sm:$0xf]
        %v11262 = vld [vmem:[%s11231 + $0x78] sm:$0xf]
        %v11263 = vld [vmem:[%s11231 + $0x7c] sm:$0xf]
        %v11264 = vld [vmem:[%s11231 + $0x80] sm:$0xf]
        %v11265 = vld [vmem:[%s11231 + $0x84] sm:$0xf]
        %v11266 = vld [vmem:[%s11231 + $0x88] sm:$0xf]
        %v11267 = vld [vmem:[%s11231 + $0x8c] sm:$0xf]
        %v11268 = vld [vmem:[%s11231 + $0x90] sm:$0xf]
        %v11269 = vld [vmem:[%s11231 + $0x94] sm:$0xf]
        %v11270 = vld [vmem:[%s11231 + $0x98] sm:$0xf]
        %v11271 = vld [vmem:[%s11231 + $0x9c] sm:$0xf]
        %v11272 = vld [vmem:[%s11231 + $0xa0] sm:$0xf]
        %v11273 = vld [vmem:[%s11231 + $0xa4] sm:$0xf]
        %v11274 = vld [vmem:[%s11231 + $0xa8] sm:$0xf]
        %v11275 = vld [vmem:[%s11231 + $0xac] sm:$0xf]
        %v11276 = vld [vmem:[%s11231 + $0xb0] sm:$0xf]
        %v11277 = vld [vmem:[%s11231 + $0xb4] sm:$0xf]
        %v11278 = vld [vmem:[%s11231 + $0xb8] sm:$0xf]
        %v11279 = vld [vmem:[%s11231 + $0xbc] sm:$0xf]
        %v11328 = vunpack.c.l.b16 %v11232
        %v11329 = vunpack.c.l.b16 %v11233
        %v11330 = vunpack.c.l.b16 %v11234
        %v11331 = vunpack.c.l.b16 %v11235
        %v11332 = vunpack.c.l.b16 %v11236
        %v11333 = vunpack.c.l.b16 %v11237
        %v11334 = vunpack.c.l.b16 %v11238
        %v11335 = vunpack.c.l.b16 %v11239
        %v11336 = vunpack.c.l.b16 %v11240
        %v11337 = vunpack.c.l.b16 %v11241
        %v11338 = vunpack.c.l.b16 %v11242
        %v11339 = vunpack.c.l.b16 %v11243
        %v11340 = vunpack.c.l.b16 %v11244
        %v11341 = vunpack.c.l.b16 %v11245
        %v11342 = vunpack.c.l.b16 %v11246
        %v11343 = vunpack.c.l.b16 %v11247
        %v11344 = vunpack.c.l.b16 %v11248
        %v11345 = vunpack.c.l.b16 %v11249
        %v11346 = vunpack.c.l.b16 %v11250
        %v11347 = vunpack.c.l.b16 %v11251
        %v11348 = vunpack.c.l.b16 %v11252
        %v11349 = vunpack.c.l.b16 %v11253
        %v11350 = vunpack.c.l.b16 %v11254
        %v11351 = vunpack.c.l.b16 %v11255
        %v11352 = vunpack.c.l.b16 %v11256
        %v11353 = vunpack.c.l.b16 %v11257
        %v11354 = vunpack.c.l.b16 %v11258
        %v11355 = vunpack.c.l.b16 %v11259
        %v11356 = vunpack.c.l.b16 %v11260
        %v11357 = vunpack.c.l.b16 %v11261
        %v11358 = vunpack.c.l.b16 %v11262
        %v11359 = vunpack.c.l.b16 %v11263
        %v11360 = vunpack.c.l.b16 %v11264
        %v11361 = vunpack.c.l.b16 %v11265
        %v11362 = vunpack.c.l.b16 %v11266
        %v11363 = vunpack.c.l.b16 %v11267
        %v11364 = vunpack.c.l.b16 %v11268
        %v11365 = vunpack.c.l.b16 %v11269
        %v11366 = vunpack.c.l.b16 %v11270
        %v11367 = vunpack.c.l.b16 %v11271
        %v11368 = vunpack.c.l.b16 %v11272
        %v11369 = vunpack.c.l.b16 %v11273
        %v11370 = vunpack.c.l.b16 %v11274
        %v11371 = vunpack.c.l.b16 %v11275
        %v11372 = vunpack.c.l.b16 %v11276
        %v11373 = vunpack.c.l.b16 %v11277
        %v11374 = vunpack.c.l.b16 %v11278
        %v11375 = vunpack.c.l.b16 %v11279
        %v11376 = vpack.c.b16 %v11329, %v11328
        %v11377 = vpack.c.b16 %v11331, %v11330
        %v11378 = vpack.c.b16 %v11333, %v11332
        %v11379 = vpack.c.b16 %v11335, %v11334
        %v11380 = vpack.c.b16 %v11337, %v11336
        %v11381 = vpack.c.b16 %v11339, %v11338
        %v11382 = vpack.c.b16 %v11341, %v11340
        %v11383 = vpack.c.b16 %v11343, %v11342
        %v11384 = vpack.c.b16 %v11345, %v11344
        %v11385 = vpack.c.b16 %v11347, %v11346
        %v11386 = vpack.c.b16 %v11349, %v11348
        %v11387 = vpack.c.b16 %v11351, %v11350
        %v11388 = vpack.c.b16 %v11353, %v11352
        %v11389 = vpack.c.b16 %v11355, %v11354
        %v11390 = vpack.c.b16 %v11357, %v11356
        %v11391 = vpack.c.b16 %v11359, %v11358
        %v11392 = vpack.c.b16 %v11361, %v11360
        %v11393 = vpack.c.b16 %v11363, %v11362
        %v11394 = vpack.c.b16 %v11365, %v11364
        %v11395 = vpack.c.b16 %v11367, %v11366
        %v11396 = vpack.c.b16 %v11369, %v11368
        %v11397 = vpack.c.b16 %v11371, %v11370
        %v11398 = vpack.c.b16 %v11373, %v11372
        %v11399 = vpack.c.b16 %v11375, %v11374
        %11424 = vmatpush.bf16.msra.mxu0 %v11383
        %11425 = vmatpush.bf16.msra.mxu0 %v11382
        %11426 = vmatpush.bf16.msra.mxu0 %v11381
        %11427 = vmatpush.bf16.msra.mxu0 %v11380
        %11428 = vmatpush.bf16.msra.mxu0 %v11379
        %11429 = vmatpush.bf16.msra.mxu0 %v11378
        %11430 = vmatpush.bf16.msra.mxu0 %v11377
        %11431 = vmatpush.bf16.msra.mxu0 %v11376
        %11432 = vmatmul.bf16.gmra.mxu0 %v3761
        %v11433 = vpop.f32.mrf.mxu0
        %v11434 = vadd.f32 0.0, %v11433
        %v11435 = vpop.f32.mrf.mxu0
        %v11436 = vadd.f32 0.0, %v11435
        %11437 = vmatmul.bf16.gmra.mxu0 %v3762
        %v11438 = vpop.f32.mrf.mxu0
        %v11439 = vadd.f32 0.0, %v11438
        %v11440 = vpop.f32.mrf.mxu0
        %v11441 = vadd.f32 0.0, %v11440
        %11442 = vmatmul.bf16.gmra.mxu0 %v3763
        %v11443 = vpop.f32.mrf.mxu0
        %v11444 = vadd.f32 0.0, %v11443
        %v11445 = vpop.f32.mrf.mxu0
        %v11446 = vadd.f32 0.0, %v11445
        %11447 = vmatmul.bf16.gmra.mxu0 %v6017
        %v11448 = vpop.f32.mrf.mxu0
        %v11449 = vadd.f32 0.0, %v11448
        %v11450 = vpop.f32.mrf.mxu0
        %v11451 = vadd.f32 0.0, %v11450
        %11452 = vmatmul.bf16.gmra.mxu0 %v3765
        %v11453 = vpop.f32.mrf.mxu0
        %v11454 = vadd.f32 0.0, %v11453
        %v11455 = vpop.f32.mrf.mxu0
        %v11456 = vadd.f32 0.0, %v11455
        %11457 = vmatmul.bf16.gmra.mxu0 %v3766
        %v11458 = vpop.f32.mrf.mxu0
        %v11459 = vadd.f32 0.0, %v11458
        %v11460 = vpop.f32.mrf.mxu0
        %v11461 = vadd.f32 0.0, %v11460
        %11462 = vmatmul.bf16.gmra.mxu0 %v3767
        %v11463 = vpop.f32.mrf.mxu0
        %v11464 = vadd.f32 0.0, %v11463
        %v11465 = vpop.f32.mrf.mxu0
        %v11466 = vadd.f32 0.0, %v11465
        %11467 = vmatmul.bf16.gmra.mxu0 %v6018
        %v11468 = vpop.f32.mrf.mxu0
        %v11469 = vadd.f32 0.0, %v11468
        %v11470 = vpop.f32.mrf.mxu0
        %v11471 = vadd.f32 0.0, %v11470
        %11472 = vmatmul.bf16.gmra.mxu0 %v3769
        %v11473 = vpop.f32.mrf.mxu0
        %v11474 = vadd.f32 0.0, %v11473
        %v11475 = vpop.f32.mrf.mxu0
        %v11476 = vadd.f32 0.0, %v11475
        %11477 = vmatmul.bf16.gmra.mxu0 %v3770
        %v11478 = vpop.f32.mrf.mxu0
        %v11479 = vadd.f32 0.0, %v11478
        %v11480 = vpop.f32.mrf.mxu0
        %v11481 = vadd.f32 0.0, %v11480
        %11482 = vmatmul.bf16.gmra.mxu0 %v3771
        %v11483 = vpop.f32.mrf.mxu0
        %v11484 = vadd.f32 0.0, %v11483
        %v11485 = vpop.f32.mrf.mxu0
        %v11486 = vadd.f32 0.0, %v11485
        %11487 = vmatmul.bf16.gmra.mxu0 %v6019
        %v11488 = vpop.f32.mrf.mxu0
        %v11489 = vadd.f32 0.0, %v11488
        %v11490 = vpop.f32.mrf.mxu0
        %v11491 = vadd.f32 0.0, %v11490
        %11492 = vmatmul.bf16.gmra.mxu0 %v3773
        %v11493 = vpop.f32.mrf.mxu0
        %v11494 = vadd.f32 0.0, %v11493
        %v11495 = vpop.f32.mrf.mxu0
        %v11496 = vadd.f32 0.0, %v11495
        %11497 = vmatmul.bf16.gmra.mxu0 %v3774
        %v11498 = vpop.f32.mrf.mxu0
        %v11499 = vadd.f32 0.0, %v11498
        %v11500 = vpop.f32.mrf.mxu0
        %v11501 = vadd.f32 0.0, %v11500
        %11502 = vmatmul.bf16.gmra.mxu0 %v3775
        %v11503 = vpop.f32.mrf.mxu0
        %v11504 = vadd.f32 0.0, %v11503
        %v11505 = vpop.f32.mrf.mxu0
        %v11506 = vadd.f32 0.0, %v11505
        %11507 = vmatmul.bf16.gmra.mxu0 %v6020
        %v11508 = vpop.f32.mrf.mxu0
        %v11509 = vadd.f32 0.0, %v11508
        %v11510 = vpop.f32.mrf.mxu0
        %v11511 = vadd.f32 0.0, %v11510
        %11512 = vmatmul.bf16.gmra.mxu0 %v3777
        %v11513 = vpop.f32.mrf.mxu0
        %v11514 = vadd.f32 0.0, %v11513
        %v11515 = vpop.f32.mrf.mxu0
        %v11516 = vadd.f32 0.0, %v11515
        %11517 = vmatmul.bf16.gmra.mxu0 %v3778
        %v11518 = vpop.f32.mrf.mxu0
        %v11519 = vadd.f32 0.0, %v11518
        %v11520 = vpop.f32.mrf.mxu0
        %v11521 = vadd.f32 0.0, %v11520
        %11522 = vmatmul.bf16.gmra.mxu0 %v3779
        %v11523 = vpop.f32.mrf.mxu0
        %v11524 = vadd.f32 0.0, %v11523
        %v11525 = vpop.f32.mrf.mxu0
        %v11526 = vadd.f32 0.0, %v11525
        %11527 = vmatmul.bf16.gmra.mxu0 %v6021
        %v11528 = vpop.f32.mrf.mxu0
        %v11529 = vadd.f32 0.0, %v11528
        %v11530 = vpop.f32.mrf.mxu0
        %v11531 = vadd.f32 0.0, %v11530
        %11532 = vmatmul.bf16.gmra.mxu0 %v3781
        %v11533 = vpop.f32.mrf.mxu0
        %v11534 = vadd.f32 0.0, %v11533
        %v11535 = vpop.f32.mrf.mxu0
        %v11536 = vadd.f32 0.0, %v11535
        %11537 = vmatmul.bf16.gmra.mxu0 %v3782
        %v11538 = vpop.f32.mrf.mxu0
        %v11539 = vadd.f32 0.0, %v11538
        %v11540 = vpop.f32.mrf.mxu0
        %v11541 = vadd.f32 0.0, %v11540
        %11542 = vmatmul.bf16.gmra.mxu0 %v3783
        %v11543 = vpop.f32.mrf.mxu0
        %v11544 = vadd.f32 0.0, %v11543
        %v11545 = vpop.f32.mrf.mxu0
        %v11546 = vadd.f32 0.0, %v11545
        %11547 = vmatmul.bf16.gmra.mxu0 %v6022
        %v11548 = vpop.f32.mrf.mxu0
        %v11549 = vadd.f32 0.0, %v11548
        %v11550 = vpop.f32.mrf.mxu0
        %v11551 = vadd.f32 0.0, %v11550
        %11552 = vmatmul.bf16.gmra.mxu0 %v7012
        %v11553 = vpop.f32.mrf.mxu0
        %v11554 = vadd.f32 0.0, %v11553
        %v11555 = vpop.f32.mrf.mxu0
        %v11556 = vadd.f32 0.0, %v11555
        %11557 = vmatmul.bf16.gmra.mxu0 %v7013
        %v11558 = vpop.f32.mrf.mxu0
        %v11559 = vadd.f32 0.0, %v11558
        %v11560 = vpop.f32.mrf.mxu0
        %v11561 = vadd.f32 0.0, %v11560
        %11562 = vmatmul.bf16.gmra.mxu0 %v7014
        %v11563 = vpop.f32.mrf.mxu0
        %v11564 = vadd.f32 0.0, %v11563
        %v11565 = vpop.f32.mrf.mxu0
        %v11566 = vadd.f32 0.0, %v11565
        %11567 = vmatmul.bf16.gmra.mxu0 %v8647
        %v11568 = vpop.f32.mrf.mxu0
        %v11569 = vadd.f32 0.0, %v11568
        %v11570 = vpop.f32.mrf.mxu0
        %v11571 = vadd.f32 0.0, %v11570
        %11572 = vmatmul.bf16.gmra.mxu0 %v9588
        %v11573 = vpop.f32.mrf.mxu0
        %v11574 = vadd.f32 0.0, %v11573
        %v11575 = vpop.f32.mrf.mxu0
        %v11576 = vadd.f32 0.0, %v11575
        %11577 = vmatmul.bf16.gmra.mxu0 %v9589
        %v11578 = vpop.f32.mrf.mxu0
        %v11579 = vadd.f32 0.0, %v11578
        %v11580 = vpop.f32.mrf.mxu0
        %v11581 = vadd.f32 0.0, %v11580
        %11582 = vmatmul.bf16.gmra.mxu0 %v9590
        %v11583 = vpop.f32.mrf.mxu0
        %v11584 = vadd.f32 0.0, %v11583
        %v11585 = vpop.f32.mrf.mxu0
        %v11586 = vadd.f32 0.0, %v11585
        %11587 = vmatmul.bf16.gmra.mxu0 %v11223
        %v11588 = vpop.f32.mrf.mxu0
        %v11589 = vadd.f32 0.0, %v11588
        %v11590 = vpop.f32.mrf.mxu0
        %v11591 = vadd.f32 0.0, %v11590
        %11592 = vdwg.mxu0
        %11593 = vmatpush.bf16.msra.mxu0 %v11391
        %11594 = vmatpush.bf16.msra.mxu0 %v11390
        %11595 = vmatpush.bf16.msra.mxu0 %v11389
        %11596 = vmatpush.bf16.msra.mxu0 %v11388
        %11597 = vmatpush.bf16.msra.mxu0 %v11387
        %11598 = vmatpush.bf16.msra.mxu0 %v11386
        %11599 = vmatpush.bf16.msra.mxu0 %v11385
        %11600 = vmatpush.bf16.msra.mxu0 %v11384
        %11601 = vmatmul.bf16.gmra.mxu0 %v3889
        %v11602 = vpop.f32.mrf.mxu0
        %v11603 = vadd.f32 %v11434, %v11602
        %v11604 = vpop.f32.mrf.mxu0
        %v11605 = vadd.f32 %v11436, %v11604
        %11606 = vmatmul.bf16.gmra.mxu0 %v3890
        %v11607 = vpop.f32.mrf.mxu0
        %v11608 = vadd.f32 %v11439, %v11607
        %v11609 = vpop.f32.mrf.mxu0
        %v11610 = vadd.f32 %v11441, %v11609
        %11611 = vmatmul.bf16.gmra.mxu0 %v3891
        %v11612 = vpop.f32.mrf.mxu0
        %v11613 = vadd.f32 %v11444, %v11612
        %v11614 = vpop.f32.mrf.mxu0
        %v11615 = vadd.f32 %v11446, %v11614
        %11616 = vmatmul.bf16.gmra.mxu0 %v6041
        %v11617 = vpop.f32.mrf.mxu0
        %v11618 = vadd.f32 %v11449, %v11617
        %v11619 = vpop.f32.mrf.mxu0
        %v11620 = vadd.f32 %v11451, %v11619
        %11621 = vmatmul.bf16.gmra.mxu0 %v3893
        %v11622 = vpop.f32.mrf.mxu0
        %v11623 = vadd.f32 %v11454, %v11622
        %v11624 = vpop.f32.mrf.mxu0
        %v11625 = vadd.f32 %v11456, %v11624
        %11626 = vmatmul.bf16.gmra.mxu0 %v3894
        %v11627 = vpop.f32.mrf.mxu0
        %v11628 = vadd.f32 %v11459, %v11627
        %v11629 = vpop.f32.mrf.mxu0
        %v11630 = vadd.f32 %v11461, %v11629
        %11631 = vmatmul.bf16.gmra.mxu0 %v3895
        %v11632 = vpop.f32.mrf.mxu0
        %v11633 = vadd.f32 %v11464, %v11632
        %v11634 = vpop.f32.mrf.mxu0
        %v11635 = vadd.f32 %v11466, %v11634
        %11636 = vmatmul.bf16.gmra.mxu0 %v6042
        %v11637 = vpop.f32.mrf.mxu0
        %v11638 = vadd.f32 %v11469, %v11637
        %v11639 = vpop.f32.mrf.mxu0
        %v11640 = vadd.f32 %v11471, %v11639
        %11641 = vmatmul.bf16.gmra.mxu0 %v3897
        %v11642 = vpop.f32.mrf.mxu0
        %v11643 = vadd.f32 %v11474, %v11642
        %v11644 = vpop.f32.mrf.mxu0
        %v11645 = vadd.f32 %v11476, %v11644
        %11646 = vmatmul.bf16.gmra.mxu0 %v3898
        %v11647 = vpop.f32.mrf.mxu0
        %v11648 = vadd.f32 %v11479, %v11647
        %v11649 = vpop.f32.mrf.mxu0
        %v11650 = vadd.f32 %v11481, %v11649
        %11651 = vmatmul.bf16.gmra.mxu0 %v3899
        %v11652 = vpop.f32.mrf.mxu0
        %v11653 = vadd.f32 %v11484, %v11652
        %v11654 = vpop.f32.mrf.mxu0
        %v11655 = vadd.f32 %v11486, %v11654
        %11656 = vmatmul.bf16.gmra.mxu0 %v6043
        %v11657 = vpop.f32.mrf.mxu0
        %v11658 = vadd.f32 %v11489, %v11657
        %v11659 = vpop.f32.mrf.mxu0
        %v11660 = vadd.f32 %v11491, %v11659
        %11661 = vmatmul.bf16.gmra.mxu0 %v3901
        %v11662 = vpop.f32.mrf.mxu0
        %v11663 = vadd.f32 %v11494, %v11662
        %v11664 = vpop.f32.mrf.mxu0
        %v11665 = vadd.f32 %v11496, %v11664
        %11666 = vmatmul.bf16.gmra.mxu0 %v3902
        %v11667 = vpop.f32.mrf.mxu0
        %v11668 = vadd.f32 %v11499, %v11667
        %v11669 = vpop.f32.mrf.mxu0
        %v11670 = vadd.f32 %v11501, %v11669
        %11671 = vmatmul.bf16.gmra.mxu0 %v3903
        %v11672 = vpop.f32.mrf.mxu0
        %v11673 = vadd.f32 %v11504, %v11672
        %v11674 = vpop.f32.mrf.mxu0
        %v11675 = vadd.f32 %v11506, %v11674
        %11676 = vmatmul.bf16.gmra.mxu0 %v6044
        %v11677 = vpop.f32.mrf.mxu0
        %v11678 = vadd.f32 %v11509, %v11677
        %v11679 = vpop.f32.mrf.mxu0
        %v11680 = vadd.f32 %v11511, %v11679
        %11681 = vmatmul.bf16.gmra.mxu0 %v3905
        %v11682 = vpop.f32.mrf.mxu0
        %v11683 = vadd.f32 %v11514, %v11682
        %v11684 = vpop.f32.mrf.mxu0
        %v11685 = vadd.f32 %v11516, %v11684
        %11686 = vmatmul.bf16.gmra.mxu0 %v3906
        %v11687 = vpop.f32.mrf.mxu0
        %v11688 = vadd.f32 %v11519, %v11687
        %v11689 = vpop.f32.mrf.mxu0
        %v11690 = vadd.f32 %v11521, %v11689
        %11691 = vmatmul.bf16.gmra.mxu0 %v3907
        %v11692 = vpop.f32.mrf.mxu0
        %v11693 = vadd.f32 %v11524, %v11692
        %v11694 = vpop.f32.mrf.mxu0
        %v11695 = vadd.f32 %v11526, %v11694
        %11696 = vmatmul.bf16.gmra.mxu0 %v6045
        %v11697 = vpop.f32.mrf.mxu0
        %v11698 = vadd.f32 %v11529, %v11697
        %v11699 = vpop.f32.mrf.mxu0
        %v11700 = vadd.f32 %v11531, %v11699
        %11701 = vmatmul.bf16.gmra.mxu0 %v3909
        %v11702 = vpop.f32.mrf.mxu0
        %v11703 = vadd.f32 %v11534, %v11702
        %v11704 = vpop.f32.mrf.mxu0
        %v11705 = vadd.f32 %v11536, %v11704
        %11706 = vmatmul.bf16.gmra.mxu0 %v3910
        %v11707 = vpop.f32.mrf.mxu0
        %v11708 = vadd.f32 %v11539, %v11707
        %v11709 = vpop.f32.mrf.mxu0
        %v11710 = vadd.f32 %v11541, %v11709
        %11711 = vmatmul.bf16.gmra.mxu0 %v3911
        %v11712 = vpop.f32.mrf.mxu0
        %v11713 = vadd.f32 %v11544, %v11712
        %v11714 = vpop.f32.mrf.mxu0
        %v11715 = vadd.f32 %v11546, %v11714
        %11716 = vmatmul.bf16.gmra.mxu0 %v6046
        %v11717 = vpop.f32.mrf.mxu0
        %v11718 = vadd.f32 %v11549, %v11717
        %v11719 = vpop.f32.mrf.mxu0
        %v11720 = vadd.f32 %v11551, %v11719
        %11721 = vmatmul.bf16.gmra.mxu0 %v7028
        %v11722 = vpop.f32.mrf.mxu0
        %v11723 = vadd.f32 %v11554, %v11722
        %v11724 = vpop.f32.mrf.mxu0
        %v11725 = vadd.f32 %v11556, %v11724
        %11726 = vmatmul.bf16.gmra.mxu0 %v7029
        %v11727 = vpop.f32.mrf.mxu0
        %v11728 = vadd.f32 %v11559, %v11727
        %v11729 = vpop.f32.mrf.mxu0
        %v11730 = vadd.f32 %v11561, %v11729
        %11731 = vmatmul.bf16.gmra.mxu0 %v7030
        %v11732 = vpop.f32.mrf.mxu0
        %v11733 = vadd.f32 %v11564, %v11732
        %v11734 = vpop.f32.mrf.mxu0
        %v11735 = vadd.f32 %v11566, %v11734
        %11736 = vmatmul.bf16.gmra.mxu0 %v8650
        %v11737 = vpop.f32.mrf.mxu0
        %v11738 = vadd.f32 %v11569, %v11737
        %v11739 = vpop.f32.mrf.mxu0
        %v11740 = vadd.f32 %v11571, %v11739
        %11741 = vmatmul.bf16.gmra.mxu0 %v9604
        %v11742 = vpop.f32.mrf.mxu0
        %v11743 = vadd.f32 %v11574, %v11742
        %v11744 = vpop.f32.mrf.mxu0
        %v11745 = vadd.f32 %v11576, %v11744
        %11746 = vmatmul.bf16.gmra.mxu0 %v9605
        %v11747 = vpop.f32.mrf.mxu0
        %v11748 = vadd.f32 %v11579, %v11747
        %v11749 = vpop.f32.mrf.mxu0
        %v11750 = vadd.f32 %v11581, %v11749
        %11751 = vmatmul.bf16.gmra.mxu0 %v9606
        %v11752 = vpop.f32.mrf.mxu0
        %v11753 = vadd.f32 %v11584, %v11752
        %v11754 = vpop.f32.mrf.mxu0
        %v11755 = vadd.f32 %v11586, %v11754
        %11756 = vmatmul.bf16.gmra.mxu0 %v11226
        %v11757 = vpop.f32.mrf.mxu0
        %v11758 = vadd.f32 %v11589, %v11757
        %v11759 = vpop.f32.mrf.mxu0
        %v11760 = vadd.f32 %v11591, %v11759
        %11761 = vdwg.mxu0
        %11762 = vmatpush.bf16.msra.mxu0 %v11399
        %11763 = vmatpush.bf16.msra.mxu0 %v11398
        %11764 = vmatpush.bf16.msra.mxu0 %v11397
        %11765 = vmatpush.bf16.msra.mxu0 %v11396
        %11766 = vmatpush.bf16.msra.mxu0 %v11395
        %11767 = vmatpush.bf16.msra.mxu0 %v11394
        %11768 = vmatpush.bf16.msra.mxu0 %v11393
        %11769 = vmatpush.bf16.msra.mxu0 %v11392
        %11770 = vmatmul.bf16.gmra.mxu0 %v4017
        %v11771 = vpop.f32.mrf.mxu0
        %v11772 = vadd.f32 %v11603, %v11771
        %v11773 = vpop.f32.mrf.mxu0
        %v11774 = vadd.f32 %v11605, %v11773
        %11775 = vmatmul.bf16.gmra.mxu0 %v4018
        %v11776 = vpop.f32.mrf.mxu0
        %v11777 = vadd.f32 %v11608, %v11776
        %v11778 = vpop.f32.mrf.mxu0
        %v11779 = vadd.f32 %v11610, %v11778
        %11780 = vmatmul.bf16.gmra.mxu0 %v4019
        %v11781 = vpop.f32.mrf.mxu0
        %v11782 = vadd.f32 %v11613, %v11781
        %v11783 = vpop.f32.mrf.mxu0
        %v11784 = vadd.f32 %v11615, %v11783
        %11785 = vmatmul.bf16.gmra.mxu0 %v6065
        %v11786 = vpop.f32.mrf.mxu0
        %v11787 = vadd.f32 %v11618, %v11786
        %v11788 = vpop.f32.mrf.mxu0
        %v11789 = vadd.f32 %v11620, %v11788
        %11790 = vmatmul.bf16.gmra.mxu0 %v4021
        %v11791 = vpop.f32.mrf.mxu0
        %v11792 = vadd.f32 %v11623, %v11791
        %v11793 = vpop.f32.mrf.mxu0
        %v11794 = vadd.f32 %v11625, %v11793
        %11795 = vmatmul.bf16.gmra.mxu0 %v4022
        %v11796 = vpop.f32.mrf.mxu0
        %v11797 = vadd.f32 %v11628, %v11796
        %v11798 = vpop.f32.mrf.mxu0
        %v11799 = vadd.f32 %v11630, %v11798
        %11800 = vmatmul.bf16.gmra.mxu0 %v4023
        %v11801 = vpop.f32.mrf.mxu0
        %v11802 = vadd.f32 %v11633, %v11801
        %v11803 = vpop.f32.mrf.mxu0
        %v11804 = vadd.f32 %v11635, %v11803
        %11805 = vmatmul.bf16.gmra.mxu0 %v6066
        %v11806 = vpop.f32.mrf.mxu0
        %v11807 = vadd.f32 %v11638, %v11806
        %v11808 = vpop.f32.mrf.mxu0
        %v11809 = vadd.f32 %v11640, %v11808
        %11810 = vmatmul.bf16.gmra.mxu0 %v4025
        %v11811 = vpop.f32.mrf.mxu0
        %v11812 = vadd.f32 %v11643, %v11811
        %v11813 = vpop.f32.mrf.mxu0
        %v11814 = vadd.f32 %v11645, %v11813
        %11815 = vmatmul.bf16.gmra.mxu0 %v4026
        %v11816 = vpop.f32.mrf.mxu0
        %v11817 = vadd.f32 %v11648, %v11816
        %v11818 = vpop.f32.mrf.mxu0
        %v11819 = vadd.f32 %v11650, %v11818
        %11820 = vmatmul.bf16.gmra.mxu0 %v4027
        %v11821 = vpop.f32.mrf.mxu0
        %v11822 = vadd.f32 %v11653, %v11821
        %v11823 = vpop.f32.mrf.mxu0
        %v11824 = vadd.f32 %v11655, %v11823
        %11825 = vmatmul.bf16.gmra.mxu0 %v6067
        %v11826 = vpop.f32.mrf.mxu0
        %v11827 = vadd.f32 %v11658, %v11826
        %v11828 = vpop.f32.mrf.mxu0
        %v11829 = vadd.f32 %v11660, %v11828
        %11830 = vmatmul.bf16.gmra.mxu0 %v4029
        %v11831 = vpop.f32.mrf.mxu0
        %v11832 = vadd.f32 %v11663, %v11831
        %v11833 = vpop.f32.mrf.mxu0
        %v11834 = vadd.f32 %v11665, %v11833
        %11835 = vmatmul.bf16.gmra.mxu0 %v4030
        %v11836 = vpop.f32.mrf.mxu0
        %v11837 = vadd.f32 %v11668, %v11836
        %v11838 = vpop.f32.mrf.mxu0
        %v11839 = vadd.f32 %v11670, %v11838
        %11840 = vmatmul.bf16.gmra.mxu0 %v4031
        %v11841 = vpop.f32.mrf.mxu0
        %v11842 = vadd.f32 %v11673, %v11841
        %v11843 = vpop.f32.mrf.mxu0
        %v11844 = vadd.f32 %v11675, %v11843
        %11845 = vmatmul.bf16.gmra.mxu0 %v6068
        %v11846 = vpop.f32.mrf.mxu0
        %v11847 = vadd.f32 %v11678, %v11846
        %v11848 = vpop.f32.mrf.mxu0
        %v11849 = vadd.f32 %v11680, %v11848
        %11850 = vmatmul.bf16.gmra.mxu0 %v4033
        %v11851 = vpop.f32.mrf.mxu0
        %v11852 = vadd.f32 %v11683, %v11851
        %v11853 = vpop.f32.mrf.mxu0
        %v11854 = vadd.f32 %v11685, %v11853
        %11855 = vmatmul.bf16.gmra.mxu0 %v4034
        %v11856 = vpop.f32.mrf.mxu0
        %v11857 = vadd.f32 %v11688, %v11856
        %v11858 = vpop.f32.mrf.mxu0
        %v11859 = vadd.f32 %v11690, %v11858
        %11860 = vmatmul.bf16.gmra.mxu0 %v4035
        %v11861 = vpop.f32.mrf.mxu0
        %v11862 = vadd.f32 %v11693, %v11861
        %v11863 = vpop.f32.mrf.mxu0
        %v11864 = vadd.f32 %v11695, %v11863
        %11865 = vmatmul.bf16.gmra.mxu0 %v6069
        %v11866 = vpop.f32.mrf.mxu0
        %v11867 = vadd.f32 %v11698, %v11866
        %v11868 = vpop.f32.mrf.mxu0
        %v11869 = vadd.f32 %v11700, %v11868
        %11870 = vmatmul.bf16.gmra.mxu0 %v4037
        %v11871 = vpop.f32.mrf.mxu0
        %v11872 = vadd.f32 %v11703, %v11871
        %v11873 = vpop.f32.mrf.mxu0
        %v11874 = vadd.f32 %v11705, %v11873
        %11875 = vmatmul.bf16.gmra.mxu0 %v4038
        %v11876 = vpop.f32.mrf.mxu0
        %v11877 = vadd.f32 %v11708, %v11876
        %v11878 = vpop.f32.mrf.mxu0
        %v11879 = vadd.f32 %v11710, %v11878
        %11880 = vmatmul.bf16.gmra.mxu0 %v4039
        %v11881 = vpop.f32.mrf.mxu0
        %v11882 = vadd.f32 %v11713, %v11881
        %v11883 = vpop.f32.mrf.mxu0
        %v11884 = vadd.f32 %v11715, %v11883
        %11885 = vmatmul.bf16.gmra.mxu0 %v6070
        %v11886 = vpop.f32.mrf.mxu0
        %v11887 = vadd.f32 %v11718, %v11886
        %v11888 = vpop.f32.mrf.mxu0
        %v11889 = vadd.f32 %v11720, %v11888
        %11890 = vmatmul.bf16.gmra.mxu0 %v7044
        %v11891 = vpop.f32.mrf.mxu0
        %v11892 = vadd.f32 %v11723, %v11891
        %v11893 = vpop.f32.mrf.mxu0
        %v11894 = vadd.f32 %v11725, %v11893
        %11895 = vmatmul.bf16.gmra.mxu0 %v7045
        %v11896 = vpop.f32.mrf.mxu0
        %v11897 = vadd.f32 %v11728, %v11896
        %v11898 = vpop.f32.mrf.mxu0
        %v11899 = vadd.f32 %v11730, %v11898
        %11900 = vmatmul.bf16.gmra.mxu0 %v7046
        %v11901 = vpop.f32.mrf.mxu0
        %v11902 = vadd.f32 %v11733, %v11901
        %v11903 = vpop.f32.mrf.mxu0
        %v11904 = vadd.f32 %v11735, %v11903
        %11905 = vmatmul.bf16.gmra.mxu0 %v8653
        %v11906 = vpop.f32.mrf.mxu0
        %v11907 = vadd.f32 %v11738, %v11906
        %v11908 = vpop.f32.mrf.mxu0
        %v11909 = vadd.f32 %v11740, %v11908
        %11910 = vmatmul.bf16.gmra.mxu0 %v9620
        %v11911 = vpop.f32.mrf.mxu0
        %v11912 = vadd.f32 %v11743, %v11911
        %v11913 = vpop.f32.mrf.mxu0
        %v11914 = vadd.f32 %v11745, %v11913
        %11915 = vmatmul.bf16.gmra.mxu0 %v9621
        %v11916 = vpop.f32.mrf.mxu0
        %v11917 = vadd.f32 %v11748, %v11916
        %v11918 = vpop.f32.mrf.mxu0
        %v11919 = vadd.f32 %v11750, %v11918
        %11920 = vmatmul.bf16.gmra.mxu0 %v9622
        %v11921 = vpop.f32.mrf.mxu0
        %v11922 = vadd.f32 %v11753, %v11921
        %v11923 = vpop.f32.mrf.mxu0
        %v11924 = vadd.f32 %v11755, %v11923
        %11925 = vmatmul.bf16.gmra.mxu0 %v11229
        %v11926 = vpop.f32.mrf.mxu0
        %v11927 = vadd.f32 %v11758, %v11926
        %v11928 = vpop.f32.mrf.mxu0
        %v11929 = vadd.f32 %v11760, %v11928
        %11930 = vdwg.mxu0
        %v11931 = vadd.f32 %v11138, %v11772
        %v11932 = vadd.f32 %v11139, %v11774
        %v11933 = vadd.f32 %v11140, %v11777
        %v11934 = vadd.f32 %v11141, %v11779
        %v11935 = vadd.f32 %v11142, %v11782
        %v11936 = vadd.f32 %v11143, %v11784
        %v11937 = vadd.f32 %v11144, %v11787
        %v11938 = vadd.f32 %v11145, %v11789
        %v11939 = vadd.f32 %v11146, %v11792
        %v11940 = vadd.f32 %v11147, %v11794
        %v11941 = vadd.f32 %v11148, %v11797
        %v11942 = vadd.f32 %v11149, %v11799
        %v11943 = vadd.f32 %v11150, %v11802
        %v11944 = vadd.f32 %v11151, %v11804
        %v11945 = vadd.f32 %v11152, %v11807
        %v11946 = vadd.f32 %v11153, %v11809
        %v11947 = vadd.f32 %v11154, %v11812
        %v11948 = vadd.f32 %v11155, %v11814
        %v11949 = vadd.f32 %v11156, %v11817
        %v11950 = vadd.f32 %v11157, %v11819
        %v11951 = vadd.f32 %v11158, %v11822
        %v11952 = vadd.f32 %v11159, %v11824
        %v11953 = vadd.f32 %v11160, %v11827
        %v11954 = vadd.f32 %v11161, %v11829
        %v11955 = vadd.f32 %v11162, %v11832
        %v11956 = vadd.f32 %v11163, %v11834
        %v11957 = vadd.f32 %v11164, %v11837
        %v11958 = vadd.f32 %v11165, %v11839
        %v11959 = vadd.f32 %v11166, %v11842
        %v11960 = vadd.f32 %v11167, %v11844
        %v11961 = vadd.f32 %v11168, %v11847
        %v11962 = vadd.f32 %v11169, %v11849
        %v11963 = vadd.f32 %v11170, %v11852
        %v11964 = vadd.f32 %v11171, %v11854
        %v11965 = vadd.f32 %v11172, %v11857
        %v11966 = vadd.f32 %v11173, %v11859
        %v11967 = vadd.f32 %v11174, %v11862
        %v11968 = vadd.f32 %v11175, %v11864
        %v11969 = vadd.f32 %v11176, %v11867
        %v11970 = vadd.f32 %v11177, %v11869
        %v11971 = vadd.f32 %v11178, %v11872
        %v11972 = vadd.f32 %v11179, %v11874
        %v11973 = vadd.f32 %v11180, %v11877
        %v11974 = vadd.f32 %v11181, %v11879
        %v11975 = vadd.f32 %v11182, %v11882
        %v11976 = vadd.f32 %v11183, %v11884
        %v11977 = vadd.f32 %v11184, %v11887
        %v11978 = vadd.f32 %v11185, %v11889
        %v11979 = vadd.f32 %v11186, %v11892
        %v11980 = vadd.f32 %v11187, %v11894
        %v11981 = vadd.f32 %v11188, %v11897
        %v11982 = vadd.f32 %v11189, %v11899
        %v11983 = vadd.f32 %v11190, %v11902
        %v11984 = vadd.f32 %v11191, %v11904
        %v11985 = vadd.f32 %v11192, %v11907
        %v11986 = vadd.f32 %v11193, %v11909
        %v11987 = vadd.f32 %v11194, %v11912
        %v11988 = vadd.f32 %v11195, %v11914
        %v11989 = vadd.f32 %v11196, %v11917
        %v11990 = vadd.f32 %v11197, %v11919
        %v11991 = vadd.f32 %v11198, %v11922
        %v11992 = vadd.f32 %v11199, %v11924
        %v11993 = vadd.f32 %v11200, %v11927
        %v11994 = vadd.f32 %v11201, %v11929
        %v11995 = vld [vmem:[%s4] sm:$0x1]
        %v11997 = vperm.slane %v11995, 0
        %v11999 = vadd.f32 %v11931, %v11997
        %v12000 = vadd.f32 %v11932, %v11997
        %v12001 = vadd.f32 %v11933, %v11997
        %v12002 = vadd.f32 %v11934, %v11997
        %v12003 = vadd.f32 %v11935, %v11997
        %v12004 = vadd.f32 %v11936, %v11997
        %v12005 = vadd.f32 %v11937, %v11997
        %v12006 = vadd.f32 %v11938, %v11997
        %v12007 = vadd.f32 %v11939, %v11997
        %v12008 = vadd.f32 %v11940, %v11997
        %v12009 = vadd.f32 %v11941, %v11997
        %v12010 = vadd.f32 %v11942, %v11997
        %v12011 = vadd.f32 %v11943, %v11997
        %v12012 = vadd.f32 %v11944, %v11997
        %v12013 = vadd.f32 %v11945, %v11997
        %v12014 = vadd.f32 %v11946, %v11997
        %v12015 = vadd.f32 %v11947, %v11997
        %v12016 = vadd.f32 %v11948, %v11997
        %v12017 = vadd.f32 %v11949, %v11997
        %v12018 = vadd.f32 %v11950, %v11997
        %v12019 = vadd.f32 %v11951, %v11997
        %v12020 = vadd.f32 %v11952, %v11997
        %v12021 = vadd.f32 %v11953, %v11997
        %v12022 = vadd.f32 %v11954, %v11997
        %v12023 = vadd.f32 %v11955, %v11997
        %v12024 = vadd.f32 %v11956, %v11997
        %v12025 = vadd.f32 %v11957, %v11997
        %v12026 = vadd.f32 %v11958, %v11997
        %v12027 = vadd.f32 %v11959, %v11997
        %v12028 = vadd.f32 %v11960, %v11997
        %v12029 = vadd.f32 %v11961, %v11997
        %v12030 = vadd.f32 %v11962, %v11997
        %v12031 = vadd.f32 %v11963, %v11997
        %v12032 = vadd.f32 %v11964, %v11997
        %v12033 = vadd.f32 %v11965, %v11997
        %v12034 = vadd.f32 %v11966, %v11997
        %v12035 = vadd.f32 %v11967, %v11997
        %v12036 = vadd.f32 %v11968, %v11997
        %v12037 = vadd.f32 %v11969, %v11997
        %v12038 = vadd.f32 %v11970, %v11997
        %v12039 = vadd.f32 %v11971, %v11997
        %v12040 = vadd.f32 %v11972, %v11997
        %v12041 = vadd.f32 %v11973, %v11997
        %v12042 = vadd.f32 %v11974, %v11997
        %v12043 = vadd.f32 %v11975, %v11997
        %v12044 = vadd.f32 %v11976, %v11997
        %v12045 = vadd.f32 %v11977, %v11997
        %v12046 = vadd.f32 %v11978, %v11997
        %v12047 = vadd.f32 %v11979, %v11997
        %v12048 = vadd.f32 %v11980, %v11997
        %v12049 = vadd.f32 %v11981, %v11997
        %v12050 = vadd.f32 %v11982, %v11997
        %v12051 = vadd.f32 %v11983, %v11997
        %v12052 = vadd.f32 %v11984, %v11997
        %v12053 = vadd.f32 %v11985, %v11997
        %v12054 = vadd.f32 %v11986, %v11997
        %v12055 = vadd.f32 %v11987, %v11997
        %v12056 = vadd.f32 %v11988, %v11997
        %v12057 = vadd.f32 %v11989, %v11997
        %v12058 = vadd.f32 %v11990, %v11997
        %v12059 = vadd.f32 %v11991, %v11997
        %v12060 = vadd.f32 %v11992, %v11997
        %v12061 = vadd.f32 %v11993, %v11997
        %v12062 = vadd.f32 %v11994, %v11997
        %v12063 = vmax.f32 %v11999, 0.0
        %v12064 = vmax.f32 %v12000, 0.0
        %v12065 = vmax.f32 %v12001, 0.0
        %v12066 = vmax.f32 %v12002, 0.0
        %v12067 = vmax.f32 %v12003, 0.0
        %v12068 = vmax.f32 %v12004, 0.0
        %v12069 = vmax.f32 %v12005, 0.0
        %v12070 = vmax.f32 %v12006, 0.0
        %v12071 = vmax.f32 %v12007, 0.0
        %v12072 = vmax.f32 %v12008, 0.0
        %v12073 = vmax.f32 %v12009, 0.0
        %v12074 = vmax.f32 %v12010, 0.0
        %v12075 = vmax.f32 %v12011, 0.0
        %v12076 = vmax.f32 %v12012, 0.0
        %v12077 = vmax.f32 %v12013, 0.0
        %v12078 = vmax.f32 %v12014, 0.0
        %v12079 = vmax.f32 %v12015, 0.0
        %v12080 = vmax.f32 %v12016, 0.0
        %v12081 = vmax.f32 %v12017, 0.0
        %v12082 = vmax.f32 %v12018, 0.0
        %v12083 = vmax.f32 %v12019, 0.0
        %v12084 = vmax.f32 %v12020, 0.0
        %v12085 = vmax.f32 %v12021, 0.0
        %v12086 = vmax.f32 %v12022, 0.0
        %v12087 = vmax.f32 %v12023, 0.0
        %v12088 = vmax.f32 %v12024, 0.0
        %v12089 = vmax.f32 %v12025, 0.0
        %v12090 = vmax.f32 %v12026, 0.0
        %v12091 = vmax.f32 %v12027, 0.0
        %v12092 = vmax.f32 %v12028, 0.0
        %v12093 = vmax.f32 %v12029, 0.0
        %v12094 = vmax.f32 %v12030, 0.0
        %v12095 = vmax.f32 %v12031, 0.0
        %v12096 = vmax.f32 %v12032, 0.0
        %v12097 = vmax.f32 %v12033, 0.0
        %v12098 = vmax.f32 %v12034, 0.0
        %v12099 = vmax.f32 %v12035, 0.0
        %v12100 = vmax.f32 %v12036, 0.0
        %v12101 = vmax.f32 %v12037, 0.0
        %v12102 = vmax.f32 %v12038, 0.0
        %v12103 = vmax.f32 %v12039, 0.0
        %v12104 = vmax.f32 %v12040, 0.0
        %v12105 = vmax.f32 %v12041, 0.0
        %v12106 = vmax.f32 %v12042, 0.0
        %v12107 = vmax.f32 %v12043, 0.0
        %v12108 = vmax.f32 %v12044, 0.0
        %v12109 = vmax.f32 %v12045, 0.0
        %v12110 = vmax.f32 %v12046, 0.0
        %v12111 = vmax.f32 %v12047, 0.0
        %v12112 = vmax.f32 %v12048, 0.0
        %v12113 = vmax.f32 %v12049, 0.0
        %v12114 = vmax.f32 %v12050, 0.0
        %v12115 = vmax.f32 %v12051, 0.0
        %v12116 = vmax.f32 %v12052, 0.0
        %v12117 = vmax.f32 %v12053, 0.0
        %v12118 = vmax.f32 %v12054, 0.0
        %v12119 = vmax.f32 %v12055, 0.0
        %v12120 = vmax.f32 %v12056, 0.0
        %v12121 = vmax.f32 %v12057, 0.0
        %v12122 = vmax.f32 %v12058, 0.0
        %v12123 = vmax.f32 %v12059, 0.0
        %v12124 = vmax.f32 %v12060, 0.0
        %v12125 = vmax.f32 %v12061, 0.0
        %v12126 = vmax.f32 %v12062, 0.0
        %v12127 = vpack.c.bf16 %v12064, %v12063
        %v12128 = vpack.c.bf16 %v12066, %v12065
        %v12129 = vpack.c.bf16 %v12068, %v12067
        %v12130 = vpack.c.bf16 %v12070, %v12069
        %v12131 = vpack.c.bf16 %v12072, %v12071
        %v12132 = vpack.c.bf16 %v12074, %v12073
        %v12133 = vpack.c.bf16 %v12076, %v12075
        %v12134 = vpack.c.bf16 %v12078, %v12077
        %v12135 = vpack.c.bf16 %v12080, %v12079
        %v12136 = vpack.c.bf16 %v12082, %v12081
        %v12137 = vpack.c.bf16 %v12084, %v12083
        %v12138 = vpack.c.bf16 %v12086, %v12085
        %v12139 = vpack.c.bf16 %v12088, %v12087
        %v12140 = vpack.c.bf16 %v12090, %v12089
        %v12141 = vpack.c.bf16 %v12092, %v12091
        %v12142 = vpack.c.bf16 %v12094, %v12093
        %v12143 = vpack.c.bf16 %v12096, %v12095
        %v12144 = vpack.c.bf16 %v12098, %v12097
        %v12145 = vpack.c.bf16 %v12100, %v12099
        %v12146 = vpack.c.bf16 %v12102, %v12101
        %v12147 = vpack.c.bf16 %v12104, %v12103
        %v12148 = vpack.c.bf16 %v12106, %v12105
        %v12149 = vpack.c.bf16 %v12108, %v12107
        %v12150 = vpack.c.bf16 %v12110, %v12109
        %v12151 = vpack.c.bf16 %v12112, %v12111
        %v12152 = vpack.c.bf16 %v12114, %v12113
        %v12153 = vpack.c.bf16 %v12116, %v12115
        %v12154 = vpack.c.bf16 %v12118, %v12117
        %v12155 = vpack.c.bf16 %v12120, %v12119
        %v12156 = vpack.c.bf16 %v12122, %v12121
        %v12157 = vpack.c.bf16 %v12124, %v12123
        %v12158 = vpack.c.bf16 %v12126, %v12125
        %v12159 = vld [vmem:[#allocation9] sm:$0xf]
        %v12160 = vld [vmem:[#allocation9 + $0x4] sm:$0xf]
        %v12161 = vld [vmem:[#allocation9 + $0x8] sm:$0xf]
        %v12162 = vld [vmem:[#allocation9 + $0xc] sm:$0xf]
        %v12163 = vld [vmem:[#allocation9 + $0x10] sm:$0xf]
        %v12164 = vld [vmem:[#allocation9 + $0x14] sm:$0xf]
        %v12165 = vld [vmem:[#allocation9 + $0x18] sm:$0xf]
        %v12166 = vld [vmem:[#allocation9 + $0x1c] sm:$0xf]
        %v12167 = vld [vmem:[#allocation9 + $0x20] sm:$0xf]
        %v12168 = vld [vmem:[#allocation9 + $0x24] sm:$0xf]
        %v12169 = vld [vmem:[#allocation9 + $0x28] sm:$0xf]
        %v12170 = vld [vmem:[#allocation9 + $0x2c] sm:$0xf]
        %v12171 = vld [vmem:[#allocation9 + $0x30] sm:$0xf]
        %v12172 = vld [vmem:[#allocation9 + $0x34] sm:$0xf]
        %v12173 = vld [vmem:[#allocation9 + $0x38] sm:$0xf]
        %v12174 = vld [vmem:[#allocation9 + $0x3c] sm:$0xf]
        %v12175 = vld [vmem:[%s6] sm:$0x1]
        %v12177 = vperm.slane %v12175, 0
        %v12195 = vunpack.c.l.b16 %v12159
        %v12196 = vunpack.c.l.b16 %v12160
        %v12197 = vunpack.c.l.b16 %v12161
        %v12198 = vunpack.c.l.b16 %v12162
        %v12199 = vunpack.c.l.b16 %v12163
        %v12200 = vunpack.c.l.b16 %v12164
        %v12201 = vunpack.c.l.b16 %v12165
        %v12202 = vunpack.c.l.b16 %v12166
        %v12203 = vunpack.c.l.b16 %v12167
        %v12204 = vunpack.c.l.b16 %v12168
        %v12205 = vunpack.c.l.b16 %v12169
        %v12206 = vunpack.c.l.b16 %v12170
        %v12207 = vunpack.c.l.b16 %v12171
        %v12208 = vunpack.c.l.b16 %v12172
        %v12209 = vunpack.c.l.b16 %v12173
        %v12210 = vunpack.c.l.b16 %v12174
        %v12211 = vpack.c.b16 %v12196, %v12195
        %v12212 = vpack.c.b16 %v12198, %v12197
        %v12213 = vpack.c.b16 %v12200, %v12199
        %v12214 = vpack.c.b16 %v12202, %v12201
        %v12215 = vpack.c.b16 %v12204, %v12203
        %v12216 = vpack.c.b16 %v12206, %v12205
        %v12217 = vpack.c.b16 %v12208, %v12207
        %v12218 = vpack.c.b16 %v12210, %v12209
        %12227 = vmatpush.bf16.msra.mxu0 %v12218
        %12228 = vmatpush.bf16.msra.mxu0 %v12217
        %12229 = vmatpush.bf16.msra.mxu0 %v12216
        %12230 = vmatpush.bf16.msra.mxu0 %v12215
        %12231 = vmatpush.bf16.msra.mxu0 %v12214
        %12232 = vmatpush.bf16.msra.mxu0 %v12213
        %12233 = vmatpush.bf16.msra.mxu0 %v12212
        %12234 = vmatpush.bf16.msra.mxu0 %v12211
        %12235 = vmatmul.bf16.gmra.mxu0 %v12127
        %v12236 = vpop.f32.mrf.mxu0
        %v12237 = vadd.f32 %v12177, %v12236
        %v12238 = vpop.f32.mrf.mxu0
        %v12239 = vadd.f32 %v12177, %v12238
        %12240 = vmatmul.bf16.gmra.mxu0 %v12128
        %v12241 = vpop.f32.mrf.mxu0
        %v12242 = vadd.f32 %v12177, %v12241
        %v12243 = vpop.f32.mrf.mxu0
        %v12244 = vadd.f32 %v12177, %v12243
        %12245 = vmatmul.bf16.gmra.mxu0 %v12129
        %v12246 = vpop.f32.mrf.mxu0
        %v12247 = vadd.f32 %v12177, %v12246
        %v12248 = vpop.f32.mrf.mxu0
        %v12249 = vadd.f32 %v12177, %v12248
        %12250 = vmatmul.bf16.gmra.mxu0 %v12130
        %v12251 = vpop.f32.mrf.mxu0
        %v12252 = vadd.f32 %v12177, %v12251
        %v12253 = vpop.f32.mrf.mxu0
        %v12254 = vadd.f32 %v12177, %v12253
        %12255 = vmatmul.bf16.gmra.mxu0 %v12131
        %v12256 = vpop.f32.mrf.mxu0
        %v12257 = vadd.f32 %v12177, %v12256
        %v12258 = vpop.f32.mrf.mxu0
        %v12259 = vadd.f32 %v12177, %v12258
        %12260 = vmatmul.bf16.gmra.mxu0 %v12132
        %v12261 = vpop.f32.mrf.mxu0
        %v12262 = vadd.f32 %v12177, %v12261
        %v12263 = vpop.f32.mrf.mxu0
        %v12264 = vadd.f32 %v12177, %v12263
        %12265 = vmatmul.bf16.gmra.mxu0 %v12133
        %v12266 = vpop.f32.mrf.mxu0
        %v12267 = vadd.f32 %v12177, %v12266
        %v12268 = vpop.f32.mrf.mxu0
        %v12269 = vadd.f32 %v12177, %v12268
        %12270 = vmatmul.bf16.gmra.mxu0 %v12134
        %v12271 = vpop.f32.mrf.mxu0
        %v12272 = vadd.f32 %v12177, %v12271
        %v12273 = vpop.f32.mrf.mxu0
        %v12274 = vadd.f32 %v12177, %v12273
        %12275 = vmatmul.bf16.gmra.mxu0 %v12135
        %v12276 = vpop.f32.mrf.mxu0
        %v12277 = vadd.f32 %v12177, %v12276
        %v12278 = vpop.f32.mrf.mxu0
        %v12279 = vadd.f32 %v12177, %v12278
        %12280 = vmatmul.bf16.gmra.mxu0 %v12136
        %v12281 = vpop.f32.mrf.mxu0
        %v12282 = vadd.f32 %v12177, %v12281
        %v12283 = vpop.f32.mrf.mxu0
        %v12284 = vadd.f32 %v12177, %v12283
        %12285 = vmatmul.bf16.gmra.mxu0 %v12137
        %v12286 = vpop.f32.mrf.mxu0
        %v12287 = vadd.f32 %v12177, %v12286
        %v12288 = vpop.f32.mrf.mxu0
        %v12289 = vadd.f32 %v12177, %v12288
        %12290 = vmatmul.bf16.gmra.mxu0 %v12138
        %v12291 = vpop.f32.mrf.mxu0
        %v12292 = vadd.f32 %v12177, %v12291
        %v12293 = vpop.f32.mrf.mxu0
        %v12294 = vadd.f32 %v12177, %v12293
        %12295 = vmatmul.bf16.gmra.mxu0 %v12139
        %v12296 = vpop.f32.mrf.mxu0
        %v12297 = vadd.f32 %v12177, %v12296
        %v12298 = vpop.f32.mrf.mxu0
        %v12299 = vadd.f32 %v12177, %v12298
        %12300 = vmatmul.bf16.gmra.mxu0 %v12140
        %v12301 = vpop.f32.mrf.mxu0
        %v12302 = vadd.f32 %v12177, %v12301
        %v12303 = vpop.f32.mrf.mxu0
        %v12304 = vadd.f32 %v12177, %v12303
        %12305 = vmatmul.bf16.gmra.mxu0 %v12141
        %v12306 = vpop.f32.mrf.mxu0
        %v12307 = vadd.f32 %v12177, %v12306
        %v12308 = vpop.f32.mrf.mxu0
        %v12309 = vadd.f32 %v12177, %v12308
        %12310 = vmatmul.bf16.gmra.mxu0 %v12142
        %v12311 = vpop.f32.mrf.mxu0
        %v12312 = vadd.f32 %v12177, %v12311
        %v12313 = vpop.f32.mrf.mxu0
        %v12314 = vadd.f32 %v12177, %v12313
        %12315 = vmatmul.bf16.gmra.mxu0 %v12143
        %v12316 = vpop.f32.mrf.mxu0
        %v12317 = vadd.f32 %v12177, %v12316
        %v12318 = vpop.f32.mrf.mxu0
        %v12319 = vadd.f32 %v12177, %v12318
        %12320 = vmatmul.bf16.gmra.mxu0 %v12144
        %v12321 = vpop.f32.mrf.mxu0
        %v12322 = vadd.f32 %v12177, %v12321
        %v12323 = vpop.f32.mrf.mxu0
        %v12324 = vadd.f32 %v12177, %v12323
        %12325 = vmatmul.bf16.gmra.mxu0 %v12145
        %v12326 = vpop.f32.mrf.mxu0
        %v12327 = vadd.f32 %v12177, %v12326
        %v12328 = vpop.f32.mrf.mxu0
        %v12329 = vadd.f32 %v12177, %v12328
        %12330 = vmatmul.bf16.gmra.mxu0 %v12146
        %v12331 = vpop.f32.mrf.mxu0
        %v12332 = vadd.f32 %v12177, %v12331
        %v12333 = vpop.f32.mrf.mxu0
        %v12334 = vadd.f32 %v12177, %v12333
        %12335 = vmatmul.bf16.gmra.mxu0 %v12147
        %v12336 = vpop.f32.mrf.mxu0
        %v12337 = vadd.f32 %v12177, %v12336
        %v12338 = vpop.f32.mrf.mxu0
        %v12339 = vadd.f32 %v12177, %v12338
        %12340 = vmatmul.bf16.gmra.mxu0 %v12148
        %v12341 = vpop.f32.mrf.mxu0
        %v12342 = vadd.f32 %v12177, %v12341
        %v12343 = vpop.f32.mrf.mxu0
        %v12344 = vadd.f32 %v12177, %v12343
        %12345 = vmatmul.bf16.gmra.mxu0 %v12149
        %v12346 = vpop.f32.mrf.mxu0
        %v12347 = vadd.f32 %v12177, %v12346
        %v12348 = vpop.f32.mrf.mxu0
        %v12349 = vadd.f32 %v12177, %v12348
        %12350 = vmatmul.bf16.gmra.mxu0 %v12150
        %v12351 = vpop.f32.mrf.mxu0
        %v12352 = vadd.f32 %v12177, %v12351
        %v12353 = vpop.f32.mrf.mxu0
        %v12354 = vadd.f32 %v12177, %v12353
        %12355 = vmatmul.bf16.gmra.mxu0 %v12151
        %v12356 = vpop.f32.mrf.mxu0
        %v12357 = vadd.f32 %v12177, %v12356
        %v12358 = vpop.f32.mrf.mxu0
        %v12359 = vadd.f32 %v12177, %v12358
        %12360 = vmatmul.bf16.gmra.mxu0 %v12152
        %v12361 = vpop.f32.mrf.mxu0
        %v12362 = vadd.f32 %v12177, %v12361
        %v12363 = vpop.f32.mrf.mxu0
        %v12364 = vadd.f32 %v12177, %v12363
        %12365 = vmatmul.bf16.gmra.mxu0 %v12153
        %v12366 = vpop.f32.mrf.mxu0
        %v12367 = vadd.f32 %v12177, %v12366
        %v12368 = vpop.f32.mrf.mxu0
        %v12369 = vadd.f32 %v12177, %v12368
        %12370 = vmatmul.bf16.gmra.mxu0 %v12154
        %v12371 = vpop.f32.mrf.mxu0
        %v12372 = vadd.f32 %v12177, %v12371
        %v12373 = vpop.f32.mrf.mxu0
        %v12374 = vadd.f32 %v12177, %v12373
        %12375 = vmatmul.bf16.gmra.mxu0 %v12155
        %v12376 = vpop.f32.mrf.mxu0
        %v12377 = vadd.f32 %v12177, %v12376
        %v12378 = vpop.f32.mrf.mxu0
        %v12379 = vadd.f32 %v12177, %v12378
        %12380 = vmatmul.bf16.gmra.mxu0 %v12156
        %v12381 = vpop.f32.mrf.mxu0
        %v12382 = vadd.f32 %v12177, %v12381
        %v12383 = vpop.f32.mrf.mxu0
        %v12384 = vadd.f32 %v12177, %v12383
        %12385 = vmatmul.bf16.gmra.mxu0 %v12157
        %v12386 = vpop.f32.mrf.mxu0
        %v12387 = vadd.f32 %v12177, %v12386
        %v12388 = vpop.f32.mrf.mxu0
        %v12389 = vadd.f32 %v12177, %v12388
        %12390 = vmatmul.bf16.gmra.mxu0 %v12158
        %v12391 = vpop.f32.mrf.mxu0
        %v12392 = vadd.f32 %v12177, %v12391
        %v12393 = vpop.f32.mrf.mxu0
        %v12394 = vadd.f32 %v12177, %v12393
        %12395 = vdwg.mxu0
        %v12396 = vunpack.c.l.bf16 %v350
        %v12397 = vunpack.c.l.bf16 %v351
        %v12398 = vunpack.c.l.bf16 %v352
        %v12399 = vunpack.c.l.bf16 %v353
        %v12400 = vunpack.c.l.bf16 %v354
        %v12401 = vunpack.c.l.bf16 %v355
        %v12402 = vunpack.c.l.bf16 %v356
        %v12403 = vunpack.c.l.bf16 %v357
        %v12404 = vunpack.c.l.bf16 %v358
        %v12405 = vunpack.c.l.bf16 %v359
        %v12406 = vunpack.c.l.bf16 %v360
        %v12407 = vunpack.c.l.bf16 %v361
        %v12408 = vunpack.c.l.bf16 %v362
        %v12409 = vunpack.c.l.bf16 %v363
        %v12410 = vunpack.c.l.bf16 %v364
        %v12411 = vunpack.c.l.bf16 %v365
        %v12412 = vunpack.c.l.bf16 %v366
        %v12413 = vunpack.c.l.bf16 %v367
        %v12414 = vunpack.c.l.bf16 %v368
        %v12415 = vunpack.c.l.bf16 %v369
        %v12416 = vunpack.c.l.bf16 %v370
        %v12417 = vunpack.c.l.bf16 %v371
        %v12418 = vunpack.c.l.bf16 %v372
        %v12419 = vunpack.c.l.bf16 %v373
        %v12420 = vunpack.c.l.bf16 %v374
        %v12421 = vunpack.c.l.bf16 %v375
        %v12422 = vunpack.c.l.bf16 %v376
        %v12423 = vunpack.c.l.bf16 %v377
        %v12424 = vunpack.c.l.bf16 %v378
        %v12425 = vunpack.c.l.bf16 %v379
        %v12426 = vunpack.c.l.bf16 %v380
        %v12427 = vunpack.c.l.bf16 %v381
        %v12428 = vunpack.c.l.bf16 %v382
        %v12429 = vunpack.c.l.bf16 %v383
        %v12430 = vunpack.c.l.bf16 %v384
        %v12431 = vunpack.c.l.bf16 %v385
        %v12432 = vunpack.c.l.bf16 %v386
        %v12433 = vunpack.c.l.bf16 %v387
        %v12434 = vunpack.c.l.bf16 %v388
        %v12435 = vunpack.c.l.bf16 %v389
        %v12436 = vunpack.c.l.bf16 %v390
        %v12437 = vunpack.c.l.bf16 %v391
        %v12438 = vunpack.c.l.bf16 %v392
        %v12439 = vunpack.c.l.bf16 %v393
        %v12440 = vunpack.c.l.bf16 %v394
        %v12441 = vunpack.c.l.bf16 %v395
        %v12442 = vunpack.c.l.bf16 %v396
        %v12443 = vunpack.c.l.bf16 %v397
        %v12444 = vunpack.c.l.bf16 %v398
        %v12445 = vunpack.c.l.bf16 %v399
        %v12446 = vunpack.c.l.bf16 %v400
        %v12447 = vunpack.c.l.bf16 %v401
        %v12448 = vunpack.c.l.bf16 %v402
        %v12449 = vunpack.c.l.bf16 %v403
        %v12450 = vunpack.c.l.bf16 %v404
        %v12451 = vunpack.c.l.bf16 %v405
        %v12452 = vunpack.c.l.bf16 %v406
        %v12453 = vunpack.c.l.bf16 %v407
        %v12454 = vunpack.c.l.bf16 %v408
        %v12455 = vunpack.c.l.bf16 %v409
        %v12456 = vunpack.c.l.bf16 %v410
        %v12457 = vunpack.c.l.bf16 %v411
        %v12458 = vunpack.c.l.bf16 %v412
        %v12459 = vunpack.c.l.bf16 %v413
        %v12460 = vadd.f32 %v12237, %v12396
        %v12461 = vadd.f32 %v12239, %v12397
        %v12462 = vadd.f32 %v12242, %v12398
        %v12463 = vadd.f32 %v12244, %v12399
        %v12464 = vadd.f32 %v12247, %v12400
        %v12465 = vadd.f32 %v12249, %v12401
        %v12466 = vadd.f32 %v12252, %v12402
        %v12467 = vadd.f32 %v12254, %v12403
        %v12468 = vadd.f32 %v12257, %v12404
        %v12469 = vadd.f32 %v12259, %v12405
        %v12470 = vadd.f32 %v12262, %v12406
        %v12471 = vadd.f32 %v12264, %v12407
        %v12472 = vadd.f32 %v12267, %v12408
        %v12473 = vadd.f32 %v12269, %v12409
        %v12474 = vadd.f32 %v12272, %v12410
        %v12475 = vadd.f32 %v12274, %v12411
        %v12476 = vadd.f32 %v12277, %v12412
        %v12477 = vadd.f32 %v12279, %v12413
        %v12478 = vadd.f32 %v12282, %v12414
        %v12479 = vadd.f32 %v12284, %v12415
        %v12480 = vadd.f32 %v12287, %v12416
        %v12481 = vadd.f32 %v12289, %v12417
        %v12482 = vadd.f32 %v12292, %v12418
        %v12483 = vadd.f32 %v12294, %v12419
        %v12484 = vadd.f32 %v12297, %v12420
        %v12485 = vadd.f32 %v12299, %v12421
        %v12486 = vadd.f32 %v12302, %v12422
        %v12487 = vadd.f32 %v12304, %v12423
        %v12488 = vadd.f32 %v12307, %v12424
        %v12489 = vadd.f32 %v12309, %v12425
        %v12490 = vadd.f32 %v12312, %v12426
        %v12491 = vadd.f32 %v12314, %v12427
        %v12492 = vadd.f32 %v12317, %v12428
        %v12493 = vadd.f32 %v12319, %v12429
        %v12494 = vadd.f32 %v12322, %v12430
        %v12495 = vadd.f32 %v12324, %v12431
        %v12496 = vadd.f32 %v12327, %v12432
        %v12497 = vadd.f32 %v12329, %v12433
        %v12498 = vadd.f32 %v12332, %v12434
        %v12499 = vadd.f32 %v12334, %v12435
        %v12500 = vadd.f32 %v12337, %v12436
        %v12501 = vadd.f32 %v12339, %v12437
        %v12502 = vadd.f32 %v12342, %v12438
        %v12503 = vadd.f32 %v12344, %v12439
        %v12504 = vadd.f32 %v12347, %v12440
        %v12505 = vadd.f32 %v12349, %v12441
        %v12506 = vadd.f32 %v12352, %v12442
        %v12507 = vadd.f32 %v12354, %v12443
        %v12508 = vadd.f32 %v12357, %v12444
        %v12509 = vadd.f32 %v12359, %v12445
        %v12510 = vadd.f32 %v12362, %v12446
        %v12511 = vadd.f32 %v12364, %v12447
        %v12512 = vadd.f32 %v12367, %v12448
        %v12513 = vadd.f32 %v12369, %v12449
        %v12514 = vadd.f32 %v12372, %v12450
        %v12515 = vadd.f32 %v12374, %v12451
        %v12516 = vadd.f32 %v12377, %v12452
        %v12517 = vadd.f32 %v12379, %v12453
        %v12518 = vadd.f32 %v12382, %v12454
        %v12519 = vadd.f32 %v12384, %v12455
        %v12520 = vadd.f32 %v12387, %v12456
        %v12521 = vadd.f32 %v12389, %v12457
        %v12522 = vadd.f32 %v12392, %v12458
        %v12523 = vadd.f32 %v12394, %v12459
        %v12524 = vmax.f32 %v12460, 0.0
        %v12525 = vmax.f32 %v12461, 0.0
        %v12526 = vmax.f32 %v12462, 0.0
        %v12527 = vmax.f32 %v12463, 0.0
        %v12528 = vmax.f32 %v12464, 0.0
        %v12529 = vmax.f32 %v12465, 0.0
        %v12530 = vmax.f32 %v12466, 0.0
        %v12531 = vmax.f32 %v12467, 0.0
        %v12532 = vmax.f32 %v12468, 0.0
        %v12533 = vmax.f32 %v12469, 0.0
        %v12534 = vmax.f32 %v12470, 0.0
        %v12535 = vmax.f32 %v12471, 0.0
        %v12536 = vmax.f32 %v12472, 0.0
        %v12537 = vmax.f32 %v12473, 0.0
        %v12538 = vmax.f32 %v12474, 0.0
        %v12539 = vmax.f32 %v12475, 0.0
        %v12540 = vmax.f32 %v12476, 0.0
        %v12541 = vmax.f32 %v12477, 0.0
        %v12542 = vmax.f32 %v12478, 0.0
        %v12543 = vmax.f32 %v12479, 0.0
        %v12544 = vmax.f32 %v12480, 0.0
        %v12545 = vmax.f32 %v12481, 0.0
        %v12546 = vmax.f32 %v12482, 0.0
        %v12547 = vmax.f32 %v12483, 0.0
        %v12548 = vmax.f32 %v12484, 0.0
        %v12549 = vmax.f32 %v12485, 0.0
        %v12550 = vmax.f32 %v12486, 0.0
        %v12551 = vmax.f32 %v12487, 0.0
        %v12552 = vmax.f32 %v12488, 0.0
        %v12553 = vmax.f32 %v12489, 0.0
        %v12554 = vmax.f32 %v12490, 0.0
        %v12555 = vmax.f32 %v12491, 0.0
        %v12556 = vmax.f32 %v12492, 0.0
        %v12557 = vmax.f32 %v12493, 0.0
        %v12558 = vmax.f32 %v12494, 0.0
        %v12559 = vmax.f32 %v12495, 0.0
        %v12560 = vmax.f32 %v12496, 0.0
        %v12561 = vmax.f32 %v12497, 0.0
        %v12562 = vmax.f32 %v12498, 0.0
        %v12563 = vmax.f32 %v12499, 0.0
        %v12564 = vmax.f32 %v12500, 0.0
        %v12565 = vmax.f32 %v12501, 0.0
        %v12566 = vmax.f32 %v12502, 0.0
        %v12567 = vmax.f32 %v12503, 0.0
        %v12568 = vmax.f32 %v12504, 0.0
        %v12569 = vmax.f32 %v12505, 0.0
        %v12570 = vmax.f32 %v12506, 0.0
        %v12571 = vmax.f32 %v12507, 0.0
        %v12572 = vmax.f32 %v12508, 0.0
        %v12573 = vmax.f32 %v12509, 0.0
        %v12574 = vmax.f32 %v12510, 0.0
        %v12575 = vmax.f32 %v12511, 0.0
        %v12576 = vmax.f32 %v12512, 0.0
        %v12577 = vmax.f32 %v12513, 0.0
        %v12578 = vmax.f32 %v12514, 0.0
        %v12579 = vmax.f32 %v12515, 0.0
        %v12580 = vmax.f32 %v12516, 0.0
        %v12581 = vmax.f32 %v12517, 0.0
        %v12582 = vmax.f32 %v12518, 0.0
        %v12583 = vmax.f32 %v12519, 0.0
        %v12584 = vmax.f32 %v12520, 0.0
        %v12585 = vmax.f32 %v12521, 0.0
        %v12586 = vmax.f32 %v12522, 0.0
        %v12587 = vmax.f32 %v12523, 0.0
        %12588 = vst [vmem:[%s348] sm:$0xff] %v12524
        %12589 = vst [vmem:[%s348 + $0x8] sm:$0xff] %v12525
        %12590 = vst [vmem:[%s348 + $0x10] sm:$0xff] %v12526
        %12591 = vst [vmem:[%s348 + $0x18] sm:$0xff] %v12527
        %12592 = vst [vmem:[%s348 + $0x20] sm:$0xff] %v12528
        %12593 = vst [vmem:[%s348 + $0x28] sm:$0xff] %v12529
        %12594 = vst [vmem:[%s348 + $0x30] sm:$0xff] %v12530
        %12595 = vst [vmem:[%s348 + $0x38] sm:$0xff] %v12531
        %12596 = vst [vmem:[%s348 + $0x40] sm:$0xff] %v12532
        %12597 = vst [vmem:[%s348 + $0x48] sm:$0xff] %v12533
        %12598 = vst [vmem:[%s348 + $0x50] sm:$0xff] %v12534
        %12599 = vst [vmem:[%s348 + $0x58] sm:$0xff] %v12535
        %12600 = vst [vmem:[%s348 + $0x60] sm:$0xff] %v12536
        %12601 = vst [vmem:[%s348 + $0x68] sm:$0xff] %v12537
        %12602 = vst [vmem:[%s348 + $0x70] sm:$0xff] %v12538
        %12603 = vst [vmem:[%s348 + $0x78] sm:$0xff] %v12539
        %12604 = vst [vmem:[%s348 + $0x80] sm:$0xff] %v12540
        %12605 = vst [vmem:[%s348 + $0x88] sm:$0xff] %v12541
        %12606 = vst [vmem:[%s348 + $0x90] sm:$0xff] %v12542
        %12607 = vst [vmem:[%s348 + $0x98] sm:$0xff] %v12543
        %12608 = vst [vmem:[%s348 + $0xa0] sm:$0xff] %v12544
        %12609 = vst [vmem:[%s348 + $0xa8] sm:$0xff] %v12545
        %12610 = vst [vmem:[%s348 + $0xb0] sm:$0xff] %v12546
        %12611 = vst [vmem:[%s348 + $0xb8] sm:$0xff] %v12547
        %12612 = vst [vmem:[%s348 + $0xc0] sm:$0xff] %v12548
        %12613 = vst [vmem:[%s348 + $0xc8] sm:$0xff] %v12549
        %12614 = vst [vmem:[%s348 + $0xd0] sm:$0xff] %v12550
        %12615 = vst [vmem:[%s348 + $0xd8] sm:$0xff] %v12551
        %12616 = vst [vmem:[%s348 + $0xe0] sm:$0xff] %v12552
        %12617 = vst [vmem:[%s348 + $0xe8] sm:$0xff] %v12553
        %12618 = vst [vmem:[%s348 + $0xf0] sm:$0xff] %v12554
        %12619 = vst [vmem:[%s348 + $0xf8] sm:$0xff] %v12555
        %12620 = vst [vmem:[%s348 + $0x100] sm:$0xff] %v12556
        %12621 = vst [vmem:[%s348 + $0x108] sm:$0xff] %v12557
        %12622 = vst [vmem:[%s348 + $0x110] sm:$0xff] %v12558
        %12623 = vst [vmem:[%s348 + $0x118] sm:$0xff] %v12559
        %12624 = vst [vmem:[%s348 + $0x120] sm:$0xff] %v12560
        %12625 = vst [vmem:[%s348 + $0x128] sm:$0xff] %v12561
        %12626 = vst [vmem:[%s348 + $0x130] sm:$0xff] %v12562
        %12627 = vst [vmem:[%s348 + $0x138] sm:$0xff] %v12563
        %12628 = vst [vmem:[%s348 + $0x140] sm:$0xff] %v12564
        %12629 = vst [vmem:[%s348 + $0x148] sm:$0xff] %v12565
        %12630 = vst [vmem:[%s348 + $0x150] sm:$0xff] %v12566
        %12631 = vst [vmem:[%s348 + $0x158] sm:$0xff] %v12567
        %12632 = vst [vmem:[%s348 + $0x160] sm:$0xff] %v12568
        %12633 = vst [vmem:[%s348 + $0x168] sm:$0xff] %v12569
        %12634 = vst [vmem:[%s348 + $0x170] sm:$0xff] %v12570
        %12635 = vst [vmem:[%s348 + $0x178] sm:$0xff] %v12571
        %12636 = vst [vmem:[%s348 + $0x180] sm:$0xff] %v12572
        %12637 = vst [vmem:[%s348 + $0x188] sm:$0xff] %v12573
        %12638 = vst [vmem:[%s348 + $0x190] sm:$0xff] %v12574
        %12639 = vst [vmem:[%s348 + $0x198] sm:$0xff] %v12575
        %12640 = vst [vmem:[%s348 + $0x1a0] sm:$0xff] %v12576
        %12641 = vst [vmem:[%s348 + $0x1a8] sm:$0xff] %v12577
        %12642 = vst [vmem:[%s348 + $0x1b0] sm:$0xff] %v12578
        %12643 = vst [vmem:[%s348 + $0x1b8] sm:$0xff] %v12579
        %12644 = vst [vmem:[%s348 + $0x1c0] sm:$0xff] %v12580
        %12645 = vst [vmem:[%s348 + $0x1c8] sm:$0xff] %v12581
        %12646 = vst [vmem:[%s348 + $0x1d0] sm:$0xff] %v12582
        %12647 = vst [vmem:[%s348 + $0x1d8] sm:$0xff] %v12583
        %12648 = vst [vmem:[%s348 + $0x1e0] sm:$0xff] %v12584
        %12649 = vst [vmem:[%s348 + $0x1e8] sm:$0xff] %v12585
        %12650 = vst [vmem:[%s348 + $0x1f0] sm:$0xff] %v12586
        %12651 = vst [vmem:[%s348 + $0x1f8] sm:$0xff] %v12587
        %s12652 = sand.u32 %s186, 1
        %s12653 = scalar_lea.sflag [#allocation5], %s12652
        %s12654 = sand.u32 %s186, 1
        %s12655 = smul.addr %s12654, 512
        %s12656 = scalar_lea.vmem [#allocation11], %s12655
        // Predicated region
        $region65: #{tpu_custom_call.1} parent=47 // pred_check
          %p12657 = pneg %p196
        $region66: #{tpu_custom_call.1} parent=47 // pred_check_branch
          %12659 = sbr.rel (%p12657) target = $region68
        $region67: #{tpu_custom_call.1} parent=47 // pred_region
          %12661 = vsyncadd %s12653, 0
          %s12662 = smul.addr %s26, 64
          %s12663 = smul.addr %s12662, 8
          %s12664 = scalar_lea.hbm %s7, %s12663
          %s12665 = sshll.u32 %s12656, 4
          %s12666 = int_to_ptr.vmem [resolvable:$true] %s12665
          %s12667 = sshll.u32 %s12664, 4
          %s12668 = int_to_ptr.hbm [resolvable:$true] %s12667
          %12673 = dma.vmem_to_hbm [thread:$0]  %s12666, 8192, %s12668, %s12653, 128, 128, 8
        $region68: #{tpu_custom_call.1} parent=47 // pred_fallthru
          _
      $region48: #{tpu_custom_call.1} parent=5 // pred_fallthru
        _
      %p12674 = scmp.le.s32.totalorder 2, %s21
      // Predicated region
      $region69: #{tpu_custom_call.1} parent=5 // pred_check
        %p12675 = pneg %p12674
      $region70: #{tpu_custom_call.1} parent=5 // pred_check_branch
        %12677 = sbr.rel (%p12675) target = $region72
      $region71: #{tpu_custom_call.1} parent=5 // pred_region
        %s12678 = ssub.s32 %s21, 2
        // Predicated region
        $region73: #{tpu_custom_call.1} parent=71 // pred_check
          %p12679 = pneg %p202
        $region74: #{tpu_custom_call.1} parent=71 // pred_check_branch
          %12681 = sbr.rel (%p12679) target = $region76
        $region75: #{tpu_custom_call.1} parent=71 // pred_region
          %s12682 = sand.u32 %s187, 1
          %s12683 = scalar_lea.sflag [#allocation5], %s12682
          %s12684 = sand.u32 %s187, 1
          %s12685 = smul.addr %s12684, 512
          %s12686 = scalar_lea.vmem [#allocation11], %s12685
          %12688 = dma.done %s12683, 8192
        $region76: #{tpu_custom_call.1} parent=71 // pred_fallthru
          _
      $region72: #{tpu_custom_call.1} parent=5 // pred_fallthru
        _
    $region6: #{tpu_custom_call.1} parent=1 // loop_footer
      %s25 = sadd.s32 1, %s21
    $region7: #{tpu_custom_call.1} parent=1 // loop_footer_branch
      %20 = sbr.rel target = $region3
    $region8: #{tpu_custom_call.1} parent=1 // loop_exit
      _
    %12689 = vsyncpa [#allocation4], 1
    %s12690 = scalar_lea.sflag [#allocation4], 1
    %12691 = vsyncpa %s12690, 1
    %12692 = vsyncpa [#allocation7], 1
    %12693 = vsyncpa [#allocation10], 1
    %12694 = vsyncpa [#allocation5], 1
    %s12695 = scalar_lea.sflag [#allocation5], 1
    %12696 = vsyncpa %s12695, 1

</llo_original>
